<compile_context>
chip_gen: v5e
topology: v5e:2x2
jax: 0.10.0
libtpu: 0.0.40
codegen_flags: <defaults>
</compile_context>

<pallas_src>
import functools

import jax
import jax.numpy as jnp
from jax.experimental import pallas as pl
from jax.experimental.pallas import tpu as pltpu

_LANES = 128         # vreg lane width: channel dims kept lane-dense
_BN_EPS = 1e-5       # PyTorch nn.BatchNorm2d default


def _round_up(x, m):
    return (x + m - 1) // m * m


# ----------------------------------------------------------------------------
# Kernel
# ----------------------------------------------------------------------------
def _conv3x3_taps(load_lhs, w_ref, *, S, Wtot):
    """3x3 conv: 9 full-width bf16 MXU matmuls of the unshifted activation;
    the (dh, dw) tap offset is realigned on the f32 result with pltpu.roll."""
    acc = None
    for idx in range(9):
        dh, dw = idx // 3 - 1, idx % 3 - 1
        part = jnp.dot(load_lhs(), w_ref[idx],
                       preferred_element_type=jnp.float32)
        delta = dh * Wtot + dw              # flattened source offset of tap
        if delta != 0:
            # rolled[p] = part[(p + delta) % S]; wrap-around only lands in
            # halo rows/cols which are masked / sliced off downstream.
            part = pltpu.roll(part, shift=(-delta) % S, axis=0)
        acc = part if acc is None else acc + part
    return acc


def _common_block_kernel(x_ref, w1_ref, w2_ref, t1_ref, t2_ref, mask_ref,
                         o_ref, h1_ref, *, S, Wtot):
    # x_ref   : (1, S, 128) bf16   one image, zero-padded + flattened (r*Wtot+c)
    # w*_ref  : (9, 128, 128) bf16 conv taps, BN scale folded into out-columns
    # t*_ref  : (1, 128) f32       folded BN shift
    # mask_ref: (S, 128) f32       1 on valid pixels, 0 on the halo
    # o_ref   : (1, S, 128) f32    output in the same padded flat layout
    # h1_ref  : (S, 128) bf16      VMEM scratch for the conv1 activation
    conv1 = _conv3x3_taps(lambda: x_ref[0], w1_ref, S=S, Wtot=Wtot)
    h1 = jnp.maximum(conv1 + t1_ref[...], 0.0) * mask_ref[...]
    h1_ref[...] = h1.astype(jnp.bfloat16)

    conv2 = _conv3x3_taps(lambda: h1_ref[...], w2_ref, S=S, Wtot=Wtot)
    h2 = conv2 + t2_ref[...]

    identity = x_ref[0].astype(jnp.float32)      # zero in padded lanes / halo
    o_ref[0] = jnp.maximum(h2 + identity, 0.0)


# ----------------------------------------------------------------------------
# Wrapper-side parameter prep (one-time layout plumbing, not compute)
# ----------------------------------------------------------------------------
def _fold_bn(gamma, beta, mean, var):
    scale = gamma * jax.lax.rsqrt(var + _BN_EPS)
    shift = beta - mean * scale
    return scale, shift


def _prep_conv_weight(w_oihw, bn_scale):
    # (Cout, Cin, 3, 3) -> (9, 128, 128) bf16 with BN scale folded into Cout.
    cout, cin, _, _ = w_oihw.shape
    w = jnp.transpose(w_oihw, (2, 3, 1, 0)) * bn_scale[None, None, None, :]
    w = jnp.pad(w, ((0, 0), (0, 0), (0, _LANES - cin), (0, _LANES - cout)))
    return w.reshape(9, _LANES, _LANES).astype(jnp.bfloat16)


def _prep_bn_shift(shift):
    c = shift.shape[0]
    return jnp.pad(shift, (0, _LANES - c)).reshape(1, _LANES).astype(jnp.float32)


# ----------------------------------------------------------------------------
# Forward pass
# ----------------------------------------------------------------------------
def common_block_forward(x_nchw, params, stride=1):
    # CommonBlock's `x += identity` only shape-checks with stride == 1
    # (the downsampling variant is a different block in the original code).
    assert stride == 1
    B, cin, H, W = x_nchw.shape
    cout = params["conv1_w"].shape[0]
    assert cin == cout and cin <= _LANES

    Htot = H + 2
    Wtot = _round_up(W + 2, 8)          # tile-aligned padded width
    S = Htot * Wtot

    # NCHW -> NHWC, zero pad: 1 row top/bottom, 1 col left, Wtot-W-1 cols
    # right, channels to 128 lanes; flatten rows*width for the kernel.
    x = jnp.transpose(x_nchw, (0, 2, 3, 1)).astype(jnp.bfloat16)
    x = jnp.pad(x, ((0, 0), (1, 1), (1, Wtot - W - 1), (0, _LANES - cin)))
    x_flat = x.reshape(B, S, _LANES)

    s1, t1 = _fold_bn(params["bn1_gamma"], params["bn1_beta"],
                      params["bn1_mean"], params["bn1_var"])
    s2, t2 = _fold_bn(params["bn2_gamma"], params["bn2_beta"],
                      params["bn2_mean"], params["bn2_var"])
    w1 = _prep_conv_weight(params["conv1_w"], s1)
    w2 = _prep_conv_weight(params["conv2_w"], s2)
    t1 = _prep_bn_shift(t1)
    t2 = _prep_bn_shift(t2)

    # 0/1 validity mask over the flattened padded image (halo = 0).
    pos = jnp.arange(S, dtype=jnp.int32)
    r, c = pos // Wtot, pos % Wtot
    valid = ((r >= 1) & (r <= H) & (c >= 1) & (c <= W)).astype(jnp.float32)
    mask = jnp.broadcast_to(valid[:, None], (S, _LANES))

    flops = int(2 * 2 * 9 * B * S * _LANES * _LANES)          # two 3x3 convs
    bytes_accessed = int(x_flat.size * 2 + (w1.size + w2.size) * 2
                         + (t1.size + t2.size + mask.size) * 4
                         + B * S * _LANES * 4)
    vmem_limit = int(min(64 * 1024 * 1024,
                         max(32 * 1024 * 1024,
                             8 * S * _LANES * 4 + 4 * (w1.size + w2.size))))

    out = pl.pallas_call(
        functools.partial(_common_block_kernel, S=S, Wtot=Wtot),
        out_shape=jax.ShapeDtypeStruct((B, S, _LANES), jnp.float32),
        grid=(B,),
        in_specs=[
            pl.BlockSpec((1, S, _LANES), lambda b: (b, 0, 0)),       # x (per image)
            pl.BlockSpec((9, _LANES, _LANES), lambda b: (0, 0, 0)),  # w1 (resident)
            pl.BlockSpec((9, _LANES, _LANES), lambda b: (0, 0, 0)),  # w2 (resident)
            pl.BlockSpec((1, _LANES), lambda b: (0, 0)),             # bn1 shift
            pl.BlockSpec((1, _LANES), lambda b: (0, 0)),             # bn2 shift
            pl.BlockSpec((S, _LANES), lambda b: (0, 0)),             # halo mask
        ],
        out_specs=pl.BlockSpec((1, S, _LANES), lambda b: (b, 0, 0)),
        scratch_shapes=[pltpu.VMEM((S, _LANES), jnp.bfloat16)],      # conv1 act
        compiler_params=pltpu.CompilerParams(
            dimension_semantics=("parallel",),
            vmem_limit_bytes=vmem_limit),
        cost_estimate=pl.CostEstimate(flops=flops, transcendentals=0,
                                      bytes_accessed=bytes_accessed),
    )(x_flat, w1, w2, t1, t2, mask)

    # drop the spatial halo and padded channels, back to NCHW
    out = out.reshape(B, Htot, Wtot, _LANES)[:, 1:H + 1, 1:W + 1, :cout]
    return jnp.transpose(out, (0, 3, 1, 2))


# ----------------------------------------------------------------------------
# Deterministic synthetic parameters (PyTorch-convention shapes)
# ----------------------------------------------------------------------------
def init_params(key, channels):
    ks = jax.random.split(key, 10)
    w_scale = 0.05
    return dict(
        conv1_w=w_scale * jax.random.normal(ks[0], (channels, channels, 3, 3), jnp.float32),
        conv2_w=w_scale * jax.random.normal(ks[1], (channels, channels, 3, 3), jnp.float32),
        bn1_gamma=1.0 + 0.1 * jax.random.normal(ks[2], (channels,), jnp.float32),
        bn1_beta=0.1 * jax.random.normal(ks[3], (channels,), jnp.float32),
        bn1_mean=0.1 * jax.random.normal(ks[4], (channels,), jnp.float32),
        bn1_var=1.0 + 0.5 * jax.random.uniform(ks[5], (channels,), jnp.float32),
        bn2_gamma=1.0 + 0.1 * jax.random.normal(ks[6], (channels,), jnp.float32),
        bn2_beta=0.1 * jax.random.normal(ks[7], (channels,), jnp.float32),
        bn2_mean=0.1 * jax.random.normal(ks[8], (channels,), jnp.float32),
        bn2_var=1.0 + 0.5 * jax.random.uniform(ks[9], (channels,), jnp.float32),
    )


# ----------------------------------------------------------------------------
# Plain-JAX reference (inference-mode BN) for a sanity check
# ----------------------------------------------------------------------------
def _reference_forward(x_nchw, params):
    def conv(x, w):
        return jax.lax.conv_general_dilated(
            x, w, window_strides=(1, 1), padding=((1, 1), (1, 1)),
            dimension_numbers=("NCHW", "OIHW", "NCHW"),
            precision=jax.lax.Precision.HIGHEST)

    def bn(x, g, b, m, v):
        s = g / jnp.sqrt(v + _BN_EPS)
        return x * s[None, :, None, None] + (b - m * s)[None, :, None, None]

    identity = x_nchw
    h = jax.nn.relu(bn(conv(x_nchw, params["conv1_w"]),
                       params["bn1_gamma"], params["bn1_beta"],
                       params["bn1_mean"], params["bn1_var"]))
    h = bn(conv(h, params["conv2_w"]),
           params["bn2_gamma"], params["bn2_beta"],
           params["bn2_mean"], params["bn2_var"])
    return jax.nn.relu(h + identity)


# ----------------------------------------------------------------------------
if __name__ == "__main__":
    key = jax.random.PRNGKey(0)
    k_x, k_p = jax.random.split(key)

    B, C, H, W = 2, 4, 16, 16
    x = jax.random.normal(k_x, (B, C, H, W), dtype=jnp.float32)   # NCHW
    params = init_params(k_p, C)

    fwd = jax.jit(common_block_forward)
    out = fwd(x, params)
    jax.block_until_ready(out)

    assert out.shape == (B, C, H, W), out.shape
    assert out.dtype == jnp.float32

    ref = _reference_forward(x, params)
    err = float(jnp.max(jnp.abs(out - ref)))
    assert err < 5e-2, f"max abs err {err}"

    print("KERNEL_OK")
</pallas_src>

<mosaic_0001>
module attributes {stable_mosaic.version = 11 : i64} {
  func.func @_common_block_kernel(%arg0: i32, %arg1: memref<1x432x128xbf16, #tpu.memory_space<vmem>>, %arg2: memref<9x128x128xbf16, #tpu.memory_space<vmem>>, %arg3: memref<9x128x128xbf16, #tpu.memory_space<vmem>>, %arg4: memref<1x128xf32, #tpu.memory_space<vmem>>, %arg5: memref<1x128xf32, #tpu.memory_space<vmem>>, %arg6: memref<432x128xf32, #tpu.memory_space<vmem>>, %arg7: memref<1x432x128xf32, #tpu.memory_space<vmem>>, %arg8: memref<432x128xbf16, #tpu.memory_space<vmem>>) attributes {dimension_semantics = [#tpu.dimension_semantics<parallel>], iteration_bounds = array<i64: 2>, scalar_prefetch = 0 : i64, scratch_operands = 1 : i64, tpu.core_type = #tpu.core_type<tc>, window_params = [{transform_indices = @transform_0, window_bounds = array<i64: 1, 432, 128>}, {pipeline_mode = #tpu.pipeline_mode<synchronous>, transform_indices = @transform_1, window_bounds = array<i64: 9, 128, 128>}, {pipeline_mode = #tpu.pipeline_mode<synchronous>, transform_indices = @transform_2, window_bounds = array<i64: 9, 128, 128>}, {pipeline_mode = #tpu.pipeline_mode<synchronous>, transform_indices = @transform_3, window_bounds = array<i64: 1, 128>}, {pipeline_mode = #tpu.pipeline_mode<synchronous>, transform_indices = @transform_4, window_bounds = array<i64: 1, 128>}, {pipeline_mode = #tpu.pipeline_mode<synchronous>, transform_indices = @transform_5, window_bounds = array<i64: 432, 128>}, {transform_indices = @transform_6, window_bounds = array<i64: 1, 432, 128>}]} {
    %c0 = arith.constant 0 : index
    %c0_0 = arith.constant 0 : index
    %c0_1 = arith.constant 0 : index
    %0 = vector.load %arg1[%c0, %c0_0, %c0_1] : memref<1x432x128xbf16, #tpu.memory_space<vmem>>, vector<1x432x128xbf16>
    %1 = vector.shape_cast %0 : vector<1x432x128xbf16> to vector<432x128xbf16>
    %c0_2 = arith.constant 0 : index
    %c0_3 = arith.constant 0 : index
    %c0_4 = arith.constant 0 : index
    %2 = vector.load %arg2[%c0_2, %c0_3, %c0_4] : memref<9x128x128xbf16, #tpu.memory_space<vmem>>, vector<1x128x128xbf16>
    %3 = vector.shape_cast %2 : vector<1x128x128xbf16> to vector<128x128xbf16>
    %cst = arith.constant dense<0.000000e+00> : vector<432x128xf32>
    %4 = tpu.matmul %1, %3, %cst {dimension_numbers = #tpu.dot_dimension_numbers<[1], [0], [0], [1], [0, 0, 1, 1], [], []>} : vector<432x128xbf16>, vector<128x128xbf16>, vector<432x128xf32> -> vector<432x128xf32>
    %c25_i32 = arith.constant 25 : i32
    %5 = tpu.dynamic_rotate %4 by %c25_i32 dim 0 : vector<432x128xf32>, i32 -> vector<432x128xf32>
    %c0_5 = arith.constant 0 : index
    %c0_6 = arith.constant 0 : index
    %c0_7 = arith.constant 0 : index
    %6 = vector.load %arg1[%c0_5, %c0_6, %c0_7] : memref<1x432x128xbf16, #tpu.memory_space<vmem>>, vector<1x432x128xbf16>
    %7 = vector.shape_cast %6 : vector<1x432x128xbf16> to vector<432x128xbf16>
    %c1 = arith.constant 1 : index
    %c0_8 = arith.constant 0 : index
    %c0_9 = arith.constant 0 : index
    %8 = vector.load %arg2[%c1, %c0_8, %c0_9] : memref<9x128x128xbf16, #tpu.memory_space<vmem>>, vector<1x128x128xbf16>
    %9 = vector.shape_cast %8 : vector<1x128x128xbf16> to vector<128x128xbf16>
    %cst_10 = arith.constant dense<0.000000e+00> : vector<432x128xf32>
    %10 = tpu.matmul %7, %9, %cst_10 {dimension_numbers = #tpu.dot_dimension_numbers<[1], [0], [0], [1], [0, 0, 1, 1], [], []>} : vector<432x128xbf16>, vector<128x128xbf16>, vector<432x128xf32> -> vector<432x128xf32>
    %c24_i32 = arith.constant 24 : i32
    %11 = tpu.dynamic_rotate %10 by %c24_i32 dim 0 : vector<432x128xf32>, i32 -> vector<432x128xf32>
    %12 = arith.addf %5, %11 : vector<432x128xf32>
    %c0_11 = arith.constant 0 : index
    %c0_12 = arith.constant 0 : index
    %c0_13 = arith.constant 0 : index
    %13 = vector.load %arg1[%c0_11, %c0_12, %c0_13] : memref<1x432x128xbf16, #tpu.memory_space<vmem>>, vector<1x432x128xbf16>
    %14 = vector.shape_cast %13 : vector<1x432x128xbf16> to vector<432x128xbf16>
    %c2 = arith.constant 2 : index
    %c0_14 = arith.constant 0 : index
    %c0_15 = arith.constant 0 : index
    %15 = vector.load %arg2[%c2, %c0_14, %c0_15] : memref<9x128x128xbf16, #tpu.memory_space<vmem>>, vector<1x128x128xbf16>
    %16 = vector.shape_cast %15 : vector<1x128x128xbf16> to vector<128x128xbf16>
    %cst_16 = arith.constant dense<0.000000e+00> : vector<432x128xf32>
    %17 = tpu.matmul %14, %16, %cst_16 {dimension_numbers = #tpu.dot_dimension_numbers<[1], [0], [0], [1], [0, 0, 1, 1], [], []>} : vector<432x128xbf16>, vector<128x128xbf16>, vector<432x128xf32> -> vector<432x128xf32>
    %c23_i32 = arith.constant 23 : i32
    %18 = tpu.dynamic_rotate %17 by %c23_i32 dim 0 : vector<432x128xf32>, i32 -> vector<432x128xf32>
    %19 = arith.addf %12, %18 : vector<432x128xf32>
    %c0_17 = arith.constant 0 : index
    %c0_18 = arith.constant 0 : index
    %c0_19 = arith.constant 0 : index
    %20 = vector.load %arg1[%c0_17, %c0_18, %c0_19] : memref<1x432x128xbf16, #tpu.memory_space<vmem>>, vector<1x432x128xbf16>
    %21 = vector.shape_cast %20 : vector<1x432x128xbf16> to vector<432x128xbf16>
    %c3 = arith.constant 3 : index
    %c0_20 = arith.constant 0 : index
    %c0_21 = arith.constant 0 : index
    %22 = vector.load %arg2[%c3, %c0_20, %c0_21] : memref<9x128x128xbf16, #tpu.memory_space<vmem>>, vector<1x128x128xbf16>
    %23 = vector.shape_cast %22 : vector<1x128x128xbf16> to vector<128x128xbf16>
    %cst_22 = arith.constant dense<0.000000e+00> : vector<432x128xf32>
    %24 = tpu.matmul %21, %23, %cst_22 {dimension_numbers = #tpu.dot_dimension_numbers<[1], [0], [0], [1], [0, 0, 1, 1], [], []>} : vector<432x128xbf16>, vector<128x128xbf16>, vector<432x128xf32> -> vector<432x128xf32>
    %c1_i32 = arith.constant 1 : i32
    %25 = tpu.dynamic_rotate %24 by %c1_i32 dim 0 : vector<432x128xf32>, i32 -> vector<432x128xf32>
    %26 = arith.addf %19, %25 : vector<432x128xf32>
    %c0_23 = arith.constant 0 : index
    %c0_24 = arith.constant 0 : index
    %c0_25 = arith.constant 0 : index
    %27 = vector.load %arg1[%c0_23, %c0_24, %c0_25] : memref<1x432x128xbf16, #tpu.memory_space<vmem>>, vector<1x432x128xbf16>
    %28 = vector.shape_cast %27 : vector<1x432x128xbf16> to vector<432x128xbf16>
    %c4 = arith.constant 4 : index
    %c0_26 = arith.constant 0 : index
    %c0_27 = arith.constant 0 : index
    %29 = vector.load %arg2[%c4, %c0_26, %c0_27] : memref<9x128x128xbf16, #tpu.memory_space<vmem>>, vector<1x128x128xbf16>
    %30 = vector.shape_cast %29 : vector<1x128x128xbf16> to vector<128x128xbf16>
    %cst_28 = arith.constant dense<0.000000e+00> : vector<432x128xf32>
    %31 = tpu.matmul %28, %30, %cst_28 {dimension_numbers = #tpu.dot_dimension_numbers<[1], [0], [0], [1], [0, 0, 1, 1], [], []>} : vector<432x128xbf16>, vector<128x128xbf16>, vector<432x128xf32> -> vector<432x128xf32>
    %32 = arith.addf %26, %31 : vector<432x128xf32>
    %c0_29 = arith.constant 0 : index
    %c0_30 = arith.constant 0 : index
    %c0_31 = arith.constant 0 : index
    %33 = vector.load %arg1[%c0_29, %c0_30, %c0_31] : memref<1x432x128xbf16, #tpu.memory_space<vmem>>, vector<1x432x128xbf16>
    %34 = vector.shape_cast %33 : vector<1x432x128xbf16> to vector<432x128xbf16>
    %c5 = arith.constant 5 : index
    %c0_32 = arith.constant 0 : index
    %c0_33 = arith.constant 0 : index
    %35 = vector.load %arg2[%c5, %c0_32, %c0_33] : memref<9x128x128xbf16, #tpu.memory_space<vmem>>, vector<1x128x128xbf16>
    %36 = vector.shape_cast %35 : vector<1x128x128xbf16> to vector<128x128xbf16>
    %cst_34 = arith.constant dense<0.000000e+00> : vector<432x128xf32>
    %37 = tpu.matmul %34, %36, %cst_34 {dimension_numbers = #tpu.dot_dimension_numbers<[1], [0], [0], [1], [0, 0, 1, 1], [], []>} : vector<432x128xbf16>, vector<128x128xbf16>, vector<432x128xf32> -> vector<432x128xf32>
    %c431_i32 = arith.constant 431 : i32
    %38 = tpu.dynamic_rotate %37 by %c431_i32 dim 0 : vector<432x128xf32>, i32 -> vector<432x128xf32>
    %39 = arith.addf %32, %38 : vector<432x128xf32>
    %c0_35 = arith.constant 0 : index
    %c0_36 = arith.constant 0 : index
    %c0_37 = arith.constant 0 : index
    %40 = vector.load %arg1[%c0_35, %c0_36, %c0_37] : memref<1x432x128xbf16, #tpu.memory_space<vmem>>, vector<1x432x128xbf16>
    %41 = vector.shape_cast %40 : vector<1x432x128xbf16> to vector<432x128xbf16>
    %c6 = arith.constant 6 : index
    %c0_38 = arith.constant 0 : index
    %c0_39 = arith.constant 0 : index
    %42 = vector.load %arg2[%c6, %c0_38, %c0_39] : memref<9x128x128xbf16, #tpu.memory_space<vmem>>, vector<1x128x128xbf16>
    %43 = vector.shape_cast %42 : vector<1x128x128xbf16> to vector<128x128xbf16>
    %cst_40 = arith.constant dense<0.000000e+00> : vector<432x128xf32>
    %44 = tpu.matmul %41, %43, %cst_40 {dimension_numbers = #tpu.dot_dimension_numbers<[1], [0], [0], [1], [0, 0, 1, 1], [], []>} : vector<432x128xbf16>, vector<128x128xbf16>, vector<432x128xf32> -> vector<432x128xf32>
    %c409_i32 = arith.constant 409 : i32
    %45 = tpu.dynamic_rotate %44 by %c409_i32 dim 0 : vector<432x128xf32>, i32 -> vector<432x128xf32>
    %46 = arith.addf %39, %45 : vector<432x128xf32>
    %c0_41 = arith.constant 0 : index
    %c0_42 = arith.constant 0 : index
    %c0_43 = arith.constant 0 : index
    %47 = vector.load %arg1[%c0_41, %c0_42, %c0_43] : memref<1x432x128xbf16, #tpu.memory_space<vmem>>, vector<1x432x128xbf16>
    %48 = vector.shape_cast %47 : vector<1x432x128xbf16> to vector<432x128xbf16>
    %c7 = arith.constant 7 : index
    %c0_44 = arith.constant 0 : index
    %c0_45 = arith.constant 0 : index
    %49 = vector.load %arg2[%c7, %c0_44, %c0_45] : memref<9x128x128xbf16, #tpu.memory_space<vmem>>, vector<1x128x128xbf16>
    %50 = vector.shape_cast %49 : vector<1x128x128xbf16> to vector<128x128xbf16>
    %cst_46 = arith.constant dense<0.000000e+00> : vector<432x128xf32>
    %51 = tpu.matmul %48, %50, %cst_46 {dimension_numbers = #tpu.dot_dimension_numbers<[1], [0], [0], [1], [0, 0, 1, 1], [], []>} : vector<432x128xbf16>, vector<128x128xbf16>, vector<432x128xf32> -> vector<432x128xf32>
    %c408_i32 = arith.constant 408 : i32
    %52 = tpu.dynamic_rotate %51 by %c408_i32 dim 0 : vector<432x128xf32>, i32 -> vector<432x128xf32>
    %53 = arith.addf %46, %52 : vector<432x128xf32>
    %c0_47 = arith.constant 0 : index
    %c0_48 = arith.constant 0 : index
    %c0_49 = arith.constant 0 : index
    %54 = vector.load %arg1[%c0_47, %c0_48, %c0_49] : memref<1x432x128xbf16, #tpu.memory_space<vmem>>, vector<1x432x128xbf16>
    %55 = vector.shape_cast %54 : vector<1x432x128xbf16> to vector<432x128xbf16>
    %c8 = arith.constant 8 : index
    %c0_50 = arith.constant 0 : index
    %c0_51 = arith.constant 0 : index
    %56 = vector.load %arg2[%c8, %c0_50, %c0_51] : memref<9x128x128xbf16, #tpu.memory_space<vmem>>, vector<1x128x128xbf16>
    %57 = vector.shape_cast %56 : vector<1x128x128xbf16> to vector<128x128xbf16>
    %cst_52 = arith.constant dense<0.000000e+00> : vector<432x128xf32>
    %58 = tpu.matmul %55, %57, %cst_52 {dimension_numbers = #tpu.dot_dimension_numbers<[1], [0], [0], [1], [0, 0, 1, 1], [], []>} : vector<432x128xbf16>, vector<128x128xbf16>, vector<432x128xf32> -> vector<432x128xf32>
    %c407_i32 = arith.constant 407 : i32
    %59 = tpu.dynamic_rotate %58 by %c407_i32 dim 0 : vector<432x128xf32>, i32 -> vector<432x128xf32>
    %60 = arith.addf %53, %59 : vector<432x128xf32>
    %c0_53 = arith.constant 0 : index
    %c0_54 = arith.constant 0 : index
    %61 = vector.load %arg4[%c0_53, %c0_54] : memref<1x128xf32, #tpu.memory_space<vmem>>, vector<1x128xf32>
    %62 = vector.broadcast %61 : vector<1x128xf32> to vector<432x128xf32>
    %63 = arith.addf %60, %62 : vector<432x128xf32>
    %cst_55 = arith.constant 0.000000e+00 : f32
    %64 = vector.broadcast %cst_55 : f32 to vector<432x128xf32>
    %65 = arith.maximumf %63, %64 : vector<432x128xf32>
    %c0_56 = arith.constant 0 : index
    %c0_57 = arith.constant 0 : index
    %66 = vector.load %arg6[%c0_56, %c0_57] : memref<432x128xf32, #tpu.memory_space<vmem>>, vector<432x128xf32>
    %67 = arith.mulf %65, %66 : vector<432x128xf32>
    %68 = arith.truncf %67 : vector<432x128xf32> to vector<432x128xbf16>
    %c0_58 = arith.constant 0 : index
    %c0_59 = arith.constant 0 : index
    %69 = vector.load %arg8[%c0_58, %c0_59] : memref<432x128xbf16, #tpu.memory_space<vmem>>, vector<432x128xbf16>
    tpu.vector_store %arg8[%c0_58, %c0_59], %68 {strides = array<i32>} : memref<432x128xbf16, #tpu.memory_space<vmem>>, vector<432x128xbf16>,
    %c0_60 = arith.constant 0 : index
    %c0_61 = arith.constant 0 : index
    %70 = vector.load %arg8[%c0_60, %c0_61] : memref<432x128xbf16, #tpu.memory_space<vmem>>, vector<432x128xbf16>
    %c0_62 = arith.constant 0 : index
    %c0_63 = arith.constant 0 : index
    %c0_64 = arith.constant 0 : index
    %71 = vector.load %arg3[%c0_62, %c0_63, %c0_64] : memref<9x128x128xbf16, #tpu.memory_space<vmem>>, vector<1x128x128xbf16>
    %72 = vector.shape_cast %71 : vector<1x128x128xbf16> to vector<128x128xbf16>
    %cst_65 = arith.constant dense<0.000000e+00> : vector<432x128xf32>
    %73 = tpu.matmul %70, %72, %cst_65 {dimension_numbers = #tpu.dot_dimension_numbers<[1], [0], [0], [1], [0, 0, 1, 1], [], []>} : vector<432x128xbf16>, vector<128x128xbf16>, vector<432x128xf32> -> vector<432x128xf32>
    %c25_i32_66 = arith.constant 25 : i32
    %74 = tpu.dynamic_rotate %73 by %c25_i32_66 dim 0 : vector<432x128xf32>, i32 -> vector<432x128xf32>
    %c0_67 = arith.constant 0 : index
    %c0_68 = arith.constant 0 : index
    %75 = vector.load %arg8[%c0_67, %c0_68] : memref<432x128xbf16, #tpu.memory_space<vmem>>, vector<432x128xbf16>
    %c1_69 = arith.constant 1 : index
    %c0_70 = arith.constant 0 : index
    %c0_71 = arith.constant 0 : index
    %76 = vector.load %arg3[%c1_69, %c0_70, %c0_71] : memref<9x128x128xbf16, #tpu.memory_space<vmem>>, vector<1x128x128xbf16>
    %77 = vector.shape_cast %76 : vector<1x128x128xbf16> to vector<128x128xbf16>
    %cst_72 = arith.constant dense<0.000000e+00> : vector<432x128xf32>
    %78 = tpu.matmul %75, %77, %cst_72 {dimension_numbers = #tpu.dot_dimension_numbers<[1], [0], [0], [1], [0, 0, 1, 1], [], []>} : vector<432x128xbf16>, vector<128x128xbf16>, vector<432x128xf32> -> vector<432x128xf32>
    %c24_i32_73 = arith.constant 24 : i32
    %79 = tpu.dynamic_rotate %78 by %c24_i32_73 dim 0 : vector<432x128xf32>, i32 -> vector<432x128xf32>
    %80 = arith.addf %74, %79 : vector<432x128xf32>
    %c0_74 = arith.constant 0 : index
    %c0_75 = arith.constant 0 : index
    %81 = vector.load %arg8[%c0_74, %c0_75] : memref<432x128xbf16, #tpu.memory_space<vmem>>, vector<432x128xbf16>
    %c2_76 = arith.constant 2 : index
    %c0_77 = arith.constant 0 : index
    %c0_78 = arith.constant 0 : index
    %82 = vector.load %arg3[%c2_76, %c0_77, %c0_78] : memref<9x128x128xbf16, #tpu.memory_space<vmem>>, vector<1x128x128xbf16>
    %83 = vector.shape_cast %82 : vector<1x128x128xbf16> to vector<128x128xbf16>
    %cst_79 = arith.constant dense<0.000000e+00> : vector<432x128xf32>
    %84 = tpu.matmul %81, %83, %cst_79 {dimension_numbers = #tpu.dot_dimension_numbers<[1], [0], [0], [1], [0, 0, 1, 1], [], []>} : vector<432x128xbf16>, vector<128x128xbf16>, vector<432x128xf32> -> vector<432x128xf32>
    %c23_i32_80 = arith.constant 23 : i32
    %85 = tpu.dynamic_rotate %84 by %c23_i32_80 dim 0 : vector<432x128xf32>, i32 -> vector<432x128xf32>
    %86 = arith.addf %80, %85 : vector<432x128xf32>
    %c0_81 = arith.constant 0 : index
    %c0_82 = arith.constant 0 : index
    %87 = vector.load %arg8[%c0_81, %c0_82] : memref<432x128xbf16, #tpu.memory_space<vmem>>, vector<432x128xbf16>
    %c3_83 = arith.constant 3 : index
    %c0_84 = arith.constant 0 : index
    %c0_85 = arith.constant 0 : index
    %88 = vector.load %arg3[%c3_83, %c0_84, %c0_85] : memref<9x128x128xbf16, #tpu.memory_space<vmem>>, vector<1x128x128xbf16>
    %89 = vector.shape_cast %88 : vector<1x128x128xbf16> to vector<128x128xbf16>
    %cst_86 = arith.constant dense<0.000000e+00> : vector<432x128xf32>
    %90 = tpu.matmul %87, %89, %cst_86 {dimension_numbers = #tpu.dot_dimension_numbers<[1], [0], [0], [1], [0, 0, 1, 1], [], []>} : vector<432x128xbf16>, vector<128x128xbf16>, vector<432x128xf32> -> vector<432x128xf32>
    %c1_i32_87 = arith.constant 1 : i32
    %91 = tpu.dynamic_rotate %90 by %c1_i32_87 dim 0 : vector<432x128xf32>, i32 -> vector<432x128xf32>
    %92 = arith.addf %86, %91 : vector<432x128xf32>
    %c0_88 = arith.constant 0 : index
    %c0_89 = arith.constant 0 : index
    %93 = vector.load %arg8[%c0_88, %c0_89] : memref<432x128xbf16, #tpu.memory_space<vmem>>, vector<432x128xbf16>
    %c4_90 = arith.constant 4 : index
    %c0_91 = arith.constant 0 : index
    %c0_92 = arith.constant 0 : index
    %94 = vector.load %arg3[%c4_90, %c0_91, %c0_92] : memref<9x128x128xbf16, #tpu.memory_space<vmem>>, vector<1x128x128xbf16>
    %95 = vector.shape_cast %94 : vector<1x128x128xbf16> to vector<128x128xbf16>
    %cst_93 = arith.constant dense<0.000000e+00> : vector<432x128xf32>
    %96 = tpu.matmul %93, %95, %cst_93 {dimension_numbers = #tpu.dot_dimension_numbers<[1], [0], [0], [1], [0, 0, 1, 1], [], []>} : vector<432x128xbf16>, vector<128x128xbf16>, vector<432x128xf32> -> vector<432x128xf32>
    %97 = arith.addf %92, %96 : vector<432x128xf32>
    %c0_94 = arith.constant 0 : index
    %c0_95 = arith.constant 0 : index
    %98 = vector.load %arg8[%c0_94, %c0_95] : memref<432x128xbf16, #tpu.memory_space<vmem>>, vector<432x128xbf16>
    %c5_96 = arith.constant 5 : index
    %c0_97 = arith.constant 0 : index
    %c0_98 = arith.constant 0 : index
    %99 = vector.load %arg3[%c5_96, %c0_97, %c0_98] : memref<9x128x128xbf16, #tpu.memory_space<vmem>>, vector<1x128x128xbf16>
    %100 = vector.shape_cast %99 : vector<1x128x128xbf16> to vector<128x128xbf16>
    %cst_99 = arith.constant dense<0.000000e+00> : vector<432x128xf32>
    %101 = tpu.matmul %98, %100, %cst_99 {dimension_numbers = #tpu.dot_dimension_numbers<[1], [0], [0], [1], [0, 0, 1, 1], [], []>} : vector<432x128xbf16>, vector<128x128xbf16>, vector<432x128xf32> -> vector<432x128xf32>
    %c431_i32_100 = arith.constant 431 : i32
    %102 = tpu.dynamic_rotate %101 by %c431_i32_100 dim 0 : vector<432x128xf32>, i32 -> vector<432x128xf32>
    %103 = arith.addf %97, %102 : vector<432x128xf32>
    %c0_101 = arith.constant 0 : index
    %c0_102 = arith.constant 0 : index
    %104 = vector.load %arg8[%c0_101, %c0_102] : memref<432x128xbf16, #tpu.memory_space<vmem>>, vector<432x128xbf16>
    %c6_103 = arith.constant 6 : index
    %c0_104 = arith.constant 0 : index
    %c0_105 = arith.constant 0 : index
    %105 = vector.load %arg3[%c6_103, %c0_104, %c0_105] : memref<9x128x128xbf16, #tpu.memory_space<vmem>>, vector<1x128x128xbf16>
    %106 = vector.shape_cast %105 : vector<1x128x128xbf16> to vector<128x128xbf16>
    %cst_106 = arith.constant dense<0.000000e+00> : vector<432x128xf32>
    %107 = tpu.matmul %104, %106, %cst_106 {dimension_numbers = #tpu.dot_dimension_numbers<[1], [0], [0], [1], [0, 0, 1, 1], [], []>} : vector<432x128xbf16>, vector<128x128xbf16>, vector<432x128xf32> -> vector<432x128xf32>
    %c409_i32_107 = arith.constant 409 : i32
    %108 = tpu.dynamic_rotate %107 by %c409_i32_107 dim 0 : vector<432x128xf32>, i32 -> vector<432x128xf32>
    %109 = arith.addf %103, %108 : vector<432x128xf32>
    %c0_108 = arith.constant 0 : index
    %c0_109 = arith.constant 0 : index
    %110 = vector.load %arg8[%c0_108, %c0_109] : memref<432x128xbf16, #tpu.memory_space<vmem>>, vector<432x128xbf16>
    %c7_110 = arith.constant 7 : index
    %c0_111 = arith.constant 0 : index
    %c0_112 = arith.constant 0 : index
    %111 = vector.load %arg3[%c7_110, %c0_111, %c0_112] : memref<9x128x128xbf16, #tpu.memory_space<vmem>>, vector<1x128x128xbf16>
    %112 = vector.shape_cast %111 : vector<1x128x128xbf16> to vector<128x128xbf16>
    %cst_113 = arith.constant dense<0.000000e+00> : vector<432x128xf32>
    %113 = tpu.matmul %110, %112, %cst_113 {dimension_numbers = #tpu.dot_dimension_numbers<[1], [0], [0], [1], [0, 0, 1, 1], [], []>} : vector<432x128xbf16>, vector<128x128xbf16>, vector<432x128xf32> -> vector<432x128xf32>
    %c408_i32_114 = arith.constant 408 : i32
    %114 = tpu.dynamic_rotate %113 by %c408_i32_114 dim 0 : vector<432x128xf32>, i32 -> vector<432x128xf32>
    %115 = arith.addf %109, %114 : vector<432x128xf32>
    %c0_115 = arith.constant 0 : index
    %c0_116 = arith.constant 0 : index
    %116 = vector.load %arg8[%c0_115, %c0_116] : memref<432x128xbf16, #tpu.memory_space<vmem>>, vector<432x128xbf16>
    %c8_117 = arith.constant 8 : index
    %c0_118 = arith.constant 0 : index
    %c0_119 = arith.constant 0 : index
    %117 = vector.load %arg3[%c8_117, %c0_118, %c0_119] : memref<9x128x128xbf16, #tpu.memory_space<vmem>>, vector<1x128x128xbf16>
    %118 = vector.shape_cast %117 : vector<1x128x128xbf16> to vector<128x128xbf16>
    %cst_120 = arith.constant dense<0.000000e+00> : vector<432x128xf32>
    %119 = tpu.matmul %116, %118, %cst_120 {dimension_numbers = #tpu.dot_dimension_numbers<[1], [0], [0], [1], [0, 0, 1, 1], [], []>} : vector<432x128xbf16>, vector<128x128xbf16>, vector<432x128xf32> -> vector<432x128xf32>
    %c407_i32_121 = arith.constant 407 : i32
    %120 = tpu.dynamic_rotate %119 by %c407_i32_121 dim 0 : vector<432x128xf32>, i32 -> vector<432x128xf32>
    %121 = arith.addf %115, %120 : vector<432x128xf32>
    %c0_122 = arith.constant 0 : index
    %c0_123 = arith.constant 0 : index
    %122 = vector.load %arg5[%c0_122, %c0_123] : memref<1x128xf32, #tpu.memory_space<vmem>>, vector<1x128xf32>
    %123 = vector.broadcast %122 : vector<1x128xf32> to vector<432x128xf32>
    %124 = arith.addf %121, %123 : vector<432x128xf32>
    %c0_124 = arith.constant 0 : index
    %c0_125 = arith.constant 0 : index
    %c0_126 = arith.constant 0 : index
    %125 = vector.load %arg1[%c0_124, %c0_125, %c0_126] : memref<1x432x128xbf16, #tpu.memory_space<vmem>>, vector<1x432x128xbf16>
    %126 = vector.shape_cast %125 : vector<1x432x128xbf16> to vector<432x128xbf16>
    %127 = arith.extf %126 : vector<432x128xbf16> to vector<432x128xf32>
    %128 = arith.addf %124, %127 : vector<432x128xf32>
    %cst_127 = arith.constant 0.000000e+00 : f32
    %129 = vector.broadcast %cst_127 : f32 to vector<432x128xf32>
    %130 = arith.maximumf %128, %129 : vector<432x128xf32>
    %c0_128 = arith.constant 0 : index
    %c0_129 = arith.constant 0 : index
    %c0_130 = arith.constant 0 : index
    %131 = vector.load %arg7[%c0_128, %c0_129, %c0_130] : memref<1x432x128xf32, #tpu.memory_space<vmem>>, vector<1x432x128xf32>
    %132 = vector.shape_cast %131 : vector<1x432x128xf32> to vector<432x128xf32>
    %133 = vector.shape_cast %130 : vector<432x128xf32> to vector<1x432x128xf32>
    tpu.vector_store %arg7[%c0_128, %c0_129, %c0_130], %133 {strides = array<i32>} : memref<1x432x128xf32, #tpu.memory_space<vmem>>, vector<1x432x128xf32>,
    return
  }
  func.func @transform_0(%arg0: i32) -> (i32, i32, i32) {
    %c0_i32 = arith.constant 0 : i32
    %c0_i32_0 = arith.constant 0 : i32
    %c0_i32_1 = arith.constant 0 : i32
    return %arg0, %c0_i32, %c0_i32_0 : i32, i32, i32
  }
  func.func @transform_1(%arg0: i32) -> (i32, i32, i32) {
    %c0_i32 = arith.constant 0 : i32
    %c0_i32_0 = arith.constant 0 : i32
    %c0_i32_1 = arith.constant 0 : i32
    %c0_i32_2 = arith.constant 0 : i32
    return %c0_i32, %c0_i32_0, %c0_i32_1 : i32, i32, i32
  }
  func.func @transform_2(%arg0: i32) -> (i32, i32, i32) {
    %c0_i32 = arith.constant 0 : i32
    %c0_i32_0 = arith.constant 0 : i32
    %c0_i32_1 = arith.constant 0 : i32
    %c0_i32_2 = arith.constant 0 : i32
    return %c0_i32, %c0_i32_0, %c0_i32_1 : i32, i32, i32
  }
  func.func @transform_3(%arg0: i32) -> (i32, i32) {
    %c0_i32 = arith.constant 0 : i32
    %c0_i32_0 = arith.constant 0 : i32
    %c0_i32_1 = arith.constant 0 : i32
    return %c0_i32, %c0_i32_0 : i32, i32
  }
  func.func @transform_4(%arg0: i32) -> (i32, i32) {
    %c0_i32 = arith.constant 0 : i32
    %c0_i32_0 = arith.constant 0 : i32
    %c0_i32_1 = arith.constant 0 : i32
    return %c0_i32, %c0_i32_0 : i32, i32
  }
  func.func @transform_5(%arg0: i32) -> (i32, i32) {
    %c0_i32 = arith.constant 0 : i32
    %c0_i32_0 = arith.constant 0 : i32
    %c0_i32_1 = arith.constant 0 : i32
    return %c0_i32, %c0_i32_0 : i32, i32
  }
  func.func @transform_6(%arg0: i32) -> (i32, i32, i32) {
    %c0_i32 = arith.constant 0 : i32
    %c0_i32_0 = arith.constant 0 : i32
    %c0_i32_1 = arith.constant 0 : i32
    return %arg0, %c0_i32, %c0_i32_0 : i32, i32, i32
  }
}

</mosaic_0001>

<llo_original>
// kernel: common_block_forward.1
$region0: #{common_block_forward.1}
  #allocation0 [shape = 'u32[]', space=smem, size = 0x4, offset = 0x4, fixed_abs, tag = 'smem constant byte address 0x4 - core index']
  #allocation1 [shape = 'u32[72,128]{1,0:T(1,128)}', space=vmem, size = 0x9000, scoped, tag = 'internal scratch']
  #allocation2 [shape = 'bf16[432,128]{1,0:T(8,128)(2,1)}', space=vmem, size = 0x1b000, scoped, tag = 'scratch operand']
  %s0 = inlined_call_operand.vmem [shape: bf16[2,432,128], index: 0, kind: input, shape index: {}]
  %s1 = inlined_call_operand.vmem [shape: bf16[9,128,128], index: 1, kind: input, shape index: {}]
  %s2 = inlined_call_operand.vmem [shape: bf16[9,128,128], index: 2, kind: input, shape index: {}]
  %s3 = inlined_call_operand.vmem [shape: f32[1,128], index: 3, kind: input, shape index: {}]
  %s4 = inlined_call_operand.vmem [shape: f32[1,128], index: 4, kind: input, shape index: {}]
  %s5 = inlined_call_operand.vmem [shape: f32[432,128], index: 5, kind: input, shape index: {}]
  %s6 = inlined_call_operand.vmem [shape: f32[2,432,128], index: 6, kind: output, shape index: {}]
  %s7 = sld [smem:[#allocation0]]
  $region57: #{common_block_forward.1} parent=0
    _
  %s9 = ssub.s32 1, %s7
  %s10 = scalar_select 0, %s9, %s7
  loop: start=0, step=1, limit=4
  $region2: #{common_block_forward.1} parent=0 // loop_pre_header
    _
  $region3: #{common_block_forward.1} parent=0 // loop_header
    %s12 = sphi 0, %s16
    %p13 = scmp.ge.s32.totalorder %s12, 4
    %s22 = sphi 0, %s24
    %s25 = sphi 0, %s22
    %s26 = sphi 0, %s25
    %s42 = sphi 0, %s26
    %s46 = sphi 0, %s46
    %s48 = sphi 0, %s46
    %s49 = sphi 0, %s48
    %s63 = sphi 0, %s49
    %s67 = sphi 0, %s67
    %s69 = sphi 0, %s67
    %s70 = sphi 0, %s69
    %s84 = sphi 0, %s70
    %s88 = sphi 0, %s88
    %s90 = sphi 0, %s88
    %s91 = sphi 0, %s90
    %s105 = sphi 0, %s91
    %s109 = sphi 0, %s109
    %s111 = sphi 0, %s109
    %s112 = sphi 0, %s111
    %s126 = sphi 0, %s112
    %s130 = sphi 0, %s130
    %s132 = sphi 0, %s130
    %s133 = sphi 0, %s132
    %s147 = sphi 0, %s133
    %s153 = sphi 0, %s155
    %s156 = sphi 0, %s153
    %s157 = sphi 0, %s156
    %s173 = sphi 0, %s157
  $region4: #{common_block_forward.1} parent=0 // loop_header_branch
    %15 = sbr.rel (%p13) target = $region8
  $region5: #{common_block_forward.1} parent=0 // loop_body
    %s17 = ssub.s32 %s12, 1
    %s18 = ssub.s32 %s12, 2
    %s19 = sadd.s32 %s12, 1
    %s20 = ssub.s32 %s12, %s19
    %p21 = scmp.eq.s32.totalorder %s20, 0
    %s23 = sadd.s32 %s22, 1
    %s24 = scalar_select %p21, %s22, %s23
    %p27 = pneg %p21
    %p28 = scmp.eq.s32.totalorder %s12, 1
    %p29 = por %p27, %p28
    %p30 = scmp.ne.s32.totalorder %s22, %s25
    %p31 = scmp.eq.s32.totalorder %s12, 0
    %p32 = por %p30, %p31
    %p33 = scmp.ne.s32.totalorder %s22, %s25
    %p34 = scmp.eq.s32.totalorder %s17, 1
    %p35 = por %p33, %p34
    %p36 = scmp.ne.s32.totalorder %s25, %s26
    %p37 = scmp.eq.s32.totalorder %s17, 0
    %p38 = por %p36, %p37
    %p39 = scmp.ne.s32.totalorder %s25, %s26
    %p40 = scmp.eq.s32.totalorder %s18, 1
    %p41 = por %p39, %p40
    %p43 = scmp.ne.s32.totalorder %s26, %s42
    %p44 = scmp.eq.s32.totalorder %s18, 0
    %p45 = por %p43, %p44
    %s47 = sadd.s32 %s46, 1
    %p50 = scmp.eq.s32.totalorder %s12, 1
    %p51 = scmp.ne.s32.totalorder %s46, %s48
    %p52 = scmp.eq.s32.totalorder %s12, 0
    %p53 = por %p51, %p52
    %p54 = scmp.ne.s32.totalorder %s46, %s48
    %p55 = scmp.eq.s32.totalorder %s17, 1
    %p56 = por %p54, %p55
    %p57 = scmp.ne.s32.totalorder %s48, %s49
    %p58 = scmp.eq.s32.totalorder %s17, 0
    %p59 = por %p57, %p58
    %p60 = scmp.ne.s32.totalorder %s48, %s49
    %p61 = scmp.eq.s32.totalorder %s18, 1
    %p62 = por %p60, %p61
    %p64 = scmp.ne.s32.totalorder %s49, %s63
    %p65 = scmp.eq.s32.totalorder %s18, 0
    %p66 = por %p64, %p65
    %s68 = sadd.s32 %s67, 1
    %p71 = scmp.eq.s32.totalorder %s12, 1
    %p72 = scmp.ne.s32.totalorder %s67, %s69
    %p73 = scmp.eq.s32.totalorder %s12, 0
    %p74 = por %p72, %p73
    %p75 = scmp.ne.s32.totalorder %s67, %s69
    %p76 = scmp.eq.s32.totalorder %s17, 1
    %p77 = por %p75, %p76
    %p78 = scmp.ne.s32.totalorder %s69, %s70
    %p79 = scmp.eq.s32.totalorder %s17, 0
    %p80 = por %p78, %p79
    %p81 = scmp.ne.s32.totalorder %s69, %s70
    %p82 = scmp.eq.s32.totalorder %s18, 1
    %p83 = por %p81, %p82
    %p85 = scmp.ne.s32.totalorder %s70, %s84
    %p86 = scmp.eq.s32.totalorder %s18, 0
    %p87 = por %p85, %p86
    %s89 = sadd.s32 %s88, 1
    %p92 = scmp.eq.s32.totalorder %s12, 1
    %p93 = scmp.ne.s32.totalorder %s88, %s90
    %p94 = scmp.eq.s32.totalorder %s12, 0
    %p95 = por %p93, %p94
    %p96 = scmp.ne.s32.totalorder %s88, %s90
    %p97 = scmp.eq.s32.totalorder %s17, 1
    %p98 = por %p96, %p97
    %p99 = scmp.ne.s32.totalorder %s90, %s91
    %p100 = scmp.eq.s32.totalorder %s17, 0
    %p101 = por %p99, %p100
    %p102 = scmp.ne.s32.totalorder %s90, %s91
    %p103 = scmp.eq.s32.totalorder %s18, 1
    %p104 = por %p102, %p103
    %p106 = scmp.ne.s32.totalorder %s91, %s105
    %p107 = scmp.eq.s32.totalorder %s18, 0
    %p108 = por %p106, %p107
    %s110 = sadd.s32 %s109, 1
    %p113 = scmp.eq.s32.totalorder %s12, 1
    %p114 = scmp.ne.s32.totalorder %s109, %s111
    %p115 = scmp.eq.s32.totalorder %s12, 0
    %p116 = por %p114, %p115
    %p117 = scmp.ne.s32.totalorder %s109, %s111
    %p118 = scmp.eq.s32.totalorder %s17, 1
    %p119 = por %p117, %p118
    %p120 = scmp.ne.s32.totalorder %s111, %s112
    %p121 = scmp.eq.s32.totalorder %s17, 0
    %p122 = por %p120, %p121
    %p123 = scmp.ne.s32.totalorder %s111, %s112
    %p124 = scmp.eq.s32.totalorder %s18, 1
    %p125 = por %p123, %p124
    %p127 = scmp.ne.s32.totalorder %s112, %s126
    %p128 = scmp.eq.s32.totalorder %s18, 0
    %p129 = por %p127, %p128
    %s131 = sadd.s32 %s130, 1
    %p134 = scmp.eq.s32.totalorder %s12, 1
    %p135 = scmp.ne.s32.totalorder %s130, %s132
    %p136 = scmp.eq.s32.totalorder %s12, 0
    %p137 = por %p135, %p136
    %p138 = scmp.ne.s32.totalorder %s130, %s132
    %p139 = scmp.eq.s32.totalorder %s17, 1
    %p140 = por %p138, %p139
    %p141 = scmp.ne.s32.totalorder %s132, %s133
    %p142 = scmp.eq.s32.totalorder %s17, 0
    %p143 = por %p141, %p142
    %p144 = scmp.ne.s32.totalorder %s132, %s133
    %p145 = scmp.eq.s32.totalorder %s18, 1
    %p146 = por %p144, %p145
    %p148 = scmp.ne.s32.totalorder %s133, %s147
    %p149 = scmp.eq.s32.totalorder %s18, 0
    %p150 = por %p148, %p149
    %s151 = ssub.s32 %s12, %s19
    %p152 = scmp.eq.s32.totalorder %s151, 0
    %s154 = sadd.s32 %s153, 1
    %s155 = scalar_select %p152, %s153, %s154
    %p158 = pneg %p152
    %p159 = scmp.eq.s32.totalorder %s12, 1
    %p160 = por %p158, %p159
    %p161 = scmp.ne.s32.totalorder %s153, %s156
    %p162 = scmp.eq.s32.totalorder %s12, 0
    %p163 = por %p161, %p162
    %p164 = scmp.ne.s32.totalorder %s153, %s156
    %p165 = scmp.eq.s32.totalorder %s17, 1
    %p166 = por %p164, %p165
    %p167 = scmp.ne.s32.totalorder %s156, %s157
    %p168 = scmp.eq.s32.totalorder %s17, 0
    %p169 = por %p167, %p168
    %p170 = scmp.ne.s32.totalorder %s156, %s157
    %p171 = scmp.eq.s32.totalorder %s18, 1
    %p172 = por %p170, %p171
    %p174 = scmp.ne.s32.totalorder %s157, %s173
    %p175 = scmp.eq.s32.totalorder %s18, 0
    %p176 = por %p174, %p175
    %p177 = scmp.le.s32.totalorder 1, %s12
    %p178 = scmp.lt.s32.totalorder %s12, 3
    %p179 = pnand %p177, %p178
    %p180 = pneg %p179
    // Predicated region
    $region9: #{common_block_forward.1} parent=5 // pred_check
      _
    $region10: #{common_block_forward.1} parent=5 // pred_check_branch
      %182 = sbr.rel (%p179) target = $region12
    $region11: #{common_block_forward.1} parent=5 // pred_region
      %s183 = ssub.s32 %s12, 1
      // Predicated region
      $region13: #{common_block_forward.1} parent=11 // pred_check
        %p184 = pneg %p59
      $region14: #{common_block_forward.1} parent=11 // pred_check_branch
        %186 = sbr.rel (%p184) target = $region16
      $region15: #{common_block_forward.1} parent=11 // pred_region
        _
      $region16: #{common_block_forward.1} parent=11 // pred_fallthru
        _
      // Predicated region
      $region17: #{common_block_forward.1} parent=11 // pred_check
        %p187 = pneg %p80
      $region18: #{common_block_forward.1} parent=11 // pred_check_branch
        %189 = sbr.rel (%p187) target = $region20
      $region19: #{common_block_forward.1} parent=11 // pred_region
        _
      $region20: #{common_block_forward.1} parent=11 // pred_fallthru
        _
      // Predicated region
      $region21: #{common_block_forward.1} parent=11 // pred_check
        %p190 = pneg %p101
      $region22: #{common_block_forward.1} parent=11 // pred_check_branch
        %192 = sbr.rel (%p190) target = $region24
      $region23: #{common_block_forward.1} parent=11 // pred_region
        _
      $region24: #{common_block_forward.1} parent=11 // pred_fallthru
        _
      // Predicated region
      $region25: #{common_block_forward.1} parent=11 // pred_check
        %p193 = pneg %p122
      $region26: #{common_block_forward.1} parent=11 // pred_check_branch
        %195 = sbr.rel (%p193) target = $region28
      $region27: #{common_block_forward.1} parent=11 // pred_region
        _
      $region28: #{common_block_forward.1} parent=11 // pred_fallthru
        _
      // Predicated region
      $region29: #{common_block_forward.1} parent=11 // pred_check
        %p196 = pneg %p143
      $region30: #{common_block_forward.1} parent=11 // pred_check_branch
        %198 = sbr.rel (%p196) target = $region32
      $region31: #{common_block_forward.1} parent=11 // pred_region
        _
      $region32: #{common_block_forward.1} parent=11 // pred_fallthru
        _
    $region12: #{common_block_forward.1} parent=5 // pred_fallthru
      _
    %p199 = scmp.lt.s32.totalorder %s12, 2
    // Predicated region
    $region33: #{common_block_forward.1} parent=5 // pred_check
      %p200 = pneg %p199
    $region34: #{common_block_forward.1} parent=5 // pred_check_branch
      %202 = sbr.rel (%p200) target = $region36
    $region35: #{common_block_forward.1} parent=5 // pred_region
      // Predicated region
      $region37: #{common_block_forward.1} parent=35 // pred_check
        %p203 = pneg %p32
      $region38: #{common_block_forward.1} parent=35 // pred_check_branch
        %205 = sbr.rel (%p203) target = $region40
      $region39: #{common_block_forward.1} parent=35 // pred_region
        %p206 = scmp.lt.s32.totalorder %s12, 1
        %s207 = scalar_select %p206, %s12, 1
        %s208 = smul.addr %s207, 54
        %s209 = smul.addr %s208, 4
        %s210 = scalar_lea.vmem %s0, %s209
      $region40: #{common_block_forward.1} parent=35 // pred_fallthru
        _
    $region36: #{common_block_forward.1} parent=5 // pred_fallthru
      _
    %p211 = scmp.le.s32.totalorder 1, %s12
    %p212 = scmp.lt.s32.totalorder %s12, 3
    %p213 = pnand %p211, %p212
    %p214 = pneg %p213
    // Predicated region
    $region41: #{common_block_forward.1} parent=5 // pred_check
      _
    $region42: #{common_block_forward.1} parent=5 // pred_check_branch
      %216 = sbr.rel (%p213) target = $region44
    $region43: #{common_block_forward.1} parent=5 // pred_region
      %s217 = ssub.s32 %s12, 1
      %p218 = scmp.lt.s32.totalorder %s17, 1
      %s219 = scalar_select %p218, %s17, 1
      %s220 = smul.addr %s219, 54
      %s221 = smul.addr %s220, 4
      %s222 = scalar_lea.vmem %s0, %s221
      %p223 = pneg %p38
      %p224 = pneg %p35
      %p225 = pneg %p59
      %p226 = pneg %p56
      %p227 = pneg %p80
      %p228 = pneg %p77
      %p229 = pneg %p101
      %p230 = pneg %p98
      %p231 = pneg %p122
      %p232 = pneg %p119
      %p233 = pneg %p143
      %p234 = pneg %p140
      %p235 = pneg %p169
      %p236 = pneg %p166
      %p237 = scmp.lt.s32.totalorder %s17, 1
      %s238 = scalar_select %p237, %s17, 1
      %s239 = smul.addr %s238, 54
      %s240 = smul.addr %s239, 8
      %s241 = scalar_lea.vmem %s6, %s240
      %p242 = scmp.lt.s32.totalorder %s17, 1
      %s243 = scalar_select %p242, %s17, 1
      %s244 = smul.addr %s243, 54
      %s245 = smul.addr %s244, 4
      %s246 = scalar_lea.vmem %s0, %s245
      %p247 = scmp.lt.s32.totalorder %s17, 1
      %s248 = scalar_select %p247, %s17, 1
      %s249 = smul.addr %s248, 54
      %s250 = smul.addr %s249, 8
      %s251 = scalar_lea.vmem %s6, %s250
      %v252 = vld [vmem:[%s246] sm:$0xf]
      %v253 = vld [vmem:[%s246 + $0x4] sm:$0xf]
      %v254 = vld [vmem:[%s246 + $0x8] sm:$0xf]
      %v255 = vld [vmem:[%s246 + $0xc] sm:$0xf]
      %v256 = vld [vmem:[%s246 + $0x10] sm:$0xf]
      %v257 = vld [vmem:[%s246 + $0x14] sm:$0xf]
      %v258 = vld [vmem:[%s246 + $0x18] sm:$0xf]
      %v259 = vld [vmem:[%s246 + $0x1c] sm:$0xf]
      %v260 = vld [vmem:[%s246 + $0x20] sm:$0xf]
      %v261 = vld [vmem:[%s246 + $0x24] sm:$0xf]
      %v262 = vld [vmem:[%s246 + $0x28] sm:$0xf]
      %v263 = vld [vmem:[%s246 + $0x2c] sm:$0xf]
      %v264 = vld [vmem:[%s246 + $0x30] sm:$0xf]
      %v265 = vld [vmem:[%s246 + $0x34] sm:$0xf]
      %v266 = vld [vmem:[%s246 + $0x38] sm:$0xf]
      %v267 = vld [vmem:[%s246 + $0x3c] sm:$0xf]
      %v268 = vld [vmem:[%s246 + $0x40] sm:$0xf]
      %v269 = vld [vmem:[%s246 + $0x44] sm:$0xf]
      %v270 = vld [vmem:[%s246 + $0x48] sm:$0xf]
      %v271 = vld [vmem:[%s246 + $0x4c] sm:$0xf]
      %v272 = vld [vmem:[%s246 + $0x50] sm:$0xf]
      %v273 = vld [vmem:[%s246 + $0x54] sm:$0xf]
      %v274 = vld [vmem:[%s246 + $0x58] sm:$0xf]
      %v275 = vld [vmem:[%s246 + $0x5c] sm:$0xf]
      %v276 = vld [vmem:[%s246 + $0x60] sm:$0xf]
      %v277 = vld [vmem:[%s246 + $0x64] sm:$0xf]
      %v278 = vld [vmem:[%s246 + $0x68] sm:$0xf]
      %v279 = vld [vmem:[%s246 + $0x6c] sm:$0xf]
      %v280 = vld [vmem:[%s246 + $0x70] sm:$0xf]
      %v281 = vld [vmem:[%s246 + $0x74] sm:$0xf]
      %v282 = vld [vmem:[%s246 + $0x78] sm:$0xf]
      %v283 = vld [vmem:[%s246 + $0x7c] sm:$0xf]
      %v284 = vld [vmem:[%s246 + $0x80] sm:$0xf]
      %v285 = vld [vmem:[%s246 + $0x84] sm:$0xf]
      %v286 = vld [vmem:[%s246 + $0x88] sm:$0xf]
      %v287 = vld [vmem:[%s246 + $0x8c] sm:$0xf]
      %v288 = vld [vmem:[%s246 + $0x90] sm:$0xf]
      %v289 = vld [vmem:[%s246 + $0x94] sm:$0xf]
      %v290 = vld [vmem:[%s246 + $0x98] sm:$0xf]
      %v291 = vld [vmem:[%s246 + $0x9c] sm:$0xf]
      %v292 = vld [vmem:[%s246 + $0xa0] sm:$0xf]
      %v293 = vld [vmem:[%s246 + $0xa4] sm:$0xf]
      %v294 = vld [vmem:[%s246 + $0xa8] sm:$0xf]
      %v295 = vld [vmem:[%s246 + $0xac] sm:$0xf]
      %v296 = vld [vmem:[%s246 + $0xb0] sm:$0xf]
      %v297 = vld [vmem:[%s246 + $0xb4] sm:$0xf]
      %v298 = vld [vmem:[%s246 + $0xb8] sm:$0xf]
      %v299 = vld [vmem:[%s246 + $0xbc] sm:$0xf]
      %v300 = vld [vmem:[%s246 + $0xc0] sm:$0xf]
      %v301 = vld [vmem:[%s246 + $0xc4] sm:$0xf]
      %v302 = vld [vmem:[%s246 + $0xc8] sm:$0xf]
      %v303 = vld [vmem:[%s246 + $0xcc] sm:$0xf]
      %v304 = vld [vmem:[%s246 + $0xd0] sm:$0xf]
      %v305 = vld [vmem:[%s246 + $0xd4] sm:$0xf]
      %v306 = vld [vmem:[%s1] sm:$0xf]
      %v307 = vld [vmem:[%s1 + $0x4] sm:$0xf]
      %v308 = vld [vmem:[%s1 + $0x8] sm:$0xf]
      %v309 = vld [vmem:[%s1 + $0xc] sm:$0xf]
      %v310 = vld [vmem:[%s1 + $0x10] sm:$0xf]
      %v311 = vld [vmem:[%s1 + $0x14] sm:$0xf]
      %v312 = vld [vmem:[%s1 + $0x18] sm:$0xf]
      %v313 = vld [vmem:[%s1 + $0x1c] sm:$0xf]
      %v314 = vld [vmem:[%s1 + $0x20] sm:$0xf]
      %v315 = vld [vmem:[%s1 + $0x24] sm:$0xf]
      %v316 = vld [vmem:[%s1 + $0x28] sm:$0xf]
      %v317 = vld [vmem:[%s1 + $0x2c] sm:$0xf]
      %v318 = vld [vmem:[%s1 + $0x30] sm:$0xf]
      %v319 = vld [vmem:[%s1 + $0x34] sm:$0xf]
      %v320 = vld [vmem:[%s1 + $0x38] sm:$0xf]
      %v321 = vld [vmem:[%s1 + $0x3c] sm:$0xf]
      %v376 = vunpack.c.l.b16 %v252
      %v377 = vunpack.c.l.b16 %v253
      %v378 = vunpack.c.l.b16 %v254
      %v379 = vunpack.c.l.b16 %v255
      %v380 = vunpack.c.l.b16 %v256
      %v381 = vunpack.c.l.b16 %v257
      %v382 = vunpack.c.l.b16 %v258
      %v383 = vunpack.c.l.b16 %v259
      %v384 = vunpack.c.l.b16 %v260
      %v385 = vunpack.c.l.b16 %v261
      %v386 = vunpack.c.l.b16 %v262
      %v387 = vunpack.c.l.b16 %v263
      %v388 = vunpack.c.l.b16 %v264
      %v389 = vunpack.c.l.b16 %v265
      %v390 = vunpack.c.l.b16 %v266
      %v391 = vunpack.c.l.b16 %v267
      %v392 = vunpack.c.l.b16 %v268
      %v393 = vunpack.c.l.b16 %v269
      %v394 = vunpack.c.l.b16 %v270
      %v395 = vunpack.c.l.b16 %v271
      %v396 = vunpack.c.l.b16 %v272
      %v397 = vunpack.c.l.b16 %v273
      %v398 = vunpack.c.l.b16 %v274
      %v399 = vunpack.c.l.b16 %v275
      %v400 = vunpack.c.l.b16 %v276
      %v401 = vunpack.c.l.b16 %v277
      %v402 = vunpack.c.l.b16 %v278
      %v403 = vunpack.c.l.b16 %v279
      %v404 = vunpack.c.l.b16 %v280
      %v405 = vunpack.c.l.b16 %v281
      %v406 = vunpack.c.l.b16 %v282
      %v407 = vunpack.c.l.b16 %v283
      %v408 = vunpack.c.l.b16 %v284
      %v409 = vunpack.c.l.b16 %v285
      %v410 = vunpack.c.l.b16 %v286
      %v411 = vunpack.c.l.b16 %v287
      %v412 = vunpack.c.l.b16 %v288
      %v413 = vunpack.c.l.b16 %v289
      %v414 = vunpack.c.l.b16 %v290
      %v415 = vunpack.c.l.b16 %v291
      %v416 = vunpack.c.l.b16 %v292
      %v417 = vunpack.c.l.b16 %v293
      %v418 = vunpack.c.l.b16 %v294
      %v419 = vunpack.c.l.b16 %v295
      %v420 = vunpack.c.l.b16 %v296
      %v421 = vunpack.c.l.b16 %v297
      %v422 = vunpack.c.l.b16 %v298
      %v423 = vunpack.c.l.b16 %v299
      %v424 = vunpack.c.l.b16 %v300
      %v425 = vunpack.c.l.b16 %v301
      %v426 = vunpack.c.l.b16 %v302
      %v427 = vunpack.c.l.b16 %v303
      %v428 = vunpack.c.l.b16 %v304
      %v429 = vunpack.c.l.b16 %v305
      %v430 = vpack.c.b16 %v377, %v376
      %v431 = vpack.c.b16 %v379, %v378
      %v432 = vpack.c.b16 %v381, %v380
      %v433 = vpack.c.b16 %v383, %v382
      %v434 = vpack.c.b16 %v385, %v384
      %v435 = vpack.c.b16 %v387, %v386
      %v436 = vpack.c.b16 %v389, %v388
      %v437 = vpack.c.b16 %v391, %v390
      %v438 = vpack.c.b16 %v393, %v392
      %v439 = vpack.c.b16 %v395, %v394
      %v440 = vpack.c.b16 %v397, %v396
      %v441 = vpack.c.b16 %v399, %v398
      %v442 = vpack.c.b16 %v401, %v400
      %v443 = vpack.c.b16 %v403, %v402
      %v444 = vpack.c.b16 %v405, %v404
      %v445 = vpack.c.b16 %v407, %v406
      %v446 = vpack.c.b16 %v409, %v408
      %v447 = vpack.c.b16 %v411, %v410
      %v448 = vpack.c.b16 %v413, %v412
      %v449 = vpack.c.b16 %v415, %v414
      %v450 = vpack.c.b16 %v417, %v416
      %v451 = vpack.c.b16 %v419, %v418
      %v452 = vpack.c.b16 %v421, %v420
      %v453 = vpack.c.b16 %v423, %v422
      %v454 = vpack.c.b16 %v425, %v424
      %v455 = vpack.c.b16 %v427, %v426
      %v456 = vpack.c.b16 %v429, %v428
      %v500 = vunpack.c.l.b16 %v306
      %v501 = vunpack.c.l.b16 %v307
      %v502 = vunpack.c.l.b16 %v308
      %v503 = vunpack.c.l.b16 %v309
      %v504 = vunpack.c.l.b16 %v310
      %v505 = vunpack.c.l.b16 %v311
      %v506 = vunpack.c.l.b16 %v312
      %v507 = vunpack.c.l.b16 %v313
      %v508 = vunpack.c.l.b16 %v314
      %v509 = vunpack.c.l.b16 %v315
      %v510 = vunpack.c.l.b16 %v316
      %v511 = vunpack.c.l.b16 %v317
      %v512 = vunpack.c.l.b16 %v318
      %v513 = vunpack.c.l.b16 %v319
      %v514 = vunpack.c.l.b16 %v320
      %v515 = vunpack.c.l.b16 %v321
      %v516 = vpack.c.b16 %v501, %v500
      %v517 = vpack.c.b16 %v503, %v502
      %v518 = vpack.c.b16 %v505, %v504
      %v519 = vpack.c.b16 %v507, %v506
      %v520 = vpack.c.b16 %v509, %v508
      %v521 = vpack.c.b16 %v511, %v510
      %v522 = vpack.c.b16 %v513, %v512
      %v523 = vpack.c.b16 %v515, %v514
      %532 = vmatpush.bf16.msra.mxu0 %v523
      %533 = vmatpush.bf16.msra.mxu0 %v522
      %534 = vmatpush.bf16.msra.mxu0 %v521
      %535 = vmatpush.bf16.msra.mxu0 %v520
      %536 = vmatpush.bf16.msra.mxu0 %v519
      %537 = vmatpush.bf16.msra.mxu0 %v518
      %538 = vmatpush.bf16.msra.mxu0 %v517
      %539 = vmatpush.bf16.msra.mxu0 %v516
      %540 = vmatmul.bf16.gmra.mxu0 %v430
      %v541 = vpop.f32.mrf.mxu0
      %v542 = vadd.f32 0.0, %v541
      %v543 = vpop.f32.mrf.mxu0
      %v544 = vadd.f32 0.0, %v543
      %545 = vmatmul.bf16.gmra.mxu0 %v431
      %v546 = vpop.f32.mrf.mxu0
      %v547 = vadd.f32 0.0, %v546
      %v548 = vpop.f32.mrf.mxu0
      %v549 = vadd.f32 0.0, %v548
      %550 = vmatmul.bf16.gmra.mxu0 %v432
      %v551 = vpop.f32.mrf.mxu0
      %v552 = vadd.f32 0.0, %v551
      %v553 = vpop.f32.mrf.mxu0
      %v554 = vadd.f32 0.0, %v553
      %555 = vmatmul.bf16.gmra.mxu0 %v433
      %v556 = vpop.f32.mrf.mxu0
      %v557 = vadd.f32 0.0, %v556
      %v558 = vpop.f32.mrf.mxu0
      %v559 = vadd.f32 0.0, %v558
      %560 = vmatmul.bf16.gmra.mxu0 %v434
      %v561 = vpop.f32.mrf.mxu0
      %v562 = vadd.f32 0.0, %v561
      %v563 = vpop.f32.mrf.mxu0
      %v564 = vadd.f32 0.0, %v563
      %565 = vmatmul.bf16.gmra.mxu0 %v435
      %v566 = vpop.f32.mrf.mxu0
      %v567 = vadd.f32 0.0, %v566
      %v568 = vpop.f32.mrf.mxu0
      %v569 = vadd.f32 0.0, %v568
      %570 = vmatmul.bf16.gmra.mxu0 %v436
      %v571 = vpop.f32.mrf.mxu0
      %v572 = vadd.f32 0.0, %v571
      %v573 = vpop.f32.mrf.mxu0
      %v574 = vadd.f32 0.0, %v573
      %575 = vmatmul.bf16.gmra.mxu0 %v437
      %v576 = vpop.f32.mrf.mxu0
      %v577 = vadd.f32 0.0, %v576
      %v578 = vpop.f32.mrf.mxu0
      %v579 = vadd.f32 0.0, %v578
      %580 = vmatmul.bf16.gmra.mxu0 %v438
      %v581 = vpop.f32.mrf.mxu0
      %v582 = vadd.f32 0.0, %v581
      %v583 = vpop.f32.mrf.mxu0
      %v584 = vadd.f32 0.0, %v583
      %585 = vmatmul.bf16.gmra.mxu0 %v439
      %v586 = vpop.f32.mrf.mxu0
      %v587 = vadd.f32 0.0, %v586
      %v588 = vpop.f32.mrf.mxu0
      %v589 = vadd.f32 0.0, %v588
      %590 = vmatmul.bf16.gmra.mxu0 %v440
      %v591 = vpop.f32.mrf.mxu0
      %v592 = vadd.f32 0.0, %v591
      %v593 = vpop.f32.mrf.mxu0
      %v594 = vadd.f32 0.0, %v593
      %595 = vmatmul.bf16.gmra.mxu0 %v441
      %v596 = vpop.f32.mrf.mxu0
      %v597 = vadd.f32 0.0, %v596
      %v598 = vpop.f32.mrf.mxu0
      %v599 = vadd.f32 0.0, %v598
      %600 = vmatmul.bf16.gmra.mxu0 %v442
      %v601 = vpop.f32.mrf.mxu0
      %v602 = vadd.f32 0.0, %v601
      %v603 = vpop.f32.mrf.mxu0
      %v604 = vadd.f32 0.0, %v603
      %605 = vmatmul.bf16.gmra.mxu0 %v443
      %v606 = vpop.f32.mrf.mxu0
      %v607 = vadd.f32 0.0, %v606
      %v608 = vpop.f32.mrf.mxu0
      %v609 = vadd.f32 0.0, %v608
      %610 = vmatmul.bf16.gmra.mxu0 %v444
      %v611 = vpop.f32.mrf.mxu0
      %v612 = vadd.f32 0.0, %v611
      %v613 = vpop.f32.mrf.mxu0
      %v614 = vadd.f32 0.0, %v613
      %615 = vmatmul.bf16.gmra.mxu0 %v445
      %v616 = vpop.f32.mrf.mxu0
      %v617 = vadd.f32 0.0, %v616
      %v618 = vpop.f32.mrf.mxu0
      %v619 = vadd.f32 0.0, %v618
      %620 = vmatmul.bf16.gmra.mxu0 %v446
      %v621 = vpop.f32.mrf.mxu0
      %v622 = vadd.f32 0.0, %v621
      %v623 = vpop.f32.mrf.mxu0
      %v624 = vadd.f32 0.0, %v623
      %625 = vmatmul.bf16.gmra.mxu0 %v447
      %v626 = vpop.f32.mrf.mxu0
      %v627 = vadd.f32 0.0, %v626
      %v628 = vpop.f32.mrf.mxu0
      %v629 = vadd.f32 0.0, %v628
      %630 = vmatmul.bf16.gmra.mxu0 %v448
      %v631 = vpop.f32.mrf.mxu0
      %v632 = vadd.f32 0.0, %v631
      %v633 = vpop.f32.mrf.mxu0
      %v634 = vadd.f32 0.0, %v633
      %635 = vmatmul.bf16.gmra.mxu0 %v449
      %v636 = vpop.f32.mrf.mxu0
      %v637 = vadd.f32 0.0, %v636
      %v638 = vpop.f32.mrf.mxu0
      %v639 = vadd.f32 0.0, %v638
      %640 = vmatmul.bf16.gmra.mxu0 %v450
      %v641 = vpop.f32.mrf.mxu0
      %v642 = vadd.f32 0.0, %v641
      %v643 = vpop.f32.mrf.mxu0
      %v644 = vadd.f32 0.0, %v643
      %645 = vmatmul.bf16.gmra.mxu0 %v451
      %v646 = vpop.f32.mrf.mxu0
      %v647 = vadd.f32 0.0, %v646
      %v648 = vpop.f32.mrf.mxu0
      %v649 = vadd.f32 0.0, %v648
      %650 = vmatmul.bf16.gmra.mxu0 %v452
      %v651 = vpop.f32.mrf.mxu0
      %v652 = vadd.f32 0.0, %v651
      %v653 = vpop.f32.mrf.mxu0
      %v654 = vadd.f32 0.0, %v653
      %655 = vmatmul.bf16.gmra.mxu0 %v453
      %v656 = vpop.f32.mrf.mxu0
      %v657 = vadd.f32 0.0, %v656
      %v658 = vpop.f32.mrf.mxu0
      %v659 = vadd.f32 0.0, %v658
      %660 = vmatmul.bf16.gmra.mxu0 %v454
      %v661 = vpop.f32.mrf.mxu0
      %v662 = vadd.f32 0.0, %v661
      %v663 = vpop.f32.mrf.mxu0
      %v664 = vadd.f32 0.0, %v663
      %665 = vmatmul.bf16.gmra.mxu0 %v455
      %v666 = vpop.f32.mrf.mxu0
      %v667 = vadd.f32 0.0, %v666
      %v668 = vpop.f32.mrf.mxu0
      %v669 = vadd.f32 0.0, %v668
      %670 = vmatmul.bf16.gmra.mxu0 %v456
      %v671 = vpop.f32.mrf.mxu0
      %v672 = vadd.f32 0.0, %v671
      %v673 = vpop.f32.mrf.mxu0
      %v674 = vadd.f32 0.0, %v673
      %675 = vdwg.mxu0
      %v676 = vrot.slane %v542, 7
      %v677 = vrot.slane %v544, 7
      %v678 = vrot.slane %v547, 7
      %v679 = vrot.slane %v549, 7
      %v680 = vrot.slane %v552, 7
      %v681 = vrot.slane %v554, 7
      %v682 = vrot.slane %v557, 7
      %v683 = vrot.slane %v559, 7
      %v684 = vrot.slane %v562, 7
      %v685 = vrot.slane %v564, 7
      %v686 = vrot.slane %v567, 7
      %v687 = vrot.slane %v569, 7
      %v688 = vrot.slane %v572, 7
      %v689 = vrot.slane %v574, 7
      %v690 = vrot.slane %v577, 7
      %v691 = vrot.slane %v579, 7
      %v692 = vrot.slane %v582, 7
      %v693 = vrot.slane %v584, 7
      %v694 = vrot.slane %v587, 7
      %v695 = vrot.slane %v589, 7
      %v696 = vrot.slane %v592, 7
      %v697 = vrot.slane %v594, 7
      %v698 = vrot.slane %v597, 7
      %v699 = vrot.slane %v599, 7
      %v700 = vrot.slane %v602, 7
      %v701 = vrot.slane %v604, 7
      %v702 = vrot.slane %v607, 7
      %v703 = vrot.slane %v609, 7
      %v704 = vrot.slane %v612, 7
      %v705 = vrot.slane %v614, 7
      %v706 = vrot.slane %v617, 7
      %v707 = vrot.slane %v619, 7
      %v708 = vrot.slane %v622, 7
      %v709 = vrot.slane %v624, 7
      %v710 = vrot.slane %v627, 7
      %v711 = vrot.slane %v629, 7
      %v712 = vrot.slane %v632, 7
      %v713 = vrot.slane %v634, 7
      %v714 = vrot.slane %v637, 7
      %v715 = vrot.slane %v639, 7
      %v716 = vrot.slane %v642, 7
      %v717 = vrot.slane %v644, 7
      %v718 = vrot.slane %v647, 7
      %v719 = vrot.slane %v649, 7
      %v720 = vrot.slane %v652, 7
      %v721 = vrot.slane %v654, 7
      %v722 = vrot.slane %v657, 7
      %v723 = vrot.slane %v659, 7
      %v724 = vrot.slane %v662, 7
      %v725 = vrot.slane %v664, 7
      %v726 = vrot.slane %v667, 7
      %v727 = vrot.slane %v669, 7
      %v728 = vrot.slane %v672, 7
      %v729 = vrot.slane %v674, 7
      %v730 = vlaneseq
      %v731 = vshrl.u32 %v730, 7
      %vm732 = vcmp.lt.s32.totalorder %v731, 1
      %v733 = vsel %vm732, %v728, %v729
      %v734 = vsel %vm732, %v727, %v728
      %v735 = vsel %vm732, %v726, %v727
      %v736 = vsel %vm732, %v725, %v726
      %v737 = vsel %vm732, %v724, %v725
      %v738 = vsel %vm732, %v723, %v724
      %v739 = vsel %vm732, %v722, %v723
      %v740 = vsel %vm732, %v721, %v722
      %v741 = vsel %vm732, %v720, %v721
      %v742 = vsel %vm732, %v719, %v720
      %v743 = vsel %vm732, %v718, %v719
      %v744 = vsel %vm732, %v717, %v718
      %v745 = vsel %vm732, %v716, %v717
      %v746 = vsel %vm732, %v715, %v716
      %v747 = vsel %vm732, %v714, %v715
      %v748 = vsel %vm732, %v713, %v714
      %v749 = vsel %vm732, %v712, %v713
      %v750 = vsel %vm732, %v711, %v712
      %v751 = vsel %vm732, %v710, %v711
      %v752 = vsel %vm732, %v709, %v710
      %v753 = vsel %vm732, %v708, %v709
      %v754 = vsel %vm732, %v707, %v708
      %v755 = vsel %vm732, %v706, %v707
      %v756 = vsel %vm732, %v705, %v706
      %v757 = vsel %vm732, %v704, %v705
      %v758 = vsel %vm732, %v703, %v704
      %v759 = vsel %vm732, %v702, %v703
      %v760 = vsel %vm732, %v701, %v702
      %v761 = vsel %vm732, %v700, %v701
      %v762 = vsel %vm732, %v699, %v700
      %v763 = vsel %vm732, %v698, %v699
      %v764 = vsel %vm732, %v697, %v698
      %v765 = vsel %vm732, %v696, %v697
      %v766 = vsel %vm732, %v695, %v696
      %v767 = vsel %vm732, %v694, %v695
      %v768 = vsel %vm732, %v693, %v694
      %v769 = vsel %vm732, %v692, %v693
      %v770 = vsel %vm732, %v691, %v692
      %v771 = vsel %vm732, %v690, %v691
      %v772 = vsel %vm732, %v689, %v690
      %v773 = vsel %vm732, %v688, %v689
      %v774 = vsel %vm732, %v687, %v688
      %v775 = vsel %vm732, %v686, %v687
      %v776 = vsel %vm732, %v685, %v686
      %v777 = vsel %vm732, %v684, %v685
      %v778 = vsel %vm732, %v683, %v684
      %v779 = vsel %vm732, %v682, %v683
      %v780 = vsel %vm732, %v681, %v682
      %v781 = vsel %vm732, %v680, %v681
      %v782 = vsel %vm732, %v679, %v680
      %v783 = vsel %vm732, %v678, %v679
      %v784 = vsel %vm732, %v677, %v678
      %v785 = vsel %vm732, %v676, %v677
      %v786 = vsel %vm732, %v729, %v676
      %s787 = scalar_lea.vmem %s1, 64
      %v788 = vld [vmem:[%s787] sm:$0xf]
      %v789 = vld [vmem:[%s787 + $0x4] sm:$0xf]
      %v790 = vld [vmem:[%s787 + $0x8] sm:$0xf]
      %v791 = vld [vmem:[%s787 + $0xc] sm:$0xf]
      %v792 = vld [vmem:[%s787 + $0x10] sm:$0xf]
      %v793 = vld [vmem:[%s787 + $0x14] sm:$0xf]
      %v794 = vld [vmem:[%s787 + $0x18] sm:$0xf]
      %v795 = vld [vmem:[%s787 + $0x1c] sm:$0xf]
      %v796 = vld [vmem:[%s787 + $0x20] sm:$0xf]
      %v797 = vld [vmem:[%s787 + $0x24] sm:$0xf]
      %v798 = vld [vmem:[%s787 + $0x28] sm:$0xf]
      %v799 = vld [vmem:[%s787 + $0x2c] sm:$0xf]
      %v800 = vld [vmem:[%s787 + $0x30] sm:$0xf]
      %v801 = vld [vmem:[%s787 + $0x34] sm:$0xf]
      %v802 = vld [vmem:[%s787 + $0x38] sm:$0xf]
      %v803 = vld [vmem:[%s787 + $0x3c] sm:$0xf]
      %v820 = vunpack.c.l.b16 %v788
      %v821 = vunpack.c.l.b16 %v789
      %v822 = vunpack.c.l.b16 %v790
      %v823 = vunpack.c.l.b16 %v791
      %v824 = vunpack.c.l.b16 %v792
      %v825 = vunpack.c.l.b16 %v793
      %v826 = vunpack.c.l.b16 %v794
      %v827 = vunpack.c.l.b16 %v795
      %v828 = vunpack.c.l.b16 %v796
      %v829 = vunpack.c.l.b16 %v797
      %v830 = vunpack.c.l.b16 %v798
      %v831 = vunpack.c.l.b16 %v799
      %v832 = vunpack.c.l.b16 %v800
      %v833 = vunpack.c.l.b16 %v801
      %v834 = vunpack.c.l.b16 %v802
      %v835 = vunpack.c.l.b16 %v803
      %v836 = vpack.c.b16 %v821, %v820
      %v837 = vpack.c.b16 %v823, %v822
      %v838 = vpack.c.b16 %v825, %v824
      %v839 = vpack.c.b16 %v827, %v826
      %v840 = vpack.c.b16 %v829, %v828
      %v841 = vpack.c.b16 %v831, %v830
      %v842 = vpack.c.b16 %v833, %v832
      %v843 = vpack.c.b16 %v835, %v834
      %852 = vmatpush.bf16.msra.mxu0 %v843
      %853 = vmatpush.bf16.msra.mxu0 %v842
      %854 = vmatpush.bf16.msra.mxu0 %v841
      %855 = vmatpush.bf16.msra.mxu0 %v840
      %856 = vmatpush.bf16.msra.mxu0 %v839
      %857 = vmatpush.bf16.msra.mxu0 %v838
      %858 = vmatpush.bf16.msra.mxu0 %v837
      %859 = vmatpush.bf16.msra.mxu0 %v836
      %860 = vmatmul.bf16.gmra.mxu0 %v430
      %v861 = vpop.f32.mrf.mxu0
      %v862 = vadd.f32 0.0, %v861
      %v863 = vpop.f32.mrf.mxu0
      %v864 = vadd.f32 0.0, %v863
      %865 = vmatmul.bf16.gmra.mxu0 %v431
      %v866 = vpop.f32.mrf.mxu0
      %v867 = vadd.f32 0.0, %v866
      %v868 = vpop.f32.mrf.mxu0
      %v869 = vadd.f32 0.0, %v868
      %870 = vmatmul.bf16.gmra.mxu0 %v432
      %v871 = vpop.f32.mrf.mxu0
      %v872 = vadd.f32 0.0, %v871
      %v873 = vpop.f32.mrf.mxu0
      %v874 = vadd.f32 0.0, %v873
      %875 = vmatmul.bf16.gmra.mxu0 %v433
      %v876 = vpop.f32.mrf.mxu0
      %v877 = vadd.f32 0.0, %v876
      %v878 = vpop.f32.mrf.mxu0
      %v879 = vadd.f32 0.0, %v878
      %880 = vmatmul.bf16.gmra.mxu0 %v434
      %v881 = vpop.f32.mrf.mxu0
      %v882 = vadd.f32 0.0, %v881
      %v883 = vpop.f32.mrf.mxu0
      %v884 = vadd.f32 0.0, %v883
      %885 = vmatmul.bf16.gmra.mxu0 %v435
      %v886 = vpop.f32.mrf.mxu0
      %v887 = vadd.f32 0.0, %v886
      %v888 = vpop.f32.mrf.mxu0
      %v889 = vadd.f32 0.0, %v888
      %890 = vmatmul.bf16.gmra.mxu0 %v436
      %v891 = vpop.f32.mrf.mxu0
      %v892 = vadd.f32 0.0, %v891
      %v893 = vpop.f32.mrf.mxu0
      %v894 = vadd.f32 0.0, %v893
      %895 = vmatmul.bf16.gmra.mxu0 %v437
      %v896 = vpop.f32.mrf.mxu0
      %v897 = vadd.f32 0.0, %v896
      %v898 = vpop.f32.mrf.mxu0
      %v899 = vadd.f32 0.0, %v898
      %900 = vmatmul.bf16.gmra.mxu0 %v438
      %v901 = vpop.f32.mrf.mxu0
      %v902 = vadd.f32 0.0, %v901
      %v903 = vpop.f32.mrf.mxu0
      %v904 = vadd.f32 0.0, %v903
      %905 = vmatmul.bf16.gmra.mxu0 %v439
      %v906 = vpop.f32.mrf.mxu0
      %v907 = vadd.f32 0.0, %v906
      %v908 = vpop.f32.mrf.mxu0
      %v909 = vadd.f32 0.0, %v908
      %910 = vmatmul.bf16.gmra.mxu0 %v440
      %v911 = vpop.f32.mrf.mxu0
      %v912 = vadd.f32 0.0, %v911
      %v913 = vpop.f32.mrf.mxu0
      %v914 = vadd.f32 0.0, %v913
      %915 = vmatmul.bf16.gmra.mxu0 %v441
      %v916 = vpop.f32.mrf.mxu0
      %v917 = vadd.f32 0.0, %v916
      %v918 = vpop.f32.mrf.mxu0
      %v919 = vadd.f32 0.0, %v918
      %920 = vmatmul.bf16.gmra.mxu0 %v442
      %v921 = vpop.f32.mrf.mxu0
      %v922 = vadd.f32 0.0, %v921
      %v923 = vpop.f32.mrf.mxu0
      %v924 = vadd.f32 0.0, %v923
      %925 = vmatmul.bf16.gmra.mxu0 %v443
      %v926 = vpop.f32.mrf.mxu0
      %v927 = vadd.f32 0.0, %v926
      %v928 = vpop.f32.mrf.mxu0
      %v929 = vadd.f32 0.0, %v928
      %930 = vmatmul.bf16.gmra.mxu0 %v444
      %v931 = vpop.f32.mrf.mxu0
      %v932 = vadd.f32 0.0, %v931
      %v933 = vpop.f32.mrf.mxu0
      %v934 = vadd.f32 0.0, %v933
      %935 = vmatmul.bf16.gmra.mxu0 %v445
      %v936 = vpop.f32.mrf.mxu0
      %v937 = vadd.f32 0.0, %v936
      %v938 = vpop.f32.mrf.mxu0
      %v939 = vadd.f32 0.0, %v938
      %940 = vmatmul.bf16.gmra.mxu0 %v446
      %v941 = vpop.f32.mrf.mxu0
      %v942 = vadd.f32 0.0, %v941
      %v943 = vpop.f32.mrf.mxu0
      %v944 = vadd.f32 0.0, %v943
      %945 = vmatmul.bf16.gmra.mxu0 %v447
      %v946 = vpop.f32.mrf.mxu0
      %v947 = vadd.f32 0.0, %v946
      %v948 = vpop.f32.mrf.mxu0
      %v949 = vadd.f32 0.0, %v948
      %950 = vmatmul.bf16.gmra.mxu0 %v448
      %v951 = vpop.f32.mrf.mxu0
      %v952 = vadd.f32 0.0, %v951
      %v953 = vpop.f32.mrf.mxu0
      %v954 = vadd.f32 0.0, %v953
      %955 = vmatmul.bf16.gmra.mxu0 %v449
      %v956 = vpop.f32.mrf.mxu0
      %v957 = vadd.f32 0.0, %v956
      %v958 = vpop.f32.mrf.mxu0
      %v959 = vadd.f32 0.0, %v958
      %960 = vmatmul.bf16.gmra.mxu0 %v450
      %v961 = vpop.f32.mrf.mxu0
      %v962 = vadd.f32 0.0, %v961
      %v963 = vpop.f32.mrf.mxu0
      %v964 = vadd.f32 0.0, %v963
      %965 = vmatmul.bf16.gmra.mxu0 %v451
      %v966 = vpop.f32.mrf.mxu0
      %v967 = vadd.f32 0.0, %v966
      %v968 = vpop.f32.mrf.mxu0
      %v969 = vadd.f32 0.0, %v968
      %970 = vmatmul.bf16.gmra.mxu0 %v452
      %v971 = vpop.f32.mrf.mxu0
      %v972 = vadd.f32 0.0, %v971
      %v973 = vpop.f32.mrf.mxu0
      %v974 = vadd.f32 0.0, %v973
      %975 = vmatmul.bf16.gmra.mxu0 %v453
      %v976 = vpop.f32.mrf.mxu0
      %v977 = vadd.f32 0.0, %v976
      %v978 = vpop.f32.mrf.mxu0
      %v979 = vadd.f32 0.0, %v978
      %980 = vmatmul.bf16.gmra.mxu0 %v454
      %v981 = vpop.f32.mrf.mxu0
      %v982 = vadd.f32 0.0, %v981
      %v983 = vpop.f32.mrf.mxu0
      %v984 = vadd.f32 0.0, %v983
      %985 = vmatmul.bf16.gmra.mxu0 %v455
      %v986 = vpop.f32.mrf.mxu0
      %v987 = vadd.f32 0.0, %v986
      %v988 = vpop.f32.mrf.mxu0
      %v989 = vadd.f32 0.0, %v988
      %990 = vmatmul.bf16.gmra.mxu0 %v456
      %v991 = vpop.f32.mrf.mxu0
      %v992 = vadd.f32 0.0, %v991
      %v993 = vpop.f32.mrf.mxu0
      %v994 = vadd.f32 0.0, %v993
      %995 = vdwg.mxu0
      %v996 = vadd.f32 %v735, %v989
      %v997 = vadd.f32 %v734, %v992
      %v998 = vadd.f32 %v733, %v994
      %v999 = vadd.f32 %v786, %v862
      %v1000 = vadd.f32 %v785, %v864
      %v1001 = vadd.f32 %v784, %v867
      %v1002 = vadd.f32 %v783, %v869
      %v1003 = vadd.f32 %v782, %v872
      %v1004 = vadd.f32 %v781, %v874
      %v1005 = vadd.f32 %v780, %v877
      %v1006 = vadd.f32 %v779, %v879
      %v1007 = vadd.f32 %v778, %v882
      %v1008 = vadd.f32 %v777, %v884
      %v1009 = vadd.f32 %v776, %v887
      %v1010 = vadd.f32 %v775, %v889
      %v1011 = vadd.f32 %v774, %v892
      %v1012 = vadd.f32 %v773, %v894
      %v1013 = vadd.f32 %v772, %v897
      %v1014 = vadd.f32 %v771, %v899
      %v1015 = vadd.f32 %v770, %v902
      %v1016 = vadd.f32 %v769, %v904
      %v1017 = vadd.f32 %v768, %v907
      %v1018 = vadd.f32 %v767, %v909
      %v1019 = vadd.f32 %v766, %v912
      %v1020 = vadd.f32 %v765, %v914
      %v1021 = vadd.f32 %v764, %v917
      %v1022 = vadd.f32 %v763, %v919
      %v1023 = vadd.f32 %v762, %v922
      %v1024 = vadd.f32 %v761, %v924
      %v1025 = vadd.f32 %v760, %v927
      %v1026 = vadd.f32 %v759, %v929
      %v1027 = vadd.f32 %v758, %v932
      %v1028 = vadd.f32 %v757, %v934
      %v1029 = vadd.f32 %v756, %v937
      %v1030 = vadd.f32 %v755, %v939
      %v1031 = vadd.f32 %v754, %v942
      %v1032 = vadd.f32 %v753, %v944
      %v1033 = vadd.f32 %v752, %v947
      %v1034 = vadd.f32 %v751, %v949
      %v1035 = vadd.f32 %v750, %v952
      %v1036 = vadd.f32 %v749, %v954
      %v1037 = vadd.f32 %v748, %v957
      %v1038 = vadd.f32 %v747, %v959
      %v1039 = vadd.f32 %v746, %v962
      %v1040 = vadd.f32 %v745, %v964
      %v1041 = vadd.f32 %v744, %v967
      %v1042 = vadd.f32 %v743, %v969
      %v1043 = vadd.f32 %v742, %v972
      %v1044 = vadd.f32 %v741, %v974
      %v1045 = vadd.f32 %v740, %v977
      %v1046 = vadd.f32 %v739, %v979
      %v1047 = vadd.f32 %v738, %v982
      %v1048 = vadd.f32 %v737, %v984
      %v1049 = vadd.f32 %v736, %v987
      %s1050 = scalar_lea.vmem %s1, 128
      %v1051 = vld [vmem:[%s1050] sm:$0xf]
      %v1052 = vld [vmem:[%s1050 + $0x4] sm:$0xf]
      %v1053 = vld [vmem:[%s1050 + $0x8] sm:$0xf]
      %v1054 = vld [vmem:[%s1050 + $0xc] sm:$0xf]
      %v1055 = vld [vmem:[%s1050 + $0x10] sm:$0xf]
      %v1056 = vld [vmem:[%s1050 + $0x14] sm:$0xf]
      %v1057 = vld [vmem:[%s1050 + $0x18] sm:$0xf]
      %v1058 = vld [vmem:[%s1050 + $0x1c] sm:$0xf]
      %v1059 = vld [vmem:[%s1050 + $0x20] sm:$0xf]
      %v1060 = vld [vmem:[%s1050 + $0x24] sm:$0xf]
      %v1061 = vld [vmem:[%s1050 + $0x28] sm:$0xf]
      %v1062 = vld [vmem:[%s1050 + $0x2c] sm:$0xf]
      %v1063 = vld [vmem:[%s1050 + $0x30] sm:$0xf]
      %v1064 = vld [vmem:[%s1050 + $0x34] sm:$0xf]
      %v1065 = vld [vmem:[%s1050 + $0x38] sm:$0xf]
      %v1066 = vld [vmem:[%s1050 + $0x3c] sm:$0xf]
      %v1083 = vunpack.c.l.b16 %v1051
      %v1084 = vunpack.c.l.b16 %v1052
      %v1085 = vunpack.c.l.b16 %v1053
      %v1086 = vunpack.c.l.b16 %v1054
      %v1087 = vunpack.c.l.b16 %v1055
      %v1088 = vunpack.c.l.b16 %v1056
      %v1089 = vunpack.c.l.b16 %v1057
      %v1090 = vunpack.c.l.b16 %v1058
      %v1091 = vunpack.c.l.b16 %v1059
      %v1092 = vunpack.c.l.b16 %v1060
      %v1093 = vunpack.c.l.b16 %v1061
      %v1094 = vunpack.c.l.b16 %v1062
      %v1095 = vunpack.c.l.b16 %v1063
      %v1096 = vunpack.c.l.b16 %v1064
      %v1097 = vunpack.c.l.b16 %v1065
      %v1098 = vunpack.c.l.b16 %v1066
      %v1099 = vpack.c.b16 %v1084, %v1083
      %v1100 = vpack.c.b16 %v1086, %v1085
      %v1101 = vpack.c.b16 %v1088, %v1087
      %v1102 = vpack.c.b16 %v1090, %v1089
      %v1103 = vpack.c.b16 %v1092, %v1091
      %v1104 = vpack.c.b16 %v1094, %v1093
      %v1105 = vpack.c.b16 %v1096, %v1095
      %v1106 = vpack.c.b16 %v1098, %v1097
      %1115 = vmatpush.bf16.msra.mxu0 %v1106
      %1116 = vmatpush.bf16.msra.mxu0 %v1105
      %1117 = vmatpush.bf16.msra.mxu0 %v1104
      %1118 = vmatpush.bf16.msra.mxu0 %v1103
      %1119 = vmatpush.bf16.msra.mxu0 %v1102
      %1120 = vmatpush.bf16.msra.mxu0 %v1101
      %1121 = vmatpush.bf16.msra.mxu0 %v1100
      %1122 = vmatpush.bf16.msra.mxu0 %v1099
      %1123 = vmatmul.bf16.gmra.mxu0 %v430
      %v1124 = vpop.f32.mrf.mxu0
      %v1125 = vadd.f32 0.0, %v1124
      %v1126 = vpop.f32.mrf.mxu0
      %v1127 = vadd.f32 0.0, %v1126
      %1128 = vmatmul.bf16.gmra.mxu0 %v431
      %v1129 = vpop.f32.mrf.mxu0
      %v1130 = vadd.f32 0.0, %v1129
      %v1131 = vpop.f32.mrf.mxu0
      %v1132 = vadd.f32 0.0, %v1131
      %1133 = vmatmul.bf16.gmra.mxu0 %v432
      %v1134 = vpop.f32.mrf.mxu0
      %v1135 = vadd.f32 0.0, %v1134
      %v1136 = vpop.f32.mrf.mxu0
      %v1137 = vadd.f32 0.0, %v1136
      %1138 = vmatmul.bf16.gmra.mxu0 %v433
      %v1139 = vpop.f32.mrf.mxu0
      %v1140 = vadd.f32 0.0, %v1139
      %v1141 = vpop.f32.mrf.mxu0
      %v1142 = vadd.f32 0.0, %v1141
      %1143 = vmatmul.bf16.gmra.mxu0 %v434
      %v1144 = vpop.f32.mrf.mxu0
      %v1145 = vadd.f32 0.0, %v1144
      %v1146 = vpop.f32.mrf.mxu0
      %v1147 = vadd.f32 0.0, %v1146
      %1148 = vmatmul.bf16.gmra.mxu0 %v435
      %v1149 = vpop.f32.mrf.mxu0
      %v1150 = vadd.f32 0.0, %v1149
      %v1151 = vpop.f32.mrf.mxu0
      %v1152 = vadd.f32 0.0, %v1151
      %1153 = vmatmul.bf16.gmra.mxu0 %v436
      %v1154 = vpop.f32.mrf.mxu0
      %v1155 = vadd.f32 0.0, %v1154
      %v1156 = vpop.f32.mrf.mxu0
      %v1157 = vadd.f32 0.0, %v1156
      %1158 = vmatmul.bf16.gmra.mxu0 %v437
      %v1159 = vpop.f32.mrf.mxu0
      %v1160 = vadd.f32 0.0, %v1159
      %v1161 = vpop.f32.mrf.mxu0
      %v1162 = vadd.f32 0.0, %v1161
      %1163 = vmatmul.bf16.gmra.mxu0 %v438
      %v1164 = vpop.f32.mrf.mxu0
      %v1165 = vadd.f32 0.0, %v1164
      %v1166 = vpop.f32.mrf.mxu0
      %v1167 = vadd.f32 0.0, %v1166
      %1168 = vmatmul.bf16.gmra.mxu0 %v439
      %v1169 = vpop.f32.mrf.mxu0
      %v1170 = vadd.f32 0.0, %v1169
      %v1171 = vpop.f32.mrf.mxu0
      %v1172 = vadd.f32 0.0, %v1171
      %1173 = vmatmul.bf16.gmra.mxu0 %v440
      %v1174 = vpop.f32.mrf.mxu0
      %v1175 = vadd.f32 0.0, %v1174
      %v1176 = vpop.f32.mrf.mxu0
      %v1177 = vadd.f32 0.0, %v1176
      %1178 = vmatmul.bf16.gmra.mxu0 %v441
      %v1179 = vpop.f32.mrf.mxu0
      %v1180 = vadd.f32 0.0, %v1179
      %v1181 = vpop.f32.mrf.mxu0
      %v1182 = vadd.f32 0.0, %v1181
      %1183 = vmatmul.bf16.gmra.mxu0 %v442
      %v1184 = vpop.f32.mrf.mxu0
      %v1185 = vadd.f32 0.0, %v1184
      %v1186 = vpop.f32.mrf.mxu0
      %v1187 = vadd.f32 0.0, %v1186
      %1188 = vmatmul.bf16.gmra.mxu0 %v443
      %v1189 = vpop.f32.mrf.mxu0
      %v1190 = vadd.f32 0.0, %v1189
      %v1191 = vpop.f32.mrf.mxu0
      %v1192 = vadd.f32 0.0, %v1191
      %1193 = vmatmul.bf16.gmra.mxu0 %v444
      %v1194 = vpop.f32.mrf.mxu0
      %v1195 = vadd.f32 0.0, %v1194
      %v1196 = vpop.f32.mrf.mxu0
      %v1197 = vadd.f32 0.0, %v1196
      %1198 = vmatmul.bf16.gmra.mxu0 %v445
      %v1199 = vpop.f32.mrf.mxu0
      %v1200 = vadd.f32 0.0, %v1199
      %v1201 = vpop.f32.mrf.mxu0
      %v1202 = vadd.f32 0.0, %v1201
      %1203 = vmatmul.bf16.gmra.mxu0 %v446
      %v1204 = vpop.f32.mrf.mxu0
      %v1205 = vadd.f32 0.0, %v1204
      %v1206 = vpop.f32.mrf.mxu0
      %v1207 = vadd.f32 0.0, %v1206
      %1208 = vmatmul.bf16.gmra.mxu0 %v447
      %v1209 = vpop.f32.mrf.mxu0
      %v1210 = vadd.f32 0.0, %v1209
      %v1211 = vpop.f32.mrf.mxu0
      %v1212 = vadd.f32 0.0, %v1211
      %1213 = vmatmul.bf16.gmra.mxu0 %v448
      %v1214 = vpop.f32.mrf.mxu0
      %v1215 = vadd.f32 0.0, %v1214
      %v1216 = vpop.f32.mrf.mxu0
      %v1217 = vadd.f32 0.0, %v1216
      %1218 = vmatmul.bf16.gmra.mxu0 %v449
      %v1219 = vpop.f32.mrf.mxu0
      %v1220 = vadd.f32 0.0, %v1219
      %v1221 = vpop.f32.mrf.mxu0
      %v1222 = vadd.f32 0.0, %v1221
      %1223 = vmatmul.bf16.gmra.mxu0 %v450
      %v1224 = vpop.f32.mrf.mxu0
      %v1225 = vadd.f32 0.0, %v1224
      %v1226 = vpop.f32.mrf.mxu0
      %v1227 = vadd.f32 0.0, %v1226
      %1228 = vmatmul.bf16.gmra.mxu0 %v451
      %v1229 = vpop.f32.mrf.mxu0
      %v1230 = vadd.f32 0.0, %v1229
      %v1231 = vpop.f32.mrf.mxu0
      %v1232 = vadd.f32 0.0, %v1231
      %1233 = vmatmul.bf16.gmra.mxu0 %v452
      %v1234 = vpop.f32.mrf.mxu0
      %v1235 = vadd.f32 0.0, %v1234
      %v1236 = vpop.f32.mrf.mxu0
      %v1237 = vadd.f32 0.0, %v1236
      %1238 = vmatmul.bf16.gmra.mxu0 %v453
      %v1239 = vpop.f32.mrf.mxu0
      %v1240 = vadd.f32 0.0, %v1239
      %v1241 = vpop.f32.mrf.mxu0
      %v1242 = vadd.f32 0.0, %v1241
      %1243 = vmatmul.bf16.gmra.mxu0 %v454
      %v1244 = vpop.f32.mrf.mxu0
      %v1245 = vadd.f32 0.0, %v1244
      %v1246 = vpop.f32.mrf.mxu0
      %v1247 = vadd.f32 0.0, %v1246
      %1248 = vmatmul.bf16.gmra.mxu0 %v455
      %v1249 = vpop.f32.mrf.mxu0
      %v1250 = vadd.f32 0.0, %v1249
      %v1251 = vpop.f32.mrf.mxu0
      %v1252 = vadd.f32 0.0, %v1251
      %1253 = vmatmul.bf16.gmra.mxu0 %v456
      %v1254 = vpop.f32.mrf.mxu0
      %v1255 = vadd.f32 0.0, %v1254
      %v1256 = vpop.f32.mrf.mxu0
      %v1257 = vadd.f32 0.0, %v1256
      %1258 = vdwg.mxu0
      %v1259 = vrot.slane %v1125, 1
      %v1260 = vrot.slane %v1127, 1
      %v1261 = vrot.slane %v1130, 1
      %v1262 = vrot.slane %v1132, 1
      %v1263 = vrot.slane %v1135, 1
      %v1264 = vrot.slane %v1137, 1
      %v1265 = vrot.slane %v1140, 1
      %v1266 = vrot.slane %v1142, 1
      %v1267 = vrot.slane %v1145, 1
      %v1268 = vrot.slane %v1147, 1
      %v1269 = vrot.slane %v1150, 1
      %v1270 = vrot.slane %v1152, 1
      %v1271 = vrot.slane %v1155, 1
      %v1272 = vrot.slane %v1157, 1
      %v1273 = vrot.slane %v1160, 1
      %v1274 = vrot.slane %v1162, 1
      %v1275 = vrot.slane %v1165, 1
      %v1276 = vrot.slane %v1167, 1
      %v1277 = vrot.slane %v1170, 1
      %v1278 = vrot.slane %v1172, 1
      %v1279 = vrot.slane %v1175, 1
      %v1280 = vrot.slane %v1177, 1
      %v1281 = vrot.slane %v1180, 1
      %v1282 = vrot.slane %v1182, 1
      %v1283 = vrot.slane %v1185, 1
      %v1284 = vrot.slane %v1187, 1
      %v1285 = vrot.slane %v1190, 1
      %v1286 = vrot.slane %v1192, 1
      %v1287 = vrot.slane %v1195, 1
      %v1288 = vrot.slane %v1197, 1
      %v1289 = vrot.slane %v1200, 1
      %v1290 = vrot.slane %v1202, 1
      %v1291 = vrot.slane %v1205, 1
      %v1292 = vrot.slane %v1207, 1
      %v1293 = vrot.slane %v1210, 1
      %v1294 = vrot.slane %v1212, 1
      %v1295 = vrot.slane %v1215, 1
      %v1296 = vrot.slane %v1217, 1
      %v1297 = vrot.slane %v1220, 1
      %v1298 = vrot.slane %v1222, 1
      %v1299 = vrot.slane %v1225, 1
      %v1300 = vrot.slane %v1227, 1
      %v1301 = vrot.slane %v1230, 1
      %v1302 = vrot.slane %v1232, 1
      %v1303 = vrot.slane %v1235, 1
      %v1304 = vrot.slane %v1237, 1
      %v1305 = vrot.slane %v1240, 1
      %v1306 = vrot.slane %v1242, 1
      %v1307 = vrot.slane %v1245, 1
      %v1308 = vrot.slane %v1247, 1
      %v1309 = vrot.slane %v1250, 1
      %v1310 = vrot.slane %v1252, 1
      %v1311 = vrot.slane %v1255, 1
      %v1312 = vrot.slane %v1257, 1
      %vm1313 = vcmp.lt.s32.totalorder %v731, 7
      %v1314 = vsel %vm1313, %v1311, %v1312
      %v1315 = vsel %vm1313, %v1310, %v1311
      %v1316 = vsel %vm1313, %v1309, %v1310
      %v1317 = vsel %vm1313, %v1308, %v1309
      %v1318 = vsel %vm1313, %v1307, %v1308
      %v1319 = vsel %vm1313, %v1306, %v1307
      %v1320 = vsel %vm1313, %v1305, %v1306
      %v1321 = vsel %vm1313, %v1304, %v1305
      %v1322 = vsel %vm1313, %v1303, %v1304
      %v1323 = vsel %vm1313, %v1302, %v1303
      %v1324 = vsel %vm1313, %v1301, %v1302
      %v1325 = vsel %vm1313, %v1300, %v1301
      %v1326 = vsel %vm1313, %v1299, %v1300
      %v1327 = vsel %vm1313, %v1298, %v1299
      %v1328 = vsel %vm1313, %v1297, %v1298
      %v1329 = vsel %vm1313, %v1296, %v1297
      %v1330 = vsel %vm1313, %v1295, %v1296
      %v1331 = vsel %vm1313, %v1294, %v1295
      %v1332 = vsel %vm1313, %v1293, %v1294
      %v1333 = vsel %vm1313, %v1292, %v1293
      %v1334 = vsel %vm1313, %v1291, %v1292
      %v1335 = vsel %vm1313, %v1290, %v1291
      %v1336 = vsel %vm1313, %v1289, %v1290
      %v1337 = vsel %vm1313, %v1288, %v1289
      %v1338 = vsel %vm1313, %v1287, %v1288
      %v1339 = vsel %vm1313, %v1286, %v1287
      %v1340 = vsel %vm1313, %v1285, %v1286
      %v1341 = vsel %vm1313, %v1284, %v1285
      %v1342 = vsel %vm1313, %v1283, %v1284
      %v1343 = vsel %vm1313, %v1282, %v1283
      %v1344 = vsel %vm1313, %v1281, %v1282
      %v1345 = vsel %vm1313, %v1280, %v1281
      %v1346 = vsel %vm1313, %v1279, %v1280
      %v1347 = vsel %vm1313, %v1278, %v1279
      %v1348 = vsel %vm1313, %v1277, %v1278
      %v1349 = vsel %vm1313, %v1276, %v1277
      %v1350 = vsel %vm1313, %v1275, %v1276
      %v1351 = vsel %vm1313, %v1274, %v1275
      %v1352 = vsel %vm1313, %v1273, %v1274
      %v1353 = vsel %vm1313, %v1272, %v1273
      %v1354 = vsel %vm1313, %v1271, %v1272
      %v1355 = vsel %vm1313, %v1270, %v1271
      %v1356 = vsel %vm1313, %v1269, %v1270
      %v1357 = vsel %vm1313, %v1268, %v1269
      %v1358 = vsel %vm1313, %v1267, %v1268
      %v1359 = vsel %vm1313, %v1266, %v1267
      %v1360 = vsel %vm1313, %v1265, %v1266
      %v1361 = vsel %vm1313, %v1264, %v1265
      %v1362 = vsel %vm1313, %v1263, %v1264
      %v1363 = vsel %vm1313, %v1262, %v1263
      %v1364 = vsel %vm1313, %v1261, %v1262
      %v1365 = vsel %vm1313, %v1260, %v1261
      %v1366 = vsel %vm1313, %v1259, %v1260
      %v1367 = vsel %vm1313, %v1312, %v1259
      %v1368 = vadd.f32 %v996, %v1315
      %v1369 = vadd.f32 %v997, %v1314
      %v1370 = vadd.f32 %v998, %v1367
      %v1371 = vadd.f32 %v999, %v1366
      %v1372 = vadd.f32 %v1000, %v1365
      %v1373 = vadd.f32 %v1001, %v1364
      %v1374 = vadd.f32 %v1002, %v1363
      %v1375 = vadd.f32 %v1003, %v1362
      %v1376 = vadd.f32 %v1004, %v1361
      %v1377 = vadd.f32 %v1005, %v1360
      %v1378 = vadd.f32 %v1006, %v1359
      %v1379 = vadd.f32 %v1007, %v1358
      %v1380 = vadd.f32 %v1008, %v1357
      %v1381 = vadd.f32 %v1009, %v1356
      %v1382 = vadd.f32 %v1010, %v1355
      %v1383 = vadd.f32 %v1011, %v1354
      %v1384 = vadd.f32 %v1012, %v1353
      %v1385 = vadd.f32 %v1013, %v1352
      %v1386 = vadd.f32 %v1014, %v1351
      %v1387 = vadd.f32 %v1015, %v1350
      %v1388 = vadd.f32 %v1016, %v1349
      %v1389 = vadd.f32 %v1017, %v1348
      %v1390 = vadd.f32 %v1018, %v1347
      %v1391 = vadd.f32 %v1019, %v1346
      %v1392 = vadd.f32 %v1020, %v1345
      %v1393 = vadd.f32 %v1021, %v1344
      %v1394 = vadd.f32 %v1022, %v1343
      %v1395 = vadd.f32 %v1023, %v1342
      %v1396 = vadd.f32 %v1024, %v1341
      %v1397 = vadd.f32 %v1025, %v1340
      %v1398 = vadd.f32 %v1026, %v1339
      %v1399 = vadd.f32 %v1027, %v1338
      %v1400 = vadd.f32 %v1028, %v1337
      %v1401 = vadd.f32 %v1029, %v1336
      %v1402 = vadd.f32 %v1030, %v1335
      %v1403 = vadd.f32 %v1031, %v1334
      %v1404 = vadd.f32 %v1032, %v1333
      %v1405 = vadd.f32 %v1033, %v1332
      %v1406 = vadd.f32 %v1034, %v1331
      %v1407 = vadd.f32 %v1035, %v1330
      %v1408 = vadd.f32 %v1036, %v1329
      %v1409 = vadd.f32 %v1037, %v1328
      %v1410 = vadd.f32 %v1038, %v1327
      %v1411 = vadd.f32 %v1039, %v1326
      %v1412 = vadd.f32 %v1040, %v1325
      %v1413 = vadd.f32 %v1041, %v1324
      %v1414 = vadd.f32 %v1042, %v1323
      %v1415 = vadd.f32 %v1043, %v1322
      %v1416 = vadd.f32 %v1044, %v1321
      %v1417 = vadd.f32 %v1045, %v1320
      %v1418 = vadd.f32 %v1046, %v1319
      %v1419 = vadd.f32 %v1047, %v1318
      %v1420 = vadd.f32 %v1048, %v1317
      %v1421 = vadd.f32 %v1049, %v1316
      %s1422 = scalar_lea.vmem %s1, 192
      %v1423 = vld [vmem:[%s1422] sm:$0xf]
      %v1424 = vld [vmem:[%s1422 + $0x4] sm:$0xf]
      %v1425 = vld [vmem:[%s1422 + $0x8] sm:$0xf]
      %v1426 = vld [vmem:[%s1422 + $0xc] sm:$0xf]
      %v1427 = vld [vmem:[%s1422 + $0x10] sm:$0xf]
      %v1428 = vld [vmem:[%s1422 + $0x14] sm:$0xf]
      %v1429 = vld [vmem:[%s1422 + $0x18] sm:$0xf]
      %v1430 = vld [vmem:[%s1422 + $0x1c] sm:$0xf]
      %v1431 = vld [vmem:[%s1422 + $0x20] sm:$0xf]
      %v1432 = vld [vmem:[%s1422 + $0x24] sm:$0xf]
      %v1433 = vld [vmem:[%s1422 + $0x28] sm:$0xf]
      %v1434 = vld [vmem:[%s1422 + $0x2c] sm:$0xf]
      %v1435 = vld [vmem:[%s1422 + $0x30] sm:$0xf]
      %v1436 = vld [vmem:[%s1422 + $0x34] sm:$0xf]
      %v1437 = vld [vmem:[%s1422 + $0x38] sm:$0xf]
      %v1438 = vld [vmem:[%s1422 + $0x3c] sm:$0xf]
      %v1455 = vunpack.c.l.b16 %v1423
      %v1456 = vunpack.c.l.b16 %v1424
      %v1457 = vunpack.c.l.b16 %v1425
      %v1458 = vunpack.c.l.b16 %v1426
      %v1459 = vunpack.c.l.b16 %v1427
      %v1460 = vunpack.c.l.b16 %v1428
      %v1461 = vunpack.c.l.b16 %v1429
      %v1462 = vunpack.c.l.b16 %v1430
      %v1463 = vunpack.c.l.b16 %v1431
      %v1464 = vunpack.c.l.b16 %v1432
      %v1465 = vunpack.c.l.b16 %v1433
      %v1466 = vunpack.c.l.b16 %v1434
      %v1467 = vunpack.c.l.b16 %v1435
      %v1468 = vunpack.c.l.b16 %v1436
      %v1469 = vunpack.c.l.b16 %v1437
      %v1470 = vunpack.c.l.b16 %v1438
      %v1471 = vpack.c.b16 %v1456, %v1455
      %v1472 = vpack.c.b16 %v1458, %v1457
      %v1473 = vpack.c.b16 %v1460, %v1459
      %v1474 = vpack.c.b16 %v1462, %v1461
      %v1475 = vpack.c.b16 %v1464, %v1463
      %v1476 = vpack.c.b16 %v1466, %v1465
      %v1477 = vpack.c.b16 %v1468, %v1467
      %v1478 = vpack.c.b16 %v1470, %v1469
      %1487 = vmatpush.bf16.msra.mxu0 %v1478
      %1488 = vmatpush.bf16.msra.mxu0 %v1477
      %1489 = vmatpush.bf16.msra.mxu0 %v1476
      %1490 = vmatpush.bf16.msra.mxu0 %v1475
      %1491 = vmatpush.bf16.msra.mxu0 %v1474
      %1492 = vmatpush.bf16.msra.mxu0 %v1473
      %1493 = vmatpush.bf16.msra.mxu0 %v1472
      %1494 = vmatpush.bf16.msra.mxu0 %v1471
      %1495 = vmatmul.bf16.gmra.mxu0 %v430
      %v1496 = vpop.f32.mrf.mxu0
      %v1497 = vadd.f32 0.0, %v1496
      %v1498 = vpop.f32.mrf.mxu0
      %v1499 = vadd.f32 0.0, %v1498
      %1500 = vmatmul.bf16.gmra.mxu0 %v431
      %v1501 = vpop.f32.mrf.mxu0
      %v1502 = vadd.f32 0.0, %v1501
      %v1503 = vpop.f32.mrf.mxu0
      %v1504 = vadd.f32 0.0, %v1503
      %1505 = vmatmul.bf16.gmra.mxu0 %v432
      %v1506 = vpop.f32.mrf.mxu0
      %v1507 = vadd.f32 0.0, %v1506
      %v1508 = vpop.f32.mrf.mxu0
      %v1509 = vadd.f32 0.0, %v1508
      %1510 = vmatmul.bf16.gmra.mxu0 %v433
      %v1511 = vpop.f32.mrf.mxu0
      %v1512 = vadd.f32 0.0, %v1511
      %v1513 = vpop.f32.mrf.mxu0
      %v1514 = vadd.f32 0.0, %v1513
      %1515 = vmatmul.bf16.gmra.mxu0 %v434
      %v1516 = vpop.f32.mrf.mxu0
      %v1517 = vadd.f32 0.0, %v1516
      %v1518 = vpop.f32.mrf.mxu0
      %v1519 = vadd.f32 0.0, %v1518
      %1520 = vmatmul.bf16.gmra.mxu0 %v435
      %v1521 = vpop.f32.mrf.mxu0
      %v1522 = vadd.f32 0.0, %v1521
      %v1523 = vpop.f32.mrf.mxu0
      %v1524 = vadd.f32 0.0, %v1523
      %1525 = vmatmul.bf16.gmra.mxu0 %v436
      %v1526 = vpop.f32.mrf.mxu0
      %v1527 = vadd.f32 0.0, %v1526
      %v1528 = vpop.f32.mrf.mxu0
      %v1529 = vadd.f32 0.0, %v1528
      %1530 = vmatmul.bf16.gmra.mxu0 %v437
      %v1531 = vpop.f32.mrf.mxu0
      %v1532 = vadd.f32 0.0, %v1531
      %v1533 = vpop.f32.mrf.mxu0
      %v1534 = vadd.f32 0.0, %v1533
      %1535 = vmatmul.bf16.gmra.mxu0 %v438
      %v1536 = vpop.f32.mrf.mxu0
      %v1537 = vadd.f32 0.0, %v1536
      %v1538 = vpop.f32.mrf.mxu0
      %v1539 = vadd.f32 0.0, %v1538
      %1540 = vmatmul.bf16.gmra.mxu0 %v439
      %v1541 = vpop.f32.mrf.mxu0
      %v1542 = vadd.f32 0.0, %v1541
      %v1543 = vpop.f32.mrf.mxu0
      %v1544 = vadd.f32 0.0, %v1543
      %1545 = vmatmul.bf16.gmra.mxu0 %v440
      %v1546 = vpop.f32.mrf.mxu0
      %v1547 = vadd.f32 0.0, %v1546
      %v1548 = vpop.f32.mrf.mxu0
      %v1549 = vadd.f32 0.0, %v1548
      %1550 = vmatmul.bf16.gmra.mxu0 %v441
      %v1551 = vpop.f32.mrf.mxu0
      %v1552 = vadd.f32 0.0, %v1551
      %v1553 = vpop.f32.mrf.mxu0
      %v1554 = vadd.f32 0.0, %v1553
      %1555 = vmatmul.bf16.gmra.mxu0 %v442
      %v1556 = vpop.f32.mrf.mxu0
      %v1557 = vadd.f32 0.0, %v1556
      %v1558 = vpop.f32.mrf.mxu0
      %v1559 = vadd.f32 0.0, %v1558
      %1560 = vmatmul.bf16.gmra.mxu0 %v443
      %v1561 = vpop.f32.mrf.mxu0
      %v1562 = vadd.f32 0.0, %v1561
      %v1563 = vpop.f32.mrf.mxu0
      %v1564 = vadd.f32 0.0, %v1563
      %1565 = vmatmul.bf16.gmra.mxu0 %v444
      %v1566 = vpop.f32.mrf.mxu0
      %v1567 = vadd.f32 0.0, %v1566
      %v1568 = vpop.f32.mrf.mxu0
      %v1569 = vadd.f32 0.0, %v1568
      %1570 = vmatmul.bf16.gmra.mxu0 %v445
      %v1571 = vpop.f32.mrf.mxu0
      %v1572 = vadd.f32 0.0, %v1571
      %v1573 = vpop.f32.mrf.mxu0
      %v1574 = vadd.f32 0.0, %v1573
      %1575 = vmatmul.bf16.gmra.mxu0 %v446
      %v1576 = vpop.f32.mrf.mxu0
      %v1577 = vadd.f32 0.0, %v1576
      %v1578 = vpop.f32.mrf.mxu0
      %v1579 = vadd.f32 0.0, %v1578
      %1580 = vmatmul.bf16.gmra.mxu0 %v447
      %v1581 = vpop.f32.mrf.mxu0
      %v1582 = vadd.f32 0.0, %v1581
      %v1583 = vpop.f32.mrf.mxu0
      %v1584 = vadd.f32 0.0, %v1583
      %1585 = vmatmul.bf16.gmra.mxu0 %v448
      %v1586 = vpop.f32.mrf.mxu0
      %v1587 = vadd.f32 0.0, %v1586
      %v1588 = vpop.f32.mrf.mxu0
      %v1589 = vadd.f32 0.0, %v1588
      %1590 = vmatmul.bf16.gmra.mxu0 %v449
      %v1591 = vpop.f32.mrf.mxu0
      %v1592 = vadd.f32 0.0, %v1591
      %v1593 = vpop.f32.mrf.mxu0
      %v1594 = vadd.f32 0.0, %v1593
      %1595 = vmatmul.bf16.gmra.mxu0 %v450
      %v1596 = vpop.f32.mrf.mxu0
      %v1597 = vadd.f32 0.0, %v1596
      %v1598 = vpop.f32.mrf.mxu0
      %v1599 = vadd.f32 0.0, %v1598
      %1600 = vmatmul.bf16.gmra.mxu0 %v451
      %v1601 = vpop.f32.mrf.mxu0
      %v1602 = vadd.f32 0.0, %v1601
      %v1603 = vpop.f32.mrf.mxu0
      %v1604 = vadd.f32 0.0, %v1603
      %1605 = vmatmul.bf16.gmra.mxu0 %v452
      %v1606 = vpop.f32.mrf.mxu0
      %v1607 = vadd.f32 0.0, %v1606
      %v1608 = vpop.f32.mrf.mxu0
      %v1609 = vadd.f32 0.0, %v1608
      %1610 = vmatmul.bf16.gmra.mxu0 %v453
      %v1611 = vpop.f32.mrf.mxu0
      %v1612 = vadd.f32 0.0, %v1611
      %v1613 = vpop.f32.mrf.mxu0
      %v1614 = vadd.f32 0.0, %v1613
      %1615 = vmatmul.bf16.gmra.mxu0 %v454
      %v1616 = vpop.f32.mrf.mxu0
      %v1617 = vadd.f32 0.0, %v1616
      %v1618 = vpop.f32.mrf.mxu0
      %v1619 = vadd.f32 0.0, %v1618
      %1620 = vmatmul.bf16.gmra.mxu0 %v455
      %v1621 = vpop.f32.mrf.mxu0
      %v1622 = vadd.f32 0.0, %v1621
      %v1623 = vpop.f32.mrf.mxu0
      %v1624 = vadd.f32 0.0, %v1623
      %1625 = vmatmul.bf16.gmra.mxu0 %v456
      %v1626 = vpop.f32.mrf.mxu0
      %v1627 = vadd.f32 0.0, %v1626
      %v1628 = vpop.f32.mrf.mxu0
      %v1629 = vadd.f32 0.0, %v1628
      %1630 = vdwg.mxu0
      %v1631 = vrot.slane %v1497, 7
      %v1632 = vrot.slane %v1499, 7
      %v1633 = vrot.slane %v1502, 7
      %v1634 = vrot.slane %v1504, 7
      %v1635 = vrot.slane %v1507, 7
      %v1636 = vrot.slane %v1509, 7
      %v1637 = vrot.slane %v1512, 7
      %v1638 = vrot.slane %v1514, 7
      %v1639 = vrot.slane %v1517, 7
      %v1640 = vrot.slane %v1519, 7
      %v1641 = vrot.slane %v1522, 7
      %v1642 = vrot.slane %v1524, 7
      %v1643 = vrot.slane %v1527, 7
      %v1644 = vrot.slane %v1529, 7
      %v1645 = vrot.slane %v1532, 7
      %v1646 = vrot.slane %v1534, 7
      %v1647 = vrot.slane %v1537, 7
      %v1648 = vrot.slane %v1539, 7
      %v1649 = vrot.slane %v1542, 7
      %v1650 = vrot.slane %v1544, 7
      %v1651 = vrot.slane %v1547, 7
      %v1652 = vrot.slane %v1549, 7
      %v1653 = vrot.slane %v1552, 7
      %v1654 = vrot.slane %v1554, 7
      %v1655 = vrot.slane %v1557, 7
      %v1656 = vrot.slane %v1559, 7
      %v1657 = vrot.slane %v1562, 7
      %v1658 = vrot.slane %v1564, 7
      %v1659 = vrot.slane %v1567, 7
      %v1660 = vrot.slane %v1569, 7
      %v1661 = vrot.slane %v1572, 7
      %v1662 = vrot.slane %v1574, 7
      %v1663 = vrot.slane %v1577, 7
      %v1664 = vrot.slane %v1579, 7
      %v1665 = vrot.slane %v1582, 7
      %v1666 = vrot.slane %v1584, 7
      %v1667 = vrot.slane %v1587, 7
      %v1668 = vrot.slane %v1589, 7
      %v1669 = vrot.slane %v1592, 7
      %v1670 = vrot.slane %v1594, 7
      %v1671 = vrot.slane %v1597, 7
      %v1672 = vrot.slane %v1599, 7
      %v1673 = vrot.slane %v1602, 7
      %v1674 = vrot.slane %v1604, 7
      %v1675 = vrot.slane %v1607, 7
      %v1676 = vrot.slane %v1609, 7
      %v1677 = vrot.slane %v1612, 7
      %v1678 = vrot.slane %v1614, 7
      %v1679 = vrot.slane %v1617, 7
      %v1680 = vrot.slane %v1619, 7
      %v1681 = vrot.slane %v1622, 7
      %v1682 = vrot.slane %v1624, 7
      %v1683 = vrot.slane %v1627, 7
      %v1684 = vrot.slane %v1629, 7
      %v1685 = vsel %vm732, %v1683, %v1684
      %v1686 = vsel %vm732, %v1682, %v1683
      %v1687 = vsel %vm732, %v1681, %v1682
      %v1688 = vsel %vm732, %v1680, %v1681
      %v1689 = vsel %vm732, %v1679, %v1680
      %v1690 = vsel %vm732, %v1678, %v1679
      %v1691 = vsel %vm732, %v1677, %v1678
      %v1692 = vsel %vm732, %v1676, %v1677
      %v1693 = vsel %vm732, %v1675, %v1676
      %v1694 = vsel %vm732, %v1674, %v1675
      %v1695 = vsel %vm732, %v1673, %v1674
      %v1696 = vsel %vm732, %v1672, %v1673
      %v1697 = vsel %vm732, %v1671, %v1672
      %v1698 = vsel %vm732, %v1670, %v1671
      %v1699 = vsel %vm732, %v1669, %v1670
      %v1700 = vsel %vm732, %v1668, %v1669
      %v1701 = vsel %vm732, %v1667, %v1668
      %v1702 = vsel %vm732, %v1666, %v1667
      %v1703 = vsel %vm732, %v1665, %v1666
      %v1704 = vsel %vm732, %v1664, %v1665
      %v1705 = vsel %vm732, %v1663, %v1664
      %v1706 = vsel %vm732, %v1662, %v1663
      %v1707 = vsel %vm732, %v1661, %v1662
      %v1708 = vsel %vm732, %v1660, %v1661
      %v1709 = vsel %vm732, %v1659, %v1660
      %v1710 = vsel %vm732, %v1658, %v1659
      %v1711 = vsel %vm732, %v1657, %v1658
      %v1712 = vsel %vm732, %v1656, %v1657
      %v1713 = vsel %vm732, %v1655, %v1656
      %v1714 = vsel %vm732, %v1654, %v1655
      %v1715 = vsel %vm732, %v1653, %v1654
      %v1716 = vsel %vm732, %v1652, %v1653
      %v1717 = vsel %vm732, %v1651, %v1652
      %v1718 = vsel %vm732, %v1650, %v1651
      %v1719 = vsel %vm732, %v1649, %v1650
      %v1720 = vsel %vm732, %v1648, %v1649
      %v1721 = vsel %vm732, %v1647, %v1648
      %v1722 = vsel %vm732, %v1646, %v1647
      %v1723 = vsel %vm732, %v1645, %v1646
      %v1724 = vsel %vm732, %v1644, %v1645
      %v1725 = vsel %vm732, %v1643, %v1644
      %v1726 = vsel %vm732, %v1642, %v1643
      %v1727 = vsel %vm732, %v1641, %v1642
      %v1728 = vsel %vm732, %v1640, %v1641
      %v1729 = vsel %vm732, %v1639, %v1640
      %v1730 = vsel %vm732, %v1638, %v1639
      %v1731 = vsel %vm732, %v1637, %v1638
      %v1732 = vsel %vm732, %v1636, %v1637
      %v1733 = vsel %vm732, %v1635, %v1636
      %v1734 = vsel %vm732, %v1634, %v1635
      %v1735 = vsel %vm732, %v1633, %v1634
      %v1736 = vsel %vm732, %v1632, %v1633
      %v1737 = vsel %vm732, %v1631, %v1632
      %v1738 = vsel %vm732, %v1684, %v1631
      %v1739 = vadd.f32 %v1368, %v1738
      %v1740 = vadd.f32 %v1369, %v1737
      %v1741 = vadd.f32 %v1370, %v1736
      %v1742 = vadd.f32 %v1371, %v1735
      %v1743 = vadd.f32 %v1372, %v1734
      %v1744 = vadd.f32 %v1373, %v1733
      %v1745 = vadd.f32 %v1374, %v1732
      %v1746 = vadd.f32 %v1375, %v1731
      %v1747 = vadd.f32 %v1376, %v1730
      %v1748 = vadd.f32 %v1377, %v1729
      %v1749 = vadd.f32 %v1378, %v1728
      %v1750 = vadd.f32 %v1379, %v1727
      %v1751 = vadd.f32 %v1380, %v1726
      %v1752 = vadd.f32 %v1381, %v1725
      %v1753 = vadd.f32 %v1382, %v1724
      %v1754 = vadd.f32 %v1383, %v1723
      %v1755 = vadd.f32 %v1384, %v1722
      %v1756 = vadd.f32 %v1385, %v1721
      %v1757 = vadd.f32 %v1386, %v1720
      %v1758 = vadd.f32 %v1387, %v1719
      %v1759 = vadd.f32 %v1388, %v1718
      %v1760 = vadd.f32 %v1389, %v1717
      %v1761 = vadd.f32 %v1390, %v1716
      %v1762 = vadd.f32 %v1391, %v1715
      %v1763 = vadd.f32 %v1392, %v1714
      %v1764 = vadd.f32 %v1393, %v1713
      %v1765 = vadd.f32 %v1394, %v1712
      %v1766 = vadd.f32 %v1395, %v1711
      %v1767 = vadd.f32 %v1396, %v1710
      %v1768 = vadd.f32 %v1397, %v1709
      %v1769 = vadd.f32 %v1398, %v1708
      %v1770 = vadd.f32 %v1399, %v1707
      %v1771 = vadd.f32 %v1400, %v1706
      %v1772 = vadd.f32 %v1401, %v1705
      %v1773 = vadd.f32 %v1402, %v1704
      %v1774 = vadd.f32 %v1403, %v1703
      %v1775 = vadd.f32 %v1404, %v1702
      %v1776 = vadd.f32 %v1405, %v1701
      %v1777 = vadd.f32 %v1406, %v1700
      %v1778 = vadd.f32 %v1407, %v1699
      %v1779 = vadd.f32 %v1408, %v1698
      %v1780 = vadd.f32 %v1409, %v1697
      %v1781 = vadd.f32 %v1410, %v1696
      %v1782 = vadd.f32 %v1411, %v1695
      %v1783 = vadd.f32 %v1412, %v1694
      %v1784 = vadd.f32 %v1413, %v1693
      %v1785 = vadd.f32 %v1414, %v1692
      %v1786 = vadd.f32 %v1415, %v1691
      %v1787 = vadd.f32 %v1416, %v1690
      %v1788 = vadd.f32 %v1417, %v1689
      %v1789 = vadd.f32 %v1418, %v1688
      %v1790 = vadd.f32 %v1419, %v1687
      %v1791 = vadd.f32 %v1420, %v1686
      %v1792 = vadd.f32 %v1421, %v1685
      %s1793 = scalar_lea.vmem %s1, 256
      %v1794 = vld [vmem:[%s1793] sm:$0xf]
      %v1795 = vld [vmem:[%s1793 + $0x4] sm:$0xf]
      %v1796 = vld [vmem:[%s1793 + $0x8] sm:$0xf]
      %v1797 = vld [vmem:[%s1793 + $0xc] sm:$0xf]
      %v1798 = vld [vmem:[%s1793 + $0x10] sm:$0xf]
      %v1799 = vld [vmem:[%s1793 + $0x14] sm:$0xf]
      %v1800 = vld [vmem:[%s1793 + $0x18] sm:$0xf]
      %v1801 = vld [vmem:[%s1793 + $0x1c] sm:$0xf]
      %v1802 = vld [vmem:[%s1793 + $0x20] sm:$0xf]
      %v1803 = vld [vmem:[%s1793 + $0x24] sm:$0xf]
      %v1804 = vld [vmem:[%s1793 + $0x28] sm:$0xf]
      %v1805 = vld [vmem:[%s1793 + $0x2c] sm:$0xf]
      %v1806 = vld [vmem:[%s1793 + $0x30] sm:$0xf]
      %v1807 = vld [vmem:[%s1793 + $0x34] sm:$0xf]
      %v1808 = vld [vmem:[%s1793 + $0x38] sm:$0xf]
      %v1809 = vld [vmem:[%s1793 + $0x3c] sm:$0xf]
      %v1826 = vunpack.c.l.b16 %v1794
      %v1827 = vunpack.c.l.b16 %v1795
      %v1828 = vunpack.c.l.b16 %v1796
      %v1829 = vunpack.c.l.b16 %v1797
      %v1830 = vunpack.c.l.b16 %v1798
      %v1831 = vunpack.c.l.b16 %v1799
      %v1832 = vunpack.c.l.b16 %v1800
      %v1833 = vunpack.c.l.b16 %v1801
      %v1834 = vunpack.c.l.b16 %v1802
      %v1835 = vunpack.c.l.b16 %v1803
      %v1836 = vunpack.c.l.b16 %v1804
      %v1837 = vunpack.c.l.b16 %v1805
      %v1838 = vunpack.c.l.b16 %v1806
      %v1839 = vunpack.c.l.b16 %v1807
      %v1840 = vunpack.c.l.b16 %v1808
      %v1841 = vunpack.c.l.b16 %v1809
      %v1842 = vpack.c.b16 %v1827, %v1826
      %v1843 = vpack.c.b16 %v1829, %v1828
      %v1844 = vpack.c.b16 %v1831, %v1830
      %v1845 = vpack.c.b16 %v1833, %v1832
      %v1846 = vpack.c.b16 %v1835, %v1834
      %v1847 = vpack.c.b16 %v1837, %v1836
      %v1848 = vpack.c.b16 %v1839, %v1838
      %v1849 = vpack.c.b16 %v1841, %v1840
      %1858 = vmatpush.bf16.msra.mxu0 %v1849
      %1859 = vmatpush.bf16.msra.mxu0 %v1848
      %1860 = vmatpush.bf16.msra.mxu0 %v1847
      %1861 = vmatpush.bf16.msra.mxu0 %v1846
      %1862 = vmatpush.bf16.msra.mxu0 %v1845
      %1863 = vmatpush.bf16.msra.mxu0 %v1844
      %1864 = vmatpush.bf16.msra.mxu0 %v1843
      %1865 = vmatpush.bf16.msra.mxu0 %v1842
      %1866 = vmatmul.bf16.gmra.mxu0 %v430
      %v1867 = vpop.f32.mrf.mxu0
      %v1868 = vadd.f32 0.0, %v1867
      %v1869 = vpop.f32.mrf.mxu0
      %v1870 = vadd.f32 0.0, %v1869
      %1871 = vmatmul.bf16.gmra.mxu0 %v431
      %v1872 = vpop.f32.mrf.mxu0
      %v1873 = vadd.f32 0.0, %v1872
      %v1874 = vpop.f32.mrf.mxu0
      %v1875 = vadd.f32 0.0, %v1874
      %1876 = vmatmul.bf16.gmra.mxu0 %v432
      %v1877 = vpop.f32.mrf.mxu0
      %v1878 = vadd.f32 0.0, %v1877
      %v1879 = vpop.f32.mrf.mxu0
      %v1880 = vadd.f32 0.0, %v1879
      %1881 = vmatmul.bf16.gmra.mxu0 %v433
      %v1882 = vpop.f32.mrf.mxu0
      %v1883 = vadd.f32 0.0, %v1882
      %v1884 = vpop.f32.mrf.mxu0
      %v1885 = vadd.f32 0.0, %v1884
      %1886 = vmatmul.bf16.gmra.mxu0 %v434
      %v1887 = vpop.f32.mrf.mxu0
      %v1888 = vadd.f32 0.0, %v1887
      %v1889 = vpop.f32.mrf.mxu0
      %v1890 = vadd.f32 0.0, %v1889
      %1891 = vmatmul.bf16.gmra.mxu0 %v435
      %v1892 = vpop.f32.mrf.mxu0
      %v1893 = vadd.f32 0.0, %v1892
      %v1894 = vpop.f32.mrf.mxu0
      %v1895 = vadd.f32 0.0, %v1894
      %1896 = vmatmul.bf16.gmra.mxu0 %v436
      %v1897 = vpop.f32.mrf.mxu0
      %v1898 = vadd.f32 0.0, %v1897
      %v1899 = vpop.f32.mrf.mxu0
      %v1900 = vadd.f32 0.0, %v1899
      %1901 = vmatmul.bf16.gmra.mxu0 %v437
      %v1902 = vpop.f32.mrf.mxu0
      %v1903 = vadd.f32 0.0, %v1902
      %v1904 = vpop.f32.mrf.mxu0
      %v1905 = vadd.f32 0.0, %v1904
      %1906 = vmatmul.bf16.gmra.mxu0 %v438
      %v1907 = vpop.f32.mrf.mxu0
      %v1908 = vadd.f32 0.0, %v1907
      %v1909 = vpop.f32.mrf.mxu0
      %v1910 = vadd.f32 0.0, %v1909
      %1911 = vmatmul.bf16.gmra.mxu0 %v439
      %v1912 = vpop.f32.mrf.mxu0
      %v1913 = vadd.f32 0.0, %v1912
      %v1914 = vpop.f32.mrf.mxu0
      %v1915 = vadd.f32 0.0, %v1914
      %1916 = vmatmul.bf16.gmra.mxu0 %v440
      %v1917 = vpop.f32.mrf.mxu0
      %v1918 = vadd.f32 0.0, %v1917
      %v1919 = vpop.f32.mrf.mxu0
      %v1920 = vadd.f32 0.0, %v1919
      %1921 = vmatmul.bf16.gmra.mxu0 %v441
      %v1922 = vpop.f32.mrf.mxu0
      %v1923 = vadd.f32 0.0, %v1922
      %v1924 = vpop.f32.mrf.mxu0
      %v1925 = vadd.f32 0.0, %v1924
      %1926 = vmatmul.bf16.gmra.mxu0 %v442
      %v1927 = vpop.f32.mrf.mxu0
      %v1928 = vadd.f32 0.0, %v1927
      %v1929 = vpop.f32.mrf.mxu0
      %v1930 = vadd.f32 0.0, %v1929
      %1931 = vmatmul.bf16.gmra.mxu0 %v443
      %v1932 = vpop.f32.mrf.mxu0
      %v1933 = vadd.f32 0.0, %v1932
      %v1934 = vpop.f32.mrf.mxu0
      %v1935 = vadd.f32 0.0, %v1934
      %1936 = vmatmul.bf16.gmra.mxu0 %v444
      %v1937 = vpop.f32.mrf.mxu0
      %v1938 = vadd.f32 0.0, %v1937
      %v1939 = vpop.f32.mrf.mxu0
      %v1940 = vadd.f32 0.0, %v1939
      %1941 = vmatmul.bf16.gmra.mxu0 %v445
      %v1942 = vpop.f32.mrf.mxu0
      %v1943 = vadd.f32 0.0, %v1942
      %v1944 = vpop.f32.mrf.mxu0
      %v1945 = vadd.f32 0.0, %v1944
      %1946 = vmatmul.bf16.gmra.mxu0 %v446
      %v1947 = vpop.f32.mrf.mxu0
      %v1948 = vadd.f32 0.0, %v1947
      %v1949 = vpop.f32.mrf.mxu0
      %v1950 = vadd.f32 0.0, %v1949
      %1951 = vmatmul.bf16.gmra.mxu0 %v447
      %v1952 = vpop.f32.mrf.mxu0
      %v1953 = vadd.f32 0.0, %v1952
      %v1954 = vpop.f32.mrf.mxu0
      %v1955 = vadd.f32 0.0, %v1954
      %1956 = vmatmul.bf16.gmra.mxu0 %v448
      %v1957 = vpop.f32.mrf.mxu0
      %v1958 = vadd.f32 0.0, %v1957
      %v1959 = vpop.f32.mrf.mxu0
      %v1960 = vadd.f32 0.0, %v1959
      %1961 = vmatmul.bf16.gmra.mxu0 %v449
      %v1962 = vpop.f32.mrf.mxu0
      %v1963 = vadd.f32 0.0, %v1962
      %v1964 = vpop.f32.mrf.mxu0
      %v1965 = vadd.f32 0.0, %v1964
      %1966 = vmatmul.bf16.gmra.mxu0 %v450
      %v1967 = vpop.f32.mrf.mxu0
      %v1968 = vadd.f32 0.0, %v1967
      %v1969 = vpop.f32.mrf.mxu0
      %v1970 = vadd.f32 0.0, %v1969
      %1971 = vmatmul.bf16.gmra.mxu0 %v451
      %v1972 = vpop.f32.mrf.mxu0
      %v1973 = vadd.f32 0.0, %v1972
      %v1974 = vpop.f32.mrf.mxu0
      %v1975 = vadd.f32 0.0, %v1974
      %1976 = vmatmul.bf16.gmra.mxu0 %v452
      %v1977 = vpop.f32.mrf.mxu0
      %v1978 = vadd.f32 0.0, %v1977
      %v1979 = vpop.f32.mrf.mxu0
      %v1980 = vadd.f32 0.0, %v1979
      %1981 = vmatmul.bf16.gmra.mxu0 %v453
      %v1982 = vpop.f32.mrf.mxu0
      %v1983 = vadd.f32 0.0, %v1982
      %v1984 = vpop.f32.mrf.mxu0
      %v1985 = vadd.f32 0.0, %v1984
      %1986 = vmatmul.bf16.gmra.mxu0 %v454
      %v1987 = vpop.f32.mrf.mxu0
      %v1988 = vadd.f32 0.0, %v1987
      %v1989 = vpop.f32.mrf.mxu0
      %v1990 = vadd.f32 0.0, %v1989
      %1991 = vmatmul.bf16.gmra.mxu0 %v455
      %v1992 = vpop.f32.mrf.mxu0
      %v1993 = vadd.f32 0.0, %v1992
      %v1994 = vpop.f32.mrf.mxu0
      %v1995 = vadd.f32 0.0, %v1994
      %1996 = vmatmul.bf16.gmra.mxu0 %v456
      %v1997 = vpop.f32.mrf.mxu0
      %v1998 = vadd.f32 0.0, %v1997
      %v1999 = vpop.f32.mrf.mxu0
      %v2000 = vadd.f32 0.0, %v1999
      %2001 = vdwg.mxu0
      %v2002 = vadd.f32 %v1739, %v1868
      %v2003 = vadd.f32 %v1740, %v1870
      %v2004 = vadd.f32 %v1741, %v1873
      %v2005 = vadd.f32 %v1742, %v1875
      %v2006 = vadd.f32 %v1743, %v1878
      %v2007 = vadd.f32 %v1744, %v1880
      %v2008 = vadd.f32 %v1745, %v1883
      %v2009 = vadd.f32 %v1746, %v1885
      %v2010 = vadd.f32 %v1747, %v1888
      %v2011 = vadd.f32 %v1748, %v1890
      %v2012 = vadd.f32 %v1749, %v1893
      %v2013 = vadd.f32 %v1750, %v1895
      %v2014 = vadd.f32 %v1751, %v1898
      %v2015 = vadd.f32 %v1752, %v1900
      %v2016 = vadd.f32 %v1753, %v1903
      %v2017 = vadd.f32 %v1754, %v1905
      %v2018 = vadd.f32 %v1755, %v1908
      %v2019 = vadd.f32 %v1756, %v1910
      %v2020 = vadd.f32 %v1757, %v1913
      %v2021 = vadd.f32 %v1758, %v1915
      %v2022 = vadd.f32 %v1759, %v1918
      %v2023 = vadd.f32 %v1760, %v1920
      %v2024 = vadd.f32 %v1761, %v1923
      %v2025 = vadd.f32 %v1762, %v1925
      %v2026 = vadd.f32 %v1763, %v1928
      %v2027 = vadd.f32 %v1764, %v1930
      %v2028 = vadd.f32 %v1765, %v1933
      %v2029 = vadd.f32 %v1766, %v1935
      %v2030 = vadd.f32 %v1767, %v1938
      %v2031 = vadd.f32 %v1768, %v1940
      %v2032 = vadd.f32 %v1769, %v1943
      %v2033 = vadd.f32 %v1770, %v1945
      %v2034 = vadd.f32 %v1771, %v1948
      %v2035 = vadd.f32 %v1772, %v1950
      %v2036 = vadd.f32 %v1773, %v1953
      %v2037 = vadd.f32 %v1774, %v1955
      %v2038 = vadd.f32 %v1775, %v1958
      %v2039 = vadd.f32 %v1776, %v1960
      %v2040 = vadd.f32 %v1777, %v1963
      %v2041 = vadd.f32 %v1778, %v1965
      %v2042 = vadd.f32 %v1779, %v1968
      %v2043 = vadd.f32 %v1780, %v1970
      %v2044 = vadd.f32 %v1781, %v1973
      %v2045 = vadd.f32 %v1782, %v1975
      %v2046 = vadd.f32 %v1783, %v1978
      %v2047 = vadd.f32 %v1784, %v1980
      %v2048 = vadd.f32 %v1785, %v1983
      %v2049 = vadd.f32 %v1786, %v1985
      %v2050 = vadd.f32 %v1787, %v1988
      %v2051 = vadd.f32 %v1788, %v1990
      %v2052 = vadd.f32 %v1789, %v1993
      %v2053 = vadd.f32 %v1790, %v1995
      %v2054 = vadd.f32 %v1791, %v1998
      %v2055 = vadd.f32 %v1792, %v2000
      %s2056 = scalar_lea.vmem %s1, 320
      %v2057 = vld [vmem:[%s2056] sm:$0xf]
      %v2058 = vld [vmem:[%s2056 + $0x4] sm:$0xf]
      %v2059 = vld [vmem:[%s2056 + $0x8] sm:$0xf]
      %v2060 = vld [vmem:[%s2056 + $0xc] sm:$0xf]
      %v2061 = vld [vmem:[%s2056 + $0x10] sm:$0xf]
      %v2062 = vld [vmem:[%s2056 + $0x14] sm:$0xf]
      %v2063 = vld [vmem:[%s2056 + $0x18] sm:$0xf]
      %v2064 = vld [vmem:[%s2056 + $0x1c] sm:$0xf]
      %v2065 = vld [vmem:[%s2056 + $0x20] sm:$0xf]
      %v2066 = vld [vmem:[%s2056 + $0x24] sm:$0xf]
      %v2067 = vld [vmem:[%s2056 + $0x28] sm:$0xf]
      %v2068 = vld [vmem:[%s2056 + $0x2c] sm:$0xf]
      %v2069 = vld [vmem:[%s2056 + $0x30] sm:$0xf]
      %v2070 = vld [vmem:[%s2056 + $0x34] sm:$0xf]
      %v2071 = vld [vmem:[%s2056 + $0x38] sm:$0xf]
      %v2072 = vld [vmem:[%s2056 + $0x3c] sm:$0xf]
      %v2089 = vunpack.c.l.b16 %v2057
      %v2090 = vunpack.c.l.b16 %v2058
      %v2091 = vunpack.c.l.b16 %v2059
      %v2092 = vunpack.c.l.b16 %v2060
      %v2093 = vunpack.c.l.b16 %v2061
      %v2094 = vunpack.c.l.b16 %v2062
      %v2095 = vunpack.c.l.b16 %v2063
      %v2096 = vunpack.c.l.b16 %v2064
      %v2097 = vunpack.c.l.b16 %v2065
      %v2098 = vunpack.c.l.b16 %v2066
      %v2099 = vunpack.c.l.b16 %v2067
      %v2100 = vunpack.c.l.b16 %v2068
      %v2101 = vunpack.c.l.b16 %v2069
      %v2102 = vunpack.c.l.b16 %v2070
      %v2103 = vunpack.c.l.b16 %v2071
      %v2104 = vunpack.c.l.b16 %v2072
      %v2105 = vpack.c.b16 %v2090, %v2089
      %v2106 = vpack.c.b16 %v2092, %v2091
      %v2107 = vpack.c.b16 %v2094, %v2093
      %v2108 = vpack.c.b16 %v2096, %v2095
      %v2109 = vpack.c.b16 %v2098, %v2097
      %v2110 = vpack.c.b16 %v2100, %v2099
      %v2111 = vpack.c.b16 %v2102, %v2101
      %v2112 = vpack.c.b16 %v2104, %v2103
      %2121 = vmatpush.bf16.msra.mxu0 %v2112
      %2122 = vmatpush.bf16.msra.mxu0 %v2111
      %2123 = vmatpush.bf16.msra.mxu0 %v2110
      %2124 = vmatpush.bf16.msra.mxu0 %v2109
      %2125 = vmatpush.bf16.msra.mxu0 %v2108
      %2126 = vmatpush.bf16.msra.mxu0 %v2107
      %2127 = vmatpush.bf16.msra.mxu0 %v2106
      %2128 = vmatpush.bf16.msra.mxu0 %v2105
      %2129 = vmatmul.bf16.gmra.mxu0 %v430
      %v2130 = vpop.f32.mrf.mxu0
      %v2131 = vadd.f32 0.0, %v2130
      %v2132 = vpop.f32.mrf.mxu0
      %v2133 = vadd.f32 0.0, %v2132
      %2134 = vmatmul.bf16.gmra.mxu0 %v431
      %v2135 = vpop.f32.mrf.mxu0
      %v2136 = vadd.f32 0.0, %v2135
      %v2137 = vpop.f32.mrf.mxu0
      %v2138 = vadd.f32 0.0, %v2137
      %2139 = vmatmul.bf16.gmra.mxu0 %v432
      %v2140 = vpop.f32.mrf.mxu0
      %v2141 = vadd.f32 0.0, %v2140
      %v2142 = vpop.f32.mrf.mxu0
      %v2143 = vadd.f32 0.0, %v2142
      %2144 = vmatmul.bf16.gmra.mxu0 %v433
      %v2145 = vpop.f32.mrf.mxu0
      %v2146 = vadd.f32 0.0, %v2145
      %v2147 = vpop.f32.mrf.mxu0
      %v2148 = vadd.f32 0.0, %v2147
      %2149 = vmatmul.bf16.gmra.mxu0 %v434
      %v2150 = vpop.f32.mrf.mxu0
      %v2151 = vadd.f32 0.0, %v2150
      %v2152 = vpop.f32.mrf.mxu0
      %v2153 = vadd.f32 0.0, %v2152
      %2154 = vmatmul.bf16.gmra.mxu0 %v435
      %v2155 = vpop.f32.mrf.mxu0
      %v2156 = vadd.f32 0.0, %v2155
      %v2157 = vpop.f32.mrf.mxu0
      %v2158 = vadd.f32 0.0, %v2157
      %2159 = vmatmul.bf16.gmra.mxu0 %v436
      %v2160 = vpop.f32.mrf.mxu0
      %v2161 = vadd.f32 0.0, %v2160
      %v2162 = vpop.f32.mrf.mxu0
      %v2163 = vadd.f32 0.0, %v2162
      %2164 = vmatmul.bf16.gmra.mxu0 %v437
      %v2165 = vpop.f32.mrf.mxu0
      %v2166 = vadd.f32 0.0, %v2165
      %v2167 = vpop.f32.mrf.mxu0
      %v2168 = vadd.f32 0.0, %v2167
      %2169 = vmatmul.bf16.gmra.mxu0 %v438
      %v2170 = vpop.f32.mrf.mxu0
      %v2171 = vadd.f32 0.0, %v2170
      %v2172 = vpop.f32.mrf.mxu0
      %v2173 = vadd.f32 0.0, %v2172
      %2174 = vmatmul.bf16.gmra.mxu0 %v439
      %v2175 = vpop.f32.mrf.mxu0
      %v2176 = vadd.f32 0.0, %v2175
      %v2177 = vpop.f32.mrf.mxu0
      %v2178 = vadd.f32 0.0, %v2177
      %2179 = vmatmul.bf16.gmra.mxu0 %v440
      %v2180 = vpop.f32.mrf.mxu0
      %v2181 = vadd.f32 0.0, %v2180
      %v2182 = vpop.f32.mrf.mxu0
      %v2183 = vadd.f32 0.0, %v2182
      %2184 = vmatmul.bf16.gmra.mxu0 %v441
      %v2185 = vpop.f32.mrf.mxu0
      %v2186 = vadd.f32 0.0, %v2185
      %v2187 = vpop.f32.mrf.mxu0
      %v2188 = vadd.f32 0.0, %v2187
      %2189 = vmatmul.bf16.gmra.mxu0 %v442
      %v2190 = vpop.f32.mrf.mxu0
      %v2191 = vadd.f32 0.0, %v2190
      %v2192 = vpop.f32.mrf.mxu0
      %v2193 = vadd.f32 0.0, %v2192
      %2194 = vmatmul.bf16.gmra.mxu0 %v443
      %v2195 = vpop.f32.mrf.mxu0
      %v2196 = vadd.f32 0.0, %v2195
      %v2197 = vpop.f32.mrf.mxu0
      %v2198 = vadd.f32 0.0, %v2197
      %2199 = vmatmul.bf16.gmra.mxu0 %v444
      %v2200 = vpop.f32.mrf.mxu0
      %v2201 = vadd.f32 0.0, %v2200
      %v2202 = vpop.f32.mrf.mxu0
      %v2203 = vadd.f32 0.0, %v2202
      %2204 = vmatmul.bf16.gmra.mxu0 %v445
      %v2205 = vpop.f32.mrf.mxu0
      %v2206 = vadd.f32 0.0, %v2205
      %v2207 = vpop.f32.mrf.mxu0
      %v2208 = vadd.f32 0.0, %v2207
      %2209 = vmatmul.bf16.gmra.mxu0 %v446
      %v2210 = vpop.f32.mrf.mxu0
      %v2211 = vadd.f32 0.0, %v2210
      %v2212 = vpop.f32.mrf.mxu0
      %v2213 = vadd.f32 0.0, %v2212
      %2214 = vmatmul.bf16.gmra.mxu0 %v447
      %v2215 = vpop.f32.mrf.mxu0
      %v2216 = vadd.f32 0.0, %v2215
      %v2217 = vpop.f32.mrf.mxu0
      %v2218 = vadd.f32 0.0, %v2217
      %2219 = vmatmul.bf16.gmra.mxu0 %v448
      %v2220 = vpop.f32.mrf.mxu0
      %v2221 = vadd.f32 0.0, %v2220
      %v2222 = vpop.f32.mrf.mxu0
      %v2223 = vadd.f32 0.0, %v2222
      %2224 = vmatmul.bf16.gmra.mxu0 %v449
      %v2225 = vpop.f32.mrf.mxu0
      %v2226 = vadd.f32 0.0, %v2225
      %v2227 = vpop.f32.mrf.mxu0
      %v2228 = vadd.f32 0.0, %v2227
      %2229 = vmatmul.bf16.gmra.mxu0 %v450
      %v2230 = vpop.f32.mrf.mxu0
      %v2231 = vadd.f32 0.0, %v2230
      %v2232 = vpop.f32.mrf.mxu0
      %v2233 = vadd.f32 0.0, %v2232
      %2234 = vmatmul.bf16.gmra.mxu0 %v451
      %v2235 = vpop.f32.mrf.mxu0
      %v2236 = vadd.f32 0.0, %v2235
      %v2237 = vpop.f32.mrf.mxu0
      %v2238 = vadd.f32 0.0, %v2237
      %2239 = vmatmul.bf16.gmra.mxu0 %v452
      %v2240 = vpop.f32.mrf.mxu0
      %v2241 = vadd.f32 0.0, %v2240
      %v2242 = vpop.f32.mrf.mxu0
      %v2243 = vadd.f32 0.0, %v2242
      %2244 = vmatmul.bf16.gmra.mxu0 %v453
      %v2245 = vpop.f32.mrf.mxu0
      %v2246 = vadd.f32 0.0, %v2245
      %v2247 = vpop.f32.mrf.mxu0
      %v2248 = vadd.f32 0.0, %v2247
      %2249 = vmatmul.bf16.gmra.mxu0 %v454
      %v2250 = vpop.f32.mrf.mxu0
      %v2251 = vadd.f32 0.0, %v2250
      %v2252 = vpop.f32.mrf.mxu0
      %v2253 = vadd.f32 0.0, %v2252
      %2254 = vmatmul.bf16.gmra.mxu0 %v455
      %v2255 = vpop.f32.mrf.mxu0
      %v2256 = vadd.f32 0.0, %v2255
      %v2257 = vpop.f32.mrf.mxu0
      %v2258 = vadd.f32 0.0, %v2257
      %2259 = vmatmul.bf16.gmra.mxu0 %v456
      %v2260 = vpop.f32.mrf.mxu0
      %v2261 = vadd.f32 0.0, %v2260
      %v2262 = vpop.f32.mrf.mxu0
      %v2263 = vadd.f32 0.0, %v2262
      %2264 = vdwg.mxu0
      %v2265 = vrot.slane %v2131, 1
      %v2266 = vrot.slane %v2133, 1
      %v2267 = vrot.slane %v2136, 1
      %v2268 = vrot.slane %v2138, 1
      %v2269 = vrot.slane %v2141, 1
      %v2270 = vrot.slane %v2143, 1
      %v2271 = vrot.slane %v2146, 1
      %v2272 = vrot.slane %v2148, 1
      %v2273 = vrot.slane %v2151, 1
      %v2274 = vrot.slane %v2153, 1
      %v2275 = vrot.slane %v2156, 1
      %v2276 = vrot.slane %v2158, 1
      %v2277 = vrot.slane %v2161, 1
      %v2278 = vrot.slane %v2163, 1
      %v2279 = vrot.slane %v2166, 1
      %v2280 = vrot.slane %v2168, 1
      %v2281 = vrot.slane %v2171, 1
      %v2282 = vrot.slane %v2173, 1
      %v2283 = vrot.slane %v2176, 1
      %v2284 = vrot.slane %v2178, 1
      %v2285 = vrot.slane %v2181, 1
      %v2286 = vrot.slane %v2183, 1
      %v2287 = vrot.slane %v2186, 1
      %v2288 = vrot.slane %v2188, 1
      %v2289 = vrot.slane %v2191, 1
      %v2290 = vrot.slane %v2193, 1
      %v2291 = vrot.slane %v2196, 1
      %v2292 = vrot.slane %v2198, 1
      %v2293 = vrot.slane %v2201, 1
      %v2294 = vrot.slane %v2203, 1
      %v2295 = vrot.slane %v2206, 1
      %v2296 = vrot.slane %v2208, 1
      %v2297 = vrot.slane %v2211, 1
      %v2298 = vrot.slane %v2213, 1
      %v2299 = vrot.slane %v2216, 1
      %v2300 = vrot.slane %v2218, 1
      %v2301 = vrot.slane %v2221, 1
      %v2302 = vrot.slane %v2223, 1
      %v2303 = vrot.slane %v2226, 1
      %v2304 = vrot.slane %v2228, 1
      %v2305 = vrot.slane %v2231, 1
      %v2306 = vrot.slane %v2233, 1
      %v2307 = vrot.slane %v2236, 1
      %v2308 = vrot.slane %v2238, 1
      %v2309 = vrot.slane %v2241, 1
      %v2310 = vrot.slane %v2243, 1
      %v2311 = vrot.slane %v2246, 1
      %v2312 = vrot.slane %v2248, 1
      %v2313 = vrot.slane %v2251, 1
      %v2314 = vrot.slane %v2253, 1
      %v2315 = vrot.slane %v2256, 1
      %v2316 = vrot.slane %v2258, 1
      %v2317 = vrot.slane %v2261, 1
      %v2318 = vrot.slane %v2263, 1
      %v2319 = vsel %vm1313, %v2317, %v2318
      %v2320 = vsel %vm1313, %v2316, %v2317
      %v2321 = vsel %vm1313, %v2315, %v2316
      %v2322 = vsel %vm1313, %v2314, %v2315
      %v2323 = vsel %vm1313, %v2313, %v2314
      %v2324 = vsel %vm1313, %v2312, %v2313
      %v2325 = vsel %vm1313, %v2311, %v2312
      %v2326 = vsel %vm1313, %v2310, %v2311
      %v2327 = vsel %vm1313, %v2309, %v2310
      %v2328 = vsel %vm1313, %v2308, %v2309
      %v2329 = vsel %vm1313, %v2307, %v2308
      %v2330 = vsel %vm1313, %v2306, %v2307
      %v2331 = vsel %vm1313, %v2305, %v2306
      %v2332 = vsel %vm1313, %v2304, %v2305
      %v2333 = vsel %vm1313, %v2303, %v2304
      %v2334 = vsel %vm1313, %v2302, %v2303
      %v2335 = vsel %vm1313, %v2301, %v2302
      %v2336 = vsel %vm1313, %v2300, %v2301
      %v2337 = vsel %vm1313, %v2299, %v2300
      %v2338 = vsel %vm1313, %v2298, %v2299
      %v2339 = vsel %vm1313, %v2297, %v2298
      %v2340 = vsel %vm1313, %v2296, %v2297
      %v2341 = vsel %vm1313, %v2295, %v2296
      %v2342 = vsel %vm1313, %v2294, %v2295
      %v2343 = vsel %vm1313, %v2293, %v2294
      %v2344 = vsel %vm1313, %v2292, %v2293
      %v2345 = vsel %vm1313, %v2291, %v2292
      %v2346 = vsel %vm1313, %v2290, %v2291
      %v2347 = vsel %vm1313, %v2289, %v2290
      %v2348 = vsel %vm1313, %v2288, %v2289
      %v2349 = vsel %vm1313, %v2287, %v2288
      %v2350 = vsel %vm1313, %v2286, %v2287
      %v2351 = vsel %vm1313, %v2285, %v2286
      %v2352 = vsel %vm1313, %v2284, %v2285
      %v2353 = vsel %vm1313, %v2283, %v2284
      %v2354 = vsel %vm1313, %v2282, %v2283
      %v2355 = vsel %vm1313, %v2281, %v2282
      %v2356 = vsel %vm1313, %v2280, %v2281
      %v2357 = vsel %vm1313, %v2279, %v2280
      %v2358 = vsel %vm1313, %v2278, %v2279
      %v2359 = vsel %vm1313, %v2277, %v2278
      %v2360 = vsel %vm1313, %v2276, %v2277
      %v2361 = vsel %vm1313, %v2275, %v2276
      %v2362 = vsel %vm1313, %v2274, %v2275
      %v2363 = vsel %vm1313, %v2273, %v2274
      %v2364 = vsel %vm1313, %v2272, %v2273
      %v2365 = vsel %vm1313, %v2271, %v2272
      %v2366 = vsel %vm1313, %v2270, %v2271
      %v2367 = vsel %vm1313, %v2269, %v2270
      %v2368 = vsel %vm1313, %v2268, %v2269
      %v2369 = vsel %vm1313, %v2267, %v2268
      %v2370 = vsel %vm1313, %v2266, %v2267
      %v2371 = vsel %vm1313, %v2265, %v2266
      %v2372 = vsel %vm1313, %v2318, %v2265
      %v2373 = vadd.f32 %v2002, %v2371
      %v2374 = vadd.f32 %v2003, %v2370
      %v2375 = vadd.f32 %v2004, %v2369
      %v2376 = vadd.f32 %v2005, %v2368
      %v2377 = vadd.f32 %v2006, %v2367
      %v2378 = vadd.f32 %v2007, %v2366
      %v2379 = vadd.f32 %v2008, %v2365
      %v2380 = vadd.f32 %v2009, %v2364
      %v2381 = vadd.f32 %v2010, %v2363
      %v2382 = vadd.f32 %v2011, %v2362
      %v2383 = vadd.f32 %v2012, %v2361
      %v2384 = vadd.f32 %v2013, %v2360
      %v2385 = vadd.f32 %v2014, %v2359
      %v2386 = vadd.f32 %v2015, %v2358
      %v2387 = vadd.f32 %v2016, %v2357
      %v2388 = vadd.f32 %v2017, %v2356
      %v2389 = vadd.f32 %v2018, %v2355
      %v2390 = vadd.f32 %v2019, %v2354
      %v2391 = vadd.f32 %v2020, %v2353
      %v2392 = vadd.f32 %v2021, %v2352
      %v2393 = vadd.f32 %v2022, %v2351
      %v2394 = vadd.f32 %v2023, %v2350
      %v2395 = vadd.f32 %v2024, %v2349
      %v2396 = vadd.f32 %v2025, %v2348
      %v2397 = vadd.f32 %v2026, %v2347
      %v2398 = vadd.f32 %v2027, %v2346
      %v2399 = vadd.f32 %v2028, %v2345
      %v2400 = vadd.f32 %v2029, %v2344
      %v2401 = vadd.f32 %v2030, %v2343
      %v2402 = vadd.f32 %v2031, %v2342
      %v2403 = vadd.f32 %v2032, %v2341
      %v2404 = vadd.f32 %v2033, %v2340
      %v2405 = vadd.f32 %v2034, %v2339
      %v2406 = vadd.f32 %v2035, %v2338
      %v2407 = vadd.f32 %v2036, %v2337
      %v2408 = vadd.f32 %v2037, %v2336
      %v2409 = vadd.f32 %v2038, %v2335
      %v2410 = vadd.f32 %v2039, %v2334
      %v2411 = vadd.f32 %v2040, %v2333
      %v2412 = vadd.f32 %v2041, %v2332
      %v2413 = vadd.f32 %v2042, %v2331
      %v2414 = vadd.f32 %v2043, %v2330
      %v2415 = vadd.f32 %v2044, %v2329
      %v2416 = vadd.f32 %v2045, %v2328
      %v2417 = vadd.f32 %v2046, %v2327
      %v2418 = vadd.f32 %v2047, %v2326
      %v2419 = vadd.f32 %v2048, %v2325
      %v2420 = vadd.f32 %v2049, %v2324
      %v2421 = vadd.f32 %v2050, %v2323
      %v2422 = vadd.f32 %v2051, %v2322
      %v2423 = vadd.f32 %v2052, %v2321
      %v2424 = vadd.f32 %v2053, %v2320
      %v2425 = vadd.f32 %v2054, %v2319
      %v2426 = vadd.f32 %v2055, %v2372
      %s2427 = scalar_lea.vmem %s1, 384
      %v2428 = vld [vmem:[%s2427] sm:$0xf]
      %v2429 = vld [vmem:[%s2427 + $0x4] sm:$0xf]
      %v2430 = vld [vmem:[%s2427 + $0x8] sm:$0xf]
      %v2431 = vld [vmem:[%s2427 + $0xc] sm:$0xf]
      %v2432 = vld [vmem:[%s2427 + $0x10] sm:$0xf]
      %v2433 = vld [vmem:[%s2427 + $0x14] sm:$0xf]
      %v2434 = vld [vmem:[%s2427 + $0x18] sm:$0xf]
      %v2435 = vld [vmem:[%s2427 + $0x1c] sm:$0xf]
      %v2436 = vld [vmem:[%s2427 + $0x20] sm:$0xf]
      %v2437 = vld [vmem:[%s2427 + $0x24] sm:$0xf]
      %v2438 = vld [vmem:[%s2427 + $0x28] sm:$0xf]
      %v2439 = vld [vmem:[%s2427 + $0x2c] sm:$0xf]
      %v2440 = vld [vmem:[%s2427 + $0x30] sm:$0xf]
      %v2441 = vld [vmem:[%s2427 + $0x34] sm:$0xf]
      %v2442 = vld [vmem:[%s2427 + $0x38] sm:$0xf]
      %v2443 = vld [vmem:[%s2427 + $0x3c] sm:$0xf]
      %v2460 = vunpack.c.l.b16 %v2428
      %v2461 = vunpack.c.l.b16 %v2429
      %v2462 = vunpack.c.l.b16 %v2430
      %v2463 = vunpack.c.l.b16 %v2431
      %v2464 = vunpack.c.l.b16 %v2432
      %v2465 = vunpack.c.l.b16 %v2433
      %v2466 = vunpack.c.l.b16 %v2434
      %v2467 = vunpack.c.l.b16 %v2435
      %v2468 = vunpack.c.l.b16 %v2436
      %v2469 = vunpack.c.l.b16 %v2437
      %v2470 = vunpack.c.l.b16 %v2438
      %v2471 = vunpack.c.l.b16 %v2439
      %v2472 = vunpack.c.l.b16 %v2440
      %v2473 = vunpack.c.l.b16 %v2441
      %v2474 = vunpack.c.l.b16 %v2442
      %v2475 = vunpack.c.l.b16 %v2443
      %v2476 = vpack.c.b16 %v2461, %v2460
      %v2477 = vpack.c.b16 %v2463, %v2462
      %v2478 = vpack.c.b16 %v2465, %v2464
      %v2479 = vpack.c.b16 %v2467, %v2466
      %v2480 = vpack.c.b16 %v2469, %v2468
      %v2481 = vpack.c.b16 %v2471, %v2470
      %v2482 = vpack.c.b16 %v2473, %v2472
      %v2483 = vpack.c.b16 %v2475, %v2474
      %2492 = vmatpush.bf16.msra.mxu0 %v2483
      %2493 = vmatpush.bf16.msra.mxu0 %v2482
      %2494 = vmatpush.bf16.msra.mxu0 %v2481
      %2495 = vmatpush.bf16.msra.mxu0 %v2480
      %2496 = vmatpush.bf16.msra.mxu0 %v2479
      %2497 = vmatpush.bf16.msra.mxu0 %v2478
      %2498 = vmatpush.bf16.msra.mxu0 %v2477
      %2499 = vmatpush.bf16.msra.mxu0 %v2476
      %2500 = vmatmul.bf16.gmra.mxu0 %v430
      %v2501 = vpop.f32.mrf.mxu0
      %v2502 = vadd.f32 0.0, %v2501
      %v2503 = vpop.f32.mrf.mxu0
      %v2504 = vadd.f32 0.0, %v2503
      %2505 = vmatmul.bf16.gmra.mxu0 %v431
      %v2506 = vpop.f32.mrf.mxu0
      %v2507 = vadd.f32 0.0, %v2506
      %v2508 = vpop.f32.mrf.mxu0
      %v2509 = vadd.f32 0.0, %v2508
      %2510 = vmatmul.bf16.gmra.mxu0 %v432
      %v2511 = vpop.f32.mrf.mxu0
      %v2512 = vadd.f32 0.0, %v2511
      %v2513 = vpop.f32.mrf.mxu0
      %v2514 = vadd.f32 0.0, %v2513
      %2515 = vmatmul.bf16.gmra.mxu0 %v433
      %v2516 = vpop.f32.mrf.mxu0
      %v2517 = vadd.f32 0.0, %v2516
      %v2518 = vpop.f32.mrf.mxu0
      %v2519 = vadd.f32 0.0, %v2518
      %2520 = vmatmul.bf16.gmra.mxu0 %v434
      %v2521 = vpop.f32.mrf.mxu0
      %v2522 = vadd.f32 0.0, %v2521
      %v2523 = vpop.f32.mrf.mxu0
      %v2524 = vadd.f32 0.0, %v2523
      %2525 = vmatmul.bf16.gmra.mxu0 %v435
      %v2526 = vpop.f32.mrf.mxu0
      %v2527 = vadd.f32 0.0, %v2526
      %v2528 = vpop.f32.mrf.mxu0
      %v2529 = vadd.f32 0.0, %v2528
      %2530 = vmatmul.bf16.gmra.mxu0 %v436
      %v2531 = vpop.f32.mrf.mxu0
      %v2532 = vadd.f32 0.0, %v2531
      %v2533 = vpop.f32.mrf.mxu0
      %v2534 = vadd.f32 0.0, %v2533
      %2535 = vmatmul.bf16.gmra.mxu0 %v437
      %v2536 = vpop.f32.mrf.mxu0
      %v2537 = vadd.f32 0.0, %v2536
      %v2538 = vpop.f32.mrf.mxu0
      %v2539 = vadd.f32 0.0, %v2538
      %2540 = vmatmul.bf16.gmra.mxu0 %v438
      %v2541 = vpop.f32.mrf.mxu0
      %v2542 = vadd.f32 0.0, %v2541
      %v2543 = vpop.f32.mrf.mxu0
      %v2544 = vadd.f32 0.0, %v2543
      %2545 = vmatmul.bf16.gmra.mxu0 %v439
      %v2546 = vpop.f32.mrf.mxu0
      %v2547 = vadd.f32 0.0, %v2546
      %v2548 = vpop.f32.mrf.mxu0
      %v2549 = vadd.f32 0.0, %v2548
      %2550 = vmatmul.bf16.gmra.mxu0 %v440
      %v2551 = vpop.f32.mrf.mxu0
      %v2552 = vadd.f32 0.0, %v2551
      %v2553 = vpop.f32.mrf.mxu0
      %v2554 = vadd.f32 0.0, %v2553
      %2555 = vmatmul.bf16.gmra.mxu0 %v441
      %v2556 = vpop.f32.mrf.mxu0
      %v2557 = vadd.f32 0.0, %v2556
      %v2558 = vpop.f32.mrf.mxu0
      %v2559 = vadd.f32 0.0, %v2558
      %2560 = vmatmul.bf16.gmra.mxu0 %v442
      %v2561 = vpop.f32.mrf.mxu0
      %v2562 = vadd.f32 0.0, %v2561
      %v2563 = vpop.f32.mrf.mxu0
      %v2564 = vadd.f32 0.0, %v2563
      %2565 = vmatmul.bf16.gmra.mxu0 %v443
      %v2566 = vpop.f32.mrf.mxu0
      %v2567 = vadd.f32 0.0, %v2566
      %v2568 = vpop.f32.mrf.mxu0
      %v2569 = vadd.f32 0.0, %v2568
      %2570 = vmatmul.bf16.gmra.mxu0 %v444
      %v2571 = vpop.f32.mrf.mxu0
      %v2572 = vadd.f32 0.0, %v2571
      %v2573 = vpop.f32.mrf.mxu0
      %v2574 = vadd.f32 0.0, %v2573
      %2575 = vmatmul.bf16.gmra.mxu0 %v445
      %v2576 = vpop.f32.mrf.mxu0
      %v2577 = vadd.f32 0.0, %v2576
      %v2578 = vpop.f32.mrf.mxu0
      %v2579 = vadd.f32 0.0, %v2578
      %2580 = vmatmul.bf16.gmra.mxu0 %v446
      %v2581 = vpop.f32.mrf.mxu0
      %v2582 = vadd.f32 0.0, %v2581
      %v2583 = vpop.f32.mrf.mxu0
      %v2584 = vadd.f32 0.0, %v2583
      %2585 = vmatmul.bf16.gmra.mxu0 %v447
      %v2586 = vpop.f32.mrf.mxu0
      %v2587 = vadd.f32 0.0, %v2586
      %v2588 = vpop.f32.mrf.mxu0
      %v2589 = vadd.f32 0.0, %v2588
      %2590 = vmatmul.bf16.gmra.mxu0 %v448
      %v2591 = vpop.f32.mrf.mxu0
      %v2592 = vadd.f32 0.0, %v2591
      %v2593 = vpop.f32.mrf.mxu0
      %v2594 = vadd.f32 0.0, %v2593
      %2595 = vmatmul.bf16.gmra.mxu0 %v449
      %v2596 = vpop.f32.mrf.mxu0
      %v2597 = vadd.f32 0.0, %v2596
      %v2598 = vpop.f32.mrf.mxu0
      %v2599 = vadd.f32 0.0, %v2598
      %2600 = vmatmul.bf16.gmra.mxu0 %v450
      %v2601 = vpop.f32.mrf.mxu0
      %v2602 = vadd.f32 0.0, %v2601
      %v2603 = vpop.f32.mrf.mxu0
      %v2604 = vadd.f32 0.0, %v2603
      %2605 = vmatmul.bf16.gmra.mxu0 %v451
      %v2606 = vpop.f32.mrf.mxu0
      %v2607 = vadd.f32 0.0, %v2606
      %v2608 = vpop.f32.mrf.mxu0
      %v2609 = vadd.f32 0.0, %v2608
      %2610 = vmatmul.bf16.gmra.mxu0 %v452
      %v2611 = vpop.f32.mrf.mxu0
      %v2612 = vadd.f32 0.0, %v2611
      %v2613 = vpop.f32.mrf.mxu0
      %v2614 = vadd.f32 0.0, %v2613
      %2615 = vmatmul.bf16.gmra.mxu0 %v453
      %v2616 = vpop.f32.mrf.mxu0
      %v2617 = vadd.f32 0.0, %v2616
      %v2618 = vpop.f32.mrf.mxu0
      %v2619 = vadd.f32 0.0, %v2618
      %2620 = vmatmul.bf16.gmra.mxu0 %v454
      %v2621 = vpop.f32.mrf.mxu0
      %v2622 = vadd.f32 0.0, %v2621
      %v2623 = vpop.f32.mrf.mxu0
      %v2624 = vadd.f32 0.0, %v2623
      %2625 = vmatmul.bf16.gmra.mxu0 %v455
      %v2626 = vpop.f32.mrf.mxu0
      %v2627 = vadd.f32 0.0, %v2626
      %v2628 = vpop.f32.mrf.mxu0
      %v2629 = vadd.f32 0.0, %v2628
      %2630 = vmatmul.bf16.gmra.mxu0 %v456
      %v2631 = vpop.f32.mrf.mxu0
      %v2632 = vadd.f32 0.0, %v2631
      %v2633 = vpop.f32.mrf.mxu0
      %v2634 = vadd.f32 0.0, %v2633
      %2635 = vdwg.mxu0
      %v2636 = vrot.slane %v2502, 7
      %v2637 = vrot.slane %v2504, 7
      %v2638 = vrot.slane %v2507, 7
      %v2639 = vrot.slane %v2509, 7
      %v2640 = vrot.slane %v2512, 7
      %v2641 = vrot.slane %v2514, 7
      %v2642 = vrot.slane %v2517, 7
      %v2643 = vrot.slane %v2519, 7
      %v2644 = vrot.slane %v2522, 7
      %v2645 = vrot.slane %v2524, 7
      %v2646 = vrot.slane %v2527, 7
      %v2647 = vrot.slane %v2529, 7
      %v2648 = vrot.slane %v2532, 7
      %v2649 = vrot.slane %v2534, 7
      %v2650 = vrot.slane %v2537, 7
      %v2651 = vrot.slane %v2539, 7
      %v2652 = vrot.slane %v2542, 7
      %v2653 = vrot.slane %v2544, 7
      %v2654 = vrot.slane %v2547, 7
      %v2655 = vrot.slane %v2549, 7
      %v2656 = vrot.slane %v2552, 7
      %v2657 = vrot.slane %v2554, 7
      %v2658 = vrot.slane %v2557, 7
      %v2659 = vrot.slane %v2559, 7
      %v2660 = vrot.slane %v2562, 7
      %v2661 = vrot.slane %v2564, 7
      %v2662 = vrot.slane %v2567, 7
      %v2663 = vrot.slane %v2569, 7
      %v2664 = vrot.slane %v2572, 7
      %v2665 = vrot.slane %v2574, 7
      %v2666 = vrot.slane %v2577, 7
      %v2667 = vrot.slane %v2579, 7
      %v2668 = vrot.slane %v2582, 7
      %v2669 = vrot.slane %v2584, 7
      %v2670 = vrot.slane %v2587, 7
      %v2671 = vrot.slane %v2589, 7
      %v2672 = vrot.slane %v2592, 7
      %v2673 = vrot.slane %v2594, 7
      %v2674 = vrot.slane %v2597, 7
      %v2675 = vrot.slane %v2599, 7
      %v2676 = vrot.slane %v2602, 7
      %v2677 = vrot.slane %v2604, 7
      %v2678 = vrot.slane %v2607, 7
      %v2679 = vrot.slane %v2609, 7
      %v2680 = vrot.slane %v2612, 7
      %v2681 = vrot.slane %v2614, 7
      %v2682 = vrot.slane %v2617, 7
      %v2683 = vrot.slane %v2619, 7
      %v2684 = vrot.slane %v2622, 7
      %v2685 = vrot.slane %v2624, 7
      %v2686 = vrot.slane %v2627, 7
      %v2687 = vrot.slane %v2629, 7
      %v2688 = vrot.slane %v2632, 7
      %v2689 = vrot.slane %v2634, 7
      %v2690 = vsel %vm732, %v2688, %v2689
      %v2691 = vsel %vm732, %v2687, %v2688
      %v2692 = vsel %vm732, %v2686, %v2687
      %v2693 = vsel %vm732, %v2685, %v2686
      %v2694 = vsel %vm732, %v2684, %v2685
      %v2695 = vsel %vm732, %v2683, %v2684
      %v2696 = vsel %vm732, %v2682, %v2683
      %v2697 = vsel %vm732, %v2681, %v2682
      %v2698 = vsel %vm732, %v2680, %v2681
      %v2699 = vsel %vm732, %v2679, %v2680
      %v2700 = vsel %vm732, %v2678, %v2679
      %v2701 = vsel %vm732, %v2677, %v2678
      %v2702 = vsel %vm732, %v2676, %v2677
      %v2703 = vsel %vm732, %v2675, %v2676
      %v2704 = vsel %vm732, %v2674, %v2675
      %v2705 = vsel %vm732, %v2673, %v2674
      %v2706 = vsel %vm732, %v2672, %v2673
      %v2707 = vsel %vm732, %v2671, %v2672
      %v2708 = vsel %vm732, %v2670, %v2671
      %v2709 = vsel %vm732, %v2669, %v2670
      %v2710 = vsel %vm732, %v2668, %v2669
      %v2711 = vsel %vm732, %v2667, %v2668
      %v2712 = vsel %vm732, %v2666, %v2667
      %v2713 = vsel %vm732, %v2665, %v2666
      %v2714 = vsel %vm732, %v2664, %v2665
      %v2715 = vsel %vm732, %v2663, %v2664
      %v2716 = vsel %vm732, %v2662, %v2663
      %v2717 = vsel %vm732, %v2661, %v2662
      %v2718 = vsel %vm732, %v2660, %v2661
      %v2719 = vsel %vm732, %v2659, %v2660
      %v2720 = vsel %vm732, %v2658, %v2659
      %v2721 = vsel %vm732, %v2657, %v2658
      %v2722 = vsel %vm732, %v2656, %v2657
      %v2723 = vsel %vm732, %v2655, %v2656
      %v2724 = vsel %vm732, %v2654, %v2655
      %v2725 = vsel %vm732, %v2653, %v2654
      %v2726 = vsel %vm732, %v2652, %v2653
      %v2727 = vsel %vm732, %v2651, %v2652
      %v2728 = vsel %vm732, %v2650, %v2651
      %v2729 = vsel %vm732, %v2649, %v2650
      %v2730 = vsel %vm732, %v2648, %v2649
      %v2731 = vsel %vm732, %v2647, %v2648
      %v2732 = vsel %vm732, %v2646, %v2647
      %v2733 = vsel %vm732, %v2645, %v2646
      %v2734 = vsel %vm732, %v2644, %v2645
      %v2735 = vsel %vm732, %v2643, %v2644
      %v2736 = vsel %vm732, %v2642, %v2643
      %v2737 = vsel %vm732, %v2641, %v2642
      %v2738 = vsel %vm732, %v2640, %v2641
      %v2739 = vsel %vm732, %v2639, %v2640
      %v2740 = vsel %vm732, %v2638, %v2639
      %v2741 = vsel %vm732, %v2637, %v2638
      %v2742 = vsel %vm732, %v2636, %v2637
      %v2743 = vsel %vm732, %v2689, %v2636
      %v2744 = vadd.f32 %v2373, %v2740
      %v2745 = vadd.f32 %v2374, %v2739
      %v2746 = vadd.f32 %v2375, %v2738
      %v2747 = vadd.f32 %v2376, %v2737
      %v2748 = vadd.f32 %v2377, %v2736
      %v2749 = vadd.f32 %v2378, %v2735
      %v2750 = vadd.f32 %v2379, %v2734
      %v2751 = vadd.f32 %v2380, %v2733
      %v2752 = vadd.f32 %v2381, %v2732
      %v2753 = vadd.f32 %v2382, %v2731
      %v2754 = vadd.f32 %v2383, %v2730
      %v2755 = vadd.f32 %v2384, %v2729
      %v2756 = vadd.f32 %v2385, %v2728
      %v2757 = vadd.f32 %v2386, %v2727
      %v2758 = vadd.f32 %v2387, %v2726
      %v2759 = vadd.f32 %v2388, %v2725
      %v2760 = vadd.f32 %v2389, %v2724
      %v2761 = vadd.f32 %v2390, %v2723
      %v2762 = vadd.f32 %v2391, %v2722
      %v2763 = vadd.f32 %v2392, %v2721
      %v2764 = vadd.f32 %v2393, %v2720
      %v2765 = vadd.f32 %v2394, %v2719
      %v2766 = vadd.f32 %v2395, %v2718
      %v2767 = vadd.f32 %v2396, %v2717
      %v2768 = vadd.f32 %v2397, %v2716
      %v2769 = vadd.f32 %v2398, %v2715
      %v2770 = vadd.f32 %v2399, %v2714
      %v2771 = vadd.f32 %v2400, %v2713
      %v2772 = vadd.f32 %v2401, %v2712
      %v2773 = vadd.f32 %v2402, %v2711
      %v2774 = vadd.f32 %v2403, %v2710
      %v2775 = vadd.f32 %v2404, %v2709
      %v2776 = vadd.f32 %v2405, %v2708
      %v2777 = vadd.f32 %v2406, %v2707
      %v2778 = vadd.f32 %v2407, %v2706
      %v2779 = vadd.f32 %v2408, %v2705
      %v2780 = vadd.f32 %v2409, %v2704
      %v2781 = vadd.f32 %v2410, %v2703
      %v2782 = vadd.f32 %v2411, %v2702
      %v2783 = vadd.f32 %v2412, %v2701
      %v2784 = vadd.f32 %v2413, %v2700
      %v2785 = vadd.f32 %v2414, %v2699
      %v2786 = vadd.f32 %v2415, %v2698
      %v2787 = vadd.f32 %v2416, %v2697
      %v2788 = vadd.f32 %v2417, %v2696
      %v2789 = vadd.f32 %v2418, %v2695
      %v2790 = vadd.f32 %v2419, %v2694
      %v2791 = vadd.f32 %v2420, %v2693
      %v2792 = vadd.f32 %v2421, %v2692
      %v2793 = vadd.f32 %v2422, %v2691
      %v2794 = vadd.f32 %v2423, %v2690
      %v2795 = vadd.f32 %v2424, %v2743
      %v2796 = vadd.f32 %v2425, %v2742
      %v2797 = vadd.f32 %v2426, %v2741
      %s2798 = scalar_lea.vmem %s1, 448
      %v2799 = vld [vmem:[%s2798] sm:$0xf]
      %v2800 = vld [vmem:[%s2798 + $0x4] sm:$0xf]
      %v2801 = vld [vmem:[%s2798 + $0x8] sm:$0xf]
      %v2802 = vld [vmem:[%s2798 + $0xc] sm:$0xf]
      %v2803 = vld [vmem:[%s2798 + $0x10] sm:$0xf]
      %v2804 = vld [vmem:[%s2798 + $0x14] sm:$0xf]
      %v2805 = vld [vmem:[%s2798 + $0x18] sm:$0xf]
      %v2806 = vld [vmem:[%s2798 + $0x1c] sm:$0xf]
      %v2807 = vld [vmem:[%s2798 + $0x20] sm:$0xf]
      %v2808 = vld [vmem:[%s2798 + $0x24] sm:$0xf]
      %v2809 = vld [vmem:[%s2798 + $0x28] sm:$0xf]
      %v2810 = vld [vmem:[%s2798 + $0x2c] sm:$0xf]
      %v2811 = vld [vmem:[%s2798 + $0x30] sm:$0xf]
      %v2812 = vld [vmem:[%s2798 + $0x34] sm:$0xf]
      %v2813 = vld [vmem:[%s2798 + $0x38] sm:$0xf]
      %v2814 = vld [vmem:[%s2798 + $0x3c] sm:$0xf]
      %v2831 = vunpack.c.l.b16 %v2799
      %v2832 = vunpack.c.l.b16 %v2800
      %v2833 = vunpack.c.l.b16 %v2801
      %v2834 = vunpack.c.l.b16 %v2802
      %v2835 = vunpack.c.l.b16 %v2803
      %v2836 = vunpack.c.l.b16 %v2804
      %v2837 = vunpack.c.l.b16 %v2805
      %v2838 = vunpack.c.l.b16 %v2806
      %v2839 = vunpack.c.l.b16 %v2807
      %v2840 = vunpack.c.l.b16 %v2808
      %v2841 = vunpack.c.l.b16 %v2809
      %v2842 = vunpack.c.l.b16 %v2810
      %v2843 = vunpack.c.l.b16 %v2811
      %v2844 = vunpack.c.l.b16 %v2812
      %v2845 = vunpack.c.l.b16 %v2813
      %v2846 = vunpack.c.l.b16 %v2814
      %v2847 = vpack.c.b16 %v2832, %v2831
      %v2848 = vpack.c.b16 %v2834, %v2833
      %v2849 = vpack.c.b16 %v2836, %v2835
      %v2850 = vpack.c.b16 %v2838, %v2837
      %v2851 = vpack.c.b16 %v2840, %v2839
      %v2852 = vpack.c.b16 %v2842, %v2841
      %v2853 = vpack.c.b16 %v2844, %v2843
      %v2854 = vpack.c.b16 %v2846, %v2845
      %2863 = vmatpush.bf16.msra.mxu0 %v2854
      %2864 = vmatpush.bf16.msra.mxu0 %v2853
      %2865 = vmatpush.bf16.msra.mxu0 %v2852
      %2866 = vmatpush.bf16.msra.mxu0 %v2851
      %2867 = vmatpush.bf16.msra.mxu0 %v2850
      %2868 = vmatpush.bf16.msra.mxu0 %v2849
      %2869 = vmatpush.bf16.msra.mxu0 %v2848
      %2870 = vmatpush.bf16.msra.mxu0 %v2847
      %2871 = vmatmul.bf16.gmra.mxu0 %v430
      %v2872 = vpop.f32.mrf.mxu0
      %v2873 = vadd.f32 0.0, %v2872
      %v2874 = vpop.f32.mrf.mxu0
      %v2875 = vadd.f32 0.0, %v2874
      %2876 = vmatmul.bf16.gmra.mxu0 %v431
      %v2877 = vpop.f32.mrf.mxu0
      %v2878 = vadd.f32 0.0, %v2877
      %v2879 = vpop.f32.mrf.mxu0
      %v2880 = vadd.f32 0.0, %v2879
      %2881 = vmatmul.bf16.gmra.mxu0 %v432
      %v2882 = vpop.f32.mrf.mxu0
      %v2883 = vadd.f32 0.0, %v2882
      %v2884 = vpop.f32.mrf.mxu0
      %v2885 = vadd.f32 0.0, %v2884
      %2886 = vmatmul.bf16.gmra.mxu0 %v433
      %v2887 = vpop.f32.mrf.mxu0
      %v2888 = vadd.f32 0.0, %v2887
      %v2889 = vpop.f32.mrf.mxu0
      %v2890 = vadd.f32 0.0, %v2889
      %2891 = vmatmul.bf16.gmra.mxu0 %v434
      %v2892 = vpop.f32.mrf.mxu0
      %v2893 = vadd.f32 0.0, %v2892
      %v2894 = vpop.f32.mrf.mxu0
      %v2895 = vadd.f32 0.0, %v2894
      %2896 = vmatmul.bf16.gmra.mxu0 %v435
      %v2897 = vpop.f32.mrf.mxu0
      %v2898 = vadd.f32 0.0, %v2897
      %v2899 = vpop.f32.mrf.mxu0
      %v2900 = vadd.f32 0.0, %v2899
      %2901 = vmatmul.bf16.gmra.mxu0 %v436
      %v2902 = vpop.f32.mrf.mxu0
      %v2903 = vadd.f32 0.0, %v2902
      %v2904 = vpop.f32.mrf.mxu0
      %v2905 = vadd.f32 0.0, %v2904
      %2906 = vmatmul.bf16.gmra.mxu0 %v437
      %v2907 = vpop.f32.mrf.mxu0
      %v2908 = vadd.f32 0.0, %v2907
      %v2909 = vpop.f32.mrf.mxu0
      %v2910 = vadd.f32 0.0, %v2909
      %2911 = vmatmul.bf16.gmra.mxu0 %v438
      %v2912 = vpop.f32.mrf.mxu0
      %v2913 = vadd.f32 0.0, %v2912
      %v2914 = vpop.f32.mrf.mxu0
      %v2915 = vadd.f32 0.0, %v2914
      %2916 = vmatmul.bf16.gmra.mxu0 %v439
      %v2917 = vpop.f32.mrf.mxu0
      %v2918 = vadd.f32 0.0, %v2917
      %v2919 = vpop.f32.mrf.mxu0
      %v2920 = vadd.f32 0.0, %v2919
      %2921 = vmatmul.bf16.gmra.mxu0 %v440
      %v2922 = vpop.f32.mrf.mxu0
      %v2923 = vadd.f32 0.0, %v2922
      %v2924 = vpop.f32.mrf.mxu0
      %v2925 = vadd.f32 0.0, %v2924
      %2926 = vmatmul.bf16.gmra.mxu0 %v441
      %v2927 = vpop.f32.mrf.mxu0
      %v2928 = vadd.f32 0.0, %v2927
      %v2929 = vpop.f32.mrf.mxu0
      %v2930 = vadd.f32 0.0, %v2929
      %2931 = vmatmul.bf16.gmra.mxu0 %v442
      %v2932 = vpop.f32.mrf.mxu0
      %v2933 = vadd.f32 0.0, %v2932
      %v2934 = vpop.f32.mrf.mxu0
      %v2935 = vadd.f32 0.0, %v2934
      %2936 = vmatmul.bf16.gmra.mxu0 %v443
      %v2937 = vpop.f32.mrf.mxu0
      %v2938 = vadd.f32 0.0, %v2937
      %v2939 = vpop.f32.mrf.mxu0
      %v2940 = vadd.f32 0.0, %v2939
      %2941 = vmatmul.bf16.gmra.mxu0 %v444
      %v2942 = vpop.f32.mrf.mxu0
      %v2943 = vadd.f32 0.0, %v2942
      %v2944 = vpop.f32.mrf.mxu0
      %v2945 = vadd.f32 0.0, %v2944
      %2946 = vmatmul.bf16.gmra.mxu0 %v445
      %v2947 = vpop.f32.mrf.mxu0
      %v2948 = vadd.f32 0.0, %v2947
      %v2949 = vpop.f32.mrf.mxu0
      %v2950 = vadd.f32 0.0, %v2949
      %2951 = vmatmul.bf16.gmra.mxu0 %v446
      %v2952 = vpop.f32.mrf.mxu0
      %v2953 = vadd.f32 0.0, %v2952
      %v2954 = vpop.f32.mrf.mxu0
      %v2955 = vadd.f32 0.0, %v2954
      %2956 = vmatmul.bf16.gmra.mxu0 %v447
      %v2957 = vpop.f32.mrf.mxu0
      %v2958 = vadd.f32 0.0, %v2957
      %v2959 = vpop.f32.mrf.mxu0
      %v2960 = vadd.f32 0.0, %v2959
      %2961 = vmatmul.bf16.gmra.mxu0 %v448
      %v2962 = vpop.f32.mrf.mxu0
      %v2963 = vadd.f32 0.0, %v2962
      %v2964 = vpop.f32.mrf.mxu0
      %v2965 = vadd.f32 0.0, %v2964
      %2966 = vmatmul.bf16.gmra.mxu0 %v449
      %v2967 = vpop.f32.mrf.mxu0
      %v2968 = vadd.f32 0.0, %v2967
      %v2969 = vpop.f32.mrf.mxu0
      %v2970 = vadd.f32 0.0, %v2969
      %2971 = vmatmul.bf16.gmra.mxu0 %v450
      %v2972 = vpop.f32.mrf.mxu0
      %v2973 = vadd.f32 0.0, %v2972
      %v2974 = vpop.f32.mrf.mxu0
      %v2975 = vadd.f32 0.0, %v2974
      %2976 = vmatmul.bf16.gmra.mxu0 %v451
      %v2977 = vpop.f32.mrf.mxu0
      %v2978 = vadd.f32 0.0, %v2977
      %v2979 = vpop.f32.mrf.mxu0
      %v2980 = vadd.f32 0.0, %v2979
      %2981 = vmatmul.bf16.gmra.mxu0 %v452
      %v2982 = vpop.f32.mrf.mxu0
      %v2983 = vadd.f32 0.0, %v2982
      %v2984 = vpop.f32.mrf.mxu0
      %v2985 = vadd.f32 0.0, %v2984
      %2986 = vmatmul.bf16.gmra.mxu0 %v453
      %v2987 = vpop.f32.mrf.mxu0
      %v2988 = vadd.f32 0.0, %v2987
      %v2989 = vpop.f32.mrf.mxu0
      %v2990 = vadd.f32 0.0, %v2989
      %2991 = vmatmul.bf16.gmra.mxu0 %v454
      %v2992 = vpop.f32.mrf.mxu0
      %v2993 = vadd.f32 0.0, %v2992
      %v2994 = vpop.f32.mrf.mxu0
      %v2995 = vadd.f32 0.0, %v2994
      %2996 = vmatmul.bf16.gmra.mxu0 %v455
      %v2997 = vpop.f32.mrf.mxu0
      %v2998 = vadd.f32 0.0, %v2997
      %v2999 = vpop.f32.mrf.mxu0
      %v3000 = vadd.f32 0.0, %v2999
      %3001 = vmatmul.bf16.gmra.mxu0 %v456
      %v3002 = vpop.f32.mrf.mxu0
      %v3003 = vadd.f32 0.0, %v3002
      %v3004 = vpop.f32.mrf.mxu0
      %v3005 = vadd.f32 0.0, %v3004
      %3006 = vdwg.mxu0
      %v3007 = vadd.f32 %v2744, %v2880
      %v3008 = vadd.f32 %v2745, %v2883
      %v3009 = vadd.f32 %v2746, %v2885
      %v3010 = vadd.f32 %v2747, %v2888
      %v3011 = vadd.f32 %v2748, %v2890
      %v3012 = vadd.f32 %v2749, %v2893
      %v3013 = vadd.f32 %v2750, %v2895
      %v3014 = vadd.f32 %v2751, %v2898
      %v3015 = vadd.f32 %v2752, %v2900
      %v3016 = vadd.f32 %v2753, %v2903
      %v3017 = vadd.f32 %v2754, %v2905
      %v3018 = vadd.f32 %v2755, %v2908
      %v3019 = vadd.f32 %v2756, %v2910
      %v3020 = vadd.f32 %v2757, %v2913
      %v3021 = vadd.f32 %v2758, %v2915
      %v3022 = vadd.f32 %v2759, %v2918
      %v3023 = vadd.f32 %v2760, %v2920
      %v3024 = vadd.f32 %v2761, %v2923
      %v3025 = vadd.f32 %v2762, %v2925
      %v3026 = vadd.f32 %v2763, %v2928
      %v3027 = vadd.f32 %v2764, %v2930
      %v3028 = vadd.f32 %v2765, %v2933
      %v3029 = vadd.f32 %v2766, %v2935
      %v3030 = vadd.f32 %v2767, %v2938
      %v3031 = vadd.f32 %v2768, %v2940
      %v3032 = vadd.f32 %v2769, %v2943
      %v3033 = vadd.f32 %v2770, %v2945
      %v3034 = vadd.f32 %v2771, %v2948
      %v3035 = vadd.f32 %v2772, %v2950
      %v3036 = vadd.f32 %v2773, %v2953
      %v3037 = vadd.f32 %v2774, %v2955
      %v3038 = vadd.f32 %v2775, %v2958
      %v3039 = vadd.f32 %v2776, %v2960
      %v3040 = vadd.f32 %v2777, %v2963
      %v3041 = vadd.f32 %v2778, %v2965
      %v3042 = vadd.f32 %v2779, %v2968
      %v3043 = vadd.f32 %v2780, %v2970
      %v3044 = vadd.f32 %v2781, %v2973
      %v3045 = vadd.f32 %v2782, %v2975
      %v3046 = vadd.f32 %v2783, %v2978
      %v3047 = vadd.f32 %v2784, %v2980
      %v3048 = vadd.f32 %v2785, %v2983
      %v3049 = vadd.f32 %v2786, %v2985
      %v3050 = vadd.f32 %v2787, %v2988
      %v3051 = vadd.f32 %v2788, %v2990
      %v3052 = vadd.f32 %v2789, %v2993
      %v3053 = vadd.f32 %v2790, %v2995
      %v3054 = vadd.f32 %v2791, %v2998
      %v3055 = vadd.f32 %v2792, %v3000
      %v3056 = vadd.f32 %v2793, %v3003
      %v3057 = vadd.f32 %v2794, %v3005
      %v3058 = vadd.f32 %v2795, %v2873
      %v3059 = vadd.f32 %v2796, %v2875
      %v3060 = vadd.f32 %v2797, %v2878
      %s3061 = scalar_lea.vmem %s1, 512
      %v3062 = vld [vmem:[%s3061] sm:$0xf]
      %v3063 = vld [vmem:[%s3061 + $0x4] sm:$0xf]
      %v3064 = vld [vmem:[%s3061 + $0x8] sm:$0xf]
      %v3065 = vld [vmem:[%s3061 + $0xc] sm:$0xf]
      %v3066 = vld [vmem:[%s3061 + $0x10] sm:$0xf]
      %v3067 = vld [vmem:[%s3061 + $0x14] sm:$0xf]
      %v3068 = vld [vmem:[%s3061 + $0x18] sm:$0xf]
      %v3069 = vld [vmem:[%s3061 + $0x1c] sm:$0xf]
      %v3070 = vld [vmem:[%s3061 + $0x20] sm:$0xf]
      %v3071 = vld [vmem:[%s3061 + $0x24] sm:$0xf]
      %v3072 = vld [vmem:[%s3061 + $0x28] sm:$0xf]
      %v3073 = vld [vmem:[%s3061 + $0x2c] sm:$0xf]
      %v3074 = vld [vmem:[%s3061 + $0x30] sm:$0xf]
      %v3075 = vld [vmem:[%s3061 + $0x34] sm:$0xf]
      %v3076 = vld [vmem:[%s3061 + $0x38] sm:$0xf]
      %v3077 = vld [vmem:[%s3061 + $0x3c] sm:$0xf]
      %v3094 = vunpack.c.l.b16 %v3062
      %v3095 = vunpack.c.l.b16 %v3063
      %v3096 = vunpack.c.l.b16 %v3064
      %v3097 = vunpack.c.l.b16 %v3065
      %v3098 = vunpack.c.l.b16 %v3066
      %v3099 = vunpack.c.l.b16 %v3067
      %v3100 = vunpack.c.l.b16 %v3068
      %v3101 = vunpack.c.l.b16 %v3069
      %v3102 = vunpack.c.l.b16 %v3070
      %v3103 = vunpack.c.l.b16 %v3071
      %v3104 = vunpack.c.l.b16 %v3072
      %v3105 = vunpack.c.l.b16 %v3073
      %v3106 = vunpack.c.l.b16 %v3074
      %v3107 = vunpack.c.l.b16 %v3075
      %v3108 = vunpack.c.l.b16 %v3076
      %v3109 = vunpack.c.l.b16 %v3077
      %v3110 = vpack.c.b16 %v3095, %v3094
      %v3111 = vpack.c.b16 %v3097, %v3096
      %v3112 = vpack.c.b16 %v3099, %v3098
      %v3113 = vpack.c.b16 %v3101, %v3100
      %v3114 = vpack.c.b16 %v3103, %v3102
      %v3115 = vpack.c.b16 %v3105, %v3104
      %v3116 = vpack.c.b16 %v3107, %v3106
      %v3117 = vpack.c.b16 %v3109, %v3108
      %3126 = vmatpush.bf16.msra.mxu0 %v3117
      %3127 = vmatpush.bf16.msra.mxu0 %v3116
      %3128 = vmatpush.bf16.msra.mxu0 %v3115
      %3129 = vmatpush.bf16.msra.mxu0 %v3114
      %3130 = vmatpush.bf16.msra.mxu0 %v3113
      %3131 = vmatpush.bf16.msra.mxu0 %v3112
      %3132 = vmatpush.bf16.msra.mxu0 %v3111
      %3133 = vmatpush.bf16.msra.mxu0 %v3110
      %3134 = vmatmul.bf16.gmra.mxu0 %v430
      %v3135 = vpop.f32.mrf.mxu0
      %v3136 = vadd.f32 0.0, %v3135
      %v3137 = vpop.f32.mrf.mxu0
      %v3138 = vadd.f32 0.0, %v3137
      %3139 = vmatmul.bf16.gmra.mxu0 %v431
      %v3140 = vpop.f32.mrf.mxu0
      %v3141 = vadd.f32 0.0, %v3140
      %v3142 = vpop.f32.mrf.mxu0
      %v3143 = vadd.f32 0.0, %v3142
      %3144 = vmatmul.bf16.gmra.mxu0 %v432
      %v3145 = vpop.f32.mrf.mxu0
      %v3146 = vadd.f32 0.0, %v3145
      %v3147 = vpop.f32.mrf.mxu0
      %v3148 = vadd.f32 0.0, %v3147
      %3149 = vmatmul.bf16.gmra.mxu0 %v433
      %v3150 = vpop.f32.mrf.mxu0
      %v3151 = vadd.f32 0.0, %v3150
      %v3152 = vpop.f32.mrf.mxu0
      %v3153 = vadd.f32 0.0, %v3152
      %3154 = vmatmul.bf16.gmra.mxu0 %v434
      %v3155 = vpop.f32.mrf.mxu0
      %v3156 = vadd.f32 0.0, %v3155
      %v3157 = vpop.f32.mrf.mxu0
      %v3158 = vadd.f32 0.0, %v3157
      %3159 = vmatmul.bf16.gmra.mxu0 %v435
      %v3160 = vpop.f32.mrf.mxu0
      %v3161 = vadd.f32 0.0, %v3160
      %v3162 = vpop.f32.mrf.mxu0
      %v3163 = vadd.f32 0.0, %v3162
      %3164 = vmatmul.bf16.gmra.mxu0 %v436
      %v3165 = vpop.f32.mrf.mxu0
      %v3166 = vadd.f32 0.0, %v3165
      %v3167 = vpop.f32.mrf.mxu0
      %v3168 = vadd.f32 0.0, %v3167
      %3169 = vmatmul.bf16.gmra.mxu0 %v437
      %v3170 = vpop.f32.mrf.mxu0
      %v3171 = vadd.f32 0.0, %v3170
      %v3172 = vpop.f32.mrf.mxu0
      %v3173 = vadd.f32 0.0, %v3172
      %3174 = vmatmul.bf16.gmra.mxu0 %v438
      %v3175 = vpop.f32.mrf.mxu0
      %v3176 = vadd.f32 0.0, %v3175
      %v3177 = vpop.f32.mrf.mxu0
      %v3178 = vadd.f32 0.0, %v3177
      %3179 = vmatmul.bf16.gmra.mxu0 %v439
      %v3180 = vpop.f32.mrf.mxu0
      %v3181 = vadd.f32 0.0, %v3180
      %v3182 = vpop.f32.mrf.mxu0
      %v3183 = vadd.f32 0.0, %v3182
      %3184 = vmatmul.bf16.gmra.mxu0 %v440
      %v3185 = vpop.f32.mrf.mxu0
      %v3186 = vadd.f32 0.0, %v3185
      %v3187 = vpop.f32.mrf.mxu0
      %v3188 = vadd.f32 0.0, %v3187
      %3189 = vmatmul.bf16.gmra.mxu0 %v441
      %v3190 = vpop.f32.mrf.mxu0
      %v3191 = vadd.f32 0.0, %v3190
      %v3192 = vpop.f32.mrf.mxu0
      %v3193 = vadd.f32 0.0, %v3192
      %3194 = vmatmul.bf16.gmra.mxu0 %v442
      %v3195 = vpop.f32.mrf.mxu0
      %v3196 = vadd.f32 0.0, %v3195
      %v3197 = vpop.f32.mrf.mxu0
      %v3198 = vadd.f32 0.0, %v3197
      %3199 = vmatmul.bf16.gmra.mxu0 %v443
      %v3200 = vpop.f32.mrf.mxu0
      %v3201 = vadd.f32 0.0, %v3200
      %v3202 = vpop.f32.mrf.mxu0
      %v3203 = vadd.f32 0.0, %v3202
      %3204 = vmatmul.bf16.gmra.mxu0 %v444
      %v3205 = vpop.f32.mrf.mxu0
      %v3206 = vadd.f32 0.0, %v3205
      %v3207 = vpop.f32.mrf.mxu0
      %v3208 = vadd.f32 0.0, %v3207
      %3209 = vmatmul.bf16.gmra.mxu0 %v445
      %v3210 = vpop.f32.mrf.mxu0
      %v3211 = vadd.f32 0.0, %v3210
      %v3212 = vpop.f32.mrf.mxu0
      %v3213 = vadd.f32 0.0, %v3212
      %3214 = vmatmul.bf16.gmra.mxu0 %v446
      %v3215 = vpop.f32.mrf.mxu0
      %v3216 = vadd.f32 0.0, %v3215
      %v3217 = vpop.f32.mrf.mxu0
      %v3218 = vadd.f32 0.0, %v3217
      %3219 = vmatmul.bf16.gmra.mxu0 %v447
      %v3220 = vpop.f32.mrf.mxu0
      %v3221 = vadd.f32 0.0, %v3220
      %v3222 = vpop.f32.mrf.mxu0
      %v3223 = vadd.f32 0.0, %v3222
      %3224 = vmatmul.bf16.gmra.mxu0 %v448
      %v3225 = vpop.f32.mrf.mxu0
      %v3226 = vadd.f32 0.0, %v3225
      %v3227 = vpop.f32.mrf.mxu0
      %v3228 = vadd.f32 0.0, %v3227
      %3229 = vmatmul.bf16.gmra.mxu0 %v449
      %v3230 = vpop.f32.mrf.mxu0
      %v3231 = vadd.f32 0.0, %v3230
      %v3232 = vpop.f32.mrf.mxu0
      %v3233 = vadd.f32 0.0, %v3232
      %3234 = vmatmul.bf16.gmra.mxu0 %v450
      %v3235 = vpop.f32.mrf.mxu0
      %v3236 = vadd.f32 0.0, %v3235
      %v3237 = vpop.f32.mrf.mxu0
      %v3238 = vadd.f32 0.0, %v3237
      %3239 = vmatmul.bf16.gmra.mxu0 %v451
      %v3240 = vpop.f32.mrf.mxu0
      %v3241 = vadd.f32 0.0, %v3240
      %v3242 = vpop.f32.mrf.mxu0
      %v3243 = vadd.f32 0.0, %v3242
      %3244 = vmatmul.bf16.gmra.mxu0 %v452
      %v3245 = vpop.f32.mrf.mxu0
      %v3246 = vadd.f32 0.0, %v3245
      %v3247 = vpop.f32.mrf.mxu0
      %v3248 = vadd.f32 0.0, %v3247
      %3249 = vmatmul.bf16.gmra.mxu0 %v453
      %v3250 = vpop.f32.mrf.mxu0
      %v3251 = vadd.f32 0.0, %v3250
      %v3252 = vpop.f32.mrf.mxu0
      %v3253 = vadd.f32 0.0, %v3252
      %3254 = vmatmul.bf16.gmra.mxu0 %v454
      %v3255 = vpop.f32.mrf.mxu0
      %v3256 = vadd.f32 0.0, %v3255
      %v3257 = vpop.f32.mrf.mxu0
      %v3258 = vadd.f32 0.0, %v3257
      %3259 = vmatmul.bf16.gmra.mxu0 %v455
      %v3260 = vpop.f32.mrf.mxu0
      %v3261 = vadd.f32 0.0, %v3260
      %v3262 = vpop.f32.mrf.mxu0
      %v3263 = vadd.f32 0.0, %v3262
      %3264 = vmatmul.bf16.gmra.mxu0 %v456
      %v3265 = vpop.f32.mrf.mxu0
      %v3266 = vadd.f32 0.0, %v3265
      %v3267 = vpop.f32.mrf.mxu0
      %v3268 = vadd.f32 0.0, %v3267
      %3269 = vdwg.mxu0
      %v3270 = vrot.slane %v3136, 1
      %v3271 = vrot.slane %v3138, 1
      %v3272 = vrot.slane %v3141, 1
      %v3273 = vrot.slane %v3143, 1
      %v3274 = vrot.slane %v3146, 1
      %v3275 = vrot.slane %v3148, 1
      %v3276 = vrot.slane %v3151, 1
      %v3277 = vrot.slane %v3153, 1
      %v3278 = vrot.slane %v3156, 1
      %v3279 = vrot.slane %v3158, 1
      %v3280 = vrot.slane %v3161, 1
      %v3281 = vrot.slane %v3163, 1
      %v3282 = vrot.slane %v3166, 1
      %v3283 = vrot.slane %v3168, 1
      %v3284 = vrot.slane %v3171, 1
      %v3285 = vrot.slane %v3173, 1
      %v3286 = vrot.slane %v3176, 1
      %v3287 = vrot.slane %v3178, 1
      %v3288 = vrot.slane %v3181, 1
      %v3289 = vrot.slane %v3183, 1
      %v3290 = vrot.slane %v3186, 1
      %v3291 = vrot.slane %v3188, 1
      %v3292 = vrot.slane %v3191, 1
      %v3293 = vrot.slane %v3193, 1
      %v3294 = vrot.slane %v3196, 1
      %v3295 = vrot.slane %v3198, 1
      %v3296 = vrot.slane %v3201, 1
      %v3297 = vrot.slane %v3203, 1
      %v3298 = vrot.slane %v3206, 1
      %v3299 = vrot.slane %v3208, 1
      %v3300 = vrot.slane %v3211, 1
      %v3301 = vrot.slane %v3213, 1
      %v3302 = vrot.slane %v3216, 1
      %v3303 = vrot.slane %v3218, 1
      %v3304 = vrot.slane %v3221, 1
      %v3305 = vrot.slane %v3223, 1
      %v3306 = vrot.slane %v3226, 1
      %v3307 = vrot.slane %v3228, 1
      %v3308 = vrot.slane %v3231, 1
      %v3309 = vrot.slane %v3233, 1
      %v3310 = vrot.slane %v3236, 1
      %v3311 = vrot.slane %v3238, 1
      %v3312 = vrot.slane %v3241, 1
      %v3313 = vrot.slane %v3243, 1
      %v3314 = vrot.slane %v3246, 1
      %v3315 = vrot.slane %v3248, 1
      %v3316 = vrot.slane %v3251, 1
      %v3317 = vrot.slane %v3253, 1
      %v3318 = vrot.slane %v3256, 1
      %v3319 = vrot.slane %v3258, 1
      %v3320 = vrot.slane %v3261, 1
      %v3321 = vrot.slane %v3263, 1
      %v3322 = vrot.slane %v3266, 1
      %v3323 = vrot.slane %v3268, 1
      %v3324 = vsel %vm1313, %v3322, %v3323
      %v3325 = vsel %vm1313, %v3321, %v3322
      %v3326 = vsel %vm1313, %v3320, %v3321
      %v3327 = vsel %vm1313, %v3319, %v3320
      %v3328 = vsel %vm1313, %v3318, %v3319
      %v3329 = vsel %vm1313, %v3317, %v3318
      %v3330 = vsel %vm1313, %v3316, %v3317
      %v3331 = vsel %vm1313, %v3315, %v3316
      %v3332 = vsel %vm1313, %v3314, %v3315
      %v3333 = vsel %vm1313, %v3313, %v3314
      %v3334 = vsel %vm1313, %v3312, %v3313
      %v3335 = vsel %vm1313, %v3311, %v3312
      %v3336 = vsel %vm1313, %v3310, %v3311
      %v3337 = vsel %vm1313, %v3309, %v3310
      %v3338 = vsel %vm1313, %v3308, %v3309
      %v3339 = vsel %vm1313, %v3307, %v3308
      %v3340 = vsel %vm1313, %v3306, %v3307
      %v3341 = vsel %vm1313, %v3305, %v3306
      %v3342 = vsel %vm1313, %v3304, %v3305
      %v3343 = vsel %vm1313, %v3303, %v3304
      %v3344 = vsel %vm1313, %v3302, %v3303
      %v3345 = vsel %vm1313, %v3301, %v3302
      %v3346 = vsel %vm1313, %v3300, %v3301
      %v3347 = vsel %vm1313, %v3299, %v3300
      %v3348 = vsel %vm1313, %v3298, %v3299
      %v3349 = vsel %vm1313, %v3297, %v3298
      %v3350 = vsel %vm1313, %v3296, %v3297
      %v3351 = vsel %vm1313, %v3295, %v3296
      %v3352 = vsel %vm1313, %v3294, %v3295
      %v3353 = vsel %vm1313, %v3293, %v3294
      %v3354 = vsel %vm1313, %v3292, %v3293
      %v3355 = vsel %vm1313, %v3291, %v3292
      %v3356 = vsel %vm1313, %v3290, %v3291
      %v3357 = vsel %vm1313, %v3289, %v3290
      %v3358 = vsel %vm1313, %v3288, %v3289
      %v3359 = vsel %vm1313, %v3287, %v3288
      %v3360 = vsel %vm1313, %v3286, %v3287
      %v3361 = vsel %vm1313, %v3285, %v3286
      %v3362 = vsel %vm1313, %v3284, %v3285
      %v3363 = vsel %vm1313, %v3283, %v3284
      %v3364 = vsel %vm1313, %v3282, %v3283
      %v3365 = vsel %vm1313, %v3281, %v3282
      %v3366 = vsel %vm1313, %v3280, %v3281
      %v3367 = vsel %vm1313, %v3279, %v3280
      %v3368 = vsel %vm1313, %v3278, %v3279
      %v3369 = vsel %vm1313, %v3277, %v3278
      %v3370 = vsel %vm1313, %v3276, %v3277
      %v3371 = vsel %vm1313, %v3275, %v3276
      %v3372 = vsel %vm1313, %v3274, %v3275
      %v3373 = vsel %vm1313, %v3273, %v3274
      %v3374 = vsel %vm1313, %v3272, %v3273
      %v3375 = vsel %vm1313, %v3271, %v3272
      %v3376 = vsel %vm1313, %v3270, %v3271
      %v3377 = vsel %vm1313, %v3323, %v3270
      %v3378 = vadd.f32 %v3007, %v3373
      %v3379 = vadd.f32 %v3008, %v3372
      %v3380 = vadd.f32 %v3009, %v3371
      %v3381 = vadd.f32 %v3010, %v3370
      %v3382 = vadd.f32 %v3011, %v3369
      %v3383 = vadd.f32 %v3012, %v3368
      %v3384 = vadd.f32 %v3013, %v3367
      %v3385 = vadd.f32 %v3014, %v3366
      %v3386 = vadd.f32 %v3015, %v3365
      %v3387 = vadd.f32 %v3016, %v3364
      %v3388 = vadd.f32 %v3017, %v3363
      %v3389 = vadd.f32 %v3018, %v3362
      %v3390 = vadd.f32 %v3019, %v3361
      %v3391 = vadd.f32 %v3020, %v3360
      %v3392 = vadd.f32 %v3021, %v3359
      %v3393 = vadd.f32 %v3022, %v3358
      %v3394 = vadd.f32 %v3023, %v3357
      %v3395 = vadd.f32 %v3024, %v3356
      %v3396 = vadd.f32 %v3025, %v3355
      %v3397 = vadd.f32 %v3026, %v3354
      %v3398 = vadd.f32 %v3027, %v3353
      %v3399 = vadd.f32 %v3028, %v3352
      %v3400 = vadd.f32 %v3029, %v3351
      %v3401 = vadd.f32 %v3030, %v3350
      %v3402 = vadd.f32 %v3031, %v3349
      %v3403 = vadd.f32 %v3032, %v3348
      %v3404 = vadd.f32 %v3033, %v3347
      %v3405 = vadd.f32 %v3034, %v3346
      %v3406 = vadd.f32 %v3035, %v3345
      %v3407 = vadd.f32 %v3036, %v3344
      %v3408 = vadd.f32 %v3037, %v3343
      %v3409 = vadd.f32 %v3038, %v3342
      %v3410 = vadd.f32 %v3039, %v3341
      %v3411 = vadd.f32 %v3040, %v3340
      %v3412 = vadd.f32 %v3041, %v3339
      %v3413 = vadd.f32 %v3042, %v3338
      %v3414 = vadd.f32 %v3043, %v3337
      %v3415 = vadd.f32 %v3044, %v3336
      %v3416 = vadd.f32 %v3045, %v3335
      %v3417 = vadd.f32 %v3046, %v3334
      %v3418 = vadd.f32 %v3047, %v3333
      %v3419 = vadd.f32 %v3048, %v3332
      %v3420 = vadd.f32 %v3049, %v3331
      %v3421 = vadd.f32 %v3050, %v3330
      %v3422 = vadd.f32 %v3051, %v3329
      %v3423 = vadd.f32 %v3052, %v3328
      %v3424 = vadd.f32 %v3053, %v3327
      %v3425 = vadd.f32 %v3054, %v3326
      %v3426 = vadd.f32 %v3055, %v3325
      %v3427 = vadd.f32 %v3056, %v3324
      %v3428 = vadd.f32 %v3057, %v3377
      %v3429 = vadd.f32 %v3058, %v3376
      %v3430 = vadd.f32 %v3059, %v3375
      %v3431 = vadd.f32 %v3060, %v3374
      %v3432 = vld [vmem:[%s3] sm:$0x1]
      %v3434 = vperm.slane %v3432, 0
      %v3436 = vadd.f32 %v3378, %v3434
      %v3437 = vadd.f32 %v3379, %v3434
      %v3438 = vadd.f32 %v3380, %v3434
      %v3439 = vadd.f32 %v3381, %v3434
      %v3440 = vadd.f32 %v3382, %v3434
      %v3441 = vadd.f32 %v3383, %v3434
      %v3442 = vadd.f32 %v3384, %v3434
      %v3443 = vadd.f32 %v3385, %v3434
      %v3444 = vadd.f32 %v3386, %v3434
      %v3445 = vadd.f32 %v3387, %v3434
      %v3446 = vadd.f32 %v3388, %v3434
      %v3447 = vadd.f32 %v3389, %v3434
      %v3448 = vadd.f32 %v3390, %v3434
      %v3449 = vadd.f32 %v3391, %v3434
      %v3450 = vadd.f32 %v3392, %v3434
      %v3451 = vadd.f32 %v3393, %v3434
      %v3452 = vadd.f32 %v3394, %v3434
      %v3453 = vadd.f32 %v3395, %v3434
      %v3454 = vadd.f32 %v3396, %v3434
      %v3455 = vadd.f32 %v3397, %v3434
      %v3456 = vadd.f32 %v3398, %v3434
      %v3457 = vadd.f32 %v3399, %v3434
      %v3458 = vadd.f32 %v3400, %v3434
      %v3459 = vadd.f32 %v3401, %v3434
      %v3460 = vadd.f32 %v3402, %v3434
      %v3461 = vadd.f32 %v3403, %v3434
      %v3462 = vadd.f32 %v3404, %v3434
      %v3463 = vadd.f32 %v3405, %v3434
      %v3464 = vadd.f32 %v3406, %v3434
      %v3465 = vadd.f32 %v3407, %v3434
      %v3466 = vadd.f32 %v3408, %v3434
      %v3467 = vadd.f32 %v3409, %v3434
      %v3468 = vadd.f32 %v3410, %v3434
      %v3469 = vadd.f32 %v3411, %v3434
      %v3470 = vadd.f32 %v3412, %v3434
      %v3471 = vadd.f32 %v3413, %v3434
      %v3472 = vadd.f32 %v3414, %v3434
      %v3473 = vadd.f32 %v3415, %v3434
      %v3474 = vadd.f32 %v3416, %v3434
      %v3475 = vadd.f32 %v3417, %v3434
      %v3476 = vadd.f32 %v3418, %v3434
      %v3477 = vadd.f32 %v3419, %v3434
      %v3478 = vadd.f32 %v3420, %v3434
      %v3479 = vadd.f32 %v3421, %v3434
      %v3480 = vadd.f32 %v3422, %v3434
      %v3481 = vadd.f32 %v3423, %v3434
      %v3482 = vadd.f32 %v3424, %v3434
      %v3483 = vadd.f32 %v3425, %v3434
      %v3484 = vadd.f32 %v3426, %v3434
      %v3485 = vadd.f32 %v3427, %v3434
      %v3486 = vadd.f32 %v3428, %v3434
      %v3487 = vadd.f32 %v3429, %v3434
      %v3488 = vadd.f32 %v3430, %v3434
      %v3489 = vadd.f32 %v3431, %v3434
      %v3490 = vmax.f32 %v3436, 0.0
      %v3491 = vmax.f32 %v3437, 0.0
      %v3492 = vmax.f32 %v3438, 0.0
      %v3493 = vmax.f32 %v3439, 0.0
      %v3494 = vmax.f32 %v3440, 0.0
      %v3495 = vmax.f32 %v3441, 0.0
      %v3496 = vmax.f32 %v3442, 0.0
      %v3497 = vmax.f32 %v3443, 0.0
      %v3498 = vmax.f32 %v3444, 0.0
      %v3499 = vmax.f32 %v3445, 0.0
      %v3500 = vmax.f32 %v3446, 0.0
      %v3501 = vmax.f32 %v3447, 0.0
      %v3502 = vmax.f32 %v3448, 0.0
      %v3503 = vmax.f32 %v3449, 0.0
      %v3504 = vmax.f32 %v3450, 0.0
      %v3505 = vmax.f32 %v3451, 0.0
      %v3506 = vmax.f32 %v3452, 0.0
      %v3507 = vmax.f32 %v3453, 0.0
      %v3508 = vmax.f32 %v3454, 0.0
      %v3509 = vmax.f32 %v3455, 0.0
      %v3510 = vmax.f32 %v3456, 0.0
      %v3511 = vmax.f32 %v3457, 0.0
      %v3512 = vmax.f32 %v3458, 0.0
      %v3513 = vmax.f32 %v3459, 0.0
      %v3514 = vmax.f32 %v3460, 0.0
      %v3515 = vmax.f32 %v3461, 0.0
      %v3516 = vmax.f32 %v3462, 0.0
      %v3517 = vmax.f32 %v3463, 0.0
      %v3518 = vmax.f32 %v3464, 0.0
      %v3519 = vmax.f32 %v3465, 0.0
      %v3520 = vmax.f32 %v3466, 0.0
      %v3521 = vmax.f32 %v3467, 0.0
      %v3522 = vmax.f32 %v3468, 0.0
      %v3523 = vmax.f32 %v3469, 0.0
      %v3524 = vmax.f32 %v3470, 0.0
      %v3525 = vmax.f32 %v3471, 0.0
      %v3526 = vmax.f32 %v3472, 0.0
      %v3527 = vmax.f32 %v3473, 0.0
      %v3528 = vmax.f32 %v3474, 0.0
      %v3529 = vmax.f32 %v3475, 0.0
      %v3530 = vmax.f32 %v3476, 0.0
      %v3531 = vmax.f32 %v3477, 0.0
      %v3532 = vmax.f32 %v3478, 0.0
      %v3533 = vmax.f32 %v3479, 0.0
      %v3534 = vmax.f32 %v3480, 0.0
      %v3535 = vmax.f32 %v3481, 0.0
      %v3536 = vmax.f32 %v3482, 0.0
      %v3537 = vmax.f32 %v3483, 0.0
      %v3538 = vmax.f32 %v3484, 0.0
      %v3539 = vmax.f32 %v3485, 0.0
      %v3540 = vmax.f32 %v3486, 0.0
      %v3541 = vmax.f32 %v3487, 0.0
      %v3542 = vmax.f32 %v3488, 0.0
      %v3543 = vmax.f32 %v3489, 0.0
      %v3544 = vld [vmem:[%s5] sm:$0xff]
      %v3545 = vld [vmem:[%s5 + $0x8] sm:$0xff]
      %v3546 = vld [vmem:[%s5 + $0x10] sm:$0xff]
      %v3547 = vld [vmem:[%s5 + $0x18] sm:$0xff]
      %v3548 = vld [vmem:[%s5 + $0x20] sm:$0xff]
      %v3549 = vld [vmem:[%s5 + $0x28] sm:$0xff]
      %v3550 = vld [vmem:[%s5 + $0x30] sm:$0xff]
      %v3551 = vld [vmem:[%s5 + $0x38] sm:$0xff]
      %v3552 = vld [vmem:[%s5 + $0x40] sm:$0xff]
      %v3553 = vld [vmem:[%s5 + $0x48] sm:$0xff]
      %v3554 = vld [vmem:[%s5 + $0x50] sm:$0xff]
      %v3555 = vld [vmem:[%s5 + $0x58] sm:$0xff]
      %v3556 = vld [vmem:[%s5 + $0x60] sm:$0xff]
      %v3557 = vld [vmem:[%s5 + $0x68] sm:$0xff]
      %v3558 = vld [vmem:[%s5 + $0x70] sm:$0xff]
      %v3559 = vld [vmem:[%s5 + $0x78] sm:$0xff]
      %v3560 = vld [vmem:[%s5 + $0x80] sm:$0xff]
      %v3561 = vld [vmem:[%s5 + $0x88] sm:$0xff]
      %v3562 = vld [vmem:[%s5 + $0x90] sm:$0xff]
      %v3563 = vld [vmem:[%s5 + $0x98] sm:$0xff]
      %v3564 = vld [vmem:[%s5 + $0xa0] sm:$0xff]
      %v3565 = vld [vmem:[%s5 + $0xa8] sm:$0xff]
      %v3566 = vld [vmem:[%s5 + $0xb0] sm:$0xff]
      %v3567 = vld [vmem:[%s5 + $0xb8] sm:$0xff]
      %v3568 = vld [vmem:[%s5 + $0xc0] sm:$0xff]
      %v3569 = vld [vmem:[%s5 + $0xc8] sm:$0xff]
      %v3570 = vld [vmem:[%s5 + $0xd0] sm:$0xff]
      %v3571 = vld [vmem:[%s5 + $0xd8] sm:$0xff]
      %v3572 = vld [vmem:[%s5 + $0xe0] sm:$0xff]
      %v3573 = vld [vmem:[%s5 + $0xe8] sm:$0xff]
      %v3574 = vld [vmem:[%s5 + $0xf0] sm:$0xff]
      %v3575 = vld [vmem:[%s5 + $0xf8] sm:$0xff]
      %v3576 = vld [vmem:[%s5 + $0x100] sm:$0xff]
      %v3577 = vld [vmem:[%s5 + $0x108] sm:$0xff]
      %v3578 = vld [vmem:[%s5 + $0x110] sm:$0xff]
      %v3579 = vld [vmem:[%s5 + $0x118] sm:$0xff]
      %v3580 = vld [vmem:[%s5 + $0x120] sm:$0xff]
      %v3581 = vld [vmem:[%s5 + $0x128] sm:$0xff]
      %v3582 = vld [vmem:[%s5 + $0x130] sm:$0xff]
      %v3583 = vld [vmem:[%s5 + $0x138] sm:$0xff]
      %v3584 = vld [vmem:[%s5 + $0x140] sm:$0xff]
      %v3585 = vld [vmem:[%s5 + $0x148] sm:$0xff]
      %v3586 = vld [vmem:[%s5 + $0x150] sm:$0xff]
      %v3587 = vld [vmem:[%s5 + $0x158] sm:$0xff]
      %v3588 = vld [vmem:[%s5 + $0x160] sm:$0xff]
      %v3589 = vld [vmem:[%s5 + $0x168] sm:$0xff]
      %v3590 = vld [vmem:[%s5 + $0x170] sm:$0xff]
      %v3591 = vld [vmem:[%s5 + $0x178] sm:$0xff]
      %v3592 = vld [vmem:[%s5 + $0x180] sm:$0xff]
      %v3593 = vld [vmem:[%s5 + $0x188] sm:$0xff]
      %v3594 = vld [vmem:[%s5 + $0x190] sm:$0xff]
      %v3595 = vld [vmem:[%s5 + $0x198] sm:$0xff]
      %v3596 = vld [vmem:[%s5 + $0x1a0] sm:$0xff]
      %v3597 = vld [vmem:[%s5 + $0x1a8] sm:$0xff]
      %v3598 = vmul.f32 %v3490, %v3544
      %v3599 = vmul.f32 %v3491, %v3545
      %v3600 = vmul.f32 %v3492, %v3546
      %v3601 = vmul.f32 %v3493, %v3547
      %v3602 = vmul.f32 %v3494, %v3548
      %v3603 = vmul.f32 %v3495, %v3549
      %v3604 = vmul.f32 %v3496, %v3550
      %v3605 = vmul.f32 %v3497, %v3551
      %v3606 = vmul.f32 %v3498, %v3552
      %v3607 = vmul.f32 %v3499, %v3553
      %v3608 = vmul.f32 %v3500, %v3554
      %v3609 = vmul.f32 %v3501, %v3555
      %v3610 = vmul.f32 %v3502, %v3556
      %v3611 = vmul.f32 %v3503, %v3557
      %v3612 = vmul.f32 %v3504, %v3558
      %v3613 = vmul.f32 %v3505, %v3559
      %v3614 = vmul.f32 %v3506, %v3560
      %v3615 = vmul.f32 %v3507, %v3561
      %v3616 = vmul.f32 %v3508, %v3562
      %v3617 = vmul.f32 %v3509, %v3563
      %v3618 = vmul.f32 %v3510, %v3564
      %v3619 = vmul.f32 %v3511, %v3565
      %v3620 = vmul.f32 %v3512, %v3566
      %v3621 = vmul.f32 %v3513, %v3567
      %v3622 = vmul.f32 %v3514, %v3568
      %v3623 = vmul.f32 %v3515, %v3569
      %v3624 = vmul.f32 %v3516, %v3570
      %v3625 = vmul.f32 %v3517, %v3571
      %v3626 = vmul.f32 %v3518, %v3572
      %v3627 = vmul.f32 %v3519, %v3573
      %v3628 = vmul.f32 %v3520, %v3574
      %v3629 = vmul.f32 %v3521, %v3575
      %v3630 = vmul.f32 %v3522, %v3576
      %v3631 = vmul.f32 %v3523, %v3577
      %v3632 = vmul.f32 %v3524, %v3578
      %v3633 = vmul.f32 %v3525, %v3579
      %v3634 = vmul.f32 %v3526, %v3580
      %v3635 = vmul.f32 %v3527, %v3581
      %v3636 = vmul.f32 %v3528, %v3582
      %v3637 = vmul.f32 %v3529, %v3583
      %v3638 = vmul.f32 %v3530, %v3584
      %v3639 = vmul.f32 %v3531, %v3585
      %v3640 = vmul.f32 %v3532, %v3586
      %v3641 = vmul.f32 %v3533, %v3587
      %v3642 = vmul.f32 %v3534, %v3588
      %v3643 = vmul.f32 %v3535, %v3589
      %v3644 = vmul.f32 %v3536, %v3590
      %v3645 = vmul.f32 %v3537, %v3591
      %v3646 = vmul.f32 %v3538, %v3592
      %v3647 = vmul.f32 %v3539, %v3593
      %v3648 = vmul.f32 %v3540, %v3594
      %v3649 = vmul.f32 %v3541, %v3595
      %v3650 = vmul.f32 %v3542, %v3596
      %v3651 = vmul.f32 %v3543, %v3597
      %v3652 = vpack.c.bf16 %v3598, %v3598
      %v3653 = vpack.c.bf16 %v3599, %v3599
      %v3654 = vpack.c.bf16 %v3600, %v3600
      %v3655 = vpack.c.bf16 %v3601, %v3601
      %v3656 = vpack.c.bf16 %v3602, %v3602
      %v3657 = vpack.c.bf16 %v3603, %v3603
      %v3658 = vpack.c.bf16 %v3604, %v3604
      %v3659 = vpack.c.bf16 %v3605, %v3605
      %v3660 = vpack.c.bf16 %v3606, %v3606
      %v3661 = vpack.c.bf16 %v3607, %v3607
      %v3662 = vpack.c.bf16 %v3608, %v3608
      %v3663 = vpack.c.bf16 %v3609, %v3609
      %v3664 = vpack.c.bf16 %v3610, %v3610
      %v3665 = vpack.c.bf16 %v3611, %v3611
      %v3666 = vpack.c.bf16 %v3612, %v3612
      %v3667 = vpack.c.bf16 %v3613, %v3613
      %v3668 = vpack.c.bf16 %v3614, %v3614
      %v3669 = vpack.c.bf16 %v3615, %v3615
      %v3670 = vpack.c.bf16 %v3616, %v3616
      %v3671 = vpack.c.bf16 %v3617, %v3617
      %v3672 = vpack.c.bf16 %v3618, %v3618
      %v3673 = vpack.c.bf16 %v3619, %v3619
      %v3674 = vpack.c.bf16 %v3620, %v3620
      %v3675 = vpack.c.bf16 %v3621, %v3621
      %v3676 = vpack.c.bf16 %v3622, %v3622
      %v3677 = vpack.c.bf16 %v3623, %v3623
      %v3678 = vpack.c.bf16 %v3624, %v3624
      %v3679 = vpack.c.bf16 %v3625, %v3625
      %v3680 = vpack.c.bf16 %v3626, %v3626
      %v3681 = vpack.c.bf16 %v3627, %v3627
      %v3682 = vpack.c.bf16 %v3628, %v3628
      %v3683 = vpack.c.bf16 %v3629, %v3629
      %v3684 = vpack.c.bf16 %v3630, %v3630
      %v3685 = vpack.c.bf16 %v3631, %v3631
      %v3686 = vpack.c.bf16 %v3632, %v3632
      %v3687 = vpack.c.bf16 %v3633, %v3633
      %v3688 = vpack.c.bf16 %v3634, %v3634
      %v3689 = vpack.c.bf16 %v3635, %v3635
      %v3690 = vpack.c.bf16 %v3636, %v3636
      %v3691 = vpack.c.bf16 %v3637, %v3637
      %v3692 = vpack.c.bf16 %v3638, %v3638
      %v3693 = vpack.c.bf16 %v3639, %v3639
      %v3694 = vpack.c.bf16 %v3640, %v3640
      %v3695 = vpack.c.bf16 %v3641, %v3641
      %v3696 = vpack.c.bf16 %v3642, %v3642
      %v3697 = vpack.c.bf16 %v3643, %v3643
      %v3698 = vpack.c.bf16 %v3644, %v3644
      %v3699 = vpack.c.bf16 %v3645, %v3645
      %v3700 = vpack.c.bf16 %v3646, %v3646
      %v3701 = vpack.c.bf16 %v3647, %v3647
      %v3702 = vpack.c.bf16 %v3648, %v3648
      %v3703 = vpack.c.bf16 %v3649, %v3649
      %v3704 = vpack.c.bf16 %v3650, %v3650
      %v3705 = vpack.c.bf16 %v3651, %v3651
      %3706 = vst [vmem:[#allocation2] sm:$0xf] %v3652
      %3707 = vst [vmem:[#allocation2 + $0x4] sm:$0xf] %v3653
      %3708 = vst [vmem:[#allocation2 + $0x8] sm:$0xf] %v3654
      %3709 = vst [vmem:[#allocation2 + $0xc] sm:$0xf] %v3655
      %3710 = vst [vmem:[#allocation2 + $0x10] sm:$0xf] %v3656
      %3711 = vst [vmem:[#allocation2 + $0x14] sm:$0xf] %v3657
      %3712 = vst [vmem:[#allocation2 + $0x18] sm:$0xf] %v3658
      %3713 = vst [vmem:[#allocation2 + $0x1c] sm:$0xf] %v3659
      %3714 = vst [vmem:[#allocation2 + $0x20] sm:$0xf] %v3660
      %3715 = vst [vmem:[#allocation2 + $0x24] sm:$0xf] %v3661
      %3716 = vst [vmem:[#allocation2 + $0x28] sm:$0xf] %v3662
      %3717 = vst [vmem:[#allocation2 + $0x2c] sm:$0xf] %v3663
      %3718 = vst [vmem:[#allocation2 + $0x30] sm:$0xf] %v3664
      %3719 = vst [vmem:[#allocation2 + $0x34] sm:$0xf] %v3665
      %3720 = vst [vmem:[#allocation2 + $0x38] sm:$0xf] %v3666
      %3721 = vst [vmem:[#allocation2 + $0x3c] sm:$0xf] %v3667
      %3722 = vst [vmem:[#allocation2 + $0x40] sm:$0xf] %v3668
      %3723 = vst [vmem:[#allocation2 + $0x44] sm:$0xf] %v3669
      %3724 = vst [vmem:[#allocation2 + $0x48] sm:$0xf] %v3670
      %3725 = vst [vmem:[#allocation2 + $0x4c] sm:$0xf] %v3671
      %3726 = vst [vmem:[#allocation2 + $0x50] sm:$0xf] %v3672
      %3727 = vst [vmem:[#allocation2 + $0x54] sm:$0xf] %v3673
      %3728 = vst [vmem:[#allocation2 + $0x58] sm:$0xf] %v3674
      %3729 = vst [vmem:[#allocation2 + $0x5c] sm:$0xf] %v3675
      %3730 = vst [vmem:[#allocation2 + $0x60] sm:$0xf] %v3676
      %3731 = vst [vmem:[#allocation2 + $0x64] sm:$0xf] %v3677
      %3732 = vst [vmem:[#allocation2 + $0x68] sm:$0xf] %v3678
      %3733 = vst [vmem:[#allocation2 + $0x6c] sm:$0xf] %v3679
      %3734 = vst [vmem:[#allocation2 + $0x70] sm:$0xf] %v3680
      %3735 = vst [vmem:[#allocation2 + $0x74] sm:$0xf] %v3681
      %3736 = vst [vmem:[#allocation2 + $0x78] sm:$0xf] %v3682
      %3737 = vst [vmem:[#allocation2 + $0x7c] sm:$0xf] %v3683
      %3738 = vst [vmem:[#allocation2 + $0x80] sm:$0xf] %v3684
      %3739 = vst [vmem:[#allocation2 + $0x84] sm:$0xf] %v3685
      %3740 = vst [vmem:[#allocation2 + $0x88] sm:$0xf] %v3686
      %3741 = vst [vmem:[#allocation2 + $0x8c] sm:$0xf] %v3687
      %3742 = vst [vmem:[#allocation2 + $0x90] sm:$0xf] %v3688
      %3743 = vst [vmem:[#allocation2 + $0x94] sm:$0xf] %v3689
      %3744 = vst [vmem:[#allocation2 + $0x98] sm:$0xf] %v3690
      %3745 = vst [vmem:[#allocation2 + $0x9c] sm:$0xf] %v3691
      %3746 = vst [vmem:[#allocation2 + $0xa0] sm:$0xf] %v3692
      %3747 = vst [vmem:[#allocation2 + $0xa4] sm:$0xf] %v3693
      %3748 = vst [vmem:[#allocation2 + $0xa8] sm:$0xf] %v3694
      %3749 = vst [vmem:[#allocation2 + $0xac] sm:$0xf] %v3695
      %3750 = vst [vmem:[#allocation2 + $0xb0] sm:$0xf] %v3696
      %3751 = vst [vmem:[#allocation2 + $0xb4] sm:$0xf] %v3697
      %3752 = vst [vmem:[#allocation2 + $0xb8] sm:$0xf] %v3698
      %3753 = vst [vmem:[#allocation2 + $0xbc] sm:$0xf] %v3699
      %3754 = vst [vmem:[#allocation2 + $0xc0] sm:$0xf] %v3700
      %3755 = vst [vmem:[#allocation2 + $0xc4] sm:$0xf] %v3701
      %3756 = vst [vmem:[#allocation2 + $0xc8] sm:$0xf] %v3702
      %3757 = vst [vmem:[#allocation2 + $0xcc] sm:$0xf] %v3703
      %3758 = vst [vmem:[#allocation2 + $0xd0] sm:$0xf] %v3704
      %3759 = vst [vmem:[#allocation2 + $0xd4] sm:$0xf] %v3705
      %v3760 = vld [vmem:[#allocation2] sm:$0xf]
      %v3761 = vld [vmem:[#allocation2 + $0x4] sm:$0xf]
      %v3762 = vld [vmem:[#allocation2 + $0x8] sm:$0xf]
      %v3763 = vld [vmem:[#allocation2 + $0xc] sm:$0xf]
      %v3764 = vld [vmem:[#allocation2 + $0x10] sm:$0xf]
      %v3765 = vld [vmem:[#allocation2 + $0x14] sm:$0xf]
      %v3766 = vld [vmem:[#allocation2 + $0x18] sm:$0xf]
      %v3767 = vld [vmem:[#allocation2 + $0x1c] sm:$0xf]
      %v3768 = vld [vmem:[#allocation2 + $0x20] sm:$0xf]
      %v3769 = vld [vmem:[#allocation2 + $0x24] sm:$0xf]
      %v3770 = vld [vmem:[#allocation2 + $0x28] sm:$0xf]
      %v3771 = vld [vmem:[#allocation2 + $0x2c] sm:$0xf]
      %v3772 = vld [vmem:[#allocation2 + $0x30] sm:$0xf]
      %v3773 = vld [vmem:[#allocation2 + $0x34] sm:$0xf]
      %v3774 = vld [vmem:[#allocation2 + $0x38] sm:$0xf]
      %v3775 = vld [vmem:[#allocation2 + $0x3c] sm:$0xf]
      %v3776 = vld [vmem:[#allocation2 + $0x40] sm:$0xf]
      %v3777 = vld [vmem:[#allocation2 + $0x44] sm:$0xf]
      %v3778 = vld [vmem:[#allocation2 + $0x48] sm:$0xf]
      %v3779 = vld [vmem:[#allocation2 + $0x4c] sm:$0xf]
      %v3780 = vld [vmem:[#allocation2 + $0x50] sm:$0xf]
      %v3781 = vld [vmem:[#allocation2 + $0x54] sm:$0xf]
      %v3782 = vld [vmem:[#allocation2 + $0x58] sm:$0xf]
      %v3783 = vld [vmem:[#allocation2 + $0x5c] sm:$0xf]
      %v3784 = vld [vmem:[#allocation2 + $0x60] sm:$0xf]
      %v3785 = vld [vmem:[#allocation2 + $0x64] sm:$0xf]
      %v3786 = vld [vmem:[#allocation2 + $0x68] sm:$0xf]
      %v3787 = vld [vmem:[#allocation2 + $0x6c] sm:$0xf]
      %v3788 = vld [vmem:[#allocation2 + $0x70] sm:$0xf]
      %v3789 = vld [vmem:[#allocation2 + $0x74] sm:$0xf]
      %v3790 = vld [vmem:[#allocation2 + $0x78] sm:$0xf]
      %v3791 = vld [vmem:[#allocation2 + $0x7c] sm:$0xf]
      %v3792 = vld [vmem:[#allocation2 + $0x80] sm:$0xf]
      %v3793 = vld [vmem:[#allocation2 + $0x84] sm:$0xf]
      %v3794 = vld [vmem:[#allocation2 + $0x88] sm:$0xf]
      %v3795 = vld [vmem:[#allocation2 + $0x8c] sm:$0xf]
      %v3796 = vld [vmem:[#allocation2 + $0x90] sm:$0xf]
      %v3797 = vld [vmem:[#allocation2 + $0x94] sm:$0xf]
      %v3798 = vld [vmem:[#allocation2 + $0x98] sm:$0xf]
      %v3799 = vld [vmem:[#allocation2 + $0x9c] sm:$0xf]
      %v3800 = vld [vmem:[#allocation2 + $0xa0] sm:$0xf]
      %v3801 = vld [vmem:[#allocation2 + $0xa4] sm:$0xf]
      %v3802 = vld [vmem:[#allocation2 + $0xa8] sm:$0xf]
      %v3803 = vld [vmem:[#allocation2 + $0xac] sm:$0xf]
      %v3804 = vld [vmem:[#allocation2 + $0xb0] sm:$0xf]
      %v3805 = vld [vmem:[#allocation2 + $0xb4] sm:$0xf]
      %v3806 = vld [vmem:[#allocation2 + $0xb8] sm:$0xf]
      %v3807 = vld [vmem:[#allocation2 + $0xbc] sm:$0xf]
      %v3808 = vld [vmem:[#allocation2 + $0xc0] sm:$0xf]
      %v3809 = vld [vmem:[#allocation2 + $0xc4] sm:$0xf]
      %v3810 = vld [vmem:[#allocation2 + $0xc8] sm:$0xf]
      %v3811 = vld [vmem:[#allocation2 + $0xcc] sm:$0xf]
      %v3812 = vld [vmem:[#allocation2 + $0xd0] sm:$0xf]
      %v3813 = vld [vmem:[#allocation2 + $0xd4] sm:$0xf]
      %v3814 = vld [vmem:[%s2] sm:$0xf]
      %v3815 = vld [vmem:[%s2 + $0x4] sm:$0xf]
      %v3816 = vld [vmem:[%s2 + $0x8] sm:$0xf]
      %v3817 = vld [vmem:[%s2 + $0xc] sm:$0xf]
      %v3818 = vld [vmem:[%s2 + $0x10] sm:$0xf]
      %v3819 = vld [vmem:[%s2 + $0x14] sm:$0xf]
      %v3820 = vld [vmem:[%s2 + $0x18] sm:$0xf]
      %v3821 = vld [vmem:[%s2 + $0x1c] sm:$0xf]
      %v3822 = vld [vmem:[%s2 + $0x20] sm:$0xf]
      %v3823 = vld [vmem:[%s2 + $0x24] sm:$0xf]
      %v3824 = vld [vmem:[%s2 + $0x28] sm:$0xf]
      %v3825 = vld [vmem:[%s2 + $0x2c] sm:$0xf]
      %v3826 = vld [vmem:[%s2 + $0x30] sm:$0xf]
      %v3827 = vld [vmem:[%s2 + $0x34] sm:$0xf]
      %v3828 = vld [vmem:[%s2 + $0x38] sm:$0xf]
      %v3829 = vld [vmem:[%s2 + $0x3c] sm:$0xf]
      %v3884 = vunpack.c.l.b16 %v3760
      %v3885 = vunpack.c.l.b16 %v3761
      %v3886 = vunpack.c.l.b16 %v3762
      %v3887 = vunpack.c.l.b16 %v3763
      %v3888 = vunpack.c.l.b16 %v3764
      %v3889 = vunpack.c.l.b16 %v3765
      %v3890 = vunpack.c.l.b16 %v3766
      %v3891 = vunpack.c.l.b16 %v3767
      %v3892 = vunpack.c.l.b16 %v3768
      %v3893 = vunpack.c.l.b16 %v3769
      %v3894 = vunpack.c.l.b16 %v3770
      %v3895 = vunpack.c.l.b16 %v3771
      %v3896 = vunpack.c.l.b16 %v3772
      %v3897 = vunpack.c.l.b16 %v3773
      %v3898 = vunpack.c.l.b16 %v3774
      %v3899 = vunpack.c.l.b16 %v3775
      %v3900 = vunpack.c.l.b16 %v3776
      %v3901 = vunpack.c.l.b16 %v3777
      %v3902 = vunpack.c.l.b16 %v3778
      %v3903 = vunpack.c.l.b16 %v3779
      %v3904 = vunpack.c.l.b16 %v3780
      %v3905 = vunpack.c.l.b16 %v3781
      %v3906 = vunpack.c.l.b16 %v3782
      %v3907 = vunpack.c.l.b16 %v3783
      %v3908 = vunpack.c.l.b16 %v3784
      %v3909 = vunpack.c.l.b16 %v3785
      %v3910 = vunpack.c.l.b16 %v3786
      %v3911 = vunpack.c.l.b16 %v3787
      %v3912 = vunpack.c.l.b16 %v3788
      %v3913 = vunpack.c.l.b16 %v3789
      %v3914 = vunpack.c.l.b16 %v3790
      %v3915 = vunpack.c.l.b16 %v3791
      %v3916 = vunpack.c.l.b16 %v3792
      %v3917 = vunpack.c.l.b16 %v3793
      %v3918 = vunpack.c.l.b16 %v3794
      %v3919 = vunpack.c.l.b16 %v3795
      %v3920 = vunpack.c.l.b16 %v3796
      %v3921 = vunpack.c.l.b16 %v3797
      %v3922 = vunpack.c.l.b16 %v3798
      %v3923 = vunpack.c.l.b16 %v3799
      %v3924 = vunpack.c.l.b16 %v3800
      %v3925 = vunpack.c.l.b16 %v3801
      %v3926 = vunpack.c.l.b16 %v3802
      %v3927 = vunpack.c.l.b16 %v3803
      %v3928 = vunpack.c.l.b16 %v3804
      %v3929 = vunpack.c.l.b16 %v3805
      %v3930 = vunpack.c.l.b16 %v3806
      %v3931 = vunpack.c.l.b16 %v3807
      %v3932 = vunpack.c.l.b16 %v3808
      %v3933 = vunpack.c.l.b16 %v3809
      %v3934 = vunpack.c.l.b16 %v3810
      %v3935 = vunpack.c.l.b16 %v3811
      %v3936 = vunpack.c.l.b16 %v3812
      %v3937 = vunpack.c.l.b16 %v3813
      %v3938 = vpack.c.b16 %v3885, %v3884
      %v3939 = vpack.c.b16 %v3887, %v3886
      %v3940 = vpack.c.b16 %v3889, %v3888
      %v3941 = vpack.c.b16 %v3891, %v3890
      %v3942 = vpack.c.b16 %v3893, %v3892
      %v3943 = vpack.c.b16 %v3895, %v3894
      %v3944 = vpack.c.b16 %v3897, %v3896
      %v3945 = vpack.c.b16 %v3899, %v3898
      %v3946 = vpack.c.b16 %v3901, %v3900
      %v3947 = vpack.c.b16 %v3903, %v3902
      %v3948 = vpack.c.b16 %v3905, %v3904
      %v3949 = vpack.c.b16 %v3907, %v3906
      %v3950 = vpack.c.b16 %v3909, %v3908
      %v3951 = vpack.c.b16 %v3911, %v3910
      %v3952 = vpack.c.b16 %v3913, %v3912
      %v3953 = vpack.c.b16 %v3915, %v3914
      %v3954 = vpack.c.b16 %v3917, %v3916
      %v3955 = vpack.c.b16 %v3919, %v3918
      %v3956 = vpack.c.b16 %v3921, %v3920
      %v3957 = vpack.c.b16 %v3923, %v3922
      %v3958 = vpack.c.b16 %v3925, %v3924
      %v3959 = vpack.c.b16 %v3927, %v3926
      %v3960 = vpack.c.b16 %v3929, %v3928
      %v3961 = vpack.c.b16 %v3931, %v3930
      %v3962 = vpack.c.b16 %v3933, %v3932
      %v3963 = vpack.c.b16 %v3935, %v3934
      %v3964 = vpack.c.b16 %v3937, %v3936
      %v4008 = vunpack.c.l.b16 %v3814
      %v4009 = vunpack.c.l.b16 %v3815
      %v4010 = vunpack.c.l.b16 %v3816
      %v4011 = vunpack.c.l.b16 %v3817
      %v4012 = vunpack.c.l.b16 %v3818
      %v4013 = vunpack.c.l.b16 %v3819
      %v4014 = vunpack.c.l.b16 %v3820
      %v4015 = vunpack.c.l.b16 %v3821
      %v4016 = vunpack.c.l.b16 %v3822
      %v4017 = vunpack.c.l.b16 %v3823
      %v4018 = vunpack.c.l.b16 %v3824
      %v4019 = vunpack.c.l.b16 %v3825
      %v4020 = vunpack.c.l.b16 %v3826
      %v4021 = vunpack.c.l.b16 %v3827
      %v4022 = vunpack.c.l.b16 %v3828
      %v4023 = vunpack.c.l.b16 %v3829
      %v4024 = vpack.c.b16 %v4009, %v4008
      %v4025 = vpack.c.b16 %v4011, %v4010
      %v4026 = vpack.c.b16 %v4013, %v4012
      %v4027 = vpack.c.b16 %v4015, %v4014
      %v4028 = vpack.c.b16 %v4017, %v4016
      %v4029 = vpack.c.b16 %v4019, %v4018
      %v4030 = vpack.c.b16 %v4021, %v4020
      %v4031 = vpack.c.b16 %v4023, %v4022
      %4040 = vmatpush.bf16.msra.mxu0 %v4031
      %4041 = vmatpush.bf16.msra.mxu0 %v4030
      %4042 = vmatpush.bf16.msra.mxu0 %v4029
      %4043 = vmatpush.bf16.msra.mxu0 %v4028
      %4044 = vmatpush.bf16.msra.mxu0 %v4027
      %4045 = vmatpush.bf16.msra.mxu0 %v4026
      %4046 = vmatpush.bf16.msra.mxu0 %v4025
      %4047 = vmatpush.bf16.msra.mxu0 %v4024
      %4048 = vmatmul.bf16.gmra.mxu0 %v3938
      %v4049 = vpop.f32.mrf.mxu0
      %v4050 = vadd.f32 0.0, %v4049
      %v4051 = vpop.f32.mrf.mxu0
      %v4052 = vadd.f32 0.0, %v4051
      %4053 = vmatmul.bf16.gmra.mxu0 %v3939
      %v4054 = vpop.f32.mrf.mxu0
      %v4055 = vadd.f32 0.0, %v4054
      %v4056 = vpop.f32.mrf.mxu0
      %v4057 = vadd.f32 0.0, %v4056
      %4058 = vmatmul.bf16.gmra.mxu0 %v3940
      %v4059 = vpop.f32.mrf.mxu0
      %v4060 = vadd.f32 0.0, %v4059
      %v4061 = vpop.f32.mrf.mxu0
      %v4062 = vadd.f32 0.0, %v4061
      %4063 = vmatmul.bf16.gmra.mxu0 %v3941
      %v4064 = vpop.f32.mrf.mxu0
      %v4065 = vadd.f32 0.0, %v4064
      %v4066 = vpop.f32.mrf.mxu0
      %v4067 = vadd.f32 0.0, %v4066
      %4068 = vmatmul.bf16.gmra.mxu0 %v3942
      %v4069 = vpop.f32.mrf.mxu0
      %v4070 = vadd.f32 0.0, %v4069
      %v4071 = vpop.f32.mrf.mxu0
      %v4072 = vadd.f32 0.0, %v4071
      %4073 = vmatmul.bf16.gmra.mxu0 %v3943
      %v4074 = vpop.f32.mrf.mxu0
      %v4075 = vadd.f32 0.0, %v4074
      %v4076 = vpop.f32.mrf.mxu0
      %v4077 = vadd.f32 0.0, %v4076
      %4078 = vmatmul.bf16.gmra.mxu0 %v3944
      %v4079 = vpop.f32.mrf.mxu0
      %v4080 = vadd.f32 0.0, %v4079
      %v4081 = vpop.f32.mrf.mxu0
      %v4082 = vadd.f32 0.0, %v4081
      %4083 = vmatmul.bf16.gmra.mxu0 %v3945
      %v4084 = vpop.f32.mrf.mxu0
      %v4085 = vadd.f32 0.0, %v4084
      %v4086 = vpop.f32.mrf.mxu0
      %v4087 = vadd.f32 0.0, %v4086
      %4088 = vmatmul.bf16.gmra.mxu0 %v3946
      %v4089 = vpop.f32.mrf.mxu0
      %v4090 = vadd.f32 0.0, %v4089
      %v4091 = vpop.f32.mrf.mxu0
      %v4092 = vadd.f32 0.0, %v4091
      %4093 = vmatmul.bf16.gmra.mxu0 %v3947
      %v4094 = vpop.f32.mrf.mxu0
      %v4095 = vadd.f32 0.0, %v4094
      %v4096 = vpop.f32.mrf.mxu0
      %v4097 = vadd.f32 0.0, %v4096
      %4098 = vmatmul.bf16.gmra.mxu0 %v3948
      %v4099 = vpop.f32.mrf.mxu0
      %v4100 = vadd.f32 0.0, %v4099
      %v4101 = vpop.f32.mrf.mxu0
      %v4102 = vadd.f32 0.0, %v4101
      %4103 = vmatmul.bf16.gmra.mxu0 %v3949
      %v4104 = vpop.f32.mrf.mxu0
      %v4105 = vadd.f32 0.0, %v4104
      %v4106 = vpop.f32.mrf.mxu0
      %v4107 = vadd.f32 0.0, %v4106
      %4108 = vmatmul.bf16.gmra.mxu0 %v3950
      %v4109 = vpop.f32.mrf.mxu0
      %v4110 = vadd.f32 0.0, %v4109
      %v4111 = vpop.f32.mrf.mxu0
      %v4112 = vadd.f32 0.0, %v4111
      %4113 = vmatmul.bf16.gmra.mxu0 %v3951
      %v4114 = vpop.f32.mrf.mxu0
      %v4115 = vadd.f32 0.0, %v4114
      %v4116 = vpop.f32.mrf.mxu0
      %v4117 = vadd.f32 0.0, %v4116
      %4118 = vmatmul.bf16.gmra.mxu0 %v3952
      %v4119 = vpop.f32.mrf.mxu0
      %v4120 = vadd.f32 0.0, %v4119
      %v4121 = vpop.f32.mrf.mxu0
      %v4122 = vadd.f32 0.0, %v4121
      %4123 = vmatmul.bf16.gmra.mxu0 %v3953
      %v4124 = vpop.f32.mrf.mxu0
      %v4125 = vadd.f32 0.0, %v4124
      %v4126 = vpop.f32.mrf.mxu0
      %v4127 = vadd.f32 0.0, %v4126
      %4128 = vmatmul.bf16.gmra.mxu0 %v3954
      %v4129 = vpop.f32.mrf.mxu0
      %v4130 = vadd.f32 0.0, %v4129
      %v4131 = vpop.f32.mrf.mxu0
      %v4132 = vadd.f32 0.0, %v4131
      %4133 = vmatmul.bf16.gmra.mxu0 %v3955
      %v4134 = vpop.f32.mrf.mxu0
      %v4135 = vadd.f32 0.0, %v4134
      %v4136 = vpop.f32.mrf.mxu0
      %v4137 = vadd.f32 0.0, %v4136
      %4138 = vmatmul.bf16.gmra.mxu0 %v3956
      %v4139 = vpop.f32.mrf.mxu0
      %v4140 = vadd.f32 0.0, %v4139
      %v4141 = vpop.f32.mrf.mxu0
      %v4142 = vadd.f32 0.0, %v4141
      %4143 = vmatmul.bf16.gmra.mxu0 %v3957
      %v4144 = vpop.f32.mrf.mxu0
      %v4145 = vadd.f32 0.0, %v4144
      %v4146 = vpop.f32.mrf.mxu0
      %v4147 = vadd.f32 0.0, %v4146
      %4148 = vmatmul.bf16.gmra.mxu0 %v3958
      %v4149 = vpop.f32.mrf.mxu0
      %v4150 = vadd.f32 0.0, %v4149
      %v4151 = vpop.f32.mrf.mxu0
      %v4152 = vadd.f32 0.0, %v4151
      %4153 = vmatmul.bf16.gmra.mxu0 %v3959
      %v4154 = vpop.f32.mrf.mxu0
      %v4155 = vadd.f32 0.0, %v4154
      %v4156 = vpop.f32.mrf.mxu0
      %v4157 = vadd.f32 0.0, %v4156
      %4158 = vmatmul.bf16.gmra.mxu0 %v3960
      %v4159 = vpop.f32.mrf.mxu0
      %v4160 = vadd.f32 0.0, %v4159
      %v4161 = vpop.f32.mrf.mxu0
      %v4162 = vadd.f32 0.0, %v4161
      %4163 = vmatmul.bf16.gmra.mxu0 %v3961
      %v4164 = vpop.f32.mrf.mxu0
      %v4165 = vadd.f32 0.0, %v4164
      %v4166 = vpop.f32.mrf.mxu0
      %v4167 = vadd.f32 0.0, %v4166
      %4168 = vmatmul.bf16.gmra.mxu0 %v3962
      %v4169 = vpop.f32.mrf.mxu0
      %v4170 = vadd.f32 0.0, %v4169
      %v4171 = vpop.f32.mrf.mxu0
      %v4172 = vadd.f32 0.0, %v4171
      %4173 = vmatmul.bf16.gmra.mxu0 %v3963
      %v4174 = vpop.f32.mrf.mxu0
      %v4175 = vadd.f32 0.0, %v4174
      %v4176 = vpop.f32.mrf.mxu0
      %v4177 = vadd.f32 0.0, %v4176
      %4178 = vmatmul.bf16.gmra.mxu0 %v3964
      %v4179 = vpop.f32.mrf.mxu0
      %v4180 = vadd.f32 0.0, %v4179
      %v4181 = vpop.f32.mrf.mxu0
      %v4182 = vadd.f32 0.0, %v4181
      %4183 = vdwg.mxu0
      %v4184 = vrot.slane %v4050, 7
      %v4185 = vrot.slane %v4052, 7
      %v4186 = vrot.slane %v4055, 7
      %v4187 = vrot.slane %v4057, 7
      %v4188 = vrot.slane %v4060, 7
      %v4189 = vrot.slane %v4062, 7
      %v4190 = vrot.slane %v4065, 7
      %v4191 = vrot.slane %v4067, 7
      %v4192 = vrot.slane %v4070, 7
      %v4193 = vrot.slane %v4072, 7
      %v4194 = vrot.slane %v4075, 7
      %v4195 = vrot.slane %v4077, 7
      %v4196 = vrot.slane %v4080, 7
      %v4197 = vrot.slane %v4082, 7
      %v4198 = vrot.slane %v4085, 7
      %v4199 = vrot.slane %v4087, 7
      %v4200 = vrot.slane %v4090, 7
      %v4201 = vrot.slane %v4092, 7
      %v4202 = vrot.slane %v4095, 7
      %v4203 = vrot.slane %v4097, 7
      %v4204 = vrot.slane %v4100, 7
      %v4205 = vrot.slane %v4102, 7
      %v4206 = vrot.slane %v4105, 7
      %v4207 = vrot.slane %v4107, 7
      %v4208 = vrot.slane %v4110, 7
      %v4209 = vrot.slane %v4112, 7
      %v4210 = vrot.slane %v4115, 7
      %v4211 = vrot.slane %v4117, 7
      %v4212 = vrot.slane %v4120, 7
      %v4213 = vrot.slane %v4122, 7
      %v4214 = vrot.slane %v4125, 7
      %v4215 = vrot.slane %v4127, 7
      %v4216 = vrot.slane %v4130, 7
      %v4217 = vrot.slane %v4132, 7
      %v4218 = vrot.slane %v4135, 7
      %v4219 = vrot.slane %v4137, 7
      %v4220 = vrot.slane %v4140, 7
      %v4221 = vrot.slane %v4142, 7
      %v4222 = vrot.slane %v4145, 7
      %v4223 = vrot.slane %v4147, 7
      %v4224 = vrot.slane %v4150, 7
      %v4225 = vrot.slane %v4152, 7
      %v4226 = vrot.slane %v4155, 7
      %v4227 = vrot.slane %v4157, 7
      %v4228 = vrot.slane %v4160, 7
      %v4229 = vrot.slane %v4162, 7
      %v4230 = vrot.slane %v4165, 7
      %v4231 = vrot.slane %v4167, 7
      %v4232 = vrot.slane %v4170, 7
      %v4233 = vrot.slane %v4172, 7
      %v4234 = vrot.slane %v4175, 7
      %v4235 = vrot.slane %v4177, 7
      %v4236 = vrot.slane %v4180, 7
      %v4237 = vrot.slane %v4182, 7
      %v4238 = vsel %vm732, %v4236, %v4237
      %v4239 = vsel %vm732, %v4235, %v4236
      %v4240 = vsel %vm732, %v4234, %v4235
      %v4241 = vsel %vm732, %v4233, %v4234
      %v4242 = vsel %vm732, %v4232, %v4233
      %v4243 = vsel %vm732, %v4231, %v4232
      %v4244 = vsel %vm732, %v4230, %v4231
      %v4245 = vsel %vm732, %v4229, %v4230
      %v4246 = vsel %vm732, %v4228, %v4229
      %v4247 = vsel %vm732, %v4227, %v4228
      %v4248 = vsel %vm732, %v4226, %v4227
      %v4249 = vsel %vm732, %v4225, %v4226
      %v4250 = vsel %vm732, %v4224, %v4225
      %v4251 = vsel %vm732, %v4223, %v4224
      %v4252 = vsel %vm732, %v4222, %v4223
      %v4253 = vsel %vm732, %v4221, %v4222
      %v4254 = vsel %vm732, %v4220, %v4221
      %v4255 = vsel %vm732, %v4219, %v4220
      %v4256 = vsel %vm732, %v4218, %v4219
      %v4257 = vsel %vm732, %v4217, %v4218
      %v4258 = vsel %vm732, %v4216, %v4217
      %v4259 = vsel %vm732, %v4215, %v4216
      %v4260 = vsel %vm732, %v4214, %v4215
      %v4261 = vsel %vm732, %v4213, %v4214
      %v4262 = vsel %vm732, %v4212, %v4213
      %v4263 = vsel %vm732, %v4211, %v4212
      %v4264 = vsel %vm732, %v4210, %v4211
      %v4265 = vsel %vm732, %v4209, %v4210
      %v4266 = vsel %vm732, %v4208, %v4209
      %v4267 = vsel %vm732, %v4207, %v4208
      %v4268 = vsel %vm732, %v4206, %v4207
      %v4269 = vsel %vm732, %v4205, %v4206
      %v4270 = vsel %vm732, %v4204, %v4205
      %v4271 = vsel %vm732, %v4203, %v4204
      %v4272 = vsel %vm732, %v4202, %v4203
      %v4273 = vsel %vm732, %v4201, %v4202
      %v4274 = vsel %vm732, %v4200, %v4201
      %v4275 = vsel %vm732, %v4199, %v4200
      %v4276 = vsel %vm732, %v4198, %v4199
      %v4277 = vsel %vm732, %v4197, %v4198
      %v4278 = vsel %vm732, %v4196, %v4197
      %v4279 = vsel %vm732, %v4195, %v4196
      %v4280 = vsel %vm732, %v4194, %v4195
      %v4281 = vsel %vm732, %v4193, %v4194
      %v4282 = vsel %vm732, %v4192, %v4193
      %v4283 = vsel %vm732, %v4191, %v4192
      %v4284 = vsel %vm732, %v4190, %v4191
      %v4285 = vsel %vm732, %v4189, %v4190
      %v4286 = vsel %vm732, %v4188, %v4189
      %v4287 = vsel %vm732, %v4187, %v4188
      %v4288 = vsel %vm732, %v4186, %v4187
      %v4289 = vsel %vm732, %v4185, %v4186
      %v4290 = vsel %vm732, %v4184, %v4185
      %v4291 = vsel %vm732, %v4237, %v4184
      %s4292 = scalar_lea.vmem %s2, 64
      %v4293 = vld [vmem:[%s4292] sm:$0xf]
      %v4294 = vld [vmem:[%s4292 + $0x4] sm:$0xf]
      %v4295 = vld [vmem:[%s4292 + $0x8] sm:$0xf]
      %v4296 = vld [vmem:[%s4292 + $0xc] sm:$0xf]
      %v4297 = vld [vmem:[%s4292 + $0x10] sm:$0xf]
      %v4298 = vld [vmem:[%s4292 + $0x14] sm:$0xf]
      %v4299 = vld [vmem:[%s4292 + $0x18] sm:$0xf]
      %v4300 = vld [vmem:[%s4292 + $0x1c] sm:$0xf]
      %v4301 = vld [vmem:[%s4292 + $0x20] sm:$0xf]
      %v4302 = vld [vmem:[%s4292 + $0x24] sm:$0xf]
      %v4303 = vld [vmem:[%s4292 + $0x28] sm:$0xf]
      %v4304 = vld [vmem:[%s4292 + $0x2c] sm:$0xf]
      %v4305 = vld [vmem:[%s4292 + $0x30] sm:$0xf]
      %v4306 = vld [vmem:[%s4292 + $0x34] sm:$0xf]
      %v4307 = vld [vmem:[%s4292 + $0x38] sm:$0xf]
      %v4308 = vld [vmem:[%s4292 + $0x3c] sm:$0xf]
      %v4325 = vunpack.c.l.b16 %v4293
      %v4326 = vunpack.c.l.b16 %v4294
      %v4327 = vunpack.c.l.b16 %v4295
      %v4328 = vunpack.c.l.b16 %v4296
      %v4329 = vunpack.c.l.b16 %v4297
      %v4330 = vunpack.c.l.b16 %v4298
      %v4331 = vunpack.c.l.b16 %v4299
      %v4332 = vunpack.c.l.b16 %v4300
      %v4333 = vunpack.c.l.b16 %v4301
      %v4334 = vunpack.c.l.b16 %v4302
      %v4335 = vunpack.c.l.b16 %v4303
      %v4336 = vunpack.c.l.b16 %v4304
      %v4337 = vunpack.c.l.b16 %v4305
      %v4338 = vunpack.c.l.b16 %v4306
      %v4339 = vunpack.c.l.b16 %v4307
      %v4340 = vunpack.c.l.b16 %v4308
      %v4341 = vpack.c.b16 %v4326, %v4325
      %v4342 = vpack.c.b16 %v4328, %v4327
      %v4343 = vpack.c.b16 %v4330, %v4329
      %v4344 = vpack.c.b16 %v4332, %v4331
      %v4345 = vpack.c.b16 %v4334, %v4333
      %v4346 = vpack.c.b16 %v4336, %v4335
      %v4347 = vpack.c.b16 %v4338, %v4337
      %v4348 = vpack.c.b16 %v4340, %v4339
      %4357 = vmatpush.bf16.msra.mxu0 %v4348
      %4358 = vmatpush.bf16.msra.mxu0 %v4347
      %4359 = vmatpush.bf16.msra.mxu0 %v4346
      %4360 = vmatpush.bf16.msra.mxu0 %v4345
      %4361 = vmatpush.bf16.msra.mxu0 %v4344
      %4362 = vmatpush.bf16.msra.mxu0 %v4343
      %4363 = vmatpush.bf16.msra.mxu0 %v4342
      %4364 = vmatpush.bf16.msra.mxu0 %v4341
      %4365 = vmatmul.bf16.gmra.mxu0 %v3938
      %v4366 = vpop.f32.mrf.mxu0
      %v4367 = vadd.f32 0.0, %v4366
      %v4368 = vpop.f32.mrf.mxu0
      %v4369 = vadd.f32 0.0, %v4368
      %4370 = vmatmul.bf16.gmra.mxu0 %v3939
      %v4371 = vpop.f32.mrf.mxu0
      %v4372 = vadd.f32 0.0, %v4371
      %v4373 = vpop.f32.mrf.mxu0
      %v4374 = vadd.f32 0.0, %v4373
      %4375 = vmatmul.bf16.gmra.mxu0 %v3940
      %v4376 = vpop.f32.mrf.mxu0
      %v4377 = vadd.f32 0.0, %v4376
      %v4378 = vpop.f32.mrf.mxu0
      %v4379 = vadd.f32 0.0, %v4378
      %4380 = vmatmul.bf16.gmra.mxu0 %v3941
      %v4381 = vpop.f32.mrf.mxu0
      %v4382 = vadd.f32 0.0, %v4381
      %v4383 = vpop.f32.mrf.mxu0
      %v4384 = vadd.f32 0.0, %v4383
      %4385 = vmatmul.bf16.gmra.mxu0 %v3942
      %v4386 = vpop.f32.mrf.mxu0
      %v4387 = vadd.f32 0.0, %v4386
      %v4388 = vpop.f32.mrf.mxu0
      %v4389 = vadd.f32 0.0, %v4388
      %4390 = vmatmul.bf16.gmra.mxu0 %v3943
      %v4391 = vpop.f32.mrf.mxu0
      %v4392 = vadd.f32 0.0, %v4391
      %v4393 = vpop.f32.mrf.mxu0
      %v4394 = vadd.f32 0.0, %v4393
      %4395 = vmatmul.bf16.gmra.mxu0 %v3944
      %v4396 = vpop.f32.mrf.mxu0
      %v4397 = vadd.f32 0.0, %v4396
      %v4398 = vpop.f32.mrf.mxu0
      %v4399 = vadd.f32 0.0, %v4398
      %4400 = vmatmul.bf16.gmra.mxu0 %v3945
      %v4401 = vpop.f32.mrf.mxu0
      %v4402 = vadd.f32 0.0, %v4401
      %v4403 = vpop.f32.mrf.mxu0
      %v4404 = vadd.f32 0.0, %v4403
      %4405 = vmatmul.bf16.gmra.mxu0 %v3946
      %v4406 = vpop.f32.mrf.mxu0
      %v4407 = vadd.f32 0.0, %v4406
      %v4408 = vpop.f32.mrf.mxu0
      %v4409 = vadd.f32 0.0, %v4408
      %4410 = vmatmul.bf16.gmra.mxu0 %v3947
      %v4411 = vpop.f32.mrf.mxu0
      %v4412 = vadd.f32 0.0, %v4411
      %v4413 = vpop.f32.mrf.mxu0
      %v4414 = vadd.f32 0.0, %v4413
      %4415 = vmatmul.bf16.gmra.mxu0 %v3948
      %v4416 = vpop.f32.mrf.mxu0
      %v4417 = vadd.f32 0.0, %v4416
      %v4418 = vpop.f32.mrf.mxu0
      %v4419 = vadd.f32 0.0, %v4418
      %4420 = vmatmul.bf16.gmra.mxu0 %v3949
      %v4421 = vpop.f32.mrf.mxu0
      %v4422 = vadd.f32 0.0, %v4421
      %v4423 = vpop.f32.mrf.mxu0
      %v4424 = vadd.f32 0.0, %v4423
      %4425 = vmatmul.bf16.gmra.mxu0 %v3950
      %v4426 = vpop.f32.mrf.mxu0
      %v4427 = vadd.f32 0.0, %v4426
      %v4428 = vpop.f32.mrf.mxu0
      %v4429 = vadd.f32 0.0, %v4428
      %4430 = vmatmul.bf16.gmra.mxu0 %v3951
      %v4431 = vpop.f32.mrf.mxu0
      %v4432 = vadd.f32 0.0, %v4431
      %v4433 = vpop.f32.mrf.mxu0
      %v4434 = vadd.f32 0.0, %v4433
      %4435 = vmatmul.bf16.gmra.mxu0 %v3952
      %v4436 = vpop.f32.mrf.mxu0
      %v4437 = vadd.f32 0.0, %v4436
      %v4438 = vpop.f32.mrf.mxu0
      %v4439 = vadd.f32 0.0, %v4438
      %4440 = vmatmul.bf16.gmra.mxu0 %v3953
      %v4441 = vpop.f32.mrf.mxu0
      %v4442 = vadd.f32 0.0, %v4441
      %v4443 = vpop.f32.mrf.mxu0
      %v4444 = vadd.f32 0.0, %v4443
      %4445 = vmatmul.bf16.gmra.mxu0 %v3954
      %v4446 = vpop.f32.mrf.mxu0
      %v4447 = vadd.f32 0.0, %v4446
      %v4448 = vpop.f32.mrf.mxu0
      %v4449 = vadd.f32 0.0, %v4448
      %4450 = vmatmul.bf16.gmra.mxu0 %v3955
      %v4451 = vpop.f32.mrf.mxu0
      %v4452 = vadd.f32 0.0, %v4451
      %v4453 = vpop.f32.mrf.mxu0
      %v4454 = vadd.f32 0.0, %v4453
      %4455 = vmatmul.bf16.gmra.mxu0 %v3956
      %v4456 = vpop.f32.mrf.mxu0
      %v4457 = vadd.f32 0.0, %v4456
      %v4458 = vpop.f32.mrf.mxu0
      %v4459 = vadd.f32 0.0, %v4458
      %4460 = vmatmul.bf16.gmra.mxu0 %v3957
      %v4461 = vpop.f32.mrf.mxu0
      %v4462 = vadd.f32 0.0, %v4461
      %v4463 = vpop.f32.mrf.mxu0
      %v4464 = vadd.f32 0.0, %v4463
      %4465 = vmatmul.bf16.gmra.mxu0 %v3958
      %v4466 = vpop.f32.mrf.mxu0
      %v4467 = vadd.f32 0.0, %v4466
      %v4468 = vpop.f32.mrf.mxu0
      %v4469 = vadd.f32 0.0, %v4468
      %4470 = vmatmul.bf16.gmra.mxu0 %v3959
      %v4471 = vpop.f32.mrf.mxu0
      %v4472 = vadd.f32 0.0, %v4471
      %v4473 = vpop.f32.mrf.mxu0
      %v4474 = vadd.f32 0.0, %v4473
      %4475 = vmatmul.bf16.gmra.mxu0 %v3960
      %v4476 = vpop.f32.mrf.mxu0
      %v4477 = vadd.f32 0.0, %v4476
      %v4478 = vpop.f32.mrf.mxu0
      %v4479 = vadd.f32 0.0, %v4478
      %4480 = vmatmul.bf16.gmra.mxu0 %v3961
      %v4481 = vpop.f32.mrf.mxu0
      %v4482 = vadd.f32 0.0, %v4481
      %v4483 = vpop.f32.mrf.mxu0
      %v4484 = vadd.f32 0.0, %v4483
      %4485 = vmatmul.bf16.gmra.mxu0 %v3962
      %v4486 = vpop.f32.mrf.mxu0
      %v4487 = vadd.f32 0.0, %v4486
      %v4488 = vpop.f32.mrf.mxu0
      %v4489 = vadd.f32 0.0, %v4488
      %4490 = vmatmul.bf16.gmra.mxu0 %v3963
      %v4491 = vpop.f32.mrf.mxu0
      %v4492 = vadd.f32 0.0, %v4491
      %v4493 = vpop.f32.mrf.mxu0
      %v4494 = vadd.f32 0.0, %v4493
      %4495 = vmatmul.bf16.gmra.mxu0 %v3964
      %v4496 = vpop.f32.mrf.mxu0
      %v4497 = vadd.f32 0.0, %v4496
      %v4498 = vpop.f32.mrf.mxu0
      %v4499 = vadd.f32 0.0, %v4498
      %4500 = vdwg.mxu0
      %v4501 = vadd.f32 %v4240, %v4494
      %v4502 = vadd.f32 %v4239, %v4497
      %v4503 = vadd.f32 %v4238, %v4499
      %v4504 = vadd.f32 %v4291, %v4367
      %v4505 = vadd.f32 %v4290, %v4369
      %v4506 = vadd.f32 %v4289, %v4372
      %v4507 = vadd.f32 %v4288, %v4374
      %v4508 = vadd.f32 %v4287, %v4377
      %v4509 = vadd.f32 %v4286, %v4379
      %v4510 = vadd.f32 %v4285, %v4382
      %v4511 = vadd.f32 %v4284, %v4384
      %v4512 = vadd.f32 %v4283, %v4387
      %v4513 = vadd.f32 %v4282, %v4389
      %v4514 = vadd.f32 %v4281, %v4392
      %v4515 = vadd.f32 %v4280, %v4394
      %v4516 = vadd.f32 %v4279, %v4397
      %v4517 = vadd.f32 %v4278, %v4399
      %v4518 = vadd.f32 %v4277, %v4402
      %v4519 = vadd.f32 %v4276, %v4404
      %v4520 = vadd.f32 %v4275, %v4407
      %v4521 = vadd.f32 %v4274, %v4409
      %v4522 = vadd.f32 %v4273, %v4412
      %v4523 = vadd.f32 %v4272, %v4414
      %v4524 = vadd.f32 %v4271, %v4417
      %v4525 = vadd.f32 %v4270, %v4419
      %v4526 = vadd.f32 %v4269, %v4422
      %v4527 = vadd.f32 %v4268, %v4424
      %v4528 = vadd.f32 %v4267, %v4427
      %v4529 = vadd.f32 %v4266, %v4429
      %v4530 = vadd.f32 %v4265, %v4432
      %v4531 = vadd.f32 %v4264, %v4434
      %v4532 = vadd.f32 %v4263, %v4437
      %v4533 = vadd.f32 %v4262, %v4439
      %v4534 = vadd.f32 %v4261, %v4442
      %v4535 = vadd.f32 %v4260, %v4444
      %v4536 = vadd.f32 %v4259, %v4447
      %v4537 = vadd.f32 %v4258, %v4449
      %v4538 = vadd.f32 %v4257, %v4452
      %v4539 = vadd.f32 %v4256, %v4454
      %v4540 = vadd.f32 %v4255, %v4457
      %v4541 = vadd.f32 %v4254, %v4459
      %v4542 = vadd.f32 %v4253, %v4462
      %v4543 = vadd.f32 %v4252, %v4464
      %v4544 = vadd.f32 %v4251, %v4467
      %v4545 = vadd.f32 %v4250, %v4469
      %v4546 = vadd.f32 %v4249, %v4472
      %v4547 = vadd.f32 %v4248, %v4474
      %v4548 = vadd.f32 %v4247, %v4477
      %v4549 = vadd.f32 %v4246, %v4479
      %v4550 = vadd.f32 %v4245, %v4482
      %v4551 = vadd.f32 %v4244, %v4484
      %v4552 = vadd.f32 %v4243, %v4487
      %v4553 = vadd.f32 %v4242, %v4489
      %v4554 = vadd.f32 %v4241, %v4492
      %s4555 = scalar_lea.vmem %s2, 128
      %v4556 = vld [vmem:[%s4555] sm:$0xf]
      %v4557 = vld [vmem:[%s4555 + $0x4] sm:$0xf]
      %v4558 = vld [vmem:[%s4555 + $0x8] sm:$0xf]
      %v4559 = vld [vmem:[%s4555 + $0xc] sm:$0xf]
      %v4560 = vld [vmem:[%s4555 + $0x10] sm:$0xf]
      %v4561 = vld [vmem:[%s4555 + $0x14] sm:$0xf]
      %v4562 = vld [vmem:[%s4555 + $0x18] sm:$0xf]
      %v4563 = vld [vmem:[%s4555 + $0x1c] sm:$0xf]
      %v4564 = vld [vmem:[%s4555 + $0x20] sm:$0xf]
      %v4565 = vld [vmem:[%s4555 + $0x24] sm:$0xf]
      %v4566 = vld [vmem:[%s4555 + $0x28] sm:$0xf]
      %v4567 = vld [vmem:[%s4555 + $0x2c] sm:$0xf]
      %v4568 = vld [vmem:[%s4555 + $0x30] sm:$0xf]
      %v4569 = vld [vmem:[%s4555 + $0x34] sm:$0xf]
      %v4570 = vld [vmem:[%s4555 + $0x38] sm:$0xf]
      %v4571 = vld [vmem:[%s4555 + $0x3c] sm:$0xf]
      %v4588 = vunpack.c.l.b16 %v4556
      %v4589 = vunpack.c.l.b16 %v4557
      %v4590 = vunpack.c.l.b16 %v4558
      %v4591 = vunpack.c.l.b16 %v4559
      %v4592 = vunpack.c.l.b16 %v4560
      %v4593 = vunpack.c.l.b16 %v4561
      %v4594 = vunpack.c.l.b16 %v4562
      %v4595 = vunpack.c.l.b16 %v4563
      %v4596 = vunpack.c.l.b16 %v4564
      %v4597 = vunpack.c.l.b16 %v4565
      %v4598 = vunpack.c.l.b16 %v4566
      %v4599 = vunpack.c.l.b16 %v4567
      %v4600 = vunpack.c.l.b16 %v4568
      %v4601 = vunpack.c.l.b16 %v4569
      %v4602 = vunpack.c.l.b16 %v4570
      %v4603 = vunpack.c.l.b16 %v4571
      %v4604 = vpack.c.b16 %v4589, %v4588
      %v4605 = vpack.c.b16 %v4591, %v4590
      %v4606 = vpack.c.b16 %v4593, %v4592
      %v4607 = vpack.c.b16 %v4595, %v4594
      %v4608 = vpack.c.b16 %v4597, %v4596
      %v4609 = vpack.c.b16 %v4599, %v4598
      %v4610 = vpack.c.b16 %v4601, %v4600
      %v4611 = vpack.c.b16 %v4603, %v4602
      %4620 = vmatpush.bf16.msra.mxu0 %v4611
      %4621 = vmatpush.bf16.msra.mxu0 %v4610
      %4622 = vmatpush.bf16.msra.mxu0 %v4609
      %4623 = vmatpush.bf16.msra.mxu0 %v4608
      %4624 = vmatpush.bf16.msra.mxu0 %v4607
      %4625 = vmatpush.bf16.msra.mxu0 %v4606
      %4626 = vmatpush.bf16.msra.mxu0 %v4605
      %4627 = vmatpush.bf16.msra.mxu0 %v4604
      %4628 = vmatmul.bf16.gmra.mxu0 %v3938
      %v4629 = vpop.f32.mrf.mxu0
      %v4630 = vadd.f32 0.0, %v4629
      %v4631 = vpop.f32.mrf.mxu0
      %v4632 = vadd.f32 0.0, %v4631
      %4633 = vmatmul.bf16.gmra.mxu0 %v3939
      %v4634 = vpop.f32.mrf.mxu0
      %v4635 = vadd.f32 0.0, %v4634
      %v4636 = vpop.f32.mrf.mxu0
      %v4637 = vadd.f32 0.0, %v4636
      %4638 = vmatmul.bf16.gmra.mxu0 %v3940
      %v4639 = vpop.f32.mrf.mxu0
      %v4640 = vadd.f32 0.0, %v4639
      %v4641 = vpop.f32.mrf.mxu0
      %v4642 = vadd.f32 0.0, %v4641
      %4643 = vmatmul.bf16.gmra.mxu0 %v3941
      %v4644 = vpop.f32.mrf.mxu0
      %v4645 = vadd.f32 0.0, %v4644
      %v4646 = vpop.f32.mrf.mxu0
      %v4647 = vadd.f32 0.0, %v4646
      %4648 = vmatmul.bf16.gmra.mxu0 %v3942
      %v4649 = vpop.f32.mrf.mxu0
      %v4650 = vadd.f32 0.0, %v4649
      %v4651 = vpop.f32.mrf.mxu0
      %v4652 = vadd.f32 0.0, %v4651
      %4653 = vmatmul.bf16.gmra.mxu0 %v3943
      %v4654 = vpop.f32.mrf.mxu0
      %v4655 = vadd.f32 0.0, %v4654
      %v4656 = vpop.f32.mrf.mxu0
      %v4657 = vadd.f32 0.0, %v4656
      %4658 = vmatmul.bf16.gmra.mxu0 %v3944
      %v4659 = vpop.f32.mrf.mxu0
      %v4660 = vadd.f32 0.0, %v4659
      %v4661 = vpop.f32.mrf.mxu0
      %v4662 = vadd.f32 0.0, %v4661
      %4663 = vmatmul.bf16.gmra.mxu0 %v3945
      %v4664 = vpop.f32.mrf.mxu0
      %v4665 = vadd.f32 0.0, %v4664
      %v4666 = vpop.f32.mrf.mxu0
      %v4667 = vadd.f32 0.0, %v4666
      %4668 = vmatmul.bf16.gmra.mxu0 %v3946
      %v4669 = vpop.f32.mrf.mxu0
      %v4670 = vadd.f32 0.0, %v4669
      %v4671 = vpop.f32.mrf.mxu0
      %v4672 = vadd.f32 0.0, %v4671
      %4673 = vmatmul.bf16.gmra.mxu0 %v3947
      %v4674 = vpop.f32.mrf.mxu0
      %v4675 = vadd.f32 0.0, %v4674
      %v4676 = vpop.f32.mrf.mxu0
      %v4677 = vadd.f32 0.0, %v4676
      %4678 = vmatmul.bf16.gmra.mxu0 %v3948
      %v4679 = vpop.f32.mrf.mxu0
      %v4680 = vadd.f32 0.0, %v4679
      %v4681 = vpop.f32.mrf.mxu0
      %v4682 = vadd.f32 0.0, %v4681
      %4683 = vmatmul.bf16.gmra.mxu0 %v3949
      %v4684 = vpop.f32.mrf.mxu0
      %v4685 = vadd.f32 0.0, %v4684
      %v4686 = vpop.f32.mrf.mxu0
      %v4687 = vadd.f32 0.0, %v4686
      %4688 = vmatmul.bf16.gmra.mxu0 %v3950
      %v4689 = vpop.f32.mrf.mxu0
      %v4690 = vadd.f32 0.0, %v4689
      %v4691 = vpop.f32.mrf.mxu0
      %v4692 = vadd.f32 0.0, %v4691
      %4693 = vmatmul.bf16.gmra.mxu0 %v3951
      %v4694 = vpop.f32.mrf.mxu0
      %v4695 = vadd.f32 0.0, %v4694
      %v4696 = vpop.f32.mrf.mxu0
      %v4697 = vadd.f32 0.0, %v4696
      %4698 = vmatmul.bf16.gmra.mxu0 %v3952
      %v4699 = vpop.f32.mrf.mxu0
      %v4700 = vadd.f32 0.0, %v4699
      %v4701 = vpop.f32.mrf.mxu0
      %v4702 = vadd.f32 0.0, %v4701
      %4703 = vmatmul.bf16.gmra.mxu0 %v3953
      %v4704 = vpop.f32.mrf.mxu0
      %v4705 = vadd.f32 0.0, %v4704
      %v4706 = vpop.f32.mrf.mxu0
      %v4707 = vadd.f32 0.0, %v4706
      %4708 = vmatmul.bf16.gmra.mxu0 %v3954
      %v4709 = vpop.f32.mrf.mxu0
      %v4710 = vadd.f32 0.0, %v4709
      %v4711 = vpop.f32.mrf.mxu0
      %v4712 = vadd.f32 0.0, %v4711
      %4713 = vmatmul.bf16.gmra.mxu0 %v3955
      %v4714 = vpop.f32.mrf.mxu0
      %v4715 = vadd.f32 0.0, %v4714
      %v4716 = vpop.f32.mrf.mxu0
      %v4717 = vadd.f32 0.0, %v4716
      %4718 = vmatmul.bf16.gmra.mxu0 %v3956
      %v4719 = vpop.f32.mrf.mxu0
      %v4720 = vadd.f32 0.0, %v4719
      %v4721 = vpop.f32.mrf.mxu0
      %v4722 = vadd.f32 0.0, %v4721
      %4723 = vmatmul.bf16.gmra.mxu0 %v3957
      %v4724 = vpop.f32.mrf.mxu0
      %v4725 = vadd.f32 0.0, %v4724
      %v4726 = vpop.f32.mrf.mxu0
      %v4727 = vadd.f32 0.0, %v4726
      %4728 = vmatmul.bf16.gmra.mxu0 %v3958
      %v4729 = vpop.f32.mrf.mxu0
      %v4730 = vadd.f32 0.0, %v4729
      %v4731 = vpop.f32.mrf.mxu0
      %v4732 = vadd.f32 0.0, %v4731
      %4733 = vmatmul.bf16.gmra.mxu0 %v3959
      %v4734 = vpop.f32.mrf.mxu0
      %v4735 = vadd.f32 0.0, %v4734
      %v4736 = vpop.f32.mrf.mxu0
      %v4737 = vadd.f32 0.0, %v4736
      %4738 = vmatmul.bf16.gmra.mxu0 %v3960
      %v4739 = vpop.f32.mrf.mxu0
      %v4740 = vadd.f32 0.0, %v4739
      %v4741 = vpop.f32.mrf.mxu0
      %v4742 = vadd.f32 0.0, %v4741
      %4743 = vmatmul.bf16.gmra.mxu0 %v3961
      %v4744 = vpop.f32.mrf.mxu0
      %v4745 = vadd.f32 0.0, %v4744
      %v4746 = vpop.f32.mrf.mxu0
      %v4747 = vadd.f32 0.0, %v4746
      %4748 = vmatmul.bf16.gmra.mxu0 %v3962
      %v4749 = vpop.f32.mrf.mxu0
      %v4750 = vadd.f32 0.0, %v4749
      %v4751 = vpop.f32.mrf.mxu0
      %v4752 = vadd.f32 0.0, %v4751
      %4753 = vmatmul.bf16.gmra.mxu0 %v3963
      %v4754 = vpop.f32.mrf.mxu0
      %v4755 = vadd.f32 0.0, %v4754
      %v4756 = vpop.f32.mrf.mxu0
      %v4757 = vadd.f32 0.0, %v4756
      %4758 = vmatmul.bf16.gmra.mxu0 %v3964
      %v4759 = vpop.f32.mrf.mxu0
      %v4760 = vadd.f32 0.0, %v4759
      %v4761 = vpop.f32.mrf.mxu0
      %v4762 = vadd.f32 0.0, %v4761
      %4763 = vdwg.mxu0
      %v4764 = vrot.slane %v4630, 1
      %v4765 = vrot.slane %v4632, 1
      %v4766 = vrot.slane %v4635, 1
      %v4767 = vrot.slane %v4637, 1
      %v4768 = vrot.slane %v4640, 1
      %v4769 = vrot.slane %v4642, 1
      %v4770 = vrot.slane %v4645, 1
      %v4771 = vrot.slane %v4647, 1
      %v4772 = vrot.slane %v4650, 1
      %v4773 = vrot.slane %v4652, 1
      %v4774 = vrot.slane %v4655, 1
      %v4775 = vrot.slane %v4657, 1
      %v4776 = vrot.slane %v4660, 1
      %v4777 = vrot.slane %v4662, 1
      %v4778 = vrot.slane %v4665, 1
      %v4779 = vrot.slane %v4667, 1
      %v4780 = vrot.slane %v4670, 1
      %v4781 = vrot.slane %v4672, 1
      %v4782 = vrot.slane %v4675, 1
      %v4783 = vrot.slane %v4677, 1
      %v4784 = vrot.slane %v4680, 1
      %v4785 = vrot.slane %v4682, 1
      %v4786 = vrot.slane %v4685, 1
      %v4787 = vrot.slane %v4687, 1
      %v4788 = vrot.slane %v4690, 1
      %v4789 = vrot.slane %v4692, 1
      %v4790 = vrot.slane %v4695, 1
      %v4791 = vrot.slane %v4697, 1
      %v4792 = vrot.slane %v4700, 1
      %v4793 = vrot.slane %v4702, 1
      %v4794 = vrot.slane %v4705, 1
      %v4795 = vrot.slane %v4707, 1
      %v4796 = vrot.slane %v4710, 1
      %v4797 = vrot.slane %v4712, 1
      %v4798 = vrot.slane %v4715, 1
      %v4799 = vrot.slane %v4717, 1
      %v4800 = vrot.slane %v4720, 1
      %v4801 = vrot.slane %v4722, 1
      %v4802 = vrot.slane %v4725, 1
      %v4803 = vrot.slane %v4727, 1
      %v4804 = vrot.slane %v4730, 1
      %v4805 = vrot.slane %v4732, 1
      %v4806 = vrot.slane %v4735, 1
      %v4807 = vrot.slane %v4737, 1
      %v4808 = vrot.slane %v4740, 1
      %v4809 = vrot.slane %v4742, 1
      %v4810 = vrot.slane %v4745, 1
      %v4811 = vrot.slane %v4747, 1
      %v4812 = vrot.slane %v4750, 1
      %v4813 = vrot.slane %v4752, 1
      %v4814 = vrot.slane %v4755, 1
      %v4815 = vrot.slane %v4757, 1
      %v4816 = vrot.slane %v4760, 1
      %v4817 = vrot.slane %v4762, 1
      %v4818 = vsel %vm1313, %v4816, %v4817
      %v4819 = vsel %vm1313, %v4815, %v4816
      %v4820 = vsel %vm1313, %v4814, %v4815
      %v4821 = vsel %vm1313, %v4813, %v4814
      %v4822 = vsel %vm1313, %v4812, %v4813
      %v4823 = vsel %vm1313, %v4811, %v4812
      %v4824 = vsel %vm1313, %v4810, %v4811
      %v4825 = vsel %vm1313, %v4809, %v4810
      %v4826 = vsel %vm1313, %v4808, %v4809
      %v4827 = vsel %vm1313, %v4807, %v4808
      %v4828 = vsel %vm1313, %v4806, %v4807
      %v4829 = vsel %vm1313, %v4805, %v4806
      %v4830 = vsel %vm1313, %v4804, %v4805
      %v4831 = vsel %vm1313, %v4803, %v4804
      %v4832 = vsel %vm1313, %v4802, %v4803
      %v4833 = vsel %vm1313, %v4801, %v4802
      %v4834 = vsel %vm1313, %v4800, %v4801
      %v4835 = vsel %vm1313, %v4799, %v4800
      %v4836 = vsel %vm1313, %v4798, %v4799
      %v4837 = vsel %vm1313, %v4797, %v4798
      %v4838 = vsel %vm1313, %v4796, %v4797
      %v4839 = vsel %vm1313, %v4795, %v4796
      %v4840 = vsel %vm1313, %v4794, %v4795
      %v4841 = vsel %vm1313, %v4793, %v4794
      %v4842 = vsel %vm1313, %v4792, %v4793
      %v4843 = vsel %vm1313, %v4791, %v4792
      %v4844 = vsel %vm1313, %v4790, %v4791
      %v4845 = vsel %vm1313, %v4789, %v4790
      %v4846 = vsel %vm1313, %v4788, %v4789
      %v4847 = vsel %vm1313, %v4787, %v4788
      %v4848 = vsel %vm1313, %v4786, %v4787
      %v4849 = vsel %vm1313, %v4785, %v4786
      %v4850 = vsel %vm1313, %v4784, %v4785
      %v4851 = vsel %vm1313, %v4783, %v4784
      %v4852 = vsel %vm1313, %v4782, %v4783
      %v4853 = vsel %vm1313, %v4781, %v4782
      %v4854 = vsel %vm1313, %v4780, %v4781
      %v4855 = vsel %vm1313, %v4779, %v4780
      %v4856 = vsel %vm1313, %v4778, %v4779
      %v4857 = vsel %vm1313, %v4777, %v4778
      %v4858 = vsel %vm1313, %v4776, %v4777
      %v4859 = vsel %vm1313, %v4775, %v4776
      %v4860 = vsel %vm1313, %v4774, %v4775
      %v4861 = vsel %vm1313, %v4773, %v4774
      %v4862 = vsel %vm1313, %v4772, %v4773
      %v4863 = vsel %vm1313, %v4771, %v4772
      %v4864 = vsel %vm1313, %v4770, %v4771
      %v4865 = vsel %vm1313, %v4769, %v4770
      %v4866 = vsel %vm1313, %v4768, %v4769
      %v4867 = vsel %vm1313, %v4767, %v4768
      %v4868 = vsel %vm1313, %v4766, %v4767
      %v4869 = vsel %vm1313, %v4765, %v4766
      %v4870 = vsel %vm1313, %v4764, %v4765
      %v4871 = vsel %vm1313, %v4817, %v4764
      %v4872 = vadd.f32 %v4501, %v4819
      %v4873 = vadd.f32 %v4502, %v4818
      %v4874 = vadd.f32 %v4503, %v4871
      %v4875 = vadd.f32 %v4504, %v4870
      %v4876 = vadd.f32 %v4505, %v4869
      %v4877 = vadd.f32 %v4506, %v4868
      %v4878 = vadd.f32 %v4507, %v4867
      %v4879 = vadd.f32 %v4508, %v4866
      %v4880 = vadd.f32 %v4509, %v4865
      %v4881 = vadd.f32 %v4510, %v4864
      %v4882 = vadd.f32 %v4511, %v4863
      %v4883 = vadd.f32 %v4512, %v4862
      %v4884 = vadd.f32 %v4513, %v4861
      %v4885 = vadd.f32 %v4514, %v4860
      %v4886 = vadd.f32 %v4515, %v4859
      %v4887 = vadd.f32 %v4516, %v4858
      %v4888 = vadd.f32 %v4517, %v4857
      %v4889 = vadd.f32 %v4518, %v4856
      %v4890 = vadd.f32 %v4519, %v4855
      %v4891 = vadd.f32 %v4520, %v4854
      %v4892 = vadd.f32 %v4521, %v4853
      %v4893 = vadd.f32 %v4522, %v4852
      %v4894 = vadd.f32 %v4523, %v4851
      %v4895 = vadd.f32 %v4524, %v4850
      %v4896 = vadd.f32 %v4525, %v4849
      %v4897 = vadd.f32 %v4526, %v4848
      %v4898 = vadd.f32 %v4527, %v4847
      %v4899 = vadd.f32 %v4528, %v4846
      %v4900 = vadd.f32 %v4529, %v4845
      %v4901 = vadd.f32 %v4530, %v4844
      %v4902 = vadd.f32 %v4531, %v4843
      %v4903 = vadd.f32 %v4532, %v4842
      %v4904 = vadd.f32 %v4533, %v4841
      %v4905 = vadd.f32 %v4534, %v4840
      %v4906 = vadd.f32 %v4535, %v4839
      %v4907 = vadd.f32 %v4536, %v4838
      %v4908 = vadd.f32 %v4537, %v4837
      %v4909 = vadd.f32 %v4538, %v4836
      %v4910 = vadd.f32 %v4539, %v4835
      %v4911 = vadd.f32 %v4540, %v4834
      %v4912 = vadd.f32 %v4541, %v4833
      %v4913 = vadd.f32 %v4542, %v4832
      %v4914 = vadd.f32 %v4543, %v4831
      %v4915 = vadd.f32 %v4544, %v4830
      %v4916 = vadd.f32 %v4545, %v4829
      %v4917 = vadd.f32 %v4546, %v4828
      %v4918 = vadd.f32 %v4547, %v4827
      %v4919 = vadd.f32 %v4548, %v4826
      %v4920 = vadd.f32 %v4549, %v4825
      %v4921 = vadd.f32 %v4550, %v4824
      %v4922 = vadd.f32 %v4551, %v4823
      %v4923 = vadd.f32 %v4552, %v4822
      %v4924 = vadd.f32 %v4553, %v4821
      %v4925 = vadd.f32 %v4554, %v4820
      %s4926 = scalar_lea.vmem %s2, 192
      %v4927 = vld [vmem:[%s4926] sm:$0xf]
      %v4928 = vld [vmem:[%s4926 + $0x4] sm:$0xf]
      %v4929 = vld [vmem:[%s4926 + $0x8] sm:$0xf]
      %v4930 = vld [vmem:[%s4926 + $0xc] sm:$0xf]
      %v4931 = vld [vmem:[%s4926 + $0x10] sm:$0xf]
      %v4932 = vld [vmem:[%s4926 + $0x14] sm:$0xf]
      %v4933 = vld [vmem:[%s4926 + $0x18] sm:$0xf]
      %v4934 = vld [vmem:[%s4926 + $0x1c] sm:$0xf]
      %v4935 = vld [vmem:[%s4926 + $0x20] sm:$0xf]
      %v4936 = vld [vmem:[%s4926 + $0x24] sm:$0xf]
      %v4937 = vld [vmem:[%s4926 + $0x28] sm:$0xf]
      %v4938 = vld [vmem:[%s4926 + $0x2c] sm:$0xf]
      %v4939 = vld [vmem:[%s4926 + $0x30] sm:$0xf]
      %v4940 = vld [vmem:[%s4926 + $0x34] sm:$0xf]
      %v4941 = vld [vmem:[%s4926 + $0x38] sm:$0xf]
      %v4942 = vld [vmem:[%s4926 + $0x3c] sm:$0xf]
      %v4959 = vunpack.c.l.b16 %v4927
      %v4960 = vunpack.c.l.b16 %v4928
      %v4961 = vunpack.c.l.b16 %v4929
      %v4962 = vunpack.c.l.b16 %v4930
      %v4963 = vunpack.c.l.b16 %v4931
      %v4964 = vunpack.c.l.b16 %v4932
      %v4965 = vunpack.c.l.b16 %v4933
      %v4966 = vunpack.c.l.b16 %v4934
      %v4967 = vunpack.c.l.b16 %v4935
      %v4968 = vunpack.c.l.b16 %v4936
      %v4969 = vunpack.c.l.b16 %v4937
      %v4970 = vunpack.c.l.b16 %v4938
      %v4971 = vunpack.c.l.b16 %v4939
      %v4972 = vunpack.c.l.b16 %v4940
      %v4973 = vunpack.c.l.b16 %v4941
      %v4974 = vunpack.c.l.b16 %v4942
      %v4975 = vpack.c.b16 %v4960, %v4959
      %v4976 = vpack.c.b16 %v4962, %v4961
      %v4977 = vpack.c.b16 %v4964, %v4963
      %v4978 = vpack.c.b16 %v4966, %v4965
      %v4979 = vpack.c.b16 %v4968, %v4967
      %v4980 = vpack.c.b16 %v4970, %v4969
      %v4981 = vpack.c.b16 %v4972, %v4971
      %v4982 = vpack.c.b16 %v4974, %v4973
      %4991 = vmatpush.bf16.msra.mxu0 %v4982
      %4992 = vmatpush.bf16.msra.mxu0 %v4981
      %4993 = vmatpush.bf16.msra.mxu0 %v4980
      %4994 = vmatpush.bf16.msra.mxu0 %v4979
      %4995 = vmatpush.bf16.msra.mxu0 %v4978
      %4996 = vmatpush.bf16.msra.mxu0 %v4977
      %4997 = vmatpush.bf16.msra.mxu0 %v4976
      %4998 = vmatpush.bf16.msra.mxu0 %v4975
      %4999 = vmatmul.bf16.gmra.mxu0 %v3938
      %v5000 = vpop.f32.mrf.mxu0
      %v5001 = vadd.f32 0.0, %v5000
      %v5002 = vpop.f32.mrf.mxu0
      %v5003 = vadd.f32 0.0, %v5002
      %5004 = vmatmul.bf16.gmra.mxu0 %v3939
      %v5005 = vpop.f32.mrf.mxu0
      %v5006 = vadd.f32 0.0, %v5005
      %v5007 = vpop.f32.mrf.mxu0
      %v5008 = vadd.f32 0.0, %v5007
      %5009 = vmatmul.bf16.gmra.mxu0 %v3940
      %v5010 = vpop.f32.mrf.mxu0
      %v5011 = vadd.f32 0.0, %v5010
      %v5012 = vpop.f32.mrf.mxu0
      %v5013 = vadd.f32 0.0, %v5012
      %5014 = vmatmul.bf16.gmra.mxu0 %v3941
      %v5015 = vpop.f32.mrf.mxu0
      %v5016 = vadd.f32 0.0, %v5015
      %v5017 = vpop.f32.mrf.mxu0
      %v5018 = vadd.f32 0.0, %v5017
      %5019 = vmatmul.bf16.gmra.mxu0 %v3942
      %v5020 = vpop.f32.mrf.mxu0
      %v5021 = vadd.f32 0.0, %v5020
      %v5022 = vpop.f32.mrf.mxu0
      %v5023 = vadd.f32 0.0, %v5022
      %5024 = vmatmul.bf16.gmra.mxu0 %v3943
      %v5025 = vpop.f32.mrf.mxu0
      %v5026 = vadd.f32 0.0, %v5025
      %v5027 = vpop.f32.mrf.mxu0
      %v5028 = vadd.f32 0.0, %v5027
      %5029 = vmatmul.bf16.gmra.mxu0 %v3944
      %v5030 = vpop.f32.mrf.mxu0
      %v5031 = vadd.f32 0.0, %v5030
      %v5032 = vpop.f32.mrf.mxu0
      %v5033 = vadd.f32 0.0, %v5032
      %5034 = vmatmul.bf16.gmra.mxu0 %v3945
      %v5035 = vpop.f32.mrf.mxu0
      %v5036 = vadd.f32 0.0, %v5035
      %v5037 = vpop.f32.mrf.mxu0
      %v5038 = vadd.f32 0.0, %v5037
      %5039 = vmatmul.bf16.gmra.mxu0 %v3946
      %v5040 = vpop.f32.mrf.mxu0
      %v5041 = vadd.f32 0.0, %v5040
      %v5042 = vpop.f32.mrf.mxu0
      %v5043 = vadd.f32 0.0, %v5042
      %5044 = vmatmul.bf16.gmra.mxu0 %v3947
      %v5045 = vpop.f32.mrf.mxu0
      %v5046 = vadd.f32 0.0, %v5045
      %v5047 = vpop.f32.mrf.mxu0
      %v5048 = vadd.f32 0.0, %v5047
      %5049 = vmatmul.bf16.gmra.mxu0 %v3948
      %v5050 = vpop.f32.mrf.mxu0
      %v5051 = vadd.f32 0.0, %v5050
      %v5052 = vpop.f32.mrf.mxu0
      %v5053 = vadd.f32 0.0, %v5052
      %5054 = vmatmul.bf16.gmra.mxu0 %v3949
      %v5055 = vpop.f32.mrf.mxu0
      %v5056 = vadd.f32 0.0, %v5055
      %v5057 = vpop.f32.mrf.mxu0
      %v5058 = vadd.f32 0.0, %v5057
      %5059 = vmatmul.bf16.gmra.mxu0 %v3950
      %v5060 = vpop.f32.mrf.mxu0
      %v5061 = vadd.f32 0.0, %v5060
      %v5062 = vpop.f32.mrf.mxu0
      %v5063 = vadd.f32 0.0, %v5062
      %5064 = vmatmul.bf16.gmra.mxu0 %v3951
      %v5065 = vpop.f32.mrf.mxu0
      %v5066 = vadd.f32 0.0, %v5065
      %v5067 = vpop.f32.mrf.mxu0
      %v5068 = vadd.f32 0.0, %v5067
      %5069 = vmatmul.bf16.gmra.mxu0 %v3952
      %v5070 = vpop.f32.mrf.mxu0
      %v5071 = vadd.f32 0.0, %v5070
      %v5072 = vpop.f32.mrf.mxu0
      %v5073 = vadd.f32 0.0, %v5072
      %5074 = vmatmul.bf16.gmra.mxu0 %v3953
      %v5075 = vpop.f32.mrf.mxu0
      %v5076 = vadd.f32 0.0, %v5075
      %v5077 = vpop.f32.mrf.mxu0
      %v5078 = vadd.f32 0.0, %v5077
      %5079 = vmatmul.bf16.gmra.mxu0 %v3954
      %v5080 = vpop.f32.mrf.mxu0
      %v5081 = vadd.f32 0.0, %v5080
      %v5082 = vpop.f32.mrf.mxu0
      %v5083 = vadd.f32 0.0, %v5082
      %5084 = vmatmul.bf16.gmra.mxu0 %v3955
      %v5085 = vpop.f32.mrf.mxu0
      %v5086 = vadd.f32 0.0, %v5085
      %v5087 = vpop.f32.mrf.mxu0
      %v5088 = vadd.f32 0.0, %v5087
      %5089 = vmatmul.bf16.gmra.mxu0 %v3956
      %v5090 = vpop.f32.mrf.mxu0
      %v5091 = vadd.f32 0.0, %v5090
      %v5092 = vpop.f32.mrf.mxu0
      %v5093 = vadd.f32 0.0, %v5092
      %5094 = vmatmul.bf16.gmra.mxu0 %v3957
      %v5095 = vpop.f32.mrf.mxu0
      %v5096 = vadd.f32 0.0, %v5095
      %v5097 = vpop.f32.mrf.mxu0
      %v5098 = vadd.f32 0.0, %v5097
      %5099 = vmatmul.bf16.gmra.mxu0 %v3958
      %v5100 = vpop.f32.mrf.mxu0
      %v5101 = vadd.f32 0.0, %v5100
      %v5102 = vpop.f32.mrf.mxu0
      %v5103 = vadd.f32 0.0, %v5102
      %5104 = vmatmul.bf16.gmra.mxu0 %v3959
      %v5105 = vpop.f32.mrf.mxu0
      %v5106 = vadd.f32 0.0, %v5105
      %v5107 = vpop.f32.mrf.mxu0
      %v5108 = vadd.f32 0.0, %v5107
      %5109 = vmatmul.bf16.gmra.mxu0 %v3960
      %v5110 = vpop.f32.mrf.mxu0
      %v5111 = vadd.f32 0.0, %v5110
      %v5112 = vpop.f32.mrf.mxu0
      %v5113 = vadd.f32 0.0, %v5112
      %5114 = vmatmul.bf16.gmra.mxu0 %v3961
      %v5115 = vpop.f32.mrf.mxu0
      %v5116 = vadd.f32 0.0, %v5115
      %v5117 = vpop.f32.mrf.mxu0
      %v5118 = vadd.f32 0.0, %v5117
      %5119 = vmatmul.bf16.gmra.mxu0 %v3962
      %v5120 = vpop.f32.mrf.mxu0
      %v5121 = vadd.f32 0.0, %v5120
      %v5122 = vpop.f32.mrf.mxu0
      %v5123 = vadd.f32 0.0, %v5122
      %5124 = vmatmul.bf16.gmra.mxu0 %v3963
      %v5125 = vpop.f32.mrf.mxu0
      %v5126 = vadd.f32 0.0, %v5125
      %v5127 = vpop.f32.mrf.mxu0
      %v5128 = vadd.f32 0.0, %v5127
      %5129 = vmatmul.bf16.gmra.mxu0 %v3964
      %v5130 = vpop.f32.mrf.mxu0
      %v5131 = vadd.f32 0.0, %v5130
      %v5132 = vpop.f32.mrf.mxu0
      %v5133 = vadd.f32 0.0, %v5132
      %5134 = vdwg.mxu0
      %v5135 = vrot.slane %v5001, 7
      %v5136 = vrot.slane %v5003, 7
      %v5137 = vrot.slane %v5006, 7
      %v5138 = vrot.slane %v5008, 7
      %v5139 = vrot.slane %v5011, 7
      %v5140 = vrot.slane %v5013, 7
      %v5141 = vrot.slane %v5016, 7
      %v5142 = vrot.slane %v5018, 7
      %v5143 = vrot.slane %v5021, 7
      %v5144 = vrot.slane %v5023, 7
      %v5145 = vrot.slane %v5026, 7
      %v5146 = vrot.slane %v5028, 7
      %v5147 = vrot.slane %v5031, 7
      %v5148 = vrot.slane %v5033, 7
      %v5149 = vrot.slane %v5036, 7
      %v5150 = vrot.slane %v5038, 7
      %v5151 = vrot.slane %v5041, 7
      %v5152 = vrot.slane %v5043, 7
      %v5153 = vrot.slane %v5046, 7
      %v5154 = vrot.slane %v5048, 7
      %v5155 = vrot.slane %v5051, 7
      %v5156 = vrot.slane %v5053, 7
      %v5157 = vrot.slane %v5056, 7
      %v5158 = vrot.slane %v5058, 7
      %v5159 = vrot.slane %v5061, 7
      %v5160 = vrot.slane %v5063, 7
      %v5161 = vrot.slane %v5066, 7
      %v5162 = vrot.slane %v5068, 7
      %v5163 = vrot.slane %v5071, 7
      %v5164 = vrot.slane %v5073, 7
      %v5165 = vrot.slane %v5076, 7
      %v5166 = vrot.slane %v5078, 7
      %v5167 = vrot.slane %v5081, 7
      %v5168 = vrot.slane %v5083, 7
      %v5169 = vrot.slane %v5086, 7
      %v5170 = vrot.slane %v5088, 7
      %v5171 = vrot.slane %v5091, 7
      %v5172 = vrot.slane %v5093, 7
      %v5173 = vrot.slane %v5096, 7
      %v5174 = vrot.slane %v5098, 7
      %v5175 = vrot.slane %v5101, 7
      %v5176 = vrot.slane %v5103, 7
      %v5177 = vrot.slane %v5106, 7
      %v5178 = vrot.slane %v5108, 7
      %v5179 = vrot.slane %v5111, 7
      %v5180 = vrot.slane %v5113, 7
      %v5181 = vrot.slane %v5116, 7
      %v5182 = vrot.slane %v5118, 7
      %v5183 = vrot.slane %v5121, 7
      %v5184 = vrot.slane %v5123, 7
      %v5185 = vrot.slane %v5126, 7
      %v5186 = vrot.slane %v5128, 7
      %v5187 = vrot.slane %v5131, 7
      %v5188 = vrot.slane %v5133, 7
      %v5189 = vsel %vm732, %v5187, %v5188
      %v5190 = vsel %vm732, %v5186, %v5187
      %v5191 = vsel %vm732, %v5185, %v5186
      %v5192 = vsel %vm732, %v5184, %v5185
      %v5193 = vsel %vm732, %v5183, %v5184
      %v5194 = vsel %vm732, %v5182, %v5183
      %v5195 = vsel %vm732, %v5181, %v5182
      %v5196 = vsel %vm732, %v5180, %v5181
      %v5197 = vsel %vm732, %v5179, %v5180
      %v5198 = vsel %vm732, %v5178, %v5179
      %v5199 = vsel %vm732, %v5177, %v5178
      %v5200 = vsel %vm732, %v5176, %v5177
      %v5201 = vsel %vm732, %v5175, %v5176
      %v5202 = vsel %vm732, %v5174, %v5175
      %v5203 = vsel %vm732, %v5173, %v5174
      %v5204 = vsel %vm732, %v5172, %v5173
      %v5205 = vsel %vm732, %v5171, %v5172
      %v5206 = vsel %vm732, %v5170, %v5171
      %v5207 = vsel %vm732, %v5169, %v5170
      %v5208 = vsel %vm732, %v5168, %v5169
      %v5209 = vsel %vm732, %v5167, %v5168
      %v5210 = vsel %vm732, %v5166, %v5167
      %v5211 = vsel %vm732, %v5165, %v5166
      %v5212 = vsel %vm732, %v5164, %v5165
      %v5213 = vsel %vm732, %v5163, %v5164
      %v5214 = vsel %vm732, %v5162, %v5163
      %v5215 = vsel %vm732, %v5161, %v5162
      %v5216 = vsel %vm732, %v5160, %v5161
      %v5217 = vsel %vm732, %v5159, %v5160
      %v5218 = vsel %vm732, %v5158, %v5159
      %v5219 = vsel %vm732, %v5157, %v5158
      %v5220 = vsel %vm732, %v5156, %v5157
      %v5221 = vsel %vm732, %v5155, %v5156
      %v5222 = vsel %vm732, %v5154, %v5155
      %v5223 = vsel %vm732, %v5153, %v5154
      %v5224 = vsel %vm732, %v5152, %v5153
      %v5225 = vsel %vm732, %v5151, %v5152
      %v5226 = vsel %vm732, %v5150, %v5151
      %v5227 = vsel %vm732, %v5149, %v5150
      %v5228 = vsel %vm732, %v5148, %v5149
      %v5229 = vsel %vm732, %v5147, %v5148
      %v5230 = vsel %vm732, %v5146, %v5147
      %v5231 = vsel %vm732, %v5145, %v5146
      %v5232 = vsel %vm732, %v5144, %v5145
      %v5233 = vsel %vm732, %v5143, %v5144
      %v5234 = vsel %vm732, %v5142, %v5143
      %v5235 = vsel %vm732, %v5141, %v5142
      %v5236 = vsel %vm732, %v5140, %v5141
      %v5237 = vsel %vm732, %v5139, %v5140
      %v5238 = vsel %vm732, %v5138, %v5139
      %v5239 = vsel %vm732, %v5137, %v5138
      %v5240 = vsel %vm732, %v5136, %v5137
      %v5241 = vsel %vm732, %v5135, %v5136
      %v5242 = vsel %vm732, %v5188, %v5135
      %v5243 = vadd.f32 %v4872, %v5242
      %v5244 = vadd.f32 %v4873, %v5241
      %v5245 = vadd.f32 %v4874, %v5240
      %v5246 = vadd.f32 %v4875, %v5239
      %v5247 = vadd.f32 %v4876, %v5238
      %v5248 = vadd.f32 %v4877, %v5237
      %v5249 = vadd.f32 %v4878, %v5236
      %v5250 = vadd.f32 %v4879, %v5235
      %v5251 = vadd.f32 %v4880, %v5234
      %v5252 = vadd.f32 %v4881, %v5233
      %v5253 = vadd.f32 %v4882, %v5232
      %v5254 = vadd.f32 %v4883, %v5231
      %v5255 = vadd.f32 %v4884, %v5230
      %v5256 = vadd.f32 %v4885, %v5229
      %v5257 = vadd.f32 %v4886, %v5228
      %v5258 = vadd.f32 %v4887, %v5227
      %v5259 = vadd.f32 %v4888, %v5226
      %v5260 = vadd.f32 %v4889, %v5225
      %v5261 = vadd.f32 %v4890, %v5224
      %v5262 = vadd.f32 %v4891, %v5223
      %v5263 = vadd.f32 %v4892, %v5222
      %v5264 = vadd.f32 %v4893, %v5221
      %v5265 = vadd.f32 %v4894, %v5220
      %v5266 = vadd.f32 %v4895, %v5219
      %v5267 = vadd.f32 %v4896, %v5218
      %v5268 = vadd.f32 %v4897, %v5217
      %v5269 = vadd.f32 %v4898, %v5216
      %v5270 = vadd.f32 %v4899, %v5215
      %v5271 = vadd.f32 %v4900, %v5214
      %v5272 = vadd.f32 %v4901, %v5213
      %v5273 = vadd.f32 %v4902, %v5212
      %v5274 = vadd.f32 %v4903, %v5211
      %v5275 = vadd.f32 %v4904, %v5210
      %v5276 = vadd.f32 %v4905, %v5209
      %v5277 = vadd.f32 %v4906, %v5208
      %v5278 = vadd.f32 %v4907, %v5207
      %v5279 = vadd.f32 %v4908, %v5206
      %v5280 = vadd.f32 %v4909, %v5205
      %v5281 = vadd.f32 %v4910, %v5204
      %v5282 = vadd.f32 %v4911, %v5203
      %v5283 = vadd.f32 %v4912, %v5202
      %v5284 = vadd.f32 %v4913, %v5201
      %v5285 = vadd.f32 %v4914, %v5200
      %v5286 = vadd.f32 %v4915, %v5199
      %v5287 = vadd.f32 %v4916, %v5198
      %v5288 = vadd.f32 %v4917, %v5197
      %v5289 = vadd.f32 %v4918, %v5196
      %v5290 = vadd.f32 %v4919, %v5195
      %v5291 = vadd.f32 %v4920, %v5194
      %v5292 = vadd.f32 %v4921, %v5193
      %v5293 = vadd.f32 %v4922, %v5192
      %v5294 = vadd.f32 %v4923, %v5191
      %v5295 = vadd.f32 %v4924, %v5190
      %v5296 = vadd.f32 %v4925, %v5189
      %s5297 = scalar_lea.vmem %s2, 256
      %v5298 = vld [vmem:[%s5297] sm:$0xf]
      %v5299 = vld [vmem:[%s5297 + $0x4] sm:$0xf]
      %v5300 = vld [vmem:[%s5297 + $0x8] sm:$0xf]
      %v5301 = vld [vmem:[%s5297 + $0xc] sm:$0xf]
      %v5302 = vld [vmem:[%s5297 + $0x10] sm:$0xf]
      %v5303 = vld [vmem:[%s5297 + $0x14] sm:$0xf]
      %v5304 = vld [vmem:[%s5297 + $0x18] sm:$0xf]
      %v5305 = vld [vmem:[%s5297 + $0x1c] sm:$0xf]
      %v5306 = vld [vmem:[%s5297 + $0x20] sm:$0xf]
      %v5307 = vld [vmem:[%s5297 + $0x24] sm:$0xf]
      %v5308 = vld [vmem:[%s5297 + $0x28] sm:$0xf]
      %v5309 = vld [vmem:[%s5297 + $0x2c] sm:$0xf]
      %v5310 = vld [vmem:[%s5297 + $0x30] sm:$0xf]
      %v5311 = vld [vmem:[%s5297 + $0x34] sm:$0xf]
      %v5312 = vld [vmem:[%s5297 + $0x38] sm:$0xf]
      %v5313 = vld [vmem:[%s5297 + $0x3c] sm:$0xf]
      %v5330 = vunpack.c.l.b16 %v5298
      %v5331 = vunpack.c.l.b16 %v5299
      %v5332 = vunpack.c.l.b16 %v5300
      %v5333 = vunpack.c.l.b16 %v5301
      %v5334 = vunpack.c.l.b16 %v5302
      %v5335 = vunpack.c.l.b16 %v5303
      %v5336 = vunpack.c.l.b16 %v5304
      %v5337 = vunpack.c.l.b16 %v5305
      %v5338 = vunpack.c.l.b16 %v5306
      %v5339 = vunpack.c.l.b16 %v5307
      %v5340 = vunpack.c.l.b16 %v5308
      %v5341 = vunpack.c.l.b16 %v5309
      %v5342 = vunpack.c.l.b16 %v5310
      %v5343 = vunpack.c.l.b16 %v5311
      %v5344 = vunpack.c.l.b16 %v5312
      %v5345 = vunpack.c.l.b16 %v5313
      %v5346 = vpack.c.b16 %v5331, %v5330
      %v5347 = vpack.c.b16 %v5333, %v5332
      %v5348 = vpack.c.b16 %v5335, %v5334
      %v5349 = vpack.c.b16 %v5337, %v5336
      %v5350 = vpack.c.b16 %v5339, %v5338
      %v5351 = vpack.c.b16 %v5341, %v5340
      %v5352 = vpack.c.b16 %v5343, %v5342
      %v5353 = vpack.c.b16 %v5345, %v5344
      %5362 = vmatpush.bf16.msra.mxu0 %v5353
      %5363 = vmatpush.bf16.msra.mxu0 %v5352
      %5364 = vmatpush.bf16.msra.mxu0 %v5351
      %5365 = vmatpush.bf16.msra.mxu0 %v5350
      %5366 = vmatpush.bf16.msra.mxu0 %v5349
      %5367 = vmatpush.bf16.msra.mxu0 %v5348
      %5368 = vmatpush.bf16.msra.mxu0 %v5347
      %5369 = vmatpush.bf16.msra.mxu0 %v5346
      %5370 = vmatmul.bf16.gmra.mxu0 %v3938
      %v5371 = vpop.f32.mrf.mxu0
      %v5372 = vadd.f32 0.0, %v5371
      %v5373 = vpop.f32.mrf.mxu0
      %v5374 = vadd.f32 0.0, %v5373
      %5375 = vmatmul.bf16.gmra.mxu0 %v3939
      %v5376 = vpop.f32.mrf.mxu0
      %v5377 = vadd.f32 0.0, %v5376
      %v5378 = vpop.f32.mrf.mxu0
      %v5379 = vadd.f32 0.0, %v5378
      %5380 = vmatmul.bf16.gmra.mxu0 %v3940
      %v5381 = vpop.f32.mrf.mxu0
      %v5382 = vadd.f32 0.0, %v5381
      %v5383 = vpop.f32.mrf.mxu0
      %v5384 = vadd.f32 0.0, %v5383
      %5385 = vmatmul.bf16.gmra.mxu0 %v3941
      %v5386 = vpop.f32.mrf.mxu0
      %v5387 = vadd.f32 0.0, %v5386
      %v5388 = vpop.f32.mrf.mxu0
      %v5389 = vadd.f32 0.0, %v5388
      %5390 = vmatmul.bf16.gmra.mxu0 %v3942
      %v5391 = vpop.f32.mrf.mxu0
      %v5392 = vadd.f32 0.0, %v5391
      %v5393 = vpop.f32.mrf.mxu0
      %v5394 = vadd.f32 0.0, %v5393
      %5395 = vmatmul.bf16.gmra.mxu0 %v3943
      %v5396 = vpop.f32.mrf.mxu0
      %v5397 = vadd.f32 0.0, %v5396
      %v5398 = vpop.f32.mrf.mxu0
      %v5399 = vadd.f32 0.0, %v5398
      %5400 = vmatmul.bf16.gmra.mxu0 %v3944
      %v5401 = vpop.f32.mrf.mxu0
      %v5402 = vadd.f32 0.0, %v5401
      %v5403 = vpop.f32.mrf.mxu0
      %v5404 = vadd.f32 0.0, %v5403
      %5405 = vmatmul.bf16.gmra.mxu0 %v3945
      %v5406 = vpop.f32.mrf.mxu0
      %v5407 = vadd.f32 0.0, %v5406
      %v5408 = vpop.f32.mrf.mxu0
      %v5409 = vadd.f32 0.0, %v5408
      %5410 = vmatmul.bf16.gmra.mxu0 %v3946
      %v5411 = vpop.f32.mrf.mxu0
      %v5412 = vadd.f32 0.0, %v5411
      %v5413 = vpop.f32.mrf.mxu0
      %v5414 = vadd.f32 0.0, %v5413
      %5415 = vmatmul.bf16.gmra.mxu0 %v3947
      %v5416 = vpop.f32.mrf.mxu0
      %v5417 = vadd.f32 0.0, %v5416
      %v5418 = vpop.f32.mrf.mxu0
      %v5419 = vadd.f32 0.0, %v5418
      %5420 = vmatmul.bf16.gmra.mxu0 %v3948
      %v5421 = vpop.f32.mrf.mxu0
      %v5422 = vadd.f32 0.0, %v5421
      %v5423 = vpop.f32.mrf.mxu0
      %v5424 = vadd.f32 0.0, %v5423
      %5425 = vmatmul.bf16.gmra.mxu0 %v3949
      %v5426 = vpop.f32.mrf.mxu0
      %v5427 = vadd.f32 0.0, %v5426
      %v5428 = vpop.f32.mrf.mxu0
      %v5429 = vadd.f32 0.0, %v5428
      %5430 = vmatmul.bf16.gmra.mxu0 %v3950
      %v5431 = vpop.f32.mrf.mxu0
      %v5432 = vadd.f32 0.0, %v5431
      %v5433 = vpop.f32.mrf.mxu0
      %v5434 = vadd.f32 0.0, %v5433
      %5435 = vmatmul.bf16.gmra.mxu0 %v3951
      %v5436 = vpop.f32.mrf.mxu0
      %v5437 = vadd.f32 0.0, %v5436
      %v5438 = vpop.f32.mrf.mxu0
      %v5439 = vadd.f32 0.0, %v5438
      %5440 = vmatmul.bf16.gmra.mxu0 %v3952
      %v5441 = vpop.f32.mrf.mxu0
      %v5442 = vadd.f32 0.0, %v5441
      %v5443 = vpop.f32.mrf.mxu0
      %v5444 = vadd.f32 0.0, %v5443
      %5445 = vmatmul.bf16.gmra.mxu0 %v3953
      %v5446 = vpop.f32.mrf.mxu0
      %v5447 = vadd.f32 0.0, %v5446
      %v5448 = vpop.f32.mrf.mxu0
      %v5449 = vadd.f32 0.0, %v5448
      %5450 = vmatmul.bf16.gmra.mxu0 %v3954
      %v5451 = vpop.f32.mrf.mxu0
      %v5452 = vadd.f32 0.0, %v5451
      %v5453 = vpop.f32.mrf.mxu0
      %v5454 = vadd.f32 0.0, %v5453
      %5455 = vmatmul.bf16.gmra.mxu0 %v3955
      %v5456 = vpop.f32.mrf.mxu0
      %v5457 = vadd.f32 0.0, %v5456
      %v5458 = vpop.f32.mrf.mxu0
      %v5459 = vadd.f32 0.0, %v5458
      %5460 = vmatmul.bf16.gmra.mxu0 %v3956
      %v5461 = vpop.f32.mrf.mxu0
      %v5462 = vadd.f32 0.0, %v5461
      %v5463 = vpop.f32.mrf.mxu0
      %v5464 = vadd.f32 0.0, %v5463
      %5465 = vmatmul.bf16.gmra.mxu0 %v3957
      %v5466 = vpop.f32.mrf.mxu0
      %v5467 = vadd.f32 0.0, %v5466
      %v5468 = vpop.f32.mrf.mxu0
      %v5469 = vadd.f32 0.0, %v5468
      %5470 = vmatmul.bf16.gmra.mxu0 %v3958
      %v5471 = vpop.f32.mrf.mxu0
      %v5472 = vadd.f32 0.0, %v5471
      %v5473 = vpop.f32.mrf.mxu0
      %v5474 = vadd.f32 0.0, %v5473
      %5475 = vmatmul.bf16.gmra.mxu0 %v3959
      %v5476 = vpop.f32.mrf.mxu0
      %v5477 = vadd.f32 0.0, %v5476
      %v5478 = vpop.f32.mrf.mxu0
      %v5479 = vadd.f32 0.0, %v5478
      %5480 = vmatmul.bf16.gmra.mxu0 %v3960
      %v5481 = vpop.f32.mrf.mxu0
      %v5482 = vadd.f32 0.0, %v5481
      %v5483 = vpop.f32.mrf.mxu0
      %v5484 = vadd.f32 0.0, %v5483
      %5485 = vmatmul.bf16.gmra.mxu0 %v3961
      %v5486 = vpop.f32.mrf.mxu0
      %v5487 = vadd.f32 0.0, %v5486
      %v5488 = vpop.f32.mrf.mxu0
      %v5489 = vadd.f32 0.0, %v5488
      %5490 = vmatmul.bf16.gmra.mxu0 %v3962
      %v5491 = vpop.f32.mrf.mxu0
      %v5492 = vadd.f32 0.0, %v5491
      %v5493 = vpop.f32.mrf.mxu0
      %v5494 = vadd.f32 0.0, %v5493
      %5495 = vmatmul.bf16.gmra.mxu0 %v3963
      %v5496 = vpop.f32.mrf.mxu0
      %v5497 = vadd.f32 0.0, %v5496
      %v5498 = vpop.f32.mrf.mxu0
      %v5499 = vadd.f32 0.0, %v5498
      %5500 = vmatmul.bf16.gmra.mxu0 %v3964
      %v5501 = vpop.f32.mrf.mxu0
      %v5502 = vadd.f32 0.0, %v5501
      %v5503 = vpop.f32.mrf.mxu0
      %v5504 = vadd.f32 0.0, %v5503
      %5505 = vdwg.mxu0
      %v5506 = vadd.f32 %v5243, %v5372
      %v5507 = vadd.f32 %v5244, %v5374
      %v5508 = vadd.f32 %v5245, %v5377
      %v5509 = vadd.f32 %v5246, %v5379
      %v5510 = vadd.f32 %v5247, %v5382
      %v5511 = vadd.f32 %v5248, %v5384
      %v5512 = vadd.f32 %v5249, %v5387
      %v5513 = vadd.f32 %v5250, %v5389
      %v5514 = vadd.f32 %v5251, %v5392
      %v5515 = vadd.f32 %v5252, %v5394
      %v5516 = vadd.f32 %v5253, %v5397
      %v5517 = vadd.f32 %v5254, %v5399
      %v5518 = vadd.f32 %v5255, %v5402
      %v5519 = vadd.f32 %v5256, %v5404
      %v5520 = vadd.f32 %v5257, %v5407
      %v5521 = vadd.f32 %v5258, %v5409
      %v5522 = vadd.f32 %v5259, %v5412
      %v5523 = vadd.f32 %v5260, %v5414
      %v5524 = vadd.f32 %v5261, %v5417
      %v5525 = vadd.f32 %v5262, %v5419
      %v5526 = vadd.f32 %v5263, %v5422
      %v5527 = vadd.f32 %v5264, %v5424
      %v5528 = vadd.f32 %v5265, %v5427
      %v5529 = vadd.f32 %v5266, %v5429
      %v5530 = vadd.f32 %v5267, %v5432
      %v5531 = vadd.f32 %v5268, %v5434
      %v5532 = vadd.f32 %v5269, %v5437
      %v5533 = vadd.f32 %v5270, %v5439
      %v5534 = vadd.f32 %v5271, %v5442
      %v5535 = vadd.f32 %v5272, %v5444
      %v5536 = vadd.f32 %v5273, %v5447
      %v5537 = vadd.f32 %v5274, %v5449
      %v5538 = vadd.f32 %v5275, %v5452
      %v5539 = vadd.f32 %v5276, %v5454
      %v5540 = vadd.f32 %v5277, %v5457
      %v5541 = vadd.f32 %v5278, %v5459
      %v5542 = vadd.f32 %v5279, %v5462
      %v5543 = vadd.f32 %v5280, %v5464
      %v5544 = vadd.f32 %v5281, %v5467
      %v5545 = vadd.f32 %v5282, %v5469
      %v5546 = vadd.f32 %v5283, %v5472
      %v5547 = vadd.f32 %v5284, %v5474
      %v5548 = vadd.f32 %v5285, %v5477
      %v5549 = vadd.f32 %v5286, %v5479
      %v5550 = vadd.f32 %v5287, %v5482
      %v5551 = vadd.f32 %v5288, %v5484
      %v5552 = vadd.f32 %v5289, %v5487
      %v5553 = vadd.f32 %v5290, %v5489
      %v5554 = vadd.f32 %v5291, %v5492
      %v5555 = vadd.f32 %v5292, %v5494
      %v5556 = vadd.f32 %v5293, %v5497
      %v5557 = vadd.f32 %v5294, %v5499
      %v5558 = vadd.f32 %v5295, %v5502
      %v5559 = vadd.f32 %v5296, %v5504
      %s5560 = scalar_lea.vmem %s2, 320
      %v5561 = vld [vmem:[%s5560] sm:$0xf]
      %v5562 = vld [vmem:[%s5560 + $0x4] sm:$0xf]
      %v5563 = vld [vmem:[%s5560 + $0x8] sm:$0xf]
      %v5564 = vld [vmem:[%s5560 + $0xc] sm:$0xf]
      %v5565 = vld [vmem:[%s5560 + $0x10] sm:$0xf]
      %v5566 = vld [vmem:[%s5560 + $0x14] sm:$0xf]
      %v5567 = vld [vmem:[%s5560 + $0x18] sm:$0xf]
      %v5568 = vld [vmem:[%s5560 + $0x1c] sm:$0xf]
      %v5569 = vld [vmem:[%s5560 + $0x20] sm:$0xf]
      %v5570 = vld [vmem:[%s5560 + $0x24] sm:$0xf]
      %v5571 = vld [vmem:[%s5560 + $0x28] sm:$0xf]
      %v5572 = vld [vmem:[%s5560 + $0x2c] sm:$0xf]
      %v5573 = vld [vmem:[%s5560 + $0x30] sm:$0xf]
      %v5574 = vld [vmem:[%s5560 + $0x34] sm:$0xf]
      %v5575 = vld [vmem:[%s5560 + $0x38] sm:$0xf]
      %v5576 = vld [vmem:[%s5560 + $0x3c] sm:$0xf]
      %v5593 = vunpack.c.l.b16 %v5561
      %v5594 = vunpack.c.l.b16 %v5562
      %v5595 = vunpack.c.l.b16 %v5563
      %v5596 = vunpack.c.l.b16 %v5564
      %v5597 = vunpack.c.l.b16 %v5565
      %v5598 = vunpack.c.l.b16 %v5566
      %v5599 = vunpack.c.l.b16 %v5567
      %v5600 = vunpack.c.l.b16 %v5568
      %v5601 = vunpack.c.l.b16 %v5569
      %v5602 = vunpack.c.l.b16 %v5570
      %v5603 = vunpack.c.l.b16 %v5571
      %v5604 = vunpack.c.l.b16 %v5572
      %v5605 = vunpack.c.l.b16 %v5573
      %v5606 = vunpack.c.l.b16 %v5574
      %v5607 = vunpack.c.l.b16 %v5575
      %v5608 = vunpack.c.l.b16 %v5576
      %v5609 = vpack.c.b16 %v5594, %v5593
      %v5610 = vpack.c.b16 %v5596, %v5595
      %v5611 = vpack.c.b16 %v5598, %v5597
      %v5612 = vpack.c.b16 %v5600, %v5599
      %v5613 = vpack.c.b16 %v5602, %v5601
      %v5614 = vpack.c.b16 %v5604, %v5603
      %v5615 = vpack.c.b16 %v5606, %v5605
      %v5616 = vpack.c.b16 %v5608, %v5607
      %5625 = vmatpush.bf16.msra.mxu0 %v5616
      %5626 = vmatpush.bf16.msra.mxu0 %v5615
      %5627 = vmatpush.bf16.msra.mxu0 %v5614
      %5628 = vmatpush.bf16.msra.mxu0 %v5613
      %5629 = vmatpush.bf16.msra.mxu0 %v5612
      %5630 = vmatpush.bf16.msra.mxu0 %v5611
      %5631 = vmatpush.bf16.msra.mxu0 %v5610
      %5632 = vmatpush.bf16.msra.mxu0 %v5609
      %5633 = vmatmul.bf16.gmra.mxu0 %v3938
      %v5634 = vpop.f32.mrf.mxu0
      %v5635 = vadd.f32 0.0, %v5634
      %v5636 = vpop.f32.mrf.mxu0
      %v5637 = vadd.f32 0.0, %v5636
      %5638 = vmatmul.bf16.gmra.mxu0 %v3939
      %v5639 = vpop.f32.mrf.mxu0
      %v5640 = vadd.f32 0.0, %v5639
      %v5641 = vpop.f32.mrf.mxu0
      %v5642 = vadd.f32 0.0, %v5641
      %5643 = vmatmul.bf16.gmra.mxu0 %v3940
      %v5644 = vpop.f32.mrf.mxu0
      %v5645 = vadd.f32 0.0, %v5644
      %v5646 = vpop.f32.mrf.mxu0
      %v5647 = vadd.f32 0.0, %v5646
      %5648 = vmatmul.bf16.gmra.mxu0 %v3941
      %v5649 = vpop.f32.mrf.mxu0
      %v5650 = vadd.f32 0.0, %v5649
      %v5651 = vpop.f32.mrf.mxu0
      %v5652 = vadd.f32 0.0, %v5651
      %5653 = vmatmul.bf16.gmra.mxu0 %v3942
      %v5654 = vpop.f32.mrf.mxu0
      %v5655 = vadd.f32 0.0, %v5654
      %v5656 = vpop.f32.mrf.mxu0
      %v5657 = vadd.f32 0.0, %v5656
      %5658 = vmatmul.bf16.gmra.mxu0 %v3943
      %v5659 = vpop.f32.mrf.mxu0
      %v5660 = vadd.f32 0.0, %v5659
      %v5661 = vpop.f32.mrf.mxu0
      %v5662 = vadd.f32 0.0, %v5661
      %5663 = vmatmul.bf16.gmra.mxu0 %v3944
      %v5664 = vpop.f32.mrf.mxu0
      %v5665 = vadd.f32 0.0, %v5664
      %v5666 = vpop.f32.mrf.mxu0
      %v5667 = vadd.f32 0.0, %v5666
      %5668 = vmatmul.bf16.gmra.mxu0 %v3945
      %v5669 = vpop.f32.mrf.mxu0
      %v5670 = vadd.f32 0.0, %v5669
      %v5671 = vpop.f32.mrf.mxu0
      %v5672 = vadd.f32 0.0, %v5671
      %5673 = vmatmul.bf16.gmra.mxu0 %v3946
      %v5674 = vpop.f32.mrf.mxu0
      %v5675 = vadd.f32 0.0, %v5674
      %v5676 = vpop.f32.mrf.mxu0
      %v5677 = vadd.f32 0.0, %v5676
      %5678 = vmatmul.bf16.gmra.mxu0 %v3947
      %v5679 = vpop.f32.mrf.mxu0
      %v5680 = vadd.f32 0.0, %v5679
      %v5681 = vpop.f32.mrf.mxu0
      %v5682 = vadd.f32 0.0, %v5681
      %5683 = vmatmul.bf16.gmra.mxu0 %v3948
      %v5684 = vpop.f32.mrf.mxu0
      %v5685 = vadd.f32 0.0, %v5684
      %v5686 = vpop.f32.mrf.mxu0
      %v5687 = vadd.f32 0.0, %v5686
      %5688 = vmatmul.bf16.gmra.mxu0 %v3949
      %v5689 = vpop.f32.mrf.mxu0
      %v5690 = vadd.f32 0.0, %v5689
      %v5691 = vpop.f32.mrf.mxu0
      %v5692 = vadd.f32 0.0, %v5691
      %5693 = vmatmul.bf16.gmra.mxu0 %v3950
      %v5694 = vpop.f32.mrf.mxu0
      %v5695 = vadd.f32 0.0, %v5694
      %v5696 = vpop.f32.mrf.mxu0
      %v5697 = vadd.f32 0.0, %v5696
      %5698 = vmatmul.bf16.gmra.mxu0 %v3951
      %v5699 = vpop.f32.mrf.mxu0
      %v5700 = vadd.f32 0.0, %v5699
      %v5701 = vpop.f32.mrf.mxu0
      %v5702 = vadd.f32 0.0, %v5701
      %5703 = vmatmul.bf16.gmra.mxu0 %v3952
      %v5704 = vpop.f32.mrf.mxu0
      %v5705 = vadd.f32 0.0, %v5704
      %v5706 = vpop.f32.mrf.mxu0
      %v5707 = vadd.f32 0.0, %v5706
      %5708 = vmatmul.bf16.gmra.mxu0 %v3953
      %v5709 = vpop.f32.mrf.mxu0
      %v5710 = vadd.f32 0.0, %v5709
      %v5711 = vpop.f32.mrf.mxu0
      %v5712 = vadd.f32 0.0, %v5711
      %5713 = vmatmul.bf16.gmra.mxu0 %v3954
      %v5714 = vpop.f32.mrf.mxu0
      %v5715 = vadd.f32 0.0, %v5714
      %v5716 = vpop.f32.mrf.mxu0
      %v5717 = vadd.f32 0.0, %v5716
      %5718 = vmatmul.bf16.gmra.mxu0 %v3955
      %v5719 = vpop.f32.mrf.mxu0
      %v5720 = vadd.f32 0.0, %v5719
      %v5721 = vpop.f32.mrf.mxu0
      %v5722 = vadd.f32 0.0, %v5721
      %5723 = vmatmul.bf16.gmra.mxu0 %v3956
      %v5724 = vpop.f32.mrf.mxu0
      %v5725 = vadd.f32 0.0, %v5724
      %v5726 = vpop.f32.mrf.mxu0
      %v5727 = vadd.f32 0.0, %v5726
      %5728 = vmatmul.bf16.gmra.mxu0 %v3957
      %v5729 = vpop.f32.mrf.mxu0
      %v5730 = vadd.f32 0.0, %v5729
      %v5731 = vpop.f32.mrf.mxu0
      %v5732 = vadd.f32 0.0, %v5731
      %5733 = vmatmul.bf16.gmra.mxu0 %v3958
      %v5734 = vpop.f32.mrf.mxu0
      %v5735 = vadd.f32 0.0, %v5734
      %v5736 = vpop.f32.mrf.mxu0
      %v5737 = vadd.f32 0.0, %v5736
      %5738 = vmatmul.bf16.gmra.mxu0 %v3959
      %v5739 = vpop.f32.mrf.mxu0
      %v5740 = vadd.f32 0.0, %v5739
      %v5741 = vpop.f32.mrf.mxu0
      %v5742 = vadd.f32 0.0, %v5741
      %5743 = vmatmul.bf16.gmra.mxu0 %v3960
      %v5744 = vpop.f32.mrf.mxu0
      %v5745 = vadd.f32 0.0, %v5744
      %v5746 = vpop.f32.mrf.mxu0
      %v5747 = vadd.f32 0.0, %v5746
      %5748 = vmatmul.bf16.gmra.mxu0 %v3961
      %v5749 = vpop.f32.mrf.mxu0
      %v5750 = vadd.f32 0.0, %v5749
      %v5751 = vpop.f32.mrf.mxu0
      %v5752 = vadd.f32 0.0, %v5751
      %5753 = vmatmul.bf16.gmra.mxu0 %v3962
      %v5754 = vpop.f32.mrf.mxu0
      %v5755 = vadd.f32 0.0, %v5754
      %v5756 = vpop.f32.mrf.mxu0
      %v5757 = vadd.f32 0.0, %v5756
      %5758 = vmatmul.bf16.gmra.mxu0 %v3963
      %v5759 = vpop.f32.mrf.mxu0
      %v5760 = vadd.f32 0.0, %v5759
      %v5761 = vpop.f32.mrf.mxu0
      %v5762 = vadd.f32 0.0, %v5761
      %5763 = vmatmul.bf16.gmra.mxu0 %v3964
      %v5764 = vpop.f32.mrf.mxu0
      %v5765 = vadd.f32 0.0, %v5764
      %v5766 = vpop.f32.mrf.mxu0
      %v5767 = vadd.f32 0.0, %v5766
      %5768 = vdwg.mxu0
      %v5769 = vrot.slane %v5635, 1
      %v5770 = vrot.slane %v5637, 1
      %v5771 = vrot.slane %v5640, 1
      %v5772 = vrot.slane %v5642, 1
      %v5773 = vrot.slane %v5645, 1
      %v5774 = vrot.slane %v5647, 1
      %v5775 = vrot.slane %v5650, 1
      %v5776 = vrot.slane %v5652, 1
      %v5777 = vrot.slane %v5655, 1
      %v5778 = vrot.slane %v5657, 1
      %v5779 = vrot.slane %v5660, 1
      %v5780 = vrot.slane %v5662, 1
      %v5781 = vrot.slane %v5665, 1
      %v5782 = vrot.slane %v5667, 1
      %v5783 = vrot.slane %v5670, 1
      %v5784 = vrot.slane %v5672, 1
      %v5785 = vrot.slane %v5675, 1
      %v5786 = vrot.slane %v5677, 1
      %v5787 = vrot.slane %v5680, 1
      %v5788 = vrot.slane %v5682, 1
      %v5789 = vrot.slane %v5685, 1
      %v5790 = vrot.slane %v5687, 1
      %v5791 = vrot.slane %v5690, 1
      %v5792 = vrot.slane %v5692, 1
      %v5793 = vrot.slane %v5695, 1
      %v5794 = vrot.slane %v5697, 1
      %v5795 = vrot.slane %v5700, 1
      %v5796 = vrot.slane %v5702, 1
      %v5797 = vrot.slane %v5705, 1
      %v5798 = vrot.slane %v5707, 1
      %v5799 = vrot.slane %v5710, 1
      %v5800 = vrot.slane %v5712, 1
      %v5801 = vrot.slane %v5715, 1
      %v5802 = vrot.slane %v5717, 1
      %v5803 = vrot.slane %v5720, 1
      %v5804 = vrot.slane %v5722, 1
      %v5805 = vrot.slane %v5725, 1
      %v5806 = vrot.slane %v5727, 1
      %v5807 = vrot.slane %v5730, 1
      %v5808 = vrot.slane %v5732, 1
      %v5809 = vrot.slane %v5735, 1
      %v5810 = vrot.slane %v5737, 1
      %v5811 = vrot.slane %v5740, 1
      %v5812 = vrot.slane %v5742, 1
      %v5813 = vrot.slane %v5745, 1
      %v5814 = vrot.slane %v5747, 1
      %v5815 = vrot.slane %v5750, 1
      %v5816 = vrot.slane %v5752, 1
      %v5817 = vrot.slane %v5755, 1
      %v5818 = vrot.slane %v5757, 1
      %v5819 = vrot.slane %v5760, 1
      %v5820 = vrot.slane %v5762, 1
      %v5821 = vrot.slane %v5765, 1
      %v5822 = vrot.slane %v5767, 1
      %v5823 = vsel %vm1313, %v5821, %v5822
      %v5824 = vsel %vm1313, %v5820, %v5821
      %v5825 = vsel %vm1313, %v5819, %v5820
      %v5826 = vsel %vm1313, %v5818, %v5819
      %v5827 = vsel %vm1313, %v5817, %v5818
      %v5828 = vsel %vm1313, %v5816, %v5817
      %v5829 = vsel %vm1313, %v5815, %v5816
      %v5830 = vsel %vm1313, %v5814, %v5815
      %v5831 = vsel %vm1313, %v5813, %v5814
      %v5832 = vsel %vm1313, %v5812, %v5813
      %v5833 = vsel %vm1313, %v5811, %v5812
      %v5834 = vsel %vm1313, %v5810, %v5811
      %v5835 = vsel %vm1313, %v5809, %v5810
      %v5836 = vsel %vm1313, %v5808, %v5809
      %v5837 = vsel %vm1313, %v5807, %v5808
      %v5838 = vsel %vm1313, %v5806, %v5807
      %v5839 = vsel %vm1313, %v5805, %v5806
      %v5840 = vsel %vm1313, %v5804, %v5805
      %v5841 = vsel %vm1313, %v5803, %v5804
      %v5842 = vsel %vm1313, %v5802, %v5803
      %v5843 = vsel %vm1313, %v5801, %v5802
      %v5844 = vsel %vm1313, %v5800, %v5801
      %v5845 = vsel %vm1313, %v5799, %v5800
      %v5846 = vsel %vm1313, %v5798, %v5799
      %v5847 = vsel %vm1313, %v5797, %v5798
      %v5848 = vsel %vm1313, %v5796, %v5797
      %v5849 = vsel %vm1313, %v5795, %v5796
      %v5850 = vsel %vm1313, %v5794, %v5795
      %v5851 = vsel %vm1313, %v5793, %v5794
      %v5852 = vsel %vm1313, %v5792, %v5793
      %v5853 = vsel %vm1313, %v5791, %v5792
      %v5854 = vsel %vm1313, %v5790, %v5791
      %v5855 = vsel %vm1313, %v5789, %v5790
      %v5856 = vsel %vm1313, %v5788, %v5789
      %v5857 = vsel %vm1313, %v5787, %v5788
      %v5858 = vsel %vm1313, %v5786, %v5787
      %v5859 = vsel %vm1313, %v5785, %v5786
      %v5860 = vsel %vm1313, %v5784, %v5785
      %v5861 = vsel %vm1313, %v5783, %v5784
      %v5862 = vsel %vm1313, %v5782, %v5783
      %v5863 = vsel %vm1313, %v5781, %v5782
      %v5864 = vsel %vm1313, %v5780, %v5781
      %v5865 = vsel %vm1313, %v5779, %v5780
      %v5866 = vsel %vm1313, %v5778, %v5779
      %v5867 = vsel %vm1313, %v5777, %v5778
      %v5868 = vsel %vm1313, %v5776, %v5777
      %v5869 = vsel %vm1313, %v5775, %v5776
      %v5870 = vsel %vm1313, %v5774, %v5775
      %v5871 = vsel %vm1313, %v5773, %v5774
      %v5872 = vsel %vm1313, %v5772, %v5773
      %v5873 = vsel %vm1313, %v5771, %v5772
      %v5874 = vsel %vm1313, %v5770, %v5771
      %v5875 = vsel %vm1313, %v5769, %v5770
      %v5876 = vsel %vm1313, %v5822, %v5769
      %v5877 = vadd.f32 %v5506, %v5875
      %v5878 = vadd.f32 %v5507, %v5874
      %v5879 = vadd.f32 %v5508, %v5873
      %v5880 = vadd.f32 %v5509, %v5872
      %v5881 = vadd.f32 %v5510, %v5871
      %v5882 = vadd.f32 %v5511, %v5870
      %v5883 = vadd.f32 %v5512, %v5869
      %v5884 = vadd.f32 %v5513, %v5868
      %v5885 = vadd.f32 %v5514, %v5867
      %v5886 = vadd.f32 %v5515, %v5866
      %v5887 = vadd.f32 %v5516, %v5865
      %v5888 = vadd.f32 %v5517, %v5864
      %v5889 = vadd.f32 %v5518, %v5863
      %v5890 = vadd.f32 %v5519, %v5862
      %v5891 = vadd.f32 %v5520, %v5861
      %v5892 = vadd.f32 %v5521, %v5860
      %v5893 = vadd.f32 %v5522, %v5859
      %v5894 = vadd.f32 %v5523, %v5858
      %v5895 = vadd.f32 %v5524, %v5857
      %v5896 = vadd.f32 %v5525, %v5856
      %v5897 = vadd.f32 %v5526, %v5855
      %v5898 = vadd.f32 %v5527, %v5854
      %v5899 = vadd.f32 %v5528, %v5853
      %v5900 = vadd.f32 %v5529, %v5852
      %v5901 = vadd.f32 %v5530, %v5851
      %v5902 = vadd.f32 %v5531, %v5850
      %v5903 = vadd.f32 %v5532, %v5849
      %v5904 = vadd.f32 %v5533, %v5848
      %v5905 = vadd.f32 %v5534, %v5847
      %v5906 = vadd.f32 %v5535, %v5846
      %v5907 = vadd.f32 %v5536, %v5845
      %v5908 = vadd.f32 %v5537, %v5844
      %v5909 = vadd.f32 %v5538, %v5843
      %v5910 = vadd.f32 %v5539, %v5842
      %v5911 = vadd.f32 %v5540, %v5841
      %v5912 = vadd.f32 %v5541, %v5840
      %v5913 = vadd.f32 %v5542, %v5839
      %v5914 = vadd.f32 %v5543, %v5838
      %v5915 = vadd.f32 %v5544, %v5837
      %v5916 = vadd.f32 %v5545, %v5836
      %v5917 = vadd.f32 %v5546, %v5835
      %v5918 = vadd.f32 %v5547, %v5834
      %v5919 = vadd.f32 %v5548, %v5833
      %v5920 = vadd.f32 %v5549, %v5832
      %v5921 = vadd.f32 %v5550, %v5831
      %v5922 = vadd.f32 %v5551, %v5830
      %v5923 = vadd.f32 %v5552, %v5829
      %v5924 = vadd.f32 %v5553, %v5828
      %v5925 = vadd.f32 %v5554, %v5827
      %v5926 = vadd.f32 %v5555, %v5826
      %v5927 = vadd.f32 %v5556, %v5825
      %v5928 = vadd.f32 %v5557, %v5824
      %v5929 = vadd.f32 %v5558, %v5823
      %v5930 = vadd.f32 %v5559, %v5876
      %s5931 = scalar_lea.vmem %s2, 384
      %v5932 = vld [vmem:[%s5931] sm:$0xf]
      %v5933 = vld [vmem:[%s5931 + $0x4] sm:$0xf]
      %v5934 = vld [vmem:[%s5931 + $0x8] sm:$0xf]
      %v5935 = vld [vmem:[%s5931 + $0xc] sm:$0xf]
      %v5936 = vld [vmem:[%s5931 + $0x10] sm:$0xf]
      %v5937 = vld [vmem:[%s5931 + $0x14] sm:$0xf]
      %v5938 = vld [vmem:[%s5931 + $0x18] sm:$0xf]
      %v5939 = vld [vmem:[%s5931 + $0x1c] sm:$0xf]
      %v5940 = vld [vmem:[%s5931 + $0x20] sm:$0xf]
      %v5941 = vld [vmem:[%s5931 + $0x24] sm:$0xf]
      %v5942 = vld [vmem:[%s5931 + $0x28] sm:$0xf]
      %v5943 = vld [vmem:[%s5931 + $0x2c] sm:$0xf]
      %v5944 = vld [vmem:[%s5931 + $0x30] sm:$0xf]
      %v5945 = vld [vmem:[%s5931 + $0x34] sm:$0xf]
      %v5946 = vld [vmem:[%s5931 + $0x38] sm:$0xf]
      %v5947 = vld [vmem:[%s5931 + $0x3c] sm:$0xf]
      %v5964 = vunpack.c.l.b16 %v5932
      %v5965 = vunpack.c.l.b16 %v5933
      %v5966 = vunpack.c.l.b16 %v5934
      %v5967 = vunpack.c.l.b16 %v5935
      %v5968 = vunpack.c.l.b16 %v5936
      %v5969 = vunpack.c.l.b16 %v5937
      %v5970 = vunpack.c.l.b16 %v5938
      %v5971 = vunpack.c.l.b16 %v5939
      %v5972 = vunpack.c.l.b16 %v5940
      %v5973 = vunpack.c.l.b16 %v5941
      %v5974 = vunpack.c.l.b16 %v5942
      %v5975 = vunpack.c.l.b16 %v5943
      %v5976 = vunpack.c.l.b16 %v5944
      %v5977 = vunpack.c.l.b16 %v5945
      %v5978 = vunpack.c.l.b16 %v5946
      %v5979 = vunpack.c.l.b16 %v5947
      %v5980 = vpack.c.b16 %v5965, %v5964
      %v5981 = vpack.c.b16 %v5967, %v5966
      %v5982 = vpack.c.b16 %v5969, %v5968
      %v5983 = vpack.c.b16 %v5971, %v5970
      %v5984 = vpack.c.b16 %v5973, %v5972
      %v5985 = vpack.c.b16 %v5975, %v5974
      %v5986 = vpack.c.b16 %v5977, %v5976
      %v5987 = vpack.c.b16 %v5979, %v5978
      %5996 = vmatpush.bf16.msra.mxu0 %v5987
      %5997 = vmatpush.bf16.msra.mxu0 %v5986
      %5998 = vmatpush.bf16.msra.mxu0 %v5985
      %5999 = vmatpush.bf16.msra.mxu0 %v5984
      %6000 = vmatpush.bf16.msra.mxu0 %v5983
      %6001 = vmatpush.bf16.msra.mxu0 %v5982
      %6002 = vmatpush.bf16.msra.mxu0 %v5981
      %6003 = vmatpush.bf16.msra.mxu0 %v5980
      %6004 = vmatmul.bf16.gmra.mxu0 %v3938
      %v6005 = vpop.f32.mrf.mxu0
      %v6006 = vadd.f32 0.0, %v6005
      %v6007 = vpop.f32.mrf.mxu0
      %v6008 = vadd.f32 0.0, %v6007
      %6009 = vmatmul.bf16.gmra.mxu0 %v3939
      %v6010 = vpop.f32.mrf.mxu0
      %v6011 = vadd.f32 0.0, %v6010
      %v6012 = vpop.f32.mrf.mxu0
      %v6013 = vadd.f32 0.0, %v6012
      %6014 = vmatmul.bf16.gmra.mxu0 %v3940
      %v6015 = vpop.f32.mrf.mxu0
      %v6016 = vadd.f32 0.0, %v6015
      %v6017 = vpop.f32.mrf.mxu0
      %v6018 = vadd.f32 0.0, %v6017
      %6019 = vmatmul.bf16.gmra.mxu0 %v3941
      %v6020 = vpop.f32.mrf.mxu0
      %v6021 = vadd.f32 0.0, %v6020
      %v6022 = vpop.f32.mrf.mxu0
      %v6023 = vadd.f32 0.0, %v6022
      %6024 = vmatmul.bf16.gmra.mxu0 %v3942
      %v6025 = vpop.f32.mrf.mxu0
      %v6026 = vadd.f32 0.0, %v6025
      %v6027 = vpop.f32.mrf.mxu0
      %v6028 = vadd.f32 0.0, %v6027
      %6029 = vmatmul.bf16.gmra.mxu0 %v3943
      %v6030 = vpop.f32.mrf.mxu0
      %v6031 = vadd.f32 0.0, %v6030
      %v6032 = vpop.f32.mrf.mxu0
      %v6033 = vadd.f32 0.0, %v6032
      %6034 = vmatmul.bf16.gmra.mxu0 %v3944
      %v6035 = vpop.f32.mrf.mxu0
      %v6036 = vadd.f32 0.0, %v6035
      %v6037 = vpop.f32.mrf.mxu0
      %v6038 = vadd.f32 0.0, %v6037
      %6039 = vmatmul.bf16.gmra.mxu0 %v3945
      %v6040 = vpop.f32.mrf.mxu0
      %v6041 = vadd.f32 0.0, %v6040
      %v6042 = vpop.f32.mrf.mxu0
      %v6043 = vadd.f32 0.0, %v6042
      %6044 = vmatmul.bf16.gmra.mxu0 %v3946
      %v6045 = vpop.f32.mrf.mxu0
      %v6046 = vadd.f32 0.0, %v6045
      %v6047 = vpop.f32.mrf.mxu0
      %v6048 = vadd.f32 0.0, %v6047
      %6049 = vmatmul.bf16.gmra.mxu0 %v3947
      %v6050 = vpop.f32.mrf.mxu0
      %v6051 = vadd.f32 0.0, %v6050
      %v6052 = vpop.f32.mrf.mxu0
      %v6053 = vadd.f32 0.0, %v6052
      %6054 = vmatmul.bf16.gmra.mxu0 %v3948
      %v6055 = vpop.f32.mrf.mxu0
      %v6056 = vadd.f32 0.0, %v6055
      %v6057 = vpop.f32.mrf.mxu0
      %v6058 = vadd.f32 0.0, %v6057
      %6059 = vmatmul.bf16.gmra.mxu0 %v3949
      %v6060 = vpop.f32.mrf.mxu0
      %v6061 = vadd.f32 0.0, %v6060
      %v6062 = vpop.f32.mrf.mxu0
      %v6063 = vadd.f32 0.0, %v6062
      %6064 = vmatmul.bf16.gmra.mxu0 %v3950
      %v6065 = vpop.f32.mrf.mxu0
      %v6066 = vadd.f32 0.0, %v6065
      %v6067 = vpop.f32.mrf.mxu0
      %v6068 = vadd.f32 0.0, %v6067
      %6069 = vmatmul.bf16.gmra.mxu0 %v3951
      %v6070 = vpop.f32.mrf.mxu0
      %v6071 = vadd.f32 0.0, %v6070
      %v6072 = vpop.f32.mrf.mxu0
      %v6073 = vadd.f32 0.0, %v6072
      %6074 = vmatmul.bf16.gmra.mxu0 %v3952
      %v6075 = vpop.f32.mrf.mxu0
      %v6076 = vadd.f32 0.0, %v6075
      %v6077 = vpop.f32.mrf.mxu0
      %v6078 = vadd.f32 0.0, %v6077
      %6079 = vmatmul.bf16.gmra.mxu0 %v3953
      %v6080 = vpop.f32.mrf.mxu0
      %v6081 = vadd.f32 0.0, %v6080
      %v6082 = vpop.f32.mrf.mxu0
      %v6083 = vadd.f32 0.0, %v6082
      %6084 = vmatmul.bf16.gmra.mxu0 %v3954
      %v6085 = vpop.f32.mrf.mxu0
      %v6086 = vadd.f32 0.0, %v6085
      %v6087 = vpop.f32.mrf.mxu0
      %v6088 = vadd.f32 0.0, %v6087
      %6089 = vmatmul.bf16.gmra.mxu0 %v3955
      %v6090 = vpop.f32.mrf.mxu0
      %v6091 = vadd.f32 0.0, %v6090
      %v6092 = vpop.f32.mrf.mxu0
      %v6093 = vadd.f32 0.0, %v6092
      %6094 = vmatmul.bf16.gmra.mxu0 %v3956
      %v6095 = vpop.f32.mrf.mxu0
      %v6096 = vadd.f32 0.0, %v6095
      %v6097 = vpop.f32.mrf.mxu0
      %v6098 = vadd.f32 0.0, %v6097
      %6099 = vmatmul.bf16.gmra.mxu0 %v3957
      %v6100 = vpop.f32.mrf.mxu0
      %v6101 = vadd.f32 0.0, %v6100
      %v6102 = vpop.f32.mrf.mxu0
      %v6103 = vadd.f32 0.0, %v6102
      %6104 = vmatmul.bf16.gmra.mxu0 %v3958
      %v6105 = vpop.f32.mrf.mxu0
      %v6106 = vadd.f32 0.0, %v6105
      %v6107 = vpop.f32.mrf.mxu0
      %v6108 = vadd.f32 0.0, %v6107
      %6109 = vmatmul.bf16.gmra.mxu0 %v3959
      %v6110 = vpop.f32.mrf.mxu0
      %v6111 = vadd.f32 0.0, %v6110
      %v6112 = vpop.f32.mrf.mxu0
      %v6113 = vadd.f32 0.0, %v6112
      %6114 = vmatmul.bf16.gmra.mxu0 %v3960
      %v6115 = vpop.f32.mrf.mxu0
      %v6116 = vadd.f32 0.0, %v6115
      %v6117 = vpop.f32.mrf.mxu0
      %v6118 = vadd.f32 0.0, %v6117
      %6119 = vmatmul.bf16.gmra.mxu0 %v3961
      %v6120 = vpop.f32.mrf.mxu0
      %v6121 = vadd.f32 0.0, %v6120
      %v6122 = vpop.f32.mrf.mxu0
      %v6123 = vadd.f32 0.0, %v6122
      %6124 = vmatmul.bf16.gmra.mxu0 %v3962
      %v6125 = vpop.f32.mrf.mxu0
      %v6126 = vadd.f32 0.0, %v6125
      %v6127 = vpop.f32.mrf.mxu0
      %v6128 = vadd.f32 0.0, %v6127
      %6129 = vmatmul.bf16.gmra.mxu0 %v3963
      %v6130 = vpop.f32.mrf.mxu0
      %v6131 = vadd.f32 0.0, %v6130
      %v6132 = vpop.f32.mrf.mxu0
      %v6133 = vadd.f32 0.0, %v6132
      %6134 = vmatmul.bf16.gmra.mxu0 %v3964
      %v6135 = vpop.f32.mrf.mxu0
      %v6136 = vadd.f32 0.0, %v6135
      %v6137 = vpop.f32.mrf.mxu0
      %v6138 = vadd.f32 0.0, %v6137
      %6139 = vdwg.mxu0
      %v6140 = vrot.slane %v6006, 7
      %v6141 = vrot.slane %v6008, 7
      %v6142 = vrot.slane %v6011, 7
      %v6143 = vrot.slane %v6013, 7
      %v6144 = vrot.slane %v6016, 7
      %v6145 = vrot.slane %v6018, 7
      %v6146 = vrot.slane %v6021, 7
      %v6147 = vrot.slane %v6023, 7
      %v6148 = vrot.slane %v6026, 7
      %v6149 = vrot.slane %v6028, 7
      %v6150 = vrot.slane %v6031, 7
      %v6151 = vrot.slane %v6033, 7
      %v6152 = vrot.slane %v6036, 7
      %v6153 = vrot.slane %v6038, 7
      %v6154 = vrot.slane %v6041, 7
      %v6155 = vrot.slane %v6043, 7
      %v6156 = vrot.slane %v6046, 7
      %v6157 = vrot.slane %v6048, 7
      %v6158 = vrot.slane %v6051, 7
      %v6159 = vrot.slane %v6053, 7
      %v6160 = vrot.slane %v6056, 7
      %v6161 = vrot.slane %v6058, 7
      %v6162 = vrot.slane %v6061, 7
      %v6163 = vrot.slane %v6063, 7
      %v6164 = vrot.slane %v6066, 7
      %v6165 = vrot.slane %v6068, 7
      %v6166 = vrot.slane %v6071, 7
      %v6167 = vrot.slane %v6073, 7
      %v6168 = vrot.slane %v6076, 7
      %v6169 = vrot.slane %v6078, 7
      %v6170 = vrot.slane %v6081, 7
      %v6171 = vrot.slane %v6083, 7
      %v6172 = vrot.slane %v6086, 7
      %v6173 = vrot.slane %v6088, 7
      %v6174 = vrot.slane %v6091, 7
      %v6175 = vrot.slane %v6093, 7
      %v6176 = vrot.slane %v6096, 7
      %v6177 = vrot.slane %v6098, 7
      %v6178 = vrot.slane %v6101, 7
      %v6179 = vrot.slane %v6103, 7
      %v6180 = vrot.slane %v6106, 7
      %v6181 = vrot.slane %v6108, 7
      %v6182 = vrot.slane %v6111, 7
      %v6183 = vrot.slane %v6113, 7
      %v6184 = vrot.slane %v6116, 7
      %v6185 = vrot.slane %v6118, 7
      %v6186 = vrot.slane %v6121, 7
      %v6187 = vrot.slane %v6123, 7
      %v6188 = vrot.slane %v6126, 7
      %v6189 = vrot.slane %v6128, 7
      %v6190 = vrot.slane %v6131, 7
      %v6191 = vrot.slane %v6133, 7
      %v6192 = vrot.slane %v6136, 7
      %v6193 = vrot.slane %v6138, 7
      %v6194 = vsel %vm732, %v6192, %v6193
      %v6195 = vsel %vm732, %v6191, %v6192
      %v6196 = vsel %vm732, %v6190, %v6191
      %v6197 = vsel %vm732, %v6189, %v6190
      %v6198 = vsel %vm732, %v6188, %v6189
      %v6199 = vsel %vm732, %v6187, %v6188
      %v6200 = vsel %vm732, %v6186, %v6187
      %v6201 = vsel %vm732, %v6185, %v6186
      %v6202 = vsel %vm732, %v6184, %v6185
      %v6203 = vsel %vm732, %v6183, %v6184
      %v6204 = vsel %vm732, %v6182, %v6183
      %v6205 = vsel %vm732, %v6181, %v6182
      %v6206 = vsel %vm732, %v6180, %v6181
      %v6207 = vsel %vm732, %v6179, %v6180
      %v6208 = vsel %vm732, %v6178, %v6179
      %v6209 = vsel %vm732, %v6177, %v6178
      %v6210 = vsel %vm732, %v6176, %v6177
      %v6211 = vsel %vm732, %v6175, %v6176
      %v6212 = vsel %vm732, %v6174, %v6175
      %v6213 = vsel %vm732, %v6173, %v6174
      %v6214 = vsel %vm732, %v6172, %v6173
      %v6215 = vsel %vm732, %v6171, %v6172
      %v6216 = vsel %vm732, %v6170, %v6171
      %v6217 = vsel %vm732, %v6169, %v6170
      %v6218 = vsel %vm732, %v6168, %v6169
      %v6219 = vsel %vm732, %v6167, %v6168
      %v6220 = vsel %vm732, %v6166, %v6167
      %v6221 = vsel %vm732, %v6165, %v6166
      %v6222 = vsel %vm732, %v6164, %v6165
      %v6223 = vsel %vm732, %v6163, %v6164
      %v6224 = vsel %vm732, %v6162, %v6163
      %v6225 = vsel %vm732, %v6161, %v6162
      %v6226 = vsel %vm732, %v6160, %v6161
      %v6227 = vsel %vm732, %v6159, %v6160
      %v6228 = vsel %vm732, %v6158, %v6159
      %v6229 = vsel %vm732, %v6157, %v6158
      %v6230 = vsel %vm732, %v6156, %v6157
      %v6231 = vsel %vm732, %v6155, %v6156
      %v6232 = vsel %vm732, %v6154, %v6155
      %v6233 = vsel %vm732, %v6153, %v6154
      %v6234 = vsel %vm732, %v6152, %v6153
      %v6235 = vsel %vm732, %v6151, %v6152
      %v6236 = vsel %vm732, %v6150, %v6151
      %v6237 = vsel %vm732, %v6149, %v6150
      %v6238 = vsel %vm732, %v6148, %v6149
      %v6239 = vsel %vm732, %v6147, %v6148
      %v6240 = vsel %vm732, %v6146, %v6147
      %v6241 = vsel %vm732, %v6145, %v6146
      %v6242 = vsel %vm732, %v6144, %v6145
      %v6243 = vsel %vm732, %v6143, %v6144
      %v6244 = vsel %vm732, %v6142, %v6143
      %v6245 = vsel %vm732, %v6141, %v6142
      %v6246 = vsel %vm732, %v6140, %v6141
      %v6247 = vsel %vm732, %v6193, %v6140
      %v6248 = vadd.f32 %v5877, %v6244
      %v6249 = vadd.f32 %v5878, %v6243
      %v6250 = vadd.f32 %v5879, %v6242
      %v6251 = vadd.f32 %v5880, %v6241
      %v6252 = vadd.f32 %v5881, %v6240
      %v6253 = vadd.f32 %v5882, %v6239
      %v6254 = vadd.f32 %v5883, %v6238
      %v6255 = vadd.f32 %v5884, %v6237
      %v6256 = vadd.f32 %v5885, %v6236
      %v6257 = vadd.f32 %v5886, %v6235
      %v6258 = vadd.f32 %v5887, %v6234
      %v6259 = vadd.f32 %v5888, %v6233
      %v6260 = vadd.f32 %v5889, %v6232
      %v6261 = vadd.f32 %v5890, %v6231
      %v6262 = vadd.f32 %v5891, %v6230
      %v6263 = vadd.f32 %v5892, %v6229
      %v6264 = vadd.f32 %v5893, %v6228
      %v6265 = vadd.f32 %v5894, %v6227
      %v6266 = vadd.f32 %v5895, %v6226
      %v6267 = vadd.f32 %v5896, %v6225
      %v6268 = vadd.f32 %v5897, %v6224
      %v6269 = vadd.f32 %v5898, %v6223
      %v6270 = vadd.f32 %v5899, %v6222
      %v6271 = vadd.f32 %v5900, %v6221
      %v6272 = vadd.f32 %v5901, %v6220
      %v6273 = vadd.f32 %v5902, %v6219
      %v6274 = vadd.f32 %v5903, %v6218
      %v6275 = vadd.f32 %v5904, %v6217
      %v6276 = vadd.f32 %v5905, %v6216
      %v6277 = vadd.f32 %v5906, %v6215
      %v6278 = vadd.f32 %v5907, %v6214
      %v6279 = vadd.f32 %v5908, %v6213
      %v6280 = vadd.f32 %v5909, %v6212
      %v6281 = vadd.f32 %v5910, %v6211
      %v6282 = vadd.f32 %v5911, %v6210
      %v6283 = vadd.f32 %v5912, %v6209
      %v6284 = vadd.f32 %v5913, %v6208
      %v6285 = vadd.f32 %v5914, %v6207
      %v6286 = vadd.f32 %v5915, %v6206
      %v6287 = vadd.f32 %v5916, %v6205
      %v6288 = vadd.f32 %v5917, %v6204
      %v6289 = vadd.f32 %v5918, %v6203
      %v6290 = vadd.f32 %v5919, %v6202
      %v6291 = vadd.f32 %v5920, %v6201
      %v6292 = vadd.f32 %v5921, %v6200
      %v6293 = vadd.f32 %v5922, %v6199
      %v6294 = vadd.f32 %v5923, %v6198
      %v6295 = vadd.f32 %v5924, %v6197
      %v6296 = vadd.f32 %v5925, %v6196
      %v6297 = vadd.f32 %v5926, %v6195
      %v6298 = vadd.f32 %v5927, %v6194
      %v6299 = vadd.f32 %v5928, %v6247
      %v6300 = vadd.f32 %v5929, %v6246
      %v6301 = vadd.f32 %v5930, %v6245
      %s6302 = scalar_lea.vmem %s2, 448
      %v6303 = vld [vmem:[%s6302] sm:$0xf]
      %v6304 = vld [vmem:[%s6302 + $0x4] sm:$0xf]
      %v6305 = vld [vmem:[%s6302 + $0x8] sm:$0xf]
      %v6306 = vld [vmem:[%s6302 + $0xc] sm:$0xf]
      %v6307 = vld [vmem:[%s6302 + $0x10] sm:$0xf]
      %v6308 = vld [vmem:[%s6302 + $0x14] sm:$0xf]
      %v6309 = vld [vmem:[%s6302 + $0x18] sm:$0xf]
      %v6310 = vld [vmem:[%s6302 + $0x1c] sm:$0xf]
      %v6311 = vld [vmem:[%s6302 + $0x20] sm:$0xf]
      %v6312 = vld [vmem:[%s6302 + $0x24] sm:$0xf]
      %v6313 = vld [vmem:[%s6302 + $0x28] sm:$0xf]
      %v6314 = vld [vmem:[%s6302 + $0x2c] sm:$0xf]
      %v6315 = vld [vmem:[%s6302 + $0x30] sm:$0xf]
      %v6316 = vld [vmem:[%s6302 + $0x34] sm:$0xf]
      %v6317 = vld [vmem:[%s6302 + $0x38] sm:$0xf]
      %v6318 = vld [vmem:[%s6302 + $0x3c] sm:$0xf]
      %v6335 = vunpack.c.l.b16 %v6303
      %v6336 = vunpack.c.l.b16 %v6304
      %v6337 = vunpack.c.l.b16 %v6305
      %v6338 = vunpack.c.l.b16 %v6306
      %v6339 = vunpack.c.l.b16 %v6307
      %v6340 = vunpack.c.l.b16 %v6308
      %v6341 = vunpack.c.l.b16 %v6309
      %v6342 = vunpack.c.l.b16 %v6310
      %v6343 = vunpack.c.l.b16 %v6311
      %v6344 = vunpack.c.l.b16 %v6312
      %v6345 = vunpack.c.l.b16 %v6313
      %v6346 = vunpack.c.l.b16 %v6314
      %v6347 = vunpack.c.l.b16 %v6315
      %v6348 = vunpack.c.l.b16 %v6316
      %v6349 = vunpack.c.l.b16 %v6317
      %v6350 = vunpack.c.l.b16 %v6318
      %v6351 = vpack.c.b16 %v6336, %v6335
      %v6352 = vpack.c.b16 %v6338, %v6337
      %v6353 = vpack.c.b16 %v6340, %v6339
      %v6354 = vpack.c.b16 %v6342, %v6341
      %v6355 = vpack.c.b16 %v6344, %v6343
      %v6356 = vpack.c.b16 %v6346, %v6345
      %v6357 = vpack.c.b16 %v6348, %v6347
      %v6358 = vpack.c.b16 %v6350, %v6349
      %6367 = vmatpush.bf16.msra.mxu0 %v6358
      %6368 = vmatpush.bf16.msra.mxu0 %v6357
      %6369 = vmatpush.bf16.msra.mxu0 %v6356
      %6370 = vmatpush.bf16.msra.mxu0 %v6355
      %6371 = vmatpush.bf16.msra.mxu0 %v6354
      %6372 = vmatpush.bf16.msra.mxu0 %v6353
      %6373 = vmatpush.bf16.msra.mxu0 %v6352
      %6374 = vmatpush.bf16.msra.mxu0 %v6351
      %6375 = vmatmul.bf16.gmra.mxu0 %v3938
      %v6376 = vpop.f32.mrf.mxu0
      %v6377 = vadd.f32 0.0, %v6376
      %v6378 = vpop.f32.mrf.mxu0
      %v6379 = vadd.f32 0.0, %v6378
      %6380 = vmatmul.bf16.gmra.mxu0 %v3939
      %v6381 = vpop.f32.mrf.mxu0
      %v6382 = vadd.f32 0.0, %v6381
      %v6383 = vpop.f32.mrf.mxu0
      %v6384 = vadd.f32 0.0, %v6383
      %6385 = vmatmul.bf16.gmra.mxu0 %v3940
      %v6386 = vpop.f32.mrf.mxu0
      %v6387 = vadd.f32 0.0, %v6386
      %v6388 = vpop.f32.mrf.mxu0
      %v6389 = vadd.f32 0.0, %v6388
      %6390 = vmatmul.bf16.gmra.mxu0 %v3941
      %v6391 = vpop.f32.mrf.mxu0
      %v6392 = vadd.f32 0.0, %v6391
      %v6393 = vpop.f32.mrf.mxu0
      %v6394 = vadd.f32 0.0, %v6393
      %6395 = vmatmul.bf16.gmra.mxu0 %v3942
      %v6396 = vpop.f32.mrf.mxu0
      %v6397 = vadd.f32 0.0, %v6396
      %v6398 = vpop.f32.mrf.mxu0
      %v6399 = vadd.f32 0.0, %v6398
      %6400 = vmatmul.bf16.gmra.mxu0 %v3943
      %v6401 = vpop.f32.mrf.mxu0
      %v6402 = vadd.f32 0.0, %v6401
      %v6403 = vpop.f32.mrf.mxu0
      %v6404 = vadd.f32 0.0, %v6403
      %6405 = vmatmul.bf16.gmra.mxu0 %v3944
      %v6406 = vpop.f32.mrf.mxu0
      %v6407 = vadd.f32 0.0, %v6406
      %v6408 = vpop.f32.mrf.mxu0
      %v6409 = vadd.f32 0.0, %v6408
      %6410 = vmatmul.bf16.gmra.mxu0 %v3945
      %v6411 = vpop.f32.mrf.mxu0
      %v6412 = vadd.f32 0.0, %v6411
      %v6413 = vpop.f32.mrf.mxu0
      %v6414 = vadd.f32 0.0, %v6413
      %6415 = vmatmul.bf16.gmra.mxu0 %v3946
      %v6416 = vpop.f32.mrf.mxu0
      %v6417 = vadd.f32 0.0, %v6416
      %v6418 = vpop.f32.mrf.mxu0
      %v6419 = vadd.f32 0.0, %v6418
      %6420 = vmatmul.bf16.gmra.mxu0 %v3947
      %v6421 = vpop.f32.mrf.mxu0
      %v6422 = vadd.f32 0.0, %v6421
      %v6423 = vpop.f32.mrf.mxu0
      %v6424 = vadd.f32 0.0, %v6423
      %6425 = vmatmul.bf16.gmra.mxu0 %v3948
      %v6426 = vpop.f32.mrf.mxu0
      %v6427 = vadd.f32 0.0, %v6426
      %v6428 = vpop.f32.mrf.mxu0
      %v6429 = vadd.f32 0.0, %v6428
      %6430 = vmatmul.bf16.gmra.mxu0 %v3949
      %v6431 = vpop.f32.mrf.mxu0
      %v6432 = vadd.f32 0.0, %v6431
      %v6433 = vpop.f32.mrf.mxu0
      %v6434 = vadd.f32 0.0, %v6433
      %6435 = vmatmul.bf16.gmra.mxu0 %v3950
      %v6436 = vpop.f32.mrf.mxu0
      %v6437 = vadd.f32 0.0, %v6436
      %v6438 = vpop.f32.mrf.mxu0
      %v6439 = vadd.f32 0.0, %v6438
      %6440 = vmatmul.bf16.gmra.mxu0 %v3951
      %v6441 = vpop.f32.mrf.mxu0
      %v6442 = vadd.f32 0.0, %v6441
      %v6443 = vpop.f32.mrf.mxu0
      %v6444 = vadd.f32 0.0, %v6443
      %6445 = vmatmul.bf16.gmra.mxu0 %v3952
      %v6446 = vpop.f32.mrf.mxu0
      %v6447 = vadd.f32 0.0, %v6446
      %v6448 = vpop.f32.mrf.mxu0
      %v6449 = vadd.f32 0.0, %v6448
      %6450 = vmatmul.bf16.gmra.mxu0 %v3953
      %v6451 = vpop.f32.mrf.mxu0
      %v6452 = vadd.f32 0.0, %v6451
      %v6453 = vpop.f32.mrf.mxu0
      %v6454 = vadd.f32 0.0, %v6453
      %6455 = vmatmul.bf16.gmra.mxu0 %v3954
      %v6456 = vpop.f32.mrf.mxu0
      %v6457 = vadd.f32 0.0, %v6456
      %v6458 = vpop.f32.mrf.mxu0
      %v6459 = vadd.f32 0.0, %v6458
      %6460 = vmatmul.bf16.gmra.mxu0 %v3955
      %v6461 = vpop.f32.mrf.mxu0
      %v6462 = vadd.f32 0.0, %v6461
      %v6463 = vpop.f32.mrf.mxu0
      %v6464 = vadd.f32 0.0, %v6463
      %6465 = vmatmul.bf16.gmra.mxu0 %v3956
      %v6466 = vpop.f32.mrf.mxu0
      %v6467 = vadd.f32 0.0, %v6466
      %v6468 = vpop.f32.mrf.mxu0
      %v6469 = vadd.f32 0.0, %v6468
      %6470 = vmatmul.bf16.gmra.mxu0 %v3957
      %v6471 = vpop.f32.mrf.mxu0
      %v6472 = vadd.f32 0.0, %v6471
      %v6473 = vpop.f32.mrf.mxu0
      %v6474 = vadd.f32 0.0, %v6473
      %6475 = vmatmul.bf16.gmra.mxu0 %v3958
      %v6476 = vpop.f32.mrf.mxu0
      %v6477 = vadd.f32 0.0, %v6476
      %v6478 = vpop.f32.mrf.mxu0
      %v6479 = vadd.f32 0.0, %v6478
      %6480 = vmatmul.bf16.gmra.mxu0 %v3959
      %v6481 = vpop.f32.mrf.mxu0
      %v6482 = vadd.f32 0.0, %v6481
      %v6483 = vpop.f32.mrf.mxu0
      %v6484 = vadd.f32 0.0, %v6483
      %6485 = vmatmul.bf16.gmra.mxu0 %v3960
      %v6486 = vpop.f32.mrf.mxu0
      %v6487 = vadd.f32 0.0, %v6486
      %v6488 = vpop.f32.mrf.mxu0
      %v6489 = vadd.f32 0.0, %v6488
      %6490 = vmatmul.bf16.gmra.mxu0 %v3961
      %v6491 = vpop.f32.mrf.mxu0
      %v6492 = vadd.f32 0.0, %v6491
      %v6493 = vpop.f32.mrf.mxu0
      %v6494 = vadd.f32 0.0, %v6493
      %6495 = vmatmul.bf16.gmra.mxu0 %v3962
      %v6496 = vpop.f32.mrf.mxu0
      %v6497 = vadd.f32 0.0, %v6496
      %v6498 = vpop.f32.mrf.mxu0
      %v6499 = vadd.f32 0.0, %v6498
      %6500 = vmatmul.bf16.gmra.mxu0 %v3963
      %v6501 = vpop.f32.mrf.mxu0
      %v6502 = vadd.f32 0.0, %v6501
      %v6503 = vpop.f32.mrf.mxu0
      %v6504 = vadd.f32 0.0, %v6503
      %6505 = vmatmul.bf16.gmra.mxu0 %v3964
      %v6506 = vpop.f32.mrf.mxu0
      %v6507 = vadd.f32 0.0, %v6506
      %v6508 = vpop.f32.mrf.mxu0
      %v6509 = vadd.f32 0.0, %v6508
      %6510 = vdwg.mxu0
      %v6511 = vadd.f32 %v6248, %v6384
      %v6512 = vadd.f32 %v6249, %v6387
      %v6513 = vadd.f32 %v6250, %v6389
      %v6514 = vadd.f32 %v6251, %v6392
      %v6515 = vadd.f32 %v6252, %v6394
      %v6516 = vadd.f32 %v6253, %v6397
      %v6517 = vadd.f32 %v6254, %v6399
      %v6518 = vadd.f32 %v6255, %v6402
      %v6519 = vadd.f32 %v6256, %v6404
      %v6520 = vadd.f32 %v6257, %v6407
      %v6521 = vadd.f32 %v6258, %v6409
      %v6522 = vadd.f32 %v6259, %v6412
      %v6523 = vadd.f32 %v6260, %v6414
      %v6524 = vadd.f32 %v6261, %v6417
      %v6525 = vadd.f32 %v6262, %v6419
      %v6526 = vadd.f32 %v6263, %v6422
      %v6527 = vadd.f32 %v6264, %v6424
      %v6528 = vadd.f32 %v6265, %v6427
      %v6529 = vadd.f32 %v6266, %v6429
      %v6530 = vadd.f32 %v6267, %v6432
      %v6531 = vadd.f32 %v6268, %v6434
      %v6532 = vadd.f32 %v6269, %v6437
      %v6533 = vadd.f32 %v6270, %v6439
      %v6534 = vadd.f32 %v6271, %v6442
      %v6535 = vadd.f32 %v6272, %v6444
      %v6536 = vadd.f32 %v6273, %v6447
      %v6537 = vadd.f32 %v6274, %v6449
      %v6538 = vadd.f32 %v6275, %v6452
      %v6539 = vadd.f32 %v6276, %v6454
      %v6540 = vadd.f32 %v6277, %v6457
      %v6541 = vadd.f32 %v6278, %v6459
      %v6542 = vadd.f32 %v6279, %v6462
      %v6543 = vadd.f32 %v6280, %v6464
      %v6544 = vadd.f32 %v6281, %v6467
      %v6545 = vadd.f32 %v6282, %v6469
      %v6546 = vadd.f32 %v6283, %v6472
      %v6547 = vadd.f32 %v6284, %v6474
      %v6548 = vadd.f32 %v6285, %v6477
      %v6549 = vadd.f32 %v6286, %v6479
      %v6550 = vadd.f32 %v6287, %v6482
      %v6551 = vadd.f32 %v6288, %v6484
      %v6552 = vadd.f32 %v6289, %v6487
      %v6553 = vadd.f32 %v6290, %v6489
      %v6554 = vadd.f32 %v6291, %v6492
      %v6555 = vadd.f32 %v6292, %v6494
      %v6556 = vadd.f32 %v6293, %v6497
      %v6557 = vadd.f32 %v6294, %v6499
      %v6558 = vadd.f32 %v6295, %v6502
      %v6559 = vadd.f32 %v6296, %v6504
      %v6560 = vadd.f32 %v6297, %v6507
      %v6561 = vadd.f32 %v6298, %v6509
      %v6562 = vadd.f32 %v6299, %v6377
      %v6563 = vadd.f32 %v6300, %v6379
      %v6564 = vadd.f32 %v6301, %v6382
      %s6565 = scalar_lea.vmem %s2, 512
      %v6566 = vld [vmem:[%s6565] sm:$0xf]
      %v6567 = vld [vmem:[%s6565 + $0x4] sm:$0xf]
      %v6568 = vld [vmem:[%s6565 + $0x8] sm:$0xf]
      %v6569 = vld [vmem:[%s6565 + $0xc] sm:$0xf]
      %v6570 = vld [vmem:[%s6565 + $0x10] sm:$0xf]
      %v6571 = vld [vmem:[%s6565 + $0x14] sm:$0xf]
      %v6572 = vld [vmem:[%s6565 + $0x18] sm:$0xf]
      %v6573 = vld [vmem:[%s6565 + $0x1c] sm:$0xf]
      %v6574 = vld [vmem:[%s6565 + $0x20] sm:$0xf]
      %v6575 = vld [vmem:[%s6565 + $0x24] sm:$0xf]
      %v6576 = vld [vmem:[%s6565 + $0x28] sm:$0xf]
      %v6577 = vld [vmem:[%s6565 + $0x2c] sm:$0xf]
      %v6578 = vld [vmem:[%s6565 + $0x30] sm:$0xf]
      %v6579 = vld [vmem:[%s6565 + $0x34] sm:$0xf]
      %v6580 = vld [vmem:[%s6565 + $0x38] sm:$0xf]
      %v6581 = vld [vmem:[%s6565 + $0x3c] sm:$0xf]
      %v6598 = vunpack.c.l.b16 %v6566
      %v6599 = vunpack.c.l.b16 %v6567
      %v6600 = vunpack.c.l.b16 %v6568
      %v6601 = vunpack.c.l.b16 %v6569
      %v6602 = vunpack.c.l.b16 %v6570
      %v6603 = vunpack.c.l.b16 %v6571
      %v6604 = vunpack.c.l.b16 %v6572
      %v6605 = vunpack.c.l.b16 %v6573
      %v6606 = vunpack.c.l.b16 %v6574
      %v6607 = vunpack.c.l.b16 %v6575
      %v6608 = vunpack.c.l.b16 %v6576
      %v6609 = vunpack.c.l.b16 %v6577
      %v6610 = vunpack.c.l.b16 %v6578
      %v6611 = vunpack.c.l.b16 %v6579
      %v6612 = vunpack.c.l.b16 %v6580
      %v6613 = vunpack.c.l.b16 %v6581
      %v6614 = vpack.c.b16 %v6599, %v6598
      %v6615 = vpack.c.b16 %v6601, %v6600
      %v6616 = vpack.c.b16 %v6603, %v6602
      %v6617 = vpack.c.b16 %v6605, %v6604
      %v6618 = vpack.c.b16 %v6607, %v6606
      %v6619 = vpack.c.b16 %v6609, %v6608
      %v6620 = vpack.c.b16 %v6611, %v6610
      %v6621 = vpack.c.b16 %v6613, %v6612
      %6630 = vmatpush.bf16.msra.mxu0 %v6621
      %6631 = vmatpush.bf16.msra.mxu0 %v6620
      %6632 = vmatpush.bf16.msra.mxu0 %v6619
      %6633 = vmatpush.bf16.msra.mxu0 %v6618
      %6634 = vmatpush.bf16.msra.mxu0 %v6617
      %6635 = vmatpush.bf16.msra.mxu0 %v6616
      %6636 = vmatpush.bf16.msra.mxu0 %v6615
      %6637 = vmatpush.bf16.msra.mxu0 %v6614
      %6638 = vmatmul.bf16.gmra.mxu0 %v3938
      %v6639 = vpop.f32.mrf.mxu0
      %v6640 = vadd.f32 0.0, %v6639
      %v6641 = vpop.f32.mrf.mxu0
      %v6642 = vadd.f32 0.0, %v6641
      %6643 = vmatmul.bf16.gmra.mxu0 %v3939
      %v6644 = vpop.f32.mrf.mxu0
      %v6645 = vadd.f32 0.0, %v6644
      %v6646 = vpop.f32.mrf.mxu0
      %v6647 = vadd.f32 0.0, %v6646
      %6648 = vmatmul.bf16.gmra.mxu0 %v3940
      %v6649 = vpop.f32.mrf.mxu0
      %v6650 = vadd.f32 0.0, %v6649
      %v6651 = vpop.f32.mrf.mxu0
      %v6652 = vadd.f32 0.0, %v6651
      %6653 = vmatmul.bf16.gmra.mxu0 %v3941
      %v6654 = vpop.f32.mrf.mxu0
      %v6655 = vadd.f32 0.0, %v6654
      %v6656 = vpop.f32.mrf.mxu0
      %v6657 = vadd.f32 0.0, %v6656
      %6658 = vmatmul.bf16.gmra.mxu0 %v3942
      %v6659 = vpop.f32.mrf.mxu0
      %v6660 = vadd.f32 0.0, %v6659
      %v6661 = vpop.f32.mrf.mxu0
      %v6662 = vadd.f32 0.0, %v6661
      %6663 = vmatmul.bf16.gmra.mxu0 %v3943
      %v6664 = vpop.f32.mrf.mxu0
      %v6665 = vadd.f32 0.0, %v6664
      %v6666 = vpop.f32.mrf.mxu0
      %v6667 = vadd.f32 0.0, %v6666
      %6668 = vmatmul.bf16.gmra.mxu0 %v3944
      %v6669 = vpop.f32.mrf.mxu0
      %v6670 = vadd.f32 0.0, %v6669
      %v6671 = vpop.f32.mrf.mxu0
      %v6672 = vadd.f32 0.0, %v6671
      %6673 = vmatmul.bf16.gmra.mxu0 %v3945
      %v6674 = vpop.f32.mrf.mxu0
      %v6675 = vadd.f32 0.0, %v6674
      %v6676 = vpop.f32.mrf.mxu0
      %v6677 = vadd.f32 0.0, %v6676
      %6678 = vmatmul.bf16.gmra.mxu0 %v3946
      %v6679 = vpop.f32.mrf.mxu0
      %v6680 = vadd.f32 0.0, %v6679
      %v6681 = vpop.f32.mrf.mxu0
      %v6682 = vadd.f32 0.0, %v6681
      %6683 = vmatmul.bf16.gmra.mxu0 %v3947
      %v6684 = vpop.f32.mrf.mxu0
      %v6685 = vadd.f32 0.0, %v6684
      %v6686 = vpop.f32.mrf.mxu0
      %v6687 = vadd.f32 0.0, %v6686
      %6688 = vmatmul.bf16.gmra.mxu0 %v3948
      %v6689 = vpop.f32.mrf.mxu0
      %v6690 = vadd.f32 0.0, %v6689
      %v6691 = vpop.f32.mrf.mxu0
      %v6692 = vadd.f32 0.0, %v6691
      %6693 = vmatmul.bf16.gmra.mxu0 %v3949
      %v6694 = vpop.f32.mrf.mxu0
      %v6695 = vadd.f32 0.0, %v6694
      %v6696 = vpop.f32.mrf.mxu0
      %v6697 = vadd.f32 0.0, %v6696
      %6698 = vmatmul.bf16.gmra.mxu0 %v3950
      %v6699 = vpop.f32.mrf.mxu0
      %v6700 = vadd.f32 0.0, %v6699
      %v6701 = vpop.f32.mrf.mxu0
      %v6702 = vadd.f32 0.0, %v6701
      %6703 = vmatmul.bf16.gmra.mxu0 %v3951
      %v6704 = vpop.f32.mrf.mxu0
      %v6705 = vadd.f32 0.0, %v6704
      %v6706 = vpop.f32.mrf.mxu0
      %v6707 = vadd.f32 0.0, %v6706
      %6708 = vmatmul.bf16.gmra.mxu0 %v3952
      %v6709 = vpop.f32.mrf.mxu0
      %v6710 = vadd.f32 0.0, %v6709
      %v6711 = vpop.f32.mrf.mxu0
      %v6712 = vadd.f32 0.0, %v6711
      %6713 = vmatmul.bf16.gmra.mxu0 %v3953
      %v6714 = vpop.f32.mrf.mxu0
      %v6715 = vadd.f32 0.0, %v6714
      %v6716 = vpop.f32.mrf.mxu0
      %v6717 = vadd.f32 0.0, %v6716
      %6718 = vmatmul.bf16.gmra.mxu0 %v3954
      %v6719 = vpop.f32.mrf.mxu0
      %v6720 = vadd.f32 0.0, %v6719
      %v6721 = vpop.f32.mrf.mxu0
      %v6722 = vadd.f32 0.0, %v6721
      %6723 = vmatmul.bf16.gmra.mxu0 %v3955
      %v6724 = vpop.f32.mrf.mxu0
      %v6725 = vadd.f32 0.0, %v6724
      %v6726 = vpop.f32.mrf.mxu0
      %v6727 = vadd.f32 0.0, %v6726
      %6728 = vmatmul.bf16.gmra.mxu0 %v3956
      %v6729 = vpop.f32.mrf.mxu0
      %v6730 = vadd.f32 0.0, %v6729
      %v6731 = vpop.f32.mrf.mxu0
      %v6732 = vadd.f32 0.0, %v6731
      %6733 = vmatmul.bf16.gmra.mxu0 %v3957
      %v6734 = vpop.f32.mrf.mxu0
      %v6735 = vadd.f32 0.0, %v6734
      %v6736 = vpop.f32.mrf.mxu0
      %v6737 = vadd.f32 0.0, %v6736
      %6738 = vmatmul.bf16.gmra.mxu0 %v3958
      %v6739 = vpop.f32.mrf.mxu0
      %v6740 = vadd.f32 0.0, %v6739
      %v6741 = vpop.f32.mrf.mxu0
      %v6742 = vadd.f32 0.0, %v6741
      %6743 = vmatmul.bf16.gmra.mxu0 %v3959
      %v6744 = vpop.f32.mrf.mxu0
      %v6745 = vadd.f32 0.0, %v6744
      %v6746 = vpop.f32.mrf.mxu0
      %v6747 = vadd.f32 0.0, %v6746
      %6748 = vmatmul.bf16.gmra.mxu0 %v3960
      %v6749 = vpop.f32.mrf.mxu0
      %v6750 = vadd.f32 0.0, %v6749
      %v6751 = vpop.f32.mrf.mxu0
      %v6752 = vadd.f32 0.0, %v6751
      %6753 = vmatmul.bf16.gmra.mxu0 %v3961
      %v6754 = vpop.f32.mrf.mxu0
      %v6755 = vadd.f32 0.0, %v6754
      %v6756 = vpop.f32.mrf.mxu0
      %v6757 = vadd.f32 0.0, %v6756
      %6758 = vmatmul.bf16.gmra.mxu0 %v3962
      %v6759 = vpop.f32.mrf.mxu0
      %v6760 = vadd.f32 0.0, %v6759
      %v6761 = vpop.f32.mrf.mxu0
      %v6762 = vadd.f32 0.0, %v6761
      %6763 = vmatmul.bf16.gmra.mxu0 %v3963
      %v6764 = vpop.f32.mrf.mxu0
      %v6765 = vadd.f32 0.0, %v6764
      %v6766 = vpop.f32.mrf.mxu0
      %v6767 = vadd.f32 0.0, %v6766
      %6768 = vmatmul.bf16.gmra.mxu0 %v3964
      %v6769 = vpop.f32.mrf.mxu0
      %v6770 = vadd.f32 0.0, %v6769
      %v6771 = vpop.f32.mrf.mxu0
      %v6772 = vadd.f32 0.0, %v6771
      %6773 = vdwg.mxu0
      %v6774 = vrot.slane %v6640, 1
      %v6775 = vrot.slane %v6642, 1
      %v6776 = vrot.slane %v6645, 1
      %v6777 = vrot.slane %v6647, 1
      %v6778 = vrot.slane %v6650, 1
      %v6779 = vrot.slane %v6652, 1
      %v6780 = vrot.slane %v6655, 1
      %v6781 = vrot.slane %v6657, 1
      %v6782 = vrot.slane %v6660, 1
      %v6783 = vrot.slane %v6662, 1
      %v6784 = vrot.slane %v6665, 1
      %v6785 = vrot.slane %v6667, 1
      %v6786 = vrot.slane %v6670, 1
      %v6787 = vrot.slane %v6672, 1
      %v6788 = vrot.slane %v6675, 1
      %v6789 = vrot.slane %v6677, 1
      %v6790 = vrot.slane %v6680, 1
      %v6791 = vrot.slane %v6682, 1
      %v6792 = vrot.slane %v6685, 1
      %v6793 = vrot.slane %v6687, 1
      %v6794 = vrot.slane %v6690, 1
      %v6795 = vrot.slane %v6692, 1
      %v6796 = vrot.slane %v6695, 1
      %v6797 = vrot.slane %v6697, 1
      %v6798 = vrot.slane %v6700, 1
      %v6799 = vrot.slane %v6702, 1
      %v6800 = vrot.slane %v6705, 1
      %v6801 = vrot.slane %v6707, 1
      %v6802 = vrot.slane %v6710, 1
      %v6803 = vrot.slane %v6712, 1
      %v6804 = vrot.slane %v6715, 1
      %v6805 = vrot.slane %v6717, 1
      %v6806 = vrot.slane %v6720, 1
      %v6807 = vrot.slane %v6722, 1
      %v6808 = vrot.slane %v6725, 1
      %v6809 = vrot.slane %v6727, 1
      %v6810 = vrot.slane %v6730, 1
      %v6811 = vrot.slane %v6732, 1
      %v6812 = vrot.slane %v6735, 1
      %v6813 = vrot.slane %v6737, 1
      %v6814 = vrot.slane %v6740, 1
      %v6815 = vrot.slane %v6742, 1
      %v6816 = vrot.slane %v6745, 1
      %v6817 = vrot.slane %v6747, 1
      %v6818 = vrot.slane %v6750, 1
      %v6819 = vrot.slane %v6752, 1
      %v6820 = vrot.slane %v6755, 1
      %v6821 = vrot.slane %v6757, 1
      %v6822 = vrot.slane %v6760, 1
      %v6823 = vrot.slane %v6762, 1
      %v6824 = vrot.slane %v6765, 1
      %v6825 = vrot.slane %v6767, 1
      %v6826 = vrot.slane %v6770, 1
      %v6827 = vrot.slane %v6772, 1
      %v6828 = vsel %vm1313, %v6826, %v6827
      %v6829 = vsel %vm1313, %v6825, %v6826
      %v6830 = vsel %vm1313, %v6824, %v6825
      %v6831 = vsel %vm1313, %v6823, %v6824
      %v6832 = vsel %vm1313, %v6822, %v6823
      %v6833 = vsel %vm1313, %v6821, %v6822
      %v6834 = vsel %vm1313, %v6820, %v6821
      %v6835 = vsel %vm1313, %v6819, %v6820
      %v6836 = vsel %vm1313, %v6818, %v6819
      %v6837 = vsel %vm1313, %v6817, %v6818
      %v6838 = vsel %vm1313, %v6816, %v6817
      %v6839 = vsel %vm1313, %v6815, %v6816
      %v6840 = vsel %vm1313, %v6814, %v6815
      %v6841 = vsel %vm1313, %v6813, %v6814
      %v6842 = vsel %vm1313, %v6812, %v6813
      %v6843 = vsel %vm1313, %v6811, %v6812
      %v6844 = vsel %vm1313, %v6810, %v6811
      %v6845 = vsel %vm1313, %v6809, %v6810
      %v6846 = vsel %vm1313, %v6808, %v6809
      %v6847 = vsel %vm1313, %v6807, %v6808
      %v6848 = vsel %vm1313, %v6806, %v6807
      %v6849 = vsel %vm1313, %v6805, %v6806
      %v6850 = vsel %vm1313, %v6804, %v6805
      %v6851 = vsel %vm1313, %v6803, %v6804
      %v6852 = vsel %vm1313, %v6802, %v6803
      %v6853 = vsel %vm1313, %v6801, %v6802
      %v6854 = vsel %vm1313, %v6800, %v6801
      %v6855 = vsel %vm1313, %v6799, %v6800
      %v6856 = vsel %vm1313, %v6798, %v6799
      %v6857 = vsel %vm1313, %v6797, %v6798
      %v6858 = vsel %vm1313, %v6796, %v6797
      %v6859 = vsel %vm1313, %v6795, %v6796
      %v6860 = vsel %vm1313, %v6794, %v6795
      %v6861 = vsel %vm1313, %v6793, %v6794
      %v6862 = vsel %vm1313, %v6792, %v6793
      %v6863 = vsel %vm1313, %v6791, %v6792
      %v6864 = vsel %vm1313, %v6790, %v6791
      %v6865 = vsel %vm1313, %v6789, %v6790
      %v6866 = vsel %vm1313, %v6788, %v6789
      %v6867 = vsel %vm1313, %v6787, %v6788
      %v6868 = vsel %vm1313, %v6786, %v6787
      %v6869 = vsel %vm1313, %v6785, %v6786
      %v6870 = vsel %vm1313, %v6784, %v6785
      %v6871 = vsel %vm1313, %v6783, %v6784
      %v6872 = vsel %vm1313, %v6782, %v6783
      %v6873 = vsel %vm1313, %v6781, %v6782
      %v6874 = vsel %vm1313, %v6780, %v6781
      %v6875 = vsel %vm1313, %v6779, %v6780
      %v6876 = vsel %vm1313, %v6778, %v6779
      %v6877 = vsel %vm1313, %v6777, %v6778
      %v6878 = vsel %vm1313, %v6776, %v6777
      %v6879 = vsel %vm1313, %v6775, %v6776
      %v6880 = vsel %vm1313, %v6774, %v6775
      %v6881 = vsel %vm1313, %v6827, %v6774
      %v6882 = vadd.f32 %v6511, %v6877
      %v6883 = vadd.f32 %v6512, %v6876
      %v6884 = vadd.f32 %v6513, %v6875
      %v6885 = vadd.f32 %v6514, %v6874
      %v6886 = vadd.f32 %v6515, %v6873
      %v6887 = vadd.f32 %v6516, %v6872
      %v6888 = vadd.f32 %v6517, %v6871
      %v6889 = vadd.f32 %v6518, %v6870
      %v6890 = vadd.f32 %v6519, %v6869
      %v6891 = vadd.f32 %v6520, %v6868
      %v6892 = vadd.f32 %v6521, %v6867
      %v6893 = vadd.f32 %v6522, %v6866
      %v6894 = vadd.f32 %v6523, %v6865
      %v6895 = vadd.f32 %v6524, %v6864
      %v6896 = vadd.f32 %v6525, %v6863
      %v6897 = vadd.f32 %v6526, %v6862
      %v6898 = vadd.f32 %v6527, %v6861
      %v6899 = vadd.f32 %v6528, %v6860
      %v6900 = vadd.f32 %v6529, %v6859
      %v6901 = vadd.f32 %v6530, %v6858
      %v6902 = vadd.f32 %v6531, %v6857
      %v6903 = vadd.f32 %v6532, %v6856
      %v6904 = vadd.f32 %v6533, %v6855
      %v6905 = vadd.f32 %v6534, %v6854
      %v6906 = vadd.f32 %v6535, %v6853
      %v6907 = vadd.f32 %v6536, %v6852
      %v6908 = vadd.f32 %v6537, %v6851
      %v6909 = vadd.f32 %v6538, %v6850
      %v6910 = vadd.f32 %v6539, %v6849
      %v6911 = vadd.f32 %v6540, %v6848
      %v6912 = vadd.f32 %v6541, %v6847
      %v6913 = vadd.f32 %v6542, %v6846
      %v6914 = vadd.f32 %v6543, %v6845
      %v6915 = vadd.f32 %v6544, %v6844
      %v6916 = vadd.f32 %v6545, %v6843
      %v6917 = vadd.f32 %v6546, %v6842
      %v6918 = vadd.f32 %v6547, %v6841
      %v6919 = vadd.f32 %v6548, %v6840
      %v6920 = vadd.f32 %v6549, %v6839
      %v6921 = vadd.f32 %v6550, %v6838
      %v6922 = vadd.f32 %v6551, %v6837
      %v6923 = vadd.f32 %v6552, %v6836
      %v6924 = vadd.f32 %v6553, %v6835
      %v6925 = vadd.f32 %v6554, %v6834
      %v6926 = vadd.f32 %v6555, %v6833
      %v6927 = vadd.f32 %v6556, %v6832
      %v6928 = vadd.f32 %v6557, %v6831
      %v6929 = vadd.f32 %v6558, %v6830
      %v6930 = vadd.f32 %v6559, %v6829
      %v6931 = vadd.f32 %v6560, %v6828
      %v6932 = vadd.f32 %v6561, %v6881
      %v6933 = vadd.f32 %v6562, %v6880
      %v6934 = vadd.f32 %v6563, %v6879
      %v6935 = vadd.f32 %v6564, %v6878
      %v6936 = vld [vmem:[%s4] sm:$0x1]
      %v6938 = vperm.slane %v6936, 0
      %v6940 = vadd.f32 %v6882, %v6938
      %v6941 = vadd.f32 %v6883, %v6938
      %v6942 = vadd.f32 %v6884, %v6938
      %v6943 = vadd.f32 %v6885, %v6938
      %v6944 = vadd.f32 %v6886, %v6938
      %v6945 = vadd.f32 %v6887, %v6938
      %v6946 = vadd.f32 %v6888, %v6938
      %v6947 = vadd.f32 %v6889, %v6938
      %v6948 = vadd.f32 %v6890, %v6938
      %v6949 = vadd.f32 %v6891, %v6938
      %v6950 = vadd.f32 %v6892, %v6938
      %v6951 = vadd.f32 %v6893, %v6938
      %v6952 = vadd.f32 %v6894, %v6938
      %v6953 = vadd.f32 %v6895, %v6938
      %v6954 = vadd.f32 %v6896, %v6938
      %v6955 = vadd.f32 %v6897, %v6938
      %v6956 = vadd.f32 %v6898, %v6938
      %v6957 = vadd.f32 %v6899, %v6938
      %v6958 = vadd.f32 %v6900, %v6938
      %v6959 = vadd.f32 %v6901, %v6938
      %v6960 = vadd.f32 %v6902, %v6938
      %v6961 = vadd.f32 %v6903, %v6938
      %v6962 = vadd.f32 %v6904, %v6938
      %v6963 = vadd.f32 %v6905, %v6938
      %v6964 = vadd.f32 %v6906, %v6938
      %v6965 = vadd.f32 %v6907, %v6938
      %v6966 = vadd.f32 %v6908, %v6938
      %v6967 = vadd.f32 %v6909, %v6938
      %v6968 = vadd.f32 %v6910, %v6938
      %v6969 = vadd.f32 %v6911, %v6938
      %v6970 = vadd.f32 %v6912, %v6938
      %v6971 = vadd.f32 %v6913, %v6938
      %v6972 = vadd.f32 %v6914, %v6938
      %v6973 = vadd.f32 %v6915, %v6938
      %v6974 = vadd.f32 %v6916, %v6938
      %v6975 = vadd.f32 %v6917, %v6938
      %v6976 = vadd.f32 %v6918, %v6938
      %v6977 = vadd.f32 %v6919, %v6938
      %v6978 = vadd.f32 %v6920, %v6938
      %v6979 = vadd.f32 %v6921, %v6938
      %v6980 = vadd.f32 %v6922, %v6938
      %v6981 = vadd.f32 %v6923, %v6938
      %v6982 = vadd.f32 %v6924, %v6938
      %v6983 = vadd.f32 %v6925, %v6938
      %v6984 = vadd.f32 %v6926, %v6938
      %v6985 = vadd.f32 %v6927, %v6938
      %v6986 = vadd.f32 %v6928, %v6938
      %v6987 = vadd.f32 %v6929, %v6938
      %v6988 = vadd.f32 %v6930, %v6938
      %v6989 = vadd.f32 %v6931, %v6938
      %v6990 = vadd.f32 %v6932, %v6938
      %v6991 = vadd.f32 %v6933, %v6938
      %v6992 = vadd.f32 %v6934, %v6938
      %v6993 = vadd.f32 %v6935, %v6938
      %v6994 = vld [vmem:[%s246] sm:$0xf]
      %v6995 = vld [vmem:[%s246 + $0x4] sm:$0xf]
      %v6996 = vld [vmem:[%s246 + $0x8] sm:$0xf]
      %v6997 = vld [vmem:[%s246 + $0xc] sm:$0xf]
      %v6998 = vld [vmem:[%s246 + $0x10] sm:$0xf]
      %v6999 = vld [vmem:[%s246 + $0x14] sm:$0xf]
      %v7000 = vld [vmem:[%s246 + $0x18] sm:$0xf]
      %v7001 = vld [vmem:[%s246 + $0x1c] sm:$0xf]
      %v7002 = vld [vmem:[%s246 + $0x20] sm:$0xf]
      %v7003 = vld [vmem:[%s246 + $0x24] sm:$0xf]
      %v7004 = vld [vmem:[%s246 + $0x28] sm:$0xf]
      %v7005 = vld [vmem:[%s246 + $0x2c] sm:$0xf]
      %v7006 = vld [vmem:[%s246 + $0x30] sm:$0xf]
      %v7007 = vld [vmem:[%s246 + $0x34] sm:$0xf]
      %v7008 = vld [vmem:[%s246 + $0x38] sm:$0xf]
      %v7009 = vld [vmem:[%s246 + $0x3c] sm:$0xf]
      %v7010 = vld [vmem:[%s246 + $0x40] sm:$0xf]
      %v7011 = vld [vmem:[%s246 + $0x44] sm:$0xf]
      %v7012 = vld [vmem:[%s246 + $0x48] sm:$0xf]
      %v7013 = vld [vmem:[%s246 + $0x4c] sm:$0xf]
      %v7014 = vld [vmem:[%s246 + $0x50] sm:$0xf]
      %v7015 = vld [vmem:[%s246 + $0x54] sm:$0xf]
      %v7016 = vld [vmem:[%s246 + $0x58] sm:$0xf]
      %v7017 = vld [vmem:[%s246 + $0x5c] sm:$0xf]
      %v7018 = vld [vmem:[%s246 + $0x60] sm:$0xf]
      %v7019 = vld [vmem:[%s246 + $0x64] sm:$0xf]
      %v7020 = vld [vmem:[%s246 + $0x68] sm:$0xf]
      %v7021 = vld [vmem:[%s246 + $0x6c] sm:$0xf]
      %v7022 = vld [vmem:[%s246 + $0x70] sm:$0xf]
      %v7023 = vld [vmem:[%s246 + $0x74] sm:$0xf]
      %v7024 = vld [vmem:[%s246 + $0x78] sm:$0xf]
      %v7025 = vld [vmem:[%s246 + $0x7c] sm:$0xf]
      %v7026 = vld [vmem:[%s246 + $0x80] sm:$0xf]
      %v7027 = vld [vmem:[%s246 + $0x84] sm:$0xf]
      %v7028 = vld [vmem:[%s246 + $0x88] sm:$0xf]
      %v7029 = vld [vmem:[%s246 + $0x8c] sm:$0xf]
      %v7030 = vld [vmem:[%s246 + $0x90] sm:$0xf]
      %v7031 = vld [vmem:[%s246 + $0x94] sm:$0xf]
      %v7032 = vld [vmem:[%s246 + $0x98] sm:$0xf]
      %v7033 = vld [vmem:[%s246 + $0x9c] sm:$0xf]
      %v7034 = vld [vmem:[%s246 + $0xa0] sm:$0xf]
      %v7035 = vld [vmem:[%s246 + $0xa4] sm:$0xf]
      %v7036 = vld [vmem:[%s246 + $0xa8] sm:$0xf]
      %v7037 = vld [vmem:[%s246 + $0xac] sm:$0xf]
      %v7038 = vld [vmem:[%s246 + $0xb0] sm:$0xf]
      %v7039 = vld [vmem:[%s246 + $0xb4] sm:$0xf]
      %v7040 = vld [vmem:[%s246 + $0xb8] sm:$0xf]
      %v7041 = vld [vmem:[%s246 + $0xbc] sm:$0xf]
      %v7042 = vld [vmem:[%s246 + $0xc0] sm:$0xf]
      %v7043 = vld [vmem:[%s246 + $0xc4] sm:$0xf]
      %v7044 = vld [vmem:[%s246 + $0xc8] sm:$0xf]
      %v7045 = vld [vmem:[%s246 + $0xcc] sm:$0xf]
      %v7046 = vld [vmem:[%s246 + $0xd0] sm:$0xf]
      %v7047 = vld [vmem:[%s246 + $0xd4] sm:$0xf]
      %v7048 = vunpack.c.l.bf16 %v6994
      %v7049 = vunpack.c.l.bf16 %v6995
      %v7050 = vunpack.c.l.bf16 %v6996
      %v7051 = vunpack.c.l.bf16 %v6997
      %v7052 = vunpack.c.l.bf16 %v6998
      %v7053 = vunpack.c.l.bf16 %v6999
      %v7054 = vunpack.c.l.bf16 %v7000
      %v7055 = vunpack.c.l.bf16 %v7001
      %v7056 = vunpack.c.l.bf16 %v7002
      %v7057 = vunpack.c.l.bf16 %v7003
      %v7058 = vunpack.c.l.bf16 %v7004
      %v7059 = vunpack.c.l.bf16 %v7005
      %v7060 = vunpack.c.l.bf16 %v7006
      %v7061 = vunpack.c.l.bf16 %v7007
      %v7062 = vunpack.c.l.bf16 %v7008
      %v7063 = vunpack.c.l.bf16 %v7009
      %v7064 = vunpack.c.l.bf16 %v7010
      %v7065 = vunpack.c.l.bf16 %v7011
      %v7066 = vunpack.c.l.bf16 %v7012
      %v7067 = vunpack.c.l.bf16 %v7013
      %v7068 = vunpack.c.l.bf16 %v7014
      %v7069 = vunpack.c.l.bf16 %v7015
      %v7070 = vunpack.c.l.bf16 %v7016
      %v7071 = vunpack.c.l.bf16 %v7017
      %v7072 = vunpack.c.l.bf16 %v7018
      %v7073 = vunpack.c.l.bf16 %v7019
      %v7074 = vunpack.c.l.bf16 %v7020
      %v7075 = vunpack.c.l.bf16 %v7021
      %v7076 = vunpack.c.l.bf16 %v7022
      %v7077 = vunpack.c.l.bf16 %v7023
      %v7078 = vunpack.c.l.bf16 %v7024
      %v7079 = vunpack.c.l.bf16 %v7025
      %v7080 = vunpack.c.l.bf16 %v7026
      %v7081 = vunpack.c.l.bf16 %v7027
      %v7082 = vunpack.c.l.bf16 %v7028
      %v7083 = vunpack.c.l.bf16 %v7029
      %v7084 = vunpack.c.l.bf16 %v7030
      %v7085 = vunpack.c.l.bf16 %v7031
      %v7086 = vunpack.c.l.bf16 %v7032
      %v7087 = vunpack.c.l.bf16 %v7033
      %v7088 = vunpack.c.l.bf16 %v7034
      %v7089 = vunpack.c.l.bf16 %v7035
      %v7090 = vunpack.c.l.bf16 %v7036
      %v7091 = vunpack.c.l.bf16 %v7037
      %v7092 = vunpack.c.l.bf16 %v7038
      %v7093 = vunpack.c.l.bf16 %v7039
      %v7094 = vunpack.c.l.bf16 %v7040
      %v7095 = vunpack.c.l.bf16 %v7041
      %v7096 = vunpack.c.l.bf16 %v7042
      %v7097 = vunpack.c.l.bf16 %v7043
      %v7098 = vunpack.c.l.bf16 %v7044
      %v7099 = vunpack.c.l.bf16 %v7045
      %v7100 = vunpack.c.l.bf16 %v7046
      %v7101 = vunpack.c.l.bf16 %v7047
      %v7102 = vadd.f32 %v6940, %v7048
      %v7103 = vadd.f32 %v6941, %v7049
      %v7104 = vadd.f32 %v6942, %v7050
      %v7105 = vadd.f32 %v6943, %v7051
      %v7106 = vadd.f32 %v6944, %v7052
      %v7107 = vadd.f32 %v6945, %v7053
      %v7108 = vadd.f32 %v6946, %v7054
      %v7109 = vadd.f32 %v6947, %v7055
      %v7110 = vadd.f32 %v6948, %v7056
      %v7111 = vadd.f32 %v6949, %v7057
      %v7112 = vadd.f32 %v6950, %v7058
      %v7113 = vadd.f32 %v6951, %v7059
      %v7114 = vadd.f32 %v6952, %v7060
      %v7115 = vadd.f32 %v6953, %v7061
      %v7116 = vadd.f32 %v6954, %v7062
      %v7117 = vadd.f32 %v6955, %v7063
      %v7118 = vadd.f32 %v6956, %v7064
      %v7119 = vadd.f32 %v6957, %v7065
      %v7120 = vadd.f32 %v6958, %v7066
      %v7121 = vadd.f32 %v6959, %v7067
      %v7122 = vadd.f32 %v6960, %v7068
      %v7123 = vadd.f32 %v6961, %v7069
      %v7124 = vadd.f32 %v6962, %v7070
      %v7125 = vadd.f32 %v6963, %v7071
      %v7126 = vadd.f32 %v6964, %v7072
      %v7127 = vadd.f32 %v6965, %v7073
      %v7128 = vadd.f32 %v6966, %v7074
      %v7129 = vadd.f32 %v6967, %v7075
      %v7130 = vadd.f32 %v6968, %v7076
      %v7131 = vadd.f32 %v6969, %v7077
      %v7132 = vadd.f32 %v6970, %v7078
      %v7133 = vadd.f32 %v6971, %v7079
      %v7134 = vadd.f32 %v6972, %v7080
      %v7135 = vadd.f32 %v6973, %v7081
      %v7136 = vadd.f32 %v6974, %v7082
      %v7137 = vadd.f32 %v6975, %v7083
      %v7138 = vadd.f32 %v6976, %v7084
      %v7139 = vadd.f32 %v6977, %v7085
      %v7140 = vadd.f32 %v6978, %v7086
      %v7141 = vadd.f32 %v6979, %v7087
      %v7142 = vadd.f32 %v6980, %v7088
      %v7143 = vadd.f32 %v6981, %v7089
      %v7144 = vadd.f32 %v6982, %v7090
      %v7145 = vadd.f32 %v6983, %v7091
      %v7146 = vadd.f32 %v6984, %v7092
      %v7147 = vadd.f32 %v6985, %v7093
      %v7148 = vadd.f32 %v6986, %v7094
      %v7149 = vadd.f32 %v6987, %v7095
      %v7150 = vadd.f32 %v6988, %v7096
      %v7151 = vadd.f32 %v6989, %v7097
      %v7152 = vadd.f32 %v6990, %v7098
      %v7153 = vadd.f32 %v6991, %v7099
      %v7154 = vadd.f32 %v6992, %v7100
      %v7155 = vadd.f32 %v6993, %v7101
      %v7156 = vmax.f32 %v7102, 0.0
      %v7157 = vmax.f32 %v7103, 0.0
      %v7158 = vmax.f32 %v7104, 0.0
      %v7159 = vmax.f32 %v7105, 0.0
      %v7160 = vmax.f32 %v7106, 0.0
      %v7161 = vmax.f32 %v7107, 0.0
      %v7162 = vmax.f32 %v7108, 0.0
      %v7163 = vmax.f32 %v7109, 0.0
      %v7164 = vmax.f32 %v7110, 0.0
      %v7165 = vmax.f32 %v7111, 0.0
      %v7166 = vmax.f32 %v7112, 0.0
      %v7167 = vmax.f32 %v7113, 0.0
      %v7168 = vmax.f32 %v7114, 0.0
      %v7169 = vmax.f32 %v7115, 0.0
      %v7170 = vmax.f32 %v7116, 0.0
      %v7171 = vmax.f32 %v7117, 0.0
      %v7172 = vmax.f32 %v7118, 0.0
      %v7173 = vmax.f32 %v7119, 0.0
      %v7174 = vmax.f32 %v7120, 0.0
      %v7175 = vmax.f32 %v7121, 0.0
      %v7176 = vmax.f32 %v7122, 0.0
      %v7177 = vmax.f32 %v7123, 0.0
      %v7178 = vmax.f32 %v7124, 0.0
      %v7179 = vmax.f32 %v7125, 0.0
      %v7180 = vmax.f32 %v7126, 0.0
      %v7181 = vmax.f32 %v7127, 0.0
      %v7182 = vmax.f32 %v7128, 0.0
      %v7183 = vmax.f32 %v7129, 0.0
      %v7184 = vmax.f32 %v7130, 0.0
      %v7185 = vmax.f32 %v7131, 0.0
      %v7186 = vmax.f32 %v7132, 0.0
      %v7187 = vmax.f32 %v7133, 0.0
      %v7188 = vmax.f32 %v7134, 0.0
      %v7189 = vmax.f32 %v7135, 0.0
      %v7190 = vmax.f32 %v7136, 0.0
      %v7191 = vmax.f32 %v7137, 0.0
      %v7192 = vmax.f32 %v7138, 0.0
      %v7193 = vmax.f32 %v7139, 0.0
      %v7194 = vmax.f32 %v7140, 0.0
      %v7195 = vmax.f32 %v7141, 0.0
      %v7196 = vmax.f32 %v7142, 0.0
      %v7197 = vmax.f32 %v7143, 0.0
      %v7198 = vmax.f32 %v7144, 0.0
      %v7199 = vmax.f32 %v7145, 0.0
      %v7200 = vmax.f32 %v7146, 0.0
      %v7201 = vmax.f32 %v7147, 0.0
      %v7202 = vmax.f32 %v7148, 0.0
      %v7203 = vmax.f32 %v7149, 0.0
      %v7204 = vmax.f32 %v7150, 0.0
      %v7205 = vmax.f32 %v7151, 0.0
      %v7206 = vmax.f32 %v7152, 0.0
      %v7207 = vmax.f32 %v7153, 0.0
      %v7208 = vmax.f32 %v7154, 0.0
      %v7209 = vmax.f32 %v7155, 0.0
      %7210 = vst [vmem:[%s251] sm:$0xff] %v7156
      %7211 = vst [vmem:[%s251 + $0x8] sm:$0xff] %v7157
      %7212 = vst [vmem:[%s251 + $0x10] sm:$0xff] %v7158
      %7213 = vst [vmem:[%s251 + $0x18] sm:$0xff] %v7159
      %7214 = vst [vmem:[%s251 + $0x20] sm:$0xff] %v7160
      %7215 = vst [vmem:[%s251 + $0x28] sm:$0xff] %v7161
      %7216 = vst [vmem:[%s251 + $0x30] sm:$0xff] %v7162
      %7217 = vst [vmem:[%s251 + $0x38] sm:$0xff] %v7163
      %7218 = vst [vmem:[%s251 + $0x40] sm:$0xff] %v7164
      %7219 = vst [vmem:[%s251 + $0x48] sm:$0xff] %v7165
      %7220 = vst [vmem:[%s251 + $0x50] sm:$0xff] %v7166
      %7221 = vst [vmem:[%s251 + $0x58] sm:$0xff] %v7167
      %7222 = vst [vmem:[%s251 + $0x60] sm:$0xff] %v7168
      %7223 = vst [vmem:[%s251 + $0x68] sm:$0xff] %v7169
      %7224 = vst [vmem:[%s251 + $0x70] sm:$0xff] %v7170
      %7225 = vst [vmem:[%s251 + $0x78] sm:$0xff] %v7171
      %7226 = vst [vmem:[%s251 + $0x80] sm:$0xff] %v7172
      %7227 = vst [vmem:[%s251 + $0x88] sm:$0xff] %v7173
      %7228 = vst [vmem:[%s251 + $0x90] sm:$0xff] %v7174
      %7229 = vst [vmem:[%s251 + $0x98] sm:$0xff] %v7175
      %7230 = vst [vmem:[%s251 + $0xa0] sm:$0xff] %v7176
      %7231 = vst [vmem:[%s251 + $0xa8] sm:$0xff] %v7177
      %7232 = vst [vmem:[%s251 + $0xb0] sm:$0xff] %v7178
      %7233 = vst [vmem:[%s251 + $0xb8] sm:$0xff] %v7179
      %7234 = vst [vmem:[%s251 + $0xc0] sm:$0xff] %v7180
      %7235 = vst [vmem:[%s251 + $0xc8] sm:$0xff] %v7181
      %7236 = vst [vmem:[%s251 + $0xd0] sm:$0xff] %v7182
      %7237 = vst [vmem:[%s251 + $0xd8] sm:$0xff] %v7183
      %7238 = vst [vmem:[%s251 + $0xe0] sm:$0xff] %v7184
      %7239 = vst [vmem:[%s251 + $0xe8] sm:$0xff] %v7185
      %7240 = vst [vmem:[%s251 + $0xf0] sm:$0xff] %v7186
      %7241 = vst [vmem:[%s251 + $0xf8] sm:$0xff] %v7187
      %7242 = vst [vmem:[%s251 + $0x100] sm:$0xff] %v7188
      %7243 = vst [vmem:[%s251 + $0x108] sm:$0xff] %v7189
      %7244 = vst [vmem:[%s251 + $0x110] sm:$0xff] %v7190
      %7245 = vst [vmem:[%s251 + $0x118] sm:$0xff] %v7191
      %7246 = vst [vmem:[%s251 + $0x120] sm:$0xff] %v7192
      %7247 = vst [vmem:[%s251 + $0x128] sm:$0xff] %v7193
      %7248 = vst [vmem:[%s251 + $0x130] sm:$0xff] %v7194
      %7249 = vst [vmem:[%s251 + $0x138] sm:$0xff] %v7195
      %7250 = vst [vmem:[%s251 + $0x140] sm:$0xff] %v7196
      %7251 = vst [vmem:[%s251 + $0x148] sm:$0xff] %v7197
      %7252 = vst [vmem:[%s251 + $0x150] sm:$0xff] %v7198
      %7253 = vst [vmem:[%s251 + $0x158] sm:$0xff] %v7199
      %7254 = vst [vmem:[%s251 + $0x160] sm:$0xff] %v7200
      %7255 = vst [vmem:[%s251 + $0x168] sm:$0xff] %v7201
      %7256 = vst [vmem:[%s251 + $0x170] sm:$0xff] %v7202
      %7257 = vst [vmem:[%s251 + $0x178] sm:$0xff] %v7203
      %7258 = vst [vmem:[%s251 + $0x180] sm:$0xff] %v7204
      %7259 = vst [vmem:[%s251 + $0x188] sm:$0xff] %v7205
      %7260 = vst [vmem:[%s251 + $0x190] sm:$0xff] %v7206
      %7261 = vst [vmem:[%s251 + $0x198] sm:$0xff] %v7207
      %7262 = vst [vmem:[%s251 + $0x1a0] sm:$0xff] %v7208
      %7263 = vst [vmem:[%s251 + $0x1a8] sm:$0xff] %v7209
      %p7264 = scmp.lt.s32.totalorder %s17, 1
      %s7265 = scalar_select %p7264, %s17, 1
      %s7266 = smul.addr %s7265, 54
      %s7267 = smul.addr %s7266, 8
      %s7268 = scalar_lea.vmem %s6, %s7267
      // Predicated region
      $region45: #{common_block_forward.1} parent=43 // pred_check
        %p7269 = pneg %p166
      $region46: #{common_block_forward.1} parent=43 // pred_check_branch
        %7271 = sbr.rel (%p7269) target = $region48
      $region47: #{common_block_forward.1} parent=43 // pred_region
        _
      $region48: #{common_block_forward.1} parent=43 // pred_fallthru
        _
    $region44: #{common_block_forward.1} parent=5 // pred_fallthru
      _
    %p7272 = scmp.le.s32.totalorder 2, %s12
    // Predicated region
    $region49: #{common_block_forward.1} parent=5 // pred_check
      %p7273 = pneg %p7272
    $region50: #{common_block_forward.1} parent=5 // pred_check_branch
      %7275 = sbr.rel (%p7273) target = $region52
    $region51: #{common_block_forward.1} parent=5 // pred_region
      %s7276 = ssub.s32 %s12, 2
      // Predicated region
      $region53: #{common_block_forward.1} parent=51 // pred_check
        %p7277 = pneg %p172
      $region54: #{common_block_forward.1} parent=51 // pred_check_branch
        %7279 = sbr.rel (%p7277) target = $region56
      $region55: #{common_block_forward.1} parent=51 // pred_region
        %p7280 = scmp.lt.s32.totalorder %s18, 1
        %s7281 = scalar_select %p7280, %s18, 1
        %s7282 = smul.addr %s7281, 54
        %s7283 = smul.addr %s7282, 8
        %s7284 = scalar_lea.vmem %s6, %s7283
      $region56: #{common_block_forward.1} parent=51 // pred_fallthru
        _
    $region52: #{common_block_forward.1} parent=5 // pred_fallthru
      _
  $region6: #{common_block_forward.1} parent=0 // loop_footer
    %s16 = sadd.s32 1, %s12
  $region7: #{common_block_forward.1} parent=0 // loop_footer_branch
    %11 = sbr.rel target = $region3
  $region8: #{common_block_forward.1} parent=0 // loop_exit
    _

</llo_original>
